<compile_context>
chip_gen: v7x
topology: tpu7x:2x2x1
jax: 0.10.0
libtpu: 0.0.40
codegen_flags: <defaults>
</compile_context>

<pallas_src>
import functools

import jax
import jax.numpy as jnp
from jax import lax
from jax.experimental import pallas as pl
from jax.experimental.pallas import tpu as pltpu

_MXU_DTYPE = jnp.bfloat16      # MXU operand dtype; accumulation is always f32.
_NEG_INF = -1e9                # additive mask value (matches the CLIP-style masks)


# ----------------------------------------------------------------------------
# Generation-aware sizing helpers
# ----------------------------------------------------------------------------
@functools.lru_cache(maxsize=None)
def _vmem_limit_bytes():
    """~3/4 of physical VMEM: ~48 MiB on v7x, ~96 MiB on v5e/v6e."""
    cap = 64 * 1024 * 1024                      # conservative default if query fails
    try:
        info = pltpu.get_tpu_info()
        cap = int(getattr(info, "vmem_capacity_bytes", cap))
    except Exception:
        pass
    return max(32 * 1024 * 1024, min(cap * 3 // 4, 112 * 1024 * 1024))


def _auto_batch_tile(B, S, D, Dm, H, kv_tile, dm_tile, vmem_budget):
    """Largest divisor of B whose resident f32 activations stay well under budget."""
    per_ex = 4 * S * (6 * D + 3 * D + H * kv_tile + dm_tile + 2 * D)
    cap = max(1, int(0.35 * vmem_budget) // max(per_ex, 1))
    bt = 1
    for cand in range(1, B + 1):
        if B % cand == 0 and cand <= cap and cand * S <= 1024:
            bt = cand
    return bt


# ----------------------------------------------------------------------------
# Fused transformer-block kernel: one (stream, batch-tile) element per grid step.
# ----------------------------------------------------------------------------
def _block_kernel(*refs, num_heads, gelu, causal, has_len, eps,
                  batch_tile, kv_tile, dm_tile, use_einshape):
    if has_len:
        len_ref, refs = refs[0], refs[1:]          # (G, B) int32 in SMEM
    (x_ref,
     ln1g_ref, ln1b_ref, wqkv_ref, bqkv_ref, wproj_ref, bproj_ref,
     ln2g_ref, ln2b_ref, wfc1_ref, bfc1_ref, wfc2_ref, bfc2_ref,
     o_ref) = refs

    Bt = batch_tile
    x = x_ref[0].astype(jnp.float32)               # (Bt, S, D)
    _, S, D = x.shape
    H = num_heads
    Dh = D // H
    Dm = wfc1_ref.shape[-1]
    M = Bt * S
    x2 = x.reshape(M, D)                           # all big matmuls use M = Bt*S rows

    kv_tiles = [(s0, min(kv_tile, S - s0)) for s0 in range(0, S, kv_tile)]
    dm_tiles = [(d0, min(dm_tile, Dm - d0)) for d0 in range(0, Dm, dm_tile)]

    def layernorm(h, g, b):
        mu = jnp.mean(h, axis=-1, keepdims=True)
        var = jnp.mean((h - mu) ** 2, axis=-1, keepdims=True)
        return (h - mu) * lax.rsqrt(var + eps) * g + b

    def split_heads(t2d):                          # (S, D) f32 -> (H, S, Dh) bf16
        if use_einshape:
            return pltpu.einshape("shd->hsd", t2d.reshape(S, H, Dh)).astype(_MXU_DTYPE)
        return jnp.stack([t2d[:, h * Dh:(h + 1) * Dh] for h in range(H)],
                         axis=0).astype(_MXU_DTYPE)

    def merge_heads(t3):                           # (H, S, Dh) f32 -> (S, D) f32
        if use_einshape:
            return pltpu.einshape("hsd->shd", t3).reshape(S, D)
        return jnp.concatenate([t3[h] for h in range(H)], axis=-1)

    if gelu == "quick":
        act = lambda h: h * jax.nn.sigmoid(1.702 * h)                     # CLIP
    elif gelu == "tanh":
        act = lambda h: 0.5 * h * (1.0 + jnp.tanh(
            0.7978845608028654 * (h + 0.044715 * h * h * h)))             # EUP-friendly
    else:  # exact erf GELU
        act = lambda h: 0.5 * h * (1.0 + lax.erf(h * (2.0 ** -0.5)))

    # ---- Attention sub-block ------------------------------------------------
    xn = layernorm(x2, ln1g_ref[0], ln1b_ref[0])                          # (M, D) f32
    qkv = jnp.dot(xn.astype(_MXU_DTYPE), wqkv_ref[0],
                  preferred_element_type=jnp.float32) + bqkv_ref[0]       # (M, 3D) f32
    qkv3 = qkv.reshape(Bt, S, 3 * D)

    g_idx = pl.program_id(0)
    bt_idx = pl.program_id(1)

    attn_chunks = []
    for b in range(Bt):
        # 1/sqrt(Dh) is pre-folded into the Q columns of wqkv/bqkv on the host.
        q3 = split_heads(qkv3[b, :, 0 * D:1 * D])                          # (H, S, Dh)
        k3 = split_heads(qkv3[b, :, 1 * D:2 * D])
        v3 = split_heads(qkv3[b, :, 2 * D:3 * D])
        if has_len:
            valid = len_ref[g_idx, bt_idx * Bt + b]

        # Flash-style online softmax over statically unrolled KV tiles.
        m_i = l_i = acc = None
        for ks, kn in kv_tiles:
            s = jnp.einsum("hqd,hkd->hqk", q3, k3[:, ks:ks + kn, :],
                           preferred_element_type=jnp.float32)             # (H, S, kn)
            if causal or has_len:
                rows = lax.broadcasted_iota(jnp.int32, (S, kn), 0)
                cols = lax.broadcasted_iota(jnp.int32, (S, kn), 1) + ks
                ok = None
                if causal:
                    ok = cols <= rows
                if has_len:
                    ok_len = cols < valid
                    ok = ok_len if ok is None else jnp.logical_and(ok, ok_len)
                s = s + jnp.where(ok, 0.0, _NEG_INF)[None, :, :]           # 1 select + 1 add
            m_blk = jnp.max(s, axis=-1, keepdims=True)
            m_new = m_blk if m_i is None else jnp.maximum(m_i, m_blk)
            e = jnp.exp(s - m_new)
            pv = jnp.einsum("hqk,hkd->hqd", e.astype(_MXU_DTYPE),
                            v3[:, ks:ks + kn, :],
                            preferred_element_type=jnp.float32)            # (H, S, Dh)
            l_blk = jnp.sum(e, axis=-1, keepdims=True)
            if m_i is None:
                m_i, l_i, acc = m_new, l_blk, pv
            else:
                alpha = jnp.exp(m_i - m_new)
                l_i = l_i * alpha + l_blk
                acc = acc * alpha + pv
                m_i = m_new
        # Deferred softmax normalization on the (H, S, Dh) output (EUP reciprocal).
        o3 = acc * pl.reciprocal(l_i, approx=True)
        attn_chunks.append(merge_heads(o3))                                # (S, D) f32
    attn = attn_chunks[0] if Bt == 1 else jnp.concatenate(attn_chunks, axis=0)

    attn = jnp.dot(attn.astype(_MXU_DTYPE), wproj_ref[0],
                   preferred_element_type=jnp.float32) + bproj_ref[0]      # (M, D)
    x1 = x2 + attn

    # ---- MLP sub-block (Dm-tiled so h1 is only (M, dm_tile) resident) -------
    xn2 = layernorm(x1, ln2g_ref[0], ln2b_ref[0]).astype(_MXU_DTYPE)
    h2 = None
    for d0, dn in dm_tiles:
        h1 = jnp.dot(xn2, wfc1_ref[0, :, d0:d0 + dn],
                     preferred_element_type=jnp.float32) + bfc1_ref[0, :, d0:d0 + dn]
        h1 = act(h1)
        part = jnp.dot(h1.astype(_MXU_DTYPE), wfc2_ref[0, d0:d0 + dn, :],
                       preferred_element_type=jnp.float32)
        h2 = part if h2 is None else h2 + part
    h2 = h2 + bfc2_ref[0]

    o_ref[0] = (x1 + h2).reshape(Bt, S, D).astype(o_ref.dtype)


# ----------------------------------------------------------------------------
# Wrapper: G stacked streams, grid = (stream, batch // batch_tile)
# ----------------------------------------------------------------------------
def transformer_block(x, p, *, num_heads, gelu="erf", causal=False,
                      key_valid_len=None, eps=1e-5,
                      batch_tile=None, kv_tile=None, dm_tile=None):
    """x: (G, B, S, D) f32.  p: stacked params (leading G axis, see _stack_params).
    key_valid_len: optional (G, B) int32 number of valid (un-padded) keys; together
    with `causal` it replaces a dense additive attention mask."""
    G, B, S, D = x.shape
    Dm = p["wfc1"].shape[-1]
    H = num_heads
    assert D % H == 0, "model dim must divide evenly into heads"
    has_len = key_valid_len is not None

    # Lane/sublane alignment enforcement (production dims must be lane-dense;
    # tiny demo dims (< 128) are allowed but use padded vregs).
    if D >= 128:
        assert D % 128 == 0, "D must be a multiple of 128 for lane-dense stores"
    if Dm >= 128:
        assert Dm % 128 == 0, "Dm (mlp hidden) must be a multiple of 128"
    if S >= 8:
        assert S % 8 == 0, "S must be a multiple of 8 (f32 sublane tiling)"

    kv_tile = int(min(kv_tile if kv_tile else min(S, 512), S))
    dm_tile = int(min(dm_tile if dm_tile else min(Dm, 1024), Dm))
    vmem_budget = _vmem_limit_bytes()

    if batch_tile is None:
        Bt = _auto_batch_tile(B, S, D, Dm, H, kv_tile, dm_tile, vmem_budget)
    else:
        Bt = max(1, min(int(batch_tile), B))
        while B % Bt:
            Bt -= 1

    # Advisory cost hint so XLA schedules the stream kernels sensibly.
    mm_flops = 8 * S * D * D + 4 * S * S * D + 4 * S * D * Dm
    cost = pl.CostEstimate(
        flops=int(G * B * mm_flops),
        transcendentals=int(G * B * (H * S * S + S * Dm)),
        bytes_accessed=int(G * B * S * D * 4 * 2               # activations in/out
                           + G * (4 * D * D + 2 * D * Dm) * 2  # bf16 weights
                           + G * (9 * D + Dm) * 4),            # LN params + biases
    )

    args = []
    num_scalar_prefetch = 0
    if has_len:
        args.append(key_valid_len.astype(jnp.int32))
        num_scalar_prefetch = 1
    args += [x, p["ln1_g"], p["ln1_b"], p["wqkv"], p["bqkv"], p["wproj"],
             p["bproj"], p["ln2_g"], p["ln2_b"], p["wfc1"], p["bfc1"],
             p["wfc2"], p["bfc2"]]

    io_spec = pl.BlockSpec((1, Bt, S, D), lambda g, b, *_: (g, b, 0, 0))

    def run(fast):
        use_einshape = bool(fast and hasattr(pltpu, "einshape"))

        def wspec(d0, d1):
            idx = lambda g, b, *_: (g, 0, 0)
            if fast:
                try:
                    # Weight block index only changes with the tiny stream axis ->
                    # single-buffer to halve weight VMEM (v7x 64 MiB headroom).
                    return pl.BlockSpec((1, d0, d1), idx, pipeline_mode=pl.Buffered(1))
                except TypeError:
                    pass
            return pl.BlockSpec((1, d0, d1), idx)

        in_specs = [
            io_spec,                  # x
            wspec(1, D),              # ln1 gamma
            wspec(1, D),              # ln1 beta
            wspec(D, 3 * D),          # wqkv   (bf16, Q-scaled)
            wspec(1, 3 * D),          # bqkv   (Q-scaled)
            wspec(D, D),              # wproj  (bf16)
            wspec(1, D),              # bproj
            wspec(1, D),              # ln2 gamma
            wspec(1, D),              # ln2 beta
            wspec(D, Dm),             # wfc1   (bf16)
            wspec(1, Dm),             # bfc1
            wspec(Dm, D),             # wfc2   (bf16)
            wspec(1, D),              # bfc2
        ]

        kernel = functools.partial(
            _block_kernel, num_heads=H, gelu=gelu, causal=causal,
            has_len=has_len, eps=eps, batch_tile=Bt, kv_tile=kv_tile,
            dm_tile=dm_tile, use_einshape=use_einshape)

        return pl.pallas_call(
            kernel,
            out_shape=jax.ShapeDtypeStruct((G, B, S, D), x.dtype),
            grid_spec=pltpu.PrefetchScalarGridSpec(
                num_scalar_prefetch=num_scalar_prefetch,
                grid=(G, B // Bt),
                in_specs=in_specs,
                out_specs=io_spec,
            ),
            compiler_params=pltpu.CompilerParams(
                dimension_semantics=("parallel", "parallel"),
                vmem_limit_bytes=int(vmem_budget),
            ),
            cost_estimate=cost,
        )(*args)

    try:
        return run(fast=True)
    except Exception:
        # Portable fallback (per-head slice/stack, default double-buffered weights)
        # in case einshape / Buffered(1) are unsupported by this Pallas build.
        return run(fast=False)


def _stack_params(param_dicts, num_heads, weight_dtype=_MXU_DTYPE):
    """Stack per-stream param dicts along a leading stream axis, fold the 1/sqrt(Dh)
    attention scale into the Q projection, and store the big matmul weights in the
    MXU dtype (halves their HBM/VMEM footprint)."""
    weight_keys = {"wqkv", "wproj", "wfc1", "wfc2"}
    dim = param_dicts[0]["wproj"].shape[0]
    q_scale = float(dim // num_heads) ** -0.5
    out = {}
    for k in param_dicts[0]:
        v = jnp.stack([d[k] for d in param_dicts], axis=0).astype(jnp.float32)
        if k in ("wqkv", "bqkv"):
            v = v.at[..., :dim].multiply(q_scale)
        out[k] = v.astype(weight_dtype) if k in weight_keys else v
    return out


# ----------------------------------------------------------------------------
# FusionBlock wrapper (T_AVeL_loc = '' branch)
# ----------------------------------------------------------------------------
def fusion_block(x, y, z, params, *, num_heads=4, kv_tile=None, dm_tile=None):
    """x: audio (B,Sa,D); y: video (B,Sv,D);
       z = (hidden (B,Sz,D), attention_mask (B,1,Sz,Sz), causal_mask (1,1,Sz,Sz))."""
    z_hidden, z_attn_mask, z_causal = z

    # Audio + video share shapes and hyper-params -> one pallas_call, grid=(2, B/Bt).
    if x.shape == y.shape:
        av = transformer_block(
            jnp.stack([x, y], axis=0),
            _stack_params([params["audio"], params["video"]], num_heads),
            num_heads=num_heads, gelu="erf", kv_tile=kv_tile, dm_tile=dm_tile)
        x_out, y_out = av[0], av[1]
    else:
        x_out = transformer_block(x[None], _stack_params([params["audio"]], num_heads),
                                  num_heads=num_heads, gelu="erf",
                                  kv_tile=kv_tile, dm_tile=dm_tile)[0]
        y_out = transformer_block(y[None], _stack_params([params["video"]], num_heads),
                                  num_heads=num_heads, gelu="erf",
                                  kv_tile=kv_tile, dm_tile=dm_tile)[0]

    # Caption: rebuild key-padding + causal masking in-kernel from valid lengths.
    # TODO(synk): assumes CLIP-style masks (right-padded key mask + standard
    #             lower-triangular causal mask); arbitrary additive masks would
    #             need a dense-mask input path.
    key_len = jnp.sum((z_attn_mask[:, 0, 0, :] > -0.5).astype(jnp.int32), axis=-1)
    z_out = transformer_block(
        z_hidden[None], _stack_params([params["caption"]], num_heads),
        num_heads=num_heads, gelu="quick", causal=True,
        key_valid_len=key_len[None], kv_tile=kv_tile, dm_tile=dm_tile)[0]

    return x_out, y_out, (z_out, z_attn_mask, z_causal)


# ----------------------------------------------------------------------------
# Pure-JAX f32 reference (same math, dense masks) for the correctness check
# ----------------------------------------------------------------------------
def _block_ref(x, mask, p, *, num_heads, gelu, eps=1e-5):
    B, S, D = x.shape
    Dh = D // num_heads
    scale = float(Dh) ** -0.5

    def ln(h, g, b):
        mu = jnp.mean(h, -1, keepdims=True)
        var = jnp.mean((h - mu) ** 2, -1, keepdims=True)
        return (h - mu) / jnp.sqrt(var + eps) * g + b

    xn = ln(x, p["ln1_g"], p["ln1_b"])
    qkv = xn @ p["wqkv"] + p["bqkv"]
    q, k, v = jnp.split(qkv, 3, axis=-1)
    q = q.reshape(B, S, num_heads, Dh).transpose(0, 2, 1, 3) * scale
    k = k.reshape(B, S, num_heads, Dh).transpose(0, 2, 1, 3)
    v = v.reshape(B, S, num_heads, Dh).transpose(0, 2, 1, 3)
    s = jnp.einsum("bhqd,bhkd->bhqk", q, k) + mask[:, None]
    pattn = jax.nn.softmax(s, axis=-1)
    o = jnp.einsum("bhqk,bhkd->bhqd", pattn, v).transpose(0, 2, 1, 3).reshape(B, S, D)
    x1 = x + o @ p["wproj"] + p["bproj"]

    xn2 = ln(x1, p["ln2_g"], p["ln2_b"])
    h1 = xn2 @ p["wfc1"] + p["bfc1"]
    if gelu == "quick":
        h1 = h1 * jax.nn.sigmoid(1.702 * h1)
    else:
        h1 = jax.nn.gelu(h1, approximate=(gelu == "tanh"))
    return x1 + h1 @ p["wfc2"] + p["bfc2"]


def _make_block_params(key, dim, mlp_ratio=4):
    ks = jax.random.split(key, 4)
    dm = dim * mlp_ratio
    return {
        "ln1_g": jnp.ones((1, dim), jnp.float32),
        "ln1_b": jnp.zeros((1, dim), jnp.float32),
        "wqkv": 0.05 * jax.random.normal(ks[0], (dim, 3 * dim), jnp.float32),
        "bqkv": jnp.zeros((1, 3 * dim), jnp.float32),
        "wproj": 0.05 * jax.random.normal(ks[1], (dim, dim), jnp.float32),
        "bproj": jnp.zeros((1, dim), jnp.float32),
        "ln2_g": jnp.ones((1, dim), jnp.float32),
        "ln2_b": jnp.zeros((1, dim), jnp.float32),
        "wfc1": 0.05 * jax.random.normal(ks[2], (dim, dm), jnp.float32),
        "bfc1": jnp.zeros((1, dm), jnp.float32),
        "wfc2": 0.05 * jax.random.normal(ks[3], (dm, dim), jnp.float32),
        "bfc2": jnp.zeros((1, dim), jnp.float32),
    }


if __name__ == "__main__":
    key = jax.random.PRNGKey(0)
    B, Sa, Sv, Sz, D = 2, 16, 16, 8, 32

    k_x, k_y, k_z, k_pa, k_pv, k_pc = jax.random.split(key, 6)
    x = jax.random.normal(k_x, (B, Sa, D), jnp.float32)
    y = jax.random.normal(k_y, (B, Sv, D), jnp.float32)
    z_hidden = jax.random.normal(k_z, (B, Sz, D), jnp.float32)

    # Caption masks (additive, CLIP-style): right-padding mask + causal mask.
    NEG = -1e9
    valid = jnp.array([Sz, Sz - 2])                        # batch 1 has 2 padded tokens
    key_ok = jnp.arange(Sz)[None, :] < valid[:, None]      # (B, Sz)
    z_attn_mask = jnp.where(key_ok[:, None, None, :], 0.0, NEG).astype(jnp.float32)
    causal = jnp.where(jnp.arange(Sz)[:, None] >= jnp.arange(Sz)[None, :], 0.0, NEG)
    z_causal = causal[None, None].astype(jnp.float32)

    params = {
        "audio": _make_block_params(k_pa, D),
        "video": _make_block_params(k_pv, D),
        "caption": _make_block_params(k_pc, D),
    }

    # Pure-JAX f32 references (kernel uses bf16 MXU operands and an approx softmax
    # reciprocal, hence the looser tolerances).
    x_ref = _block_ref(x, jnp.zeros((B, Sa, Sa)), params["audio"], num_heads=4, gelu="erf")
    y_ref = _block_ref(y, jnp.zeros((B, Sv, Sv)), params["video"], num_heads=4, gelu="erf")
    z_ref = _block_ref(z_hidden, (z_attn_mask + z_causal)[:, 0], params["caption"],
                       num_heads=4, gelu="quick")

    # 1) Default tiles (single KV / Dm tile at these tiny shapes).
    x_out, y_out, (z_out, _, _) = fusion_block(x, y, (z_hidden, z_attn_mask, z_causal), params)
    jax.block_until_ready((x_out, y_out, z_out))
    assert jnp.allclose(x_out, x_ref, atol=2e-2, rtol=2e-2)
    assert jnp.allclose(y_out, y_ref, atol=2e-2, rtol=2e-2)
    assert jnp.allclose(z_out, z_ref, atol=2e-2, rtol=2e-2)

    # 2) Forced small tiles: exercises the flash-style online-softmax KV loop and
    #    the Dm-tiled MLP accumulation paths.
    x_out2, y_out2, (z_out2, _, _) = fusion_block(
        x, y, (z_hidden, z_attn_mask, z_causal), params, kv_tile=4, dm_tile=64)
    jax.block_until_ready((x_out2, y_out2, z_out2))
    assert jnp.allclose(x_out2, x_ref, atol=2e-2, rtol=2e-2)
    assert jnp.allclose(y_out2, y_ref, atol=2e-2, rtol=2e-2)
    assert jnp.allclose(z_out2, z_ref, atol=2e-2, rtol=2e-2)

    print("KERNEL_OK")
</pallas_src>

<mosaic_0001>
module attributes {stable_mosaic.version = 11 : i64} {
  func.func @_block_kernel(%arg0: i32, %arg1: i32, %arg2: memref<1x2x16x32xf32, #tpu.memory_space<vmem>>, %arg3: memref<1x1x32xf32, #tpu.memory_space<vmem>>, %arg4: memref<1x1x32xf32, #tpu.memory_space<vmem>>, %arg5: memref<1x32x96xbf16, #tpu.memory_space<vmem>>, %arg6: memref<1x1x96xf32, #tpu.memory_space<vmem>>, %arg7: memref<1x32x32xbf16, #tpu.memory_space<vmem>>, %arg8: memref<1x1x32xf32, #tpu.memory_space<vmem>>, %arg9: memref<1x1x32xf32, #tpu.memory_space<vmem>>, %arg10: memref<1x1x32xf32, #tpu.memory_space<vmem>>, %arg11: memref<1x32x128xbf16, #tpu.memory_space<vmem>>, %arg12: memref<1x1x128xf32, #tpu.memory_space<vmem>>, %arg13: memref<1x128x32xbf16, #tpu.memory_space<vmem>>, %arg14: memref<1x1x32xf32, #tpu.memory_space<vmem>>, %arg15: memref<1x2x16x32xf32, #tpu.memory_space<vmem>>) attributes {dimension_semantics = [#tpu.dimension_semantics<parallel>, #tpu.dimension_semantics<parallel>], iteration_bounds = array<i64: 2, 1>, scalar_prefetch = 0 : i64, scratch_operands = 0 : i64, tpu.core_type = #tpu.core_type<tc>, window_params = [{transform_indices = @transform_0, window_bounds = array<i64: 1, 2, 16, 32>}, {pipeline_mode = #tpu.pipeline_mode<synchronous>, transform_indices = @transform_1, window_bounds = array<i64: 1, 1, 32>}, {pipeline_mode = #tpu.pipeline_mode<synchronous>, transform_indices = @transform_2, window_bounds = array<i64: 1, 1, 32>}, {pipeline_mode = #tpu.pipeline_mode<synchronous>, transform_indices = @transform_3, window_bounds = array<i64: 1, 32, 96>}, {pipeline_mode = #tpu.pipeline_mode<synchronous>, transform_indices = @transform_4, window_bounds = array<i64: 1, 1, 96>}, {pipeline_mode = #tpu.pipeline_mode<synchronous>, transform_indices = @transform_5, window_bounds = array<i64: 1, 32, 32>}, {pipeline_mode = #tpu.pipeline_mode<synchronous>, transform_indices = @transform_6, window_bounds = array<i64: 1, 1, 32>}, {pipeline_mode = #tpu.pipeline_mode<synchronous>, transform_indices = @transform_7, window_bounds = array<i64: 1, 1, 32>}, {pipeline_mode = #tpu.pipeline_mode<synchronous>, transform_indices = @transform_8, window_bounds = array<i64: 1, 1, 32>}, {pipeline_mode = #tpu.pipeline_mode<synchronous>, transform_indices = @transform_9, window_bounds = array<i64: 1, 32, 128>}, {pipeline_mode = #tpu.pipeline_mode<synchronous>, transform_indices = @transform_10, window_bounds = array<i64: 1, 1, 128>}, {pipeline_mode = #tpu.pipeline_mode<synchronous>, transform_indices = @transform_11, window_bounds = array<i64: 1, 128, 32>}, {pipeline_mode = #tpu.pipeline_mode<synchronous>, transform_indices = @transform_12, window_bounds = array<i64: 1, 1, 32>}, {transform_indices = @transform_13, window_bounds = array<i64: 1, 2, 16, 32>}]} {
    %c0 = arith.constant 0 : index
    %c0_0 = arith.constant 0 : index
    %c0_1 = arith.constant 0 : index
    %c0_2 = arith.constant 0 : index
    %0 = vector.load %arg2[%c0, %c0_0, %c0_1, %c0_2] : memref<1x2x16x32xf32, #tpu.memory_space<vmem>>, vector<1x2x16x32xf32>
    %1 = vector.shape_cast %0 : vector<1x2x16x32xf32> to vector<2x16x32xf32>
    %2 = vector.shape_cast %1 : vector<2x16x32xf32> to vector<32x32xf32>
    %c0_3 = arith.constant 0 : index
    %c0_4 = arith.constant 0 : index
    %c0_5 = arith.constant 0 : index
    %3 = vector.load %arg3[%c0_3, %c0_4, %c0_5] : memref<1x1x32xf32, #tpu.memory_space<vmem>>, vector<1x1x32xf32>
    %4 = vector.shape_cast %3 : vector<1x1x32xf32> to vector<1x32xf32>
    %c0_6 = arith.constant 0 : index
    %c0_7 = arith.constant 0 : index
    %c0_8 = arith.constant 0 : index
    %5 = vector.load %arg4[%c0_6, %c0_7, %c0_8] : memref<1x1x32xf32, #tpu.memory_space<vmem>>, vector<1x1x32xf32>
    %6 = vector.shape_cast %5 : vector<1x1x32xf32> to vector<1x32xf32>
    %cst = arith.constant dense<0.000000e+00> : vector<32xf32>
    %7 = vector.multi_reduction <add>, %2, %cst [1] : vector<32x32xf32> to vector<32xf32>
    %8 = vector.shape_cast %7 : vector<32xf32> to vector<32x1xf32>
    %cst_9 = arith.constant 3.200000e+01 : f32
    %9 = vector.broadcast %cst_9 : f32 to vector<32x1xf32>
    %10 = arith.divf %8, %9 : vector<32x1xf32>
    %11 = vector.broadcast %10 : vector<32x1xf32> to vector<32x32xf32>
    %12 = arith.subf %2, %11 : vector<32x32xf32>
    %13 = arith.mulf %12, %12 : vector<32x32xf32>
    %cst_10 = arith.constant dense<0.000000e+00> : vector<32xf32>
    %14 = vector.multi_reduction <add>, %13, %cst_10 [1] : vector<32x32xf32> to vector<32xf32>
    %15 = vector.shape_cast %14 : vector<32xf32> to vector<32x1xf32>
    %cst_11 = arith.constant 3.200000e+01 : f32
    %16 = vector.broadcast %cst_11 : f32 to vector<32x1xf32>
    %17 = arith.divf %15, %16 : vector<32x1xf32>
    %18 = vector.broadcast %10 : vector<32x1xf32> to vector<32x32xf32>
    %19 = arith.subf %2, %18 : vector<32x32xf32>
    %cst_12 = arith.constant 9.99999974E-6 : f32
    %20 = vector.broadcast %cst_12 : f32 to vector<32x1xf32>
    %21 = arith.addf %17, %20 : vector<32x1xf32>
    %22 = math.rsqrt %21 : vector<32x1xf32>
    %23 = vector.broadcast %22 : vector<32x1xf32> to vector<32x32xf32>
    %24 = arith.mulf %19, %23 : vector<32x32xf32>
    %25 = vector.broadcast %4 : vector<1x32xf32> to vector<32x32xf32>
    %26 = arith.mulf %24, %25 : vector<32x32xf32>
    %27 = vector.broadcast %6 : vector<1x32xf32> to vector<32x32xf32>
    %28 = arith.addf %26, %27 : vector<32x32xf32>
    %29 = arith.truncf %28 : vector<32x32xf32> to vector<32x32xbf16>
    %c0_13 = arith.constant 0 : index
    %c0_14 = arith.constant 0 : index
    %c0_15 = arith.constant 0 : index
    %30 = vector.load %arg5[%c0_13, %c0_14, %c0_15] : memref<1x32x96xbf16, #tpu.memory_space<vmem>>, vector<1x32x96xbf16>
    %31 = vector.shape_cast %30 : vector<1x32x96xbf16> to vector<32x96xbf16>
    %cst_16 = arith.constant dense<0.000000e+00> : vector<32x96xf32>
    %32 = tpu.matmul %29, %31, %cst_16 {dimension_numbers = #tpu.dot_dimension_numbers<[1], [0], [0], [1], [0, 0, 1, 1], [], []>} : vector<32x32xbf16>, vector<32x96xbf16>, vector<32x96xf32> -> vector<32x96xf32>
    %c0_17 = arith.constant 0 : index
    %c0_18 = arith.constant 0 : index
    %c0_19 = arith.constant 0 : index
    %33 = vector.load %arg6[%c0_17, %c0_18, %c0_19] : memref<1x1x96xf32, #tpu.memory_space<vmem>>, vector<1x1x96xf32>
    %34 = vector.shape_cast %33 : vector<1x1x96xf32> to vector<1x96xf32>
    %35 = vector.broadcast %34 : vector<1x96xf32> to vector<32x96xf32>
    %36 = arith.addf %32, %35 : vector<32x96xf32>
    %37 = vector.shape_cast %36 : vector<32x96xf32> to vector<2x16x96xf32>
    %38 = vector.extract_strided_slice %37 {offsets = [0, 0, 0], sizes = [1, 16, 32], strides = [1, 1, 1]} : vector<2x16x96xf32> to vector<1x16x32xf32>
    %39 = vector.shape_cast %38 : vector<1x16x32xf32> to vector<16x32xf32>
    %40 = vector.shape_cast %39 : vector<16x32xf32> to vector<16x4x8xf32>
    %41 = tpu.transpose %40, [1, 0, 2] : vector<16x4x8xf32> -> vector<4x16x8xf32>
    %42 = arith.truncf %41 : vector<4x16x8xf32> to vector<4x16x8xbf16>
    %43 = vector.extract_strided_slice %37 {offsets = [0, 0, 32], sizes = [1, 16, 32], strides = [1, 1, 1]} : vector<2x16x96xf32> to vector<1x16x32xf32>
    %44 = vector.shape_cast %43 : vector<1x16x32xf32> to vector<16x32xf32>
    %45 = vector.shape_cast %44 : vector<16x32xf32> to vector<16x4x8xf32>
    %46 = tpu.transpose %45, [1, 0, 2] : vector<16x4x8xf32> -> vector<4x16x8xf32>
    %47 = arith.truncf %46 : vector<4x16x8xf32> to vector<4x16x8xbf16>
    %48 = vector.extract_strided_slice %37 {offsets = [0, 0, 64], sizes = [1, 16, 32], strides = [1, 1, 1]} : vector<2x16x96xf32> to vector<1x16x32xf32>
    %49 = vector.shape_cast %48 : vector<1x16x32xf32> to vector<16x32xf32>
    %50 = vector.shape_cast %49 : vector<16x32xf32> to vector<16x4x8xf32>
    %51 = tpu.transpose %50, [1, 0, 2] : vector<16x4x8xf32> -> vector<4x16x8xf32>
    %52 = arith.truncf %51 : vector<4x16x8xf32> to vector<4x16x8xbf16>
    "tpu.trace_start"() <{level = 10 : i32, message = "hqd,hkd->hqk"}> : () -> ()
    %cst_20 = arith.constant dense<0.000000e+00> : vector<4x16x16xf32>
    %53 = tpu.matmul %42, %47, %cst_20 {dimension_numbers = #tpu.dot_dimension_numbers<[2], [2], [1], [1], [0, 0, 0, 1, 1, 1], [0], [0]>} : vector<4x16x8xbf16>, vector<4x16x8xbf16>, vector<4x16x16xf32> -> vector<4x16x16xf32>
    "tpu.trace_stop"() : () -> ()
    %cst_21 = arith.constant dense<0xFF800000> : vector<4x16xf32>
    %54 = vector.multi_reduction <maximumf>, %53, %cst_21 [2] : vector<4x16x16xf32> to vector<4x16xf32>
    %55 = vector.shape_cast %54 : vector<4x16xf32> to vector<4x16x1xf32>
    %56 = vector.broadcast %55 : vector<4x16x1xf32> to vector<4x16x16xf32>
    %57 = arith.subf %53, %56 : vector<4x16x16xf32>
    %58 = math.exp %57 : vector<4x16x16xf32>
    %59 = arith.truncf %58 : vector<4x16x16xf32> to vector<4x16x16xbf16>
    "tpu.trace_start"() <{level = 10 : i32, message = "hqk,hkd->hqd"}> : () -> ()
    %cst_22 = arith.constant dense<0.000000e+00> : vector<4x16x8xf32>
    %60 = tpu.matmul %59, %52, %cst_22 {dimension_numbers = #tpu.dot_dimension_numbers<[2], [1], [1], [2], [0, 0, 0, 1, 1, 2], [0], [0]>} : vector<4x16x16xbf16>, vector<4x16x8xbf16>, vector<4x16x8xf32> -> vector<4x16x8xf32>
    "tpu.trace_stop"() : () -> ()
    %cst_23 = arith.constant dense<0.000000e+00> : vector<4x16xf32>
    %61 = vector.multi_reduction <add>, %58, %cst_23 [2] : vector<4x16x16xf32> to vector<4x16xf32>
    %62 = vector.shape_cast %61 : vector<4x16xf32> to vector<4x16x1xf32>
    %63 = tpu.reciprocal %62 {approx = true} : vector<4x16x1xf32> -> vector<4x16x1xf32>
    %64 = vector.broadcast %63 : vector<4x16x1xf32> to vector<4x16x8xf32>
    %65 = arith.mulf %60, %64 : vector<4x16x8xf32>
    %66 = tpu.transpose %65, [1, 0, 2] : vector<4x16x8xf32> -> vector<16x4x8xf32>
    %67 = vector.shape_cast %66 : vector<16x4x8xf32> to vector<16x32xf32>
    %68 = vector.extract_strided_slice %37 {offsets = [1, 0, 0], sizes = [1, 16, 32], strides = [1, 1, 1]} : vector<2x16x96xf32> to vector<1x16x32xf32>
    %69 = vector.shape_cast %68 : vector<1x16x32xf32> to vector<16x32xf32>
    %70 = vector.shape_cast %69 : vector<16x32xf32> to vector<16x4x8xf32>
    %71 = tpu.transpose %70, [1, 0, 2] : vector<16x4x8xf32> -> vector<4x16x8xf32>
    %72 = arith.truncf %71 : vector<4x16x8xf32> to vector<4x16x8xbf16>
    %73 = vector.extract_strided_slice %37 {offsets = [1, 0, 32], sizes = [1, 16, 32], strides = [1, 1, 1]} : vector<2x16x96xf32> to vector<1x16x32xf32>
    %74 = vector.shape_cast %73 : vector<1x16x32xf32> to vector<16x32xf32>
    %75 = vector.shape_cast %74 : vector<16x32xf32> to vector<16x4x8xf32>
    %76 = tpu.transpose %75, [1, 0, 2] : vector<16x4x8xf32> -> vector<4x16x8xf32>
    %77 = arith.truncf %76 : vector<4x16x8xf32> to vector<4x16x8xbf16>
    %78 = vector.extract_strided_slice %37 {offsets = [1, 0, 64], sizes = [1, 16, 32], strides = [1, 1, 1]} : vector<2x16x96xf32> to vector<1x16x32xf32>
    %79 = vector.shape_cast %78 : vector<1x16x32xf32> to vector<16x32xf32>
    %80 = vector.shape_cast %79 : vector<16x32xf32> to vector<16x4x8xf32>
    %81 = tpu.transpose %80, [1, 0, 2] : vector<16x4x8xf32> -> vector<4x16x8xf32>
    %82 = arith.truncf %81 : vector<4x16x8xf32> to vector<4x16x8xbf16>
    "tpu.trace_start"() <{level = 10 : i32, message = "hqd,hkd->hqk"}> : () -> ()
    %cst_24 = arith.constant dense<0.000000e+00> : vector<4x16x16xf32>
    %83 = tpu.matmul %72, %77, %cst_24 {dimension_numbers = #tpu.dot_dimension_numbers<[2], [2], [1], [1], [0, 0, 0, 1, 1, 1], [0], [0]>} : vector<4x16x8xbf16>, vector<4x16x8xbf16>, vector<4x16x16xf32> -> vector<4x16x16xf32>
    "tpu.trace_stop"() : () -> ()
    %cst_25 = arith.constant dense<0xFF800000> : vector<4x16xf32>
    %84 = vector.multi_reduction <maximumf>, %83, %cst_25 [2] : vector<4x16x16xf32> to vector<4x16xf32>
    %85 = vector.shape_cast %84 : vector<4x16xf32> to vector<4x16x1xf32>
    %86 = vector.broadcast %85 : vector<4x16x1xf32> to vector<4x16x16xf32>
    %87 = arith.subf %83, %86 : vector<4x16x16xf32>
    %88 = math.exp %87 : vector<4x16x16xf32>
    %89 = arith.truncf %88 : vector<4x16x16xf32> to vector<4x16x16xbf16>
    "tpu.trace_start"() <{level = 10 : i32, message = "hqk,hkd->hqd"}> : () -> ()
    %cst_26 = arith.constant dense<0.000000e+00> : vector<4x16x8xf32>
    %90 = tpu.matmul %89, %82, %cst_26 {dimension_numbers = #tpu.dot_dimension_numbers<[2], [1], [1], [2], [0, 0, 0, 1, 1, 2], [0], [0]>} : vector<4x16x16xbf16>, vector<4x16x8xbf16>, vector<4x16x8xf32> -> vector<4x16x8xf32>
    "tpu.trace_stop"() : () -> ()
    %cst_27 = arith.constant dense<0.000000e+00> : vector<4x16xf32>
    %91 = vector.multi_reduction <add>, %88, %cst_27 [2] : vector<4x16x16xf32> to vector<4x16xf32>
    %92 = vector.shape_cast %91 : vector<4x16xf32> to vector<4x16x1xf32>
    %93 = tpu.reciprocal %92 {approx = true} : vector<4x16x1xf32> -> vector<4x16x1xf32>
    %94 = vector.broadcast %93 : vector<4x16x1xf32> to vector<4x16x8xf32>
    %95 = arith.mulf %90, %94 : vector<4x16x8xf32>
    %96 = tpu.transpose %95, [1, 0, 2] : vector<4x16x8xf32> -> vector<16x4x8xf32>
    %97 = vector.shape_cast %96 : vector<16x4x8xf32> to vector<16x32xf32>
    %98 = tpu.concatenate %67, %97 in 0 : vector<16x32xf32>, vector<16x32xf32> -> vector<32x32xf32>
    %99 = arith.truncf %98 : vector<32x32xf32> to vector<32x32xbf16>
    %c0_28 = arith.constant 0 : index
    %c0_29 = arith.constant 0 : index
    %c0_30 = arith.constant 0 : index
    %100 = vector.load %arg7[%c0_28, %c0_29, %c0_30] : memref<1x32x32xbf16, #tpu.memory_space<vmem>>, vector<1x32x32xbf16>
    %101 = vector.shape_cast %100 : vector<1x32x32xbf16> to vector<32x32xbf16>
    %cst_31 = arith.constant dense<0.000000e+00> : vector<32x32xf32>
    %102 = tpu.matmul %99, %101, %cst_31 {dimension_numbers = #tpu.dot_dimension_numbers<[1], [0], [0], [1], [0, 0, 1, 1], [], []>} : vector<32x32xbf16>, vector<32x32xbf16>, vector<32x32xf32> -> vector<32x32xf32>
    %c0_32 = arith.constant 0 : index
    %c0_33 = arith.constant 0 : index
    %c0_34 = arith.constant 0 : index
    %103 = vector.load %arg8[%c0_32, %c0_33, %c0_34] : memref<1x1x32xf32, #tpu.memory_space<vmem>>, vector<1x1x32xf32>
    %104 = vector.shape_cast %103 : vector<1x1x32xf32> to vector<1x32xf32>
    %105 = vector.broadcast %104 : vector<1x32xf32> to vector<32x32xf32>
    %106 = arith.addf %102, %105 : vector<32x32xf32>
    %107 = arith.addf %2, %106 : vector<32x32xf32>
    %c0_35 = arith.constant 0 : index
    %c0_36 = arith.constant 0 : index
    %c0_37 = arith.constant 0 : index
    %108 = vector.load %arg9[%c0_35, %c0_36, %c0_37] : memref<1x1x32xf32, #tpu.memory_space<vmem>>, vector<1x1x32xf32>
    %109 = vector.shape_cast %108 : vector<1x1x32xf32> to vector<1x32xf32>
    %c0_38 = arith.constant 0 : index
    %c0_39 = arith.constant 0 : index
    %c0_40 = arith.constant 0 : index
    %110 = vector.load %arg10[%c0_38, %c0_39, %c0_40] : memref<1x1x32xf32, #tpu.memory_space<vmem>>, vector<1x1x32xf32>
    %111 = vector.shape_cast %110 : vector<1x1x32xf32> to vector<1x32xf32>
    %cst_41 = arith.constant dense<0.000000e+00> : vector<32xf32>
    %112 = vector.multi_reduction <add>, %107, %cst_41 [1] : vector<32x32xf32> to vector<32xf32>
    %113 = vector.shape_cast %112 : vector<32xf32> to vector<32x1xf32>
    %cst_42 = arith.constant 3.200000e+01 : f32
    %114 = vector.broadcast %cst_42 : f32 to vector<32x1xf32>
    %115 = arith.divf %113, %114 : vector<32x1xf32>
    %116 = vector.broadcast %115 : vector<32x1xf32> to vector<32x32xf32>
    %117 = arith.subf %107, %116 : vector<32x32xf32>
    %118 = arith.mulf %117, %117 : vector<32x32xf32>
    %cst_43 = arith.constant dense<0.000000e+00> : vector<32xf32>
    %119 = vector.multi_reduction <add>, %118, %cst_43 [1] : vector<32x32xf32> to vector<32xf32>
    %120 = vector.shape_cast %119 : vector<32xf32> to vector<32x1xf32>
    %cst_44 = arith.constant 3.200000e+01 : f32
    %121 = vector.broadcast %cst_44 : f32 to vector<32x1xf32>
    %122 = arith.divf %120, %121 : vector<32x1xf32>
    %123 = vector.broadcast %115 : vector<32x1xf32> to vector<32x32xf32>
    %124 = arith.subf %107, %123 : vector<32x32xf32>
    %cst_45 = arith.constant 9.99999974E-6 : f32
    %125 = vector.broadcast %cst_45 : f32 to vector<32x1xf32>
    %126 = arith.addf %122, %125 : vector<32x1xf32>
    %127 = math.rsqrt %126 : vector<32x1xf32>
    %128 = vector.broadcast %127 : vector<32x1xf32> to vector<32x32xf32>
    %129 = arith.mulf %124, %128 : vector<32x32xf32>
    %130 = vector.broadcast %109 : vector<1x32xf32> to vector<32x32xf32>
    %131 = arith.mulf %129, %130 : vector<32x32xf32>
    %132 = vector.broadcast %111 : vector<1x32xf32> to vector<32x32xf32>
    %133 = arith.addf %131, %132 : vector<32x32xf32>
    %134 = arith.truncf %133 : vector<32x32xf32> to vector<32x32xbf16>
    %c0_46 = arith.constant 0 : index
    %c0_47 = arith.constant 0 : index
    %c0_48 = arith.constant 0 : index
    %135 = vector.load %arg11[%c0_46, %c0_47, %c0_48] : memref<1x32x128xbf16, #tpu.memory_space<vmem>>, vector<1x32x128xbf16>
    %136 = vector.shape_cast %135 : vector<1x32x128xbf16> to vector<32x128xbf16>
    %cst_49 = arith.constant dense<0.000000e+00> : vector<32x128xf32>
    %137 = tpu.matmul %134, %136, %cst_49 {dimension_numbers = #tpu.dot_dimension_numbers<[1], [0], [0], [1], [0, 0, 1, 1], [], []>} : vector<32x32xbf16>, vector<32x128xbf16>, vector<32x128xf32> -> vector<32x128xf32>
    %c0_50 = arith.constant 0 : index
    %c0_51 = arith.constant 0 : index
    %c0_52 = arith.constant 0 : index
    %138 = vector.load %arg12[%c0_50, %c0_51, %c0_52] : memref<1x1x128xf32, #tpu.memory_space<vmem>>, vector<1x1x128xf32>
    %139 = vector.shape_cast %138 : vector<1x1x128xf32> to vector<1x128xf32>
    %140 = vector.broadcast %139 : vector<1x128xf32> to vector<32x128xf32>
    %141 = arith.addf %137, %140 : vector<32x128xf32>
    %cst_53 = arith.constant 5.000000e-01 : f32
    %142 = vector.broadcast %cst_53 : f32 to vector<32x128xf32>
    %143 = arith.mulf %142, %141 : vector<32x128xf32>
    %cst_54 = arith.constant 0.707106769 : f32
    %144 = vector.broadcast %cst_54 : f32 to vector<32x128xf32>
    %145 = arith.mulf %141, %144 : vector<32x128xf32>
    %146 = math.erf %145 : vector<32x128xf32>
    %cst_55 = arith.constant 1.000000e+00 : f32
    %147 = vector.broadcast %cst_55 : f32 to vector<32x128xf32>
    %148 = arith.addf %147, %146 : vector<32x128xf32>
    %149 = arith.mulf %143, %148 : vector<32x128xf32>
    %150 = arith.truncf %149 : vector<32x128xf32> to vector<32x128xbf16>
    %c0_56 = arith.constant 0 : index
    %c0_57 = arith.constant 0 : index
    %c0_58 = arith.constant 0 : index
    %151 = vector.load %arg13[%c0_56, %c0_57, %c0_58] : memref<1x128x32xbf16, #tpu.memory_space<vmem>>, vector<1x128x32xbf16>
    %152 = vector.shape_cast %151 : vector<1x128x32xbf16> to vector<128x32xbf16>
    %cst_59 = arith.constant dense<0.000000e+00> : vector<32x32xf32>
    %153 = tpu.matmul %150, %152, %cst_59 {dimension_numbers = #tpu.dot_dimension_numbers<[1], [0], [0], [1], [0, 0, 1, 1], [], []>} : vector<32x128xbf16>, vector<128x32xbf16>, vector<32x32xf32> -> vector<32x32xf32>
    %c0_60 = arith.constant 0 : index
    %c0_61 = arith.constant 0 : index
    %c0_62 = arith.constant 0 : index
    %154 = vector.load %arg14[%c0_60, %c0_61, %c0_62] : memref<1x1x32xf32, #tpu.memory_space<vmem>>, vector<1x1x32xf32>
    %155 = vector.shape_cast %154 : vector<1x1x32xf32> to vector<1x32xf32>
    %156 = vector.broadcast %155 : vector<1x32xf32> to vector<32x32xf32>
    %157 = arith.addf %153, %156 : vector<32x32xf32>
    %158 = arith.addf %107, %157 : vector<32x32xf32>
    %159 = vector.shape_cast %158 : vector<32x32xf32> to vector<2x16x32xf32>
    %c0_63 = arith.constant 0 : index
    %c0_64 = arith.constant 0 : index
    %c0_65 = arith.constant 0 : index
    %c0_66 = arith.constant 0 : index
    %160 = vector.load %arg15[%c0_63, %c0_64, %c0_65, %c0_66] : memref<1x2x16x32xf32, #tpu.memory_space<vmem>>, vector<1x2x16x32xf32>
    %161 = vector.shape_cast %160 : vector<1x2x16x32xf32> to vector<2x16x32xf32>
    %162 = vector.shape_cast %159 : vector<2x16x32xf32> to vector<1x2x16x32xf32>
    tpu.vector_store %arg15[%c0_63, %c0_64, %c0_65, %c0_66], %162 {strides = array<i32>} : memref<1x2x16x32xf32, #tpu.memory_space<vmem>>, vector<1x2x16x32xf32>,
    return
  }
  func.func @transform_0(%arg0: i32, %arg1: i32) -> (i32, i32, i32, i32) {
    %c0_i32 = arith.constant 0 : i32
    %c0_i32_0 = arith.constant 0 : i32
    %c0_i32_1 = arith.constant 0 : i32
    return %arg0, %arg1, %c0_i32, %c0_i32_0 : i32, i32, i32, i32
  }
  func.func @transform_1(%arg0: i32, %arg1: i32) -> (i32, i32, i32) {
    %c0_i32 = arith.constant 0 : i32
    %c0_i32_0 = arith.constant 0 : i32
    %c0_i32_1 = arith.constant 0 : i32
    return %arg0, %c0_i32, %c0_i32_0 : i32, i32, i32
  }
  func.func @transform_2(%arg0: i32, %arg1: i32) -> (i32, i32, i32) {
    %c0_i32 = arith.constant 0 : i32
    %c0_i32_0 = arith.constant 0 : i32
    %c0_i32_1 = arith.constant 0 : i32
    return %arg0, %c0_i32, %c0_i32_0 : i32, i32, i32
  }
  func.func @transform_3(%arg0: i32, %arg1: i32) -> (i32, i32, i32) {
    %c0_i32 = arith.constant 0 : i32
    %c0_i32_0 = arith.constant 0 : i32
    %c0_i32_1 = arith.constant 0 : i32
    return %arg0, %c0_i32, %c0_i32_0 : i32, i32, i32
  }
  func.func @transform_4(%arg0: i32, %arg1: i32) -> (i32, i32, i32) {
    %c0_i32 = arith.constant 0 : i32
    %c0_i32_0 = arith.constant 0 : i32
    %c0_i32_1 = arith.constant 0 : i32
    return %arg0, %c0_i32, %c0_i32_0 : i32, i32, i32
  }
  func.func @transform_5(%arg0: i32, %arg1: i32) -> (i32, i32, i32) {
    %c0_i32 = arith.constant 0 : i32
    %c0_i32_0 = arith.constant 0 : i32
    %c0_i32_1 = arith.constant 0 : i32
    return %arg0, %c0_i32, %c0_i32_0 : i32, i32, i32
  }
  func.func @transform_6(%arg0: i32, %arg1: i32) -> (i32, i32, i32) {
    %c0_i32 = arith.constant 0 : i32
    %c0_i32_0 = arith.constant 0 : i32
    %c0_i32_1 = arith.constant 0 : i32
    return %arg0, %c0_i32, %c0_i32_0 : i32, i32, i32
  }
  func.func @transform_7(%arg0: i32, %arg1: i32) -> (i32, i32, i32) {
    %c0_i32 = arith.constant 0 : i32
    %c0_i32_0 = arith.constant 0 : i32
    %c0_i32_1 = arith.constant 0 : i32
    return %arg0, %c0_i32, %c0_i32_0 : i32, i32, i32
  }
  func.func @transform_8(%arg0: i32, %arg1: i32) -> (i32, i32, i32) {
    %c0_i32 = arith.constant 0 : i32
    %c0_i32_0 = arith.constant 0 : i32
    %c0_i32_1 = arith.constant 0 : i32
    return %arg0, %c0_i32, %c0_i32_0 : i32, i32, i32
  }
  func.func @transform_9(%arg0: i32, %arg1: i32) -> (i32, i32, i32) {
    %c0_i32 = arith.constant 0 : i32
    %c0_i32_0 = arith.constant 0 : i32
    %c0_i32_1 = arith.constant 0 : i32
    return %arg0, %c0_i32, %c0_i32_0 : i32, i32, i32
  }
  func.func @transform_10(%arg0: i32, %arg1: i32) -> (i32, i32, i32) {
    %c0_i32 = arith.constant 0 : i32
    %c0_i32_0 = arith.constant 0 : i32
    %c0_i32_1 = arith.constant 0 : i32
    return %arg0, %c0_i32, %c0_i32_0 : i32, i32, i32
  }
  func.func @transform_11(%arg0: i32, %arg1: i32) -> (i32, i32, i32) {
    %c0_i32 = arith.constant 0 : i32
    %c0_i32_0 = arith.constant 0 : i32
    %c0_i32_1 = arith.constant 0 : i32
    return %arg0, %c0_i32, %c0_i32_0 : i32, i32, i32
  }
  func.func @transform_12(%arg0: i32, %arg1: i32) -> (i32, i32, i32) {
    %c0_i32 = arith.constant 0 : i32
    %c0_i32_0 = arith.constant 0 : i32
    %c0_i32_1 = arith.constant 0 : i32
    return %arg0, %c0_i32, %c0_i32_0 : i32, i32, i32
  }
  func.func @transform_13(%arg0: i32, %arg1: i32) -> (i32, i32, i32, i32) {
    %c0_i32 = arith.constant 0 : i32
    %c0_i32_0 = arith.constant 0 : i32
    %c0_i32_1 = arith.constant 0 : i32
    return %arg0, %arg1, %c0_i32, %c0_i32_0 : i32, i32, i32, i32
  }
}

module attributes {stable_mosaic.version = 11 : i64} {
  func.func @_block_kernel(%arg0: i32, %arg1: i32, %arg2: memref<1x2x16x32xf32, #tpu.memory_space<vmem>>, %arg3: memref<1x1x32xf32, #tpu.memory_space<vmem>>, %arg4: memref<1x1x32xf32, #tpu.memory_space<vmem>>, %arg5: memref<1x32x96xbf16, #tpu.memory_space<vmem>>, %arg6: memref<1x1x96xf32, #tpu.memory_space<vmem>>, %arg7: memref<1x32x32xbf16, #tpu.memory_space<vmem>>, %arg8: memref<1x1x32xf32, #tpu.memory_space<vmem>>, %arg9: memref<1x1x32xf32, #tpu.memory_space<vmem>>, %arg10: memref<1x1x32xf32, #tpu.memory_space<vmem>>, %arg11: memref<1x32x128xbf16, #tpu.memory_space<vmem>>, %arg12: memref<1x1x128xf32, #tpu.memory_space<vmem>>, %arg13: memref<1x128x32xbf16, #tpu.memory_space<vmem>>, %arg14: memref<1x1x32xf32, #tpu.memory_space<vmem>>, %arg15: memref<1x2x16x32xf32, #tpu.memory_space<vmem>>) attributes {dimension_semantics = [#tpu.dimension_semantics<parallel>, #tpu.dimension_semantics<parallel>], iteration_bounds = array<i64: 2, 1>, scalar_prefetch = 0 : i64, scratch_operands = 0 : i64, tpu.core_type = #tpu.core_type<tc>, window_params = [{transform_indices = @transform_0, window_bounds = array<i64: 1, 2, 16, 32>}, {transform_indices = @transform_1, window_bounds = array<i64: 1, 1, 32>}, {transform_indices = @transform_2, window_bounds = array<i64: 1, 1, 32>}, {transform_indices = @transform_3, window_bounds = array<i64: 1, 32, 96>}, {transform_indices = @transform_4, window_bounds = array<i64: 1, 1, 96>}, {transform_indices = @transform_5, window_bounds = array<i64: 1, 32, 32>}, {transform_indices = @transform_6, window_bounds = array<i64: 1, 1, 32>}, {transform_indices = @transform_7, window_bounds = array<i64: 1, 1, 32>}, {transform_indices = @transform_8, window_bounds = array<i64: 1, 1, 32>}, {transform_indices = @transform_9, window_bounds = array<i64: 1, 32, 128>}, {transform_indices = @transform_10, window_bounds = array<i64: 1, 1, 128>}, {transform_indices = @transform_11, window_bounds = array<i64: 1, 128, 32>}, {transform_indices = @transform_12, window_bounds = array<i64: 1, 1, 32>}, {transform_indices = @transform_13, window_bounds = array<i64: 1, 2, 16, 32>}]} {
    %c0 = arith.constant 0 : index
    %c0_0 = arith.constant 0 : index
    %c0_1 = arith.constant 0 : index
    %c0_2 = arith.constant 0 : index
    %0 = vector.load %arg2[%c0, %c0_0, %c0_1, %c0_2] : memref<1x2x16x32xf32, #tpu.memory_space<vmem>>, vector<1x2x16x32xf32>
    %1 = vector.shape_cast %0 : vector<1x2x16x32xf32> to vector<2x16x32xf32>
    %2 = vector.shape_cast %1 : vector<2x16x32xf32> to vector<32x32xf32>
    %c0_3 = arith.constant 0 : index
    %c0_4 = arith.constant 0 : index
    %c0_5 = arith.constant 0 : index
    %3 = vector.load %arg3[%c0_3, %c0_4, %c0_5] : memref<1x1x32xf32, #tpu.memory_space<vmem>>, vector<1x1x32xf32>
    %4 = vector.shape_cast %3 : vector<1x1x32xf32> to vector<1x32xf32>
    %c0_6 = arith.constant 0 : index
    %c0_7 = arith.constant 0 : index
    %c0_8 = arith.constant 0 : index
    %5 = vector.load %arg4[%c0_6, %c0_7, %c0_8] : memref<1x1x32xf32, #tpu.memory_space<vmem>>, vector<1x1x32xf32>
    %6 = vector.shape_cast %5 : vector<1x1x32xf32> to vector<1x32xf32>
    %cst = arith.constant dense<0.000000e+00> : vector<32xf32>
    %7 = vector.multi_reduction <add>, %2, %cst [1] : vector<32x32xf32> to vector<32xf32>
    %8 = vector.shape_cast %7 : vector<32xf32> to vector<32x1xf32>
    %cst_9 = arith.constant 3.200000e+01 : f32
    %9 = vector.broadcast %cst_9 : f32 to vector<32x1xf32>
    %10 = arith.divf %8, %9 : vector<32x1xf32>
    %11 = vector.broadcast %10 : vector<32x1xf32> to vector<32x32xf32>
    %12 = arith.subf %2, %11 : vector<32x32xf32>
    %13 = arith.mulf %12, %12 : vector<32x32xf32>
    %cst_10 = arith.constant dense<0.000000e+00> : vector<32xf32>
    %14 = vector.multi_reduction <add>, %13, %cst_10 [1] : vector<32x32xf32> to vector<32xf32>
    %15 = vector.shape_cast %14 : vector<32xf32> to vector<32x1xf32>
    %cst_11 = arith.constant 3.200000e+01 : f32
    %16 = vector.broadcast %cst_11 : f32 to vector<32x1xf32>
    %17 = arith.divf %15, %16 : vector<32x1xf32>
    %18 = vector.broadcast %10 : vector<32x1xf32> to vector<32x32xf32>
    %19 = arith.subf %2, %18 : vector<32x32xf32>
    %cst_12 = arith.constant 9.99999974E-6 : f32
    %20 = vector.broadcast %cst_12 : f32 to vector<32x1xf32>
    %21 = arith.addf %17, %20 : vector<32x1xf32>
    %22 = math.rsqrt %21 : vector<32x1xf32>
    %23 = vector.broadcast %22 : vector<32x1xf32> to vector<32x32xf32>
    %24 = arith.mulf %19, %23 : vector<32x32xf32>
    %25 = vector.broadcast %4 : vector<1x32xf32> to vector<32x32xf32>
    %26 = arith.mulf %24, %25 : vector<32x32xf32>
    %27 = vector.broadcast %6 : vector<1x32xf32> to vector<32x32xf32>
    %28 = arith.addf %26, %27 : vector<32x32xf32>
    %29 = arith.truncf %28 : vector<32x32xf32> to vector<32x32xbf16>
    %c0_13 = arith.constant 0 : index
    %c0_14 = arith.constant 0 : index
    %c0_15 = arith.constant 0 : index
    %30 = vector.load %arg5[%c0_13, %c0_14, %c0_15] : memref<1x32x96xbf16, #tpu.memory_space<vmem>>, vector<1x32x96xbf16>
    %31 = vector.shape_cast %30 : vector<1x32x96xbf16> to vector<32x96xbf16>
    %cst_16 = arith.constant dense<0.000000e+00> : vector<32x96xf32>
    %32 = tpu.matmul %29, %31, %cst_16 {dimension_numbers = #tpu.dot_dimension_numbers<[1], [0], [0], [1], [0, 0, 1, 1], [], []>} : vector<32x32xbf16>, vector<32x96xbf16>, vector<32x96xf32> -> vector<32x96xf32>
    %c0_17 = arith.constant 0 : index
    %c0_18 = arith.constant 0 : index
    %c0_19 = arith.constant 0 : index
    %33 = vector.load %arg6[%c0_17, %c0_18, %c0_19] : memref<1x1x96xf32, #tpu.memory_space<vmem>>, vector<1x1x96xf32>
    %34 = vector.shape_cast %33 : vector<1x1x96xf32> to vector<1x96xf32>
    %35 = vector.broadcast %34 : vector<1x96xf32> to vector<32x96xf32>
    %36 = arith.addf %32, %35 : vector<32x96xf32>
    %37 = vector.shape_cast %36 : vector<32x96xf32> to vector<2x16x96xf32>
    %38 = vector.extract_strided_slice %37 {offsets = [0, 0, 0], sizes = [1, 16, 32], strides = [1, 1, 1]} : vector<2x16x96xf32> to vector<1x16x32xf32>
    %39 = vector.shape_cast %38 : vector<1x16x32xf32> to vector<16x32xf32>
    %40 = vector.extract_strided_slice %39 {offsets = [0, 0], sizes = [16, 8], strides = [1, 1]} : vector<16x32xf32> to vector<16x8xf32>
    %41 = vector.extract_strided_slice %39 {offsets = [0, 8], sizes = [16, 8], strides = [1, 1]} : vector<16x32xf32> to vector<16x8xf32>
    %42 = vector.extract_strided_slice %39 {offsets = [0, 16], sizes = [16, 8], strides = [1, 1]} : vector<16x32xf32> to vector<16x8xf32>
    %43 = vector.extract_strided_slice %39 {offsets = [0, 24], sizes = [16, 8], strides = [1, 1]} : vector<16x32xf32> to vector<16x8xf32>
    %44 = vector.shape_cast %40 : vector<16x8xf32> to vector<1x16x8xf32>
    %45 = vector.shape_cast %41 : vector<16x8xf32> to vector<1x16x8xf32>
    %46 = vector.shape_cast %42 : vector<16x8xf32> to vector<1x16x8xf32>
    %47 = vector.shape_cast %43 : vector<16x8xf32> to vector<1x16x8xf32>
    %48 = tpu.concatenate %44, %45, %46, %47 in 0 : vector<1x16x8xf32>, vector<1x16x8xf32>, vector<1x16x8xf32>, vector<1x16x8xf32> -> vector<4x16x8xf32>
    %49 = arith.truncf %48 : vector<4x16x8xf32> to vector<4x16x8xbf16>
    %50 = vector.extract_strided_slice %37 {offsets = [0, 0, 32], sizes = [1, 16, 32], strides = [1, 1, 1]} : vector<2x16x96xf32> to vector<1x16x32xf32>
    %51 = vector.shape_cast %50 : vector<1x16x32xf32> to vector<16x32xf32>
    %52 = vector.extract_strided_slice %51 {offsets = [0, 0], sizes = [16, 8], strides = [1, 1]} : vector<16x32xf32> to vector<16x8xf32>
    %53 = vector.extract_strided_slice %51 {offsets = [0, 8], sizes = [16, 8], strides = [1, 1]} : vector<16x32xf32> to vector<16x8xf32>
    %54 = vector.extract_strided_slice %51 {offsets = [0, 16], sizes = [16, 8], strides = [1, 1]} : vector<16x32xf32> to vector<16x8xf32>
    %55 = vector.extract_strided_slice %51 {offsets = [0, 24], sizes = [16, 8], strides = [1, 1]} : vector<16x32xf32> to vector<16x8xf32>
    %56 = vector.shape_cast %52 : vector<16x8xf32> to vector<1x16x8xf32>
    %57 = vector.shape_cast %53 : vector<16x8xf32> to vector<1x16x8xf32>
    %58 = vector.shape_cast %54 : vector<16x8xf32> to vector<1x16x8xf32>
    %59 = vector.shape_cast %55 : vector<16x8xf32> to vector<1x16x8xf32>
    %60 = tpu.concatenate %56, %57, %58, %59 in 0 : vector<1x16x8xf32>, vector<1x16x8xf32>, vector<1x16x8xf32>, vector<1x16x8xf32> -> vector<4x16x8xf32>
    %61 = arith.truncf %60 : vector<4x16x8xf32> to vector<4x16x8xbf16>
    %62 = vector.extract_strided_slice %37 {offsets = [0, 0, 64], sizes = [1, 16, 32], strides = [1, 1, 1]} : vector<2x16x96xf32> to vector<1x16x32xf32>
    %63 = vector.shape_cast %62 : vector<1x16x32xf32> to vector<16x32xf32>
    %64 = vector.extract_strided_slice %63 {offsets = [0, 0], sizes = [16, 8], strides = [1, 1]} : vector<16x32xf32> to vector<16x8xf32>
    %65 = vector.extract_strided_slice %63 {offsets = [0, 8], sizes = [16, 8], strides = [1, 1]} : vector<16x32xf32> to vector<16x8xf32>
    %66 = vector.extract_strided_slice %63 {offsets = [0, 16], sizes = [16, 8], strides = [1, 1]} : vector<16x32xf32> to vector<16x8xf32>
    %67 = vector.extract_strided_slice %63 {offsets = [0, 24], sizes = [16, 8], strides = [1, 1]} : vector<16x32xf32> to vector<16x8xf32>
    %68 = vector.shape_cast %64 : vector<16x8xf32> to vector<1x16x8xf32>
    %69 = vector.shape_cast %65 : vector<16x8xf32> to vector<1x16x8xf32>
    %70 = vector.shape_cast %66 : vector<16x8xf32> to vector<1x16x8xf32>
    %71 = vector.shape_cast %67 : vector<16x8xf32> to vector<1x16x8xf32>
    %72 = tpu.concatenate %68, %69, %70, %71 in 0 : vector<1x16x8xf32>, vector<1x16x8xf32>, vector<1x16x8xf32>, vector<1x16x8xf32> -> vector<4x16x8xf32>
    %73 = arith.truncf %72 : vector<4x16x8xf32> to vector<4x16x8xbf16>
    "tpu.trace_start"() <{level = 10 : i32, message = "hqd,hkd->hqk"}> : () -> ()
    %cst_20 = arith.constant dense<0.000000e+00> : vector<4x16x16xf32>
    %74 = tpu.matmul %49, %61, %cst_20 {dimension_numbers = #tpu.dot_dimension_numbers<[2], [2], [1], [1], [0, 0, 0, 1, 1, 1], [0], [0]>} : vector<4x16x8xbf16>, vector<4x16x8xbf16>, vector<4x16x16xf32> -> vector<4x16x16xf32>
    "tpu.trace_stop"() : () -> ()
    %cst_21 = arith.constant dense<0xFF800000> : vector<4x16xf32>
    %75 = vector.multi_reduction <maximumf>, %74, %cst_21 [2] : vector<4x16x16xf32> to vector<4x16xf32>
    %76 = vector.shape_cast %75 : vector<4x16xf32> to vector<4x16x1xf32>
    %77 = vector.broadcast %76 : vector<4x16x1xf32> to vector<4x16x16xf32>
    %78 = arith.subf %74, %77 : vector<4x16x16xf32>
    %79 = math.exp %78 : vector<4x16x16xf32>
    %80 = arith.truncf %79 : vector<4x16x16xf32> to vector<4x16x16xbf16>
    "tpu.trace_start"() <{level = 10 : i32, message = "hqk,hkd->hqd"}> : () -> ()
    %cst_22 = arith.constant dense<0.000000e+00> : vector<4x16x8xf32>
    %81 = tpu.matmul %80, %73, %cst_22 {dimension_numbers = #tpu.dot_dimension_numbers<[2], [1], [1], [2], [0, 0, 0, 1, 1, 2], [0], [0]>} : vector<4x16x16xbf16>, vector<4x16x8xbf16>, vector<4x16x8xf32> -> vector<4x16x8xf32>
    "tpu.trace_stop"() : () -> ()
    %cst_23 = arith.constant dense<0.000000e+00> : vector<4x16xf32>
    %82 = vector.multi_reduction <add>, %79, %cst_23 [2] : vector<4x16x16xf32> to vector<4x16xf32>
    %83 = vector.shape_cast %82 : vector<4x16xf32> to vector<4x16x1xf32>
    %84 = tpu.reciprocal %83 {approx = true} : vector<4x16x1xf32> -> vector<4x16x1xf32>
    %85 = vector.broadcast %84 : vector<4x16x1xf32> to vector<4x16x8xf32>
    %86 = arith.mulf %81, %85 : vector<4x16x8xf32>
    %87 = vector.extract_strided_slice %86 {offsets = [0, 0, 0], sizes = [1, 16, 8], strides = [1, 1, 1]} : vector<4x16x8xf32> to vector<1x16x8xf32>
    %88 = vector.shape_cast %87 : vector<1x16x8xf32> to vector<16x8xf32>
    %89 = vector.extract_strided_slice %86 {offsets = [1, 0, 0], sizes = [1, 16, 8], strides = [1, 1, 1]} : vector<4x16x8xf32> to vector<1x16x8xf32>
    %90 = vector.shape_cast %89 : vector<1x16x8xf32> to vector<16x8xf32>
    %91 = vector.extract_strided_slice %86 {offsets = [2, 0, 0], sizes = [1, 16, 8], strides = [1, 1, 1]} : vector<4x16x8xf32> to vector<1x16x8xf32>
    %92 = vector.shape_cast %91 : vector<1x16x8xf32> to vector<16x8xf32>
    %93 = vector.extract_strided_slice %86 {offsets = [3, 0, 0], sizes = [1, 16, 8], strides = [1, 1, 1]} : vector<4x16x8xf32> to vector<1x16x8xf32>
    %94 = vector.shape_cast %93 : vector<1x16x8xf32> to vector<16x8xf32>
    %95 = tpu.concatenate %88, %90, %92, %94 in 1 : vector<16x8xf32>, vector<16x8xf32>, vector<16x8xf32>, vector<16x8xf32> -> vector<16x32xf32>
    %96 = vector.extract_strided_slice %37 {offsets = [1, 0, 0], sizes = [1, 16, 32], strides = [1, 1, 1]} : vector<2x16x96xf32> to vector<1x16x32xf32>
    %97 = vector.shape_cast %96 : vector<1x16x32xf32> to vector<16x32xf32>
    %98 = vector.extract_strided_slice %97 {offsets = [0, 0], sizes = [16, 8], strides = [1, 1]} : vector<16x32xf32> to vector<16x8xf32>
    %99 = vector.extract_strided_slice %97 {offsets = [0, 8], sizes = [16, 8], strides = [1, 1]} : vector<16x32xf32> to vector<16x8xf32>
    %100 = vector.extract_strided_slice %97 {offsets = [0, 16], sizes = [16, 8], strides = [1, 1]} : vector<16x32xf32> to vector<16x8xf32>
    %101 = vector.extract_strided_slice %97 {offsets = [0, 24], sizes = [16, 8], strides = [1, 1]} : vector<16x32xf32> to vector<16x8xf32>
    %102 = vector.shape_cast %98 : vector<16x8xf32> to vector<1x16x8xf32>
    %103 = vector.shape_cast %99 : vector<16x8xf32> to vector<1x16x8xf32>
    %104 = vector.shape_cast %100 : vector<16x8xf32> to vector<1x16x8xf32>
    %105 = vector.shape_cast %101 : vector<16x8xf32> to vector<1x16x8xf32>
    %106 = tpu.concatenate %102, %103, %104, %105 in 0 : vector<1x16x8xf32>, vector<1x16x8xf32>, vector<1x16x8xf32>, vector<1x16x8xf32> -> vector<4x16x8xf32>
    %107 = arith.truncf %106 : vector<4x16x8xf32> to vector<4x16x8xbf16>
    %108 = vector.extract_strided_slice %37 {offsets = [1, 0, 32], sizes = [1, 16, 32], strides = [1, 1, 1]} : vector<2x16x96xf32> to vector<1x16x32xf32>
    %109 = vector.shape_cast %108 : vector<1x16x32xf32> to vector<16x32xf32>
    %110 = vector.extract_strided_slice %109 {offsets = [0, 0], sizes = [16, 8], strides = [1, 1]} : vector<16x32xf32> to vector<16x8xf32>
    %111 = vector.extract_strided_slice %109 {offsets = [0, 8], sizes = [16, 8], strides = [1, 1]} : vector<16x32xf32> to vector<16x8xf32>
    %112 = vector.extract_strided_slice %109 {offsets = [0, 16], sizes = [16, 8], strides = [1, 1]} : vector<16x32xf32> to vector<16x8xf32>
    %113 = vector.extract_strided_slice %109 {offsets = [0, 24], sizes = [16, 8], strides = [1, 1]} : vector<16x32xf32> to vector<16x8xf32>
    %114 = vector.shape_cast %110 : vector<16x8xf32> to vector<1x16x8xf32>
    %115 = vector.shape_cast %111 : vector<16x8xf32> to vector<1x16x8xf32>
    %116 = vector.shape_cast %112 : vector<16x8xf32> to vector<1x16x8xf32>
    %117 = vector.shape_cast %113 : vector<16x8xf32> to vector<1x16x8xf32>
    %118 = tpu.concatenate %114, %115, %116, %117 in 0 : vector<1x16x8xf32>, vector<1x16x8xf32>, vector<1x16x8xf32>, vector<1x16x8xf32> -> vector<4x16x8xf32>
    %119 = arith.truncf %118 : vector<4x16x8xf32> to vector<4x16x8xbf16>
    %120 = vector.extract_strided_slice %37 {offsets = [1, 0, 64], sizes = [1, 16, 32], strides = [1, 1, 1]} : vector<2x16x96xf32> to vector<1x16x32xf32>
    %121 = vector.shape_cast %120 : vector<1x16x32xf32> to vector<16x32xf32>
    %122 = vector.extract_strided_slice %121 {offsets = [0, 0], sizes = [16, 8], strides = [1, 1]} : vector<16x32xf32> to vector<16x8xf32>
    %123 = vector.extract_strided_slice %121 {offsets = [0, 8], sizes = [16, 8], strides = [1, 1]} : vector<16x32xf32> to vector<16x8xf32>
    %124 = vector.extract_strided_slice %121 {offsets = [0, 16], sizes = [16, 8], strides = [1, 1]} : vector<16x32xf32> to vector<16x8xf32>
    %125 = vector.extract_strided_slice %121 {offsets = [0, 24], sizes = [16, 8], strides = [1, 1]} : vector<16x32xf32> to vector<16x8xf32>
    %126 = vector.shape_cast %122 : vector<16x8xf32> to vector<1x16x8xf32>
    %127 = vector.shape_cast %123 : vector<16x8xf32> to vector<1x16x8xf32>
    %128 = vector.shape_cast %124 : vector<16x8xf32> to vector<1x16x8xf32>
    %129 = vector.shape_cast %125 : vector<16x8xf32> to vector<1x16x8xf32>
    %130 = tpu.concatenate %126, %127, %128, %129 in 0 : vector<1x16x8xf32>, vector<1x16x8xf32>, vector<1x16x8xf32>, vector<1x16x8xf32> -> vector<4x16x8xf32>
    %131 = arith.truncf %130 : vector<4x16x8xf32> to vector<4x16x8xbf16>
    "tpu.trace_start"() <{level = 10 : i32, message = "hqd,hkd->hqk"}> : () -> ()
    %cst_24 = arith.constant dense<0.000000e+00> : vector<4x16x16xf32>
    %132 = tpu.matmul %107, %119, %cst_24 {dimension_numbers = #tpu.dot_dimension_numbers<[2], [2], [1], [1], [0, 0, 0, 1, 1, 1], [0], [0]>} : vector<4x16x8xbf16>, vector<4x16x8xbf16>, vector<4x16x16xf32> -> vector<4x16x16xf32>
    "tpu.trace_stop"() : () -> ()
    %cst_25 = arith.constant dense<0xFF800000> : vector<4x16xf32>
    %133 = vector.multi_reduction <maximumf>, %132, %cst_25 [2] : vector<4x16x16xf32> to vector<4x16xf32>
    %134 = vector.shape_cast %133 : vector<4x16xf32> to vector<4x16x1xf32>
    %135 = vector.broadcast %134 : vector<4x16x1xf32> to vector<4x16x16xf32>
    %136 = arith.subf %132, %135 : vector<4x16x16xf32>
    %137 = math.exp %136 : vector<4x16x16xf32>
    %138 = arith.truncf %137 : vector<4x16x16xf32> to vector<4x16x16xbf16>
    "tpu.trace_start"() <{level = 10 : i32, message = "hqk,hkd->hqd"}> : () -> ()
    %cst_26 = arith.constant dense<0.000000e+00> : vector<4x16x8xf32>
    %139 = tpu.matmul %138, %131, %cst_26 {dimension_numbers = #tpu.dot_dimension_numbers<[2], [1], [1], [2], [0, 0, 0, 1, 1, 2], [0], [0]>} : vector<4x16x16xbf16>, vector<4x16x8xbf16>, vector<4x16x8xf32> -> vector<4x16x8xf32>
    "tpu.trace_stop"() : () -> ()
    %cst_27 = arith.constant dense<0.000000e+00> : vector<4x16xf32>
    %140 = vector.multi_reduction <add>, %137, %cst_27 [2] : vector<4x16x16xf32> to vector<4x16xf32>
    %141 = vector.shape_cast %140 : vector<4x16xf32> to vector<4x16x1xf32>
    %142 = tpu.reciprocal %141 {approx = true} : vector<4x16x1xf32> -> vector<4x16x1xf32>
    %143 = vector.broadcast %142 : vector<4x16x1xf32> to vector<4x16x8xf32>
    %144 = arith.mulf %139, %143 : vector<4x16x8xf32>
    %145 = vector.extract_strided_slice %144 {offsets = [0, 0, 0], sizes = [1, 16, 8], strides = [1, 1, 1]} : vector<4x16x8xf32> to vector<1x16x8xf32>
    %146 = vector.shape_cast %145 : vector<1x16x8xf32> to vector<16x8xf32>
    %147 = vector.extract_strided_slice %144 {offsets = [1, 0, 0], sizes = [1, 16, 8], strides = [1, 1, 1]} : vector<4x16x8xf32> to vector<1x16x8xf32>
    %148 = vector.shape_cast %147 : vector<1x16x8xf32> to vector<16x8xf32>
    %149 = vector.extract_strided_slice %144 {offsets = [2, 0, 0], sizes = [1, 16, 8], strides = [1, 1, 1]} : vector<4x16x8xf32> to vector<1x16x8xf32>
    %150 = vector.shape_cast %149 : vector<1x16x8xf32> to vector<16x8xf32>
    %151 = vector.extract_strided_slice %144 {offsets = [3, 0, 0], sizes = [1, 16, 8], strides = [1, 1, 1]} : vector<4x16x8xf32> to vector<1x16x8xf32>
    %152 = vector.shape_cast %151 : vector<1x16x8xf32> to vector<16x8xf32>
    %153 = tpu.concatenate %146, %148, %150, %152 in 1 : vector<16x8xf32>, vector<16x8xf32>, vector<16x8xf32>, vector<16x8xf32> -> vector<16x32xf32>
    %154 = tpu.concatenate %95, %153 in 0 : vector<16x32xf32>, vector<16x32xf32> -> vector<32x32xf32>
    %155 = arith.truncf %154 : vector<32x32xf32> to vector<32x32xbf16>
    %c0_28 = arith.constant 0 : index
    %c0_29 = arith.constant 0 : index
    %c0_30 = arith.constant 0 : index
    %156 = vector.load %arg7[%c0_28, %c0_29, %c0_30] : memref<1x32x32xbf16, #tpu.memory_space<vmem>>, vector<1x32x32xbf16>
    %157 = vector.shape_cast %156 : vector<1x32x32xbf16> to vector<32x32xbf16>
    %cst_31 = arith.constant dense<0.000000e+00> : vector<32x32xf32>
    %158 = tpu.matmul %155, %157, %cst_31 {dimension_numbers = #tpu.dot_dimension_numbers<[1], [0], [0], [1], [0, 0, 1, 1], [], []>} : vector<32x32xbf16>, vector<32x32xbf16>, vector<32x32xf32> -> vector<32x32xf32>
    %c0_32 = arith.constant 0 : index
    %c0_33 = arith.constant 0 : index
    %c0_34 = arith.constant 0 : index
    %159 = vector.load %arg8[%c0_32, %c0_33, %c0_34] : memref<1x1x32xf32, #tpu.memory_space<vmem>>, vector<1x1x32xf32>
    %160 = vector.shape_cast %159 : vector<1x1x32xf32> to vector<1x32xf32>
    %161 = vector.broadcast %160 : vector<1x32xf32> to vector<32x32xf32>
    %162 = arith.addf %158, %161 : vector<32x32xf32>
    %163 = arith.addf %2, %162 : vector<32x32xf32>
    %c0_35 = arith.constant 0 : index
    %c0_36 = arith.constant 0 : index
    %c0_37 = arith.constant 0 : index
    %164 = vector.load %arg9[%c0_35, %c0_36, %c0_37] : memref<1x1x32xf32, #tpu.memory_space<vmem>>, vector<1x1x32xf32>
    %165 = vector.shape_cast %164 : vector<1x1x32xf32> to vector<1x32xf32>
    %c0_38 = arith.constant 0 : index
    %c0_39 = arith.constant 0 : index
    %c0_40 = arith.constant 0 : index
    %166 = vector.load %arg10[%c0_38, %c0_39, %c0_40] : memref<1x1x32xf32, #tpu.memory_space<vmem>>, vector<1x1x32xf32>
    %167 = vector.shape_cast %166 : vector<1x1x32xf32> to vector<1x32xf32>
    %cst_41 = arith.constant dense<0.000000e+00> : vector<32xf32>
    %168 = vector.multi_reduction <add>, %163, %cst_41 [1] : vector<32x32xf32> to vector<32xf32>
    %169 = vector.shape_cast %168 : vector<32xf32> to vector<32x1xf32>
    %cst_42 = arith.constant 3.200000e+01 : f32
    %170 = vector.broadcast %cst_42 : f32 to vector<32x1xf32>
    %171 = arith.divf %169, %170 : vector<32x1xf32>
    %172 = vector.broadcast %171 : vector<32x1xf32> to vector<32x32xf32>
    %173 = arith.subf %163, %172 : vector<32x32xf32>
    %174 = arith.mulf %173, %173 : vector<32x32xf32>
    %cst_43 = arith.constant dense<0.000000e+00> : vector<32xf32>
    %175 = vector.multi_reduction <add>, %174, %cst_43 [1] : vector<32x32xf32> to vector<32xf32>
    %176 = vector.shape_cast %175 : vector<32xf32> to vector<32x1xf32>
    %cst_44 = arith.constant 3.200000e+01 : f32
    %177 = vector.broadcast %cst_44 : f32 to vector<32x1xf32>
    %178 = arith.divf %176, %177 : vector<32x1xf32>
    %179 = vector.broadcast %171 : vector<32x1xf32> to vector<32x32xf32>
    %180 = arith.subf %163, %179 : vector<32x32xf32>
    %cst_45 = arith.constant 9.99999974E-6 : f32
    %181 = vector.broadcast %cst_45 : f32 to vector<32x1xf32>
    %182 = arith.addf %178, %181 : vector<32x1xf32>
    %183 = math.rsqrt %182 : vector<32x1xf32>
    %184 = vector.broadcast %183 : vector<32x1xf32> to vector<32x32xf32>
    %185 = arith.mulf %180, %184 : vector<32x32xf32>
    %186 = vector.broadcast %165 : vector<1x32xf32> to vector<32x32xf32>
    %187 = arith.mulf %185, %186 : vector<32x32xf32>
    %188 = vector.broadcast %167 : vector<1x32xf32> to vector<32x32xf32>
    %189 = arith.addf %187, %188 : vector<32x32xf32>
    %190 = arith.truncf %189 : vector<32x32xf32> to vector<32x32xbf16>
    %c0_46 = arith.constant 0 : index
    %c0_47 = arith.constant 0 : index
    %c0_48 = arith.constant 0 : index
    %191 = vector.load %arg11[%c0_46, %c0_47, %c0_48] : memref<1x32x128xbf16, #tpu.memory_space<vmem>>, vector<1x32x128xbf16>
    %192 = vector.shape_cast %191 : vector<1x32x128xbf16> to vector<32x128xbf16>
    %cst_49 = arith.constant dense<0.000000e+00> : vector<32x128xf32>
    %193 = tpu.matmul %190, %192, %cst_49 {dimension_numbers = #tpu.dot_dimension_numbers<[1], [0], [0], [1], [0, 0, 1, 1], [], []>} : vector<32x32xbf16>, vector<32x128xbf16>, vector<32x128xf32> -> vector<32x128xf32>
    %c0_50 = arith.constant 0 : index
    %c0_51 = arith.constant 0 : index
    %c0_52 = arith.constant 0 : index
    %194 = vector.load %arg12[%c0_50, %c0_51, %c0_52] : memref<1x1x128xf32, #tpu.memory_space<vmem>>, vector<1x1x128xf32>
    %195 = vector.shape_cast %194 : vector<1x1x128xf32> to vector<1x128xf32>
    %196 = vector.broadcast %195 : vector<1x128xf32> to vector<32x128xf32>
    %197 = arith.addf %193, %196 : vector<32x128xf32>
    %cst_53 = arith.constant 5.000000e-01 : f32
    %198 = vector.broadcast %cst_53 : f32 to vector<32x128xf32>
    %199 = arith.mulf %198, %197 : vector<32x128xf32>
    %cst_54 = arith.constant 0.707106769 : f32
    %200 = vector.broadcast %cst_54 : f32 to vector<32x128xf32>
    %201 = arith.mulf %197, %200 : vector<32x128xf32>
    %202 = math.erf %201 : vector<32x128xf32>
    %cst_55 = arith.constant 1.000000e+00 : f32
    %203 = vector.broadcast %cst_55 : f32 to vector<32x128xf32>
    %204 = arith.addf %203, %202 : vector<32x128xf32>
    %205 = arith.mulf %199, %204 : vector<32x128xf32>
    %206 = arith.truncf %205 : vector<32x128xf32> to vector<32x128xbf16>
    %c0_56 = arith.constant 0 : index
    %c0_57 = arith.constant 0 : index
    %c0_58 = arith.constant 0 : index
    %207 = vector.load %arg13[%c0_56, %c0_57, %c0_58] : memref<1x128x32xbf16, #tpu.memory_space<vmem>>, vector<1x128x32xbf16>
    %208 = vector.shape_cast %207 : vector<1x128x32xbf16> to vector<128x32xbf16>
    %cst_59 = arith.constant dense<0.000000e+00> : vector<32x32xf32>
    %209 = tpu.matmul %206, %208, %cst_59 {dimension_numbers = #tpu.dot_dimension_numbers<[1], [0], [0], [1], [0, 0, 1, 1], [], []>} : vector<32x128xbf16>, vector<128x32xbf16>, vector<32x32xf32> -> vector<32x32xf32>
    %c0_60 = arith.constant 0 : index
    %c0_61 = arith.constant 0 : index
    %c0_62 = arith.constant 0 : index
    %210 = vector.load %arg14[%c0_60, %c0_61, %c0_62] : memref<1x1x32xf32, #tpu.memory_space<vmem>>, vector<1x1x32xf32>
    %211 = vector.shape_cast %210 : vector<1x1x32xf32> to vector<1x32xf32>
    %212 = vector.broadcast %211 : vector<1x32xf32> to vector<32x32xf32>
    %213 = arith.addf %209, %212 : vector<32x32xf32>
    %214 = arith.addf %163, %213 : vector<32x32xf32>
    %215 = vector.shape_cast %214 : vector<32x32xf32> to vector<2x16x32xf32>
    %c0_63 = arith.constant 0 : index
    %c0_64 = arith.constant 0 : index
    %c0_65 = arith.constant 0 : index
    %c0_66 = arith.constant 0 : index
    %216 = vector.load %arg15[%c0_63, %c0_64, %c0_65, %c0_66] : memref<1x2x16x32xf32, #tpu.memory_space<vmem>>, vector<1x2x16x32xf32>
    %217 = vector.shape_cast %216 : vector<1x2x16x32xf32> to vector<2x16x32xf32>
    %218 = vector.shape_cast %215 : vector<2x16x32xf32> to vector<1x2x16x32xf32>
    tpu.vector_store %arg15[%c0_63, %c0_64, %c0_65, %c0_66], %218 {strides = array<i32>} : memref<1x2x16x32xf32, #tpu.memory_space<vmem>>, vector<1x2x16x32xf32>,
    return
  }
  func.func @transform_0(%arg0: i32, %arg1: i32) -> (i32, i32, i32, i32) {
    %c0_i32 = arith.constant 0 : i32
    %c0_i32_0 = arith.constant 0 : i32
    %c0_i32_1 = arith.constant 0 : i32
    return %arg0, %arg1, %c0_i32, %c0_i32_0 : i32, i32, i32, i32
  }
  func.func @transform_1(%arg0: i32, %arg1: i32) -> (i32, i32, i32) {
    %c0_i32 = arith.constant 0 : i32
    %c0_i32_0 = arith.constant 0 : i32
    %c0_i32_1 = arith.constant 0 : i32
    return %arg0, %c0_i32, %c0_i32_0 : i32, i32, i32
  }
  func.func @transform_2(%arg0: i32, %arg1: i32) -> (i32, i32, i32) {
    %c0_i32 = arith.constant 0 : i32
    %c0_i32_0 = arith.constant 0 : i32
    %c0_i32_1 = arith.constant 0 : i32
    return %arg0, %c0_i32, %c0_i32_0 : i32, i32, i32
  }
  func.func @transform_3(%arg0: i32, %arg1: i32) -> (i32, i32, i32) {
    %c0_i32 = arith.constant 0 : i32
    %c0_i32_0 = arith.constant 0 : i32
    %c0_i32_1 = arith.constant 0 : i32
    return %arg0, %c0_i32, %c0_i32_0 : i32, i32, i32
  }
  func.func @transform_4(%arg0: i32, %arg1: i32) -> (i32, i32, i32) {
    %c0_i32 = arith.constant 0 : i32
    %c0_i32_0 = arith.constant 0 : i32
    %c0_i32_1 = arith.constant 0 : i32
    return %arg0, %c0_i32, %c0_i32_0 : i32, i32, i32
  }
  func.func @transform_5(%arg0: i32, %arg1: i32) -> (i32, i32, i32) {
    %c0_i32 = arith.constant 0 : i32
    %c0_i32_0 = arith.constant 0 : i32
    %c0_i32_1 = arith.constant 0 : i32
    return %arg0, %c0_i32, %c0_i32_0 : i32, i32, i32
  }
  func.func @transform_6(%arg0: i32, %arg1: i32) -> (i32, i32, i32) {
    %c0_i32 = arith.constant 0 : i32
    %c0_i32_0 = arith.constant 0 : i32
    %c0_i32_1 = arith.constant 0 : i32
    return %arg0, %c0_i32, %c0_i32_0 : i32, i32, i32
  }
  func.func @transform_7(%arg0: i32, %arg1: i32) -> (i32, i32, i32) {
    %c0_i32 = arith.constant 0 : i32
    %c0_i32_0 = arith.constant 0 : i32
    %c0_i32_1 = arith.constant 0 : i32
    return %arg0, %c0_i32, %c0_i32_0 : i32, i32, i32
  }
  func.func @transform_8(%arg0: i32, %arg1: i32) -> (i32, i32, i32) {
    %c0_i32 = arith.constant 0 : i32
    %c0_i32_0 = arith.constant 0 : i32
    %c0_i32_1 = arith.constant 0 : i32
    return %arg0, %c0_i32, %c0_i32_0 : i32, i32, i32
  }
  func.func @transform_9(%arg0: i32, %arg1: i32) -> (i32, i32, i32) {
    %c0_i32 = arith.constant 0 : i32
    %c0_i32_0 = arith.constant 0 : i32
    %c0_i32_1 = arith.constant 0 : i32
    return %arg0, %c0_i32, %c0_i32_0 : i32, i32, i32
  }
  func.func @transform_10(%arg0: i32, %arg1: i32) -> (i32, i32, i32) {
    %c0_i32 = arith.constant 0 : i32
    %c0_i32_0 = arith.constant 0 : i32
    %c0_i32_1 = arith.constant 0 : i32
    return %arg0, %c0_i32, %c0_i32_0 : i32, i32, i32
  }
  func.func @transform_11(%arg0: i32, %arg1: i32) -> (i32, i32, i32) {
    %c0_i32 = arith.constant 0 : i32
    %c0_i32_0 = arith.constant 0 : i32
    %c0_i32_1 = arith.constant 0 : i32
    return %arg0, %c0_i32, %c0_i32_0 : i32, i32, i32
  }
  func.func @transform_12(%arg0: i32, %arg1: i32) -> (i32, i32, i32) {
    %c0_i32 = arith.constant 0 : i32
    %c0_i32_0 = arith.constant 0 : i32
    %c0_i32_1 = arith.constant 0 : i32
    return %arg0, %c0_i32, %c0_i32_0 : i32, i32, i32
  }
  func.func @transform_13(%arg0: i32, %arg1: i32) -> (i32, i32, i32, i32) {
    %c0_i32 = arith.constant 0 : i32
    %c0_i32_0 = arith.constant 0 : i32
    %c0_i32_1 = arith.constant 0 : i32
    return %arg0, %arg1, %c0_i32, %c0_i32_0 : i32, i32, i32, i32
  }
}

</mosaic_0001>

<llo_original>
// kernel: tpu_custom_call.1
$region0: #{tpu_custom_call.1}
  #allocation0 [shape = 'u32[]', space=smem, size = 0x4, offset = 0x4, fixed_abs, tag = 'smem constant byte address 0x4 - core index']
  #allocation1 [shape = 'u32[144,128]{1,0:T(1,128)}', space=vmem, size = 0x12000, scoped, tag = 'internal scratch']
  %s0 = inlined_call_operand.vmem [shape: f32[2,2,16,32], index: 0, kind: input, shape index: {}]
  %s1 = inlined_call_operand.vmem [shape: f32[2,1,32], index: 1, kind: input, shape index: {}]
  %s2 = inlined_call_operand.vmem [shape: f32[2,1,32], index: 2, kind: input, shape index: {}]
  %s3 = inlined_call_operand.vmem [shape: bf16[2,32,96], index: 3, kind: input, shape index: {}]
  %s4 = inlined_call_operand.vmem [shape: f32[2,1,96], index: 4, kind: input, shape index: {}]
  %s5 = inlined_call_operand.vmem [shape: bf16[2,32,32], index: 5, kind: input, shape index: {}]
  %s6 = inlined_call_operand.vmem [shape: f32[2,1,32], index: 6, kind: input, shape index: {}]
  %s7 = inlined_call_operand.hbm [shape: f32[2,1,32], index: 7, kind: input, shape index: {}]
  %s8 = inlined_call_operand.hbm [shape: f32[2,1,32], index: 8, kind: input, shape index: {}]
  %s9 = inlined_call_operand.vmem [shape: bf16[2,32,128], index: 9, kind: input, shape index: {}]
  %s10 = inlined_call_operand.hbm [shape: f32[2,1,128], index: 10, kind: input, shape index: {}]
  %s11 = inlined_call_operand.vmem [shape: bf16[2,128,32], index: 11, kind: input, shape index: {}]
  %s12 = inlined_call_operand.vmem [shape: f32[2,1,32], index: 12, kind: input, shape index: {}]
  %s13 = inlined_call_operand.hbm [shape: f32[2,2,16,32], index: 13, kind: output, shape index: {}]
  %s14 = sld [smem:[#allocation0]]
  $region97: #{tpu_custom_call.1} parent=0
    _
  %s16 = ssub.s32 1, %s14
  %s17 = scalar_select 0, %s16, %s14
  $region1: #{tpu_custom_call.1} parent=0
    #allocation2 [shape = 'u8[512]{0}', space=vmem, size = 0x400, scoped, tag = 'input window, operand 7, single buffered']
    #allocation3 [shape = 's32[2]{0}', space=sflag, size = 0x8, scoped, tag = 'scoped memory for tpu_custom_call.1']
    #allocation4 [shape = 's32[2]{0}', space=sflag, size = 0x8, scoped, tag = 'scoped memory for tpu_custom_call.1']
    #allocation5 [shape = 'u8[512]{0}', space=vmem, size = 0x400, scoped, tag = 'input window, operand 8, single buffered']
    #allocation6 [shape = 's32[1]{0}', space=sflag, size = 0x4, scoped, tag = 'scoped memory for tpu_custom_call.1']
    #allocation7 [shape = 'u8[512]{0}', space=vmem, size = 0x400, scoped, tag = 'input window, operand 10, single buffered']
    #allocation8 [shape = 'u8[32768]{0}', space=vmem, size = 0x8000, scoped, tag = 'output window, operand 0']
    %18 = vsyncpa [#allocation3], 0
    %19 = vsyncpa [#allocation6], 0
    %20 = vsyncpa [#allocation4], 0
    %s21 = scalar_lea.sflag [#allocation4], 1
    %22 = vsyncpa %s21, 0
    loop: start=0, step=1, limit=4
    $region2: #{tpu_custom_call.1} parent=1 // loop_pre_header
      _
    $region3: #{tpu_custom_call.1} parent=1 // loop_header
      %s24 = sphi 0, %s28
      %p25 = scmp.ge.s32.totalorder %s24, 4
      %s31 = sphi 0, %s43
      %s32 = sphi 0, %s39
      %s33 = sphi 0, %s31
      %s34 = sphi 0, %s32
      %s35 = sphi 0, %s33
      %s36 = sphi 0, %s34
      %s48 = sphi 0, %s50
      %s51 = sphi 0, %s48
      %s52 = sphi 0, %s51
      %s68 = sphi 0, %s52
      %s74 = sphi 0, %s76
      %s77 = sphi 0, %s74
      %s78 = sphi 0, %s77
      %s94 = sphi 0, %s78
      %s100 = sphi 0, %s102
      %s103 = sphi 0, %s100
      %s104 = sphi 0, %s103
      %s120 = sphi 0, %s104
      %s126 = sphi 0, %s128
      %s129 = sphi 0, %s126
      %s130 = sphi 0, %s129
      %s146 = sphi 0, %s130
      %s152 = sphi 0, %s154
      %s155 = sphi 0, %s152
      %s156 = sphi 0, %s155
      %s172 = sphi 0, %s156
      %s178 = sphi 0, %s180
      %s181 = sphi 0, %s178
      %s182 = sphi 0, %s181
      %s198 = sphi 0, %s182
      %s204 = sphi 0, %s206
      %s207 = sphi 0, %s204
      %s208 = sphi 0, %s207
      %s224 = sphi 0, %s208
      %s230 = sphi 0, %s232
      %s233 = sphi 0, %s230
      %s234 = sphi 0, %s233
      %s250 = sphi 0, %s234
      %s256 = sphi 0, %s258
      %s259 = sphi 0, %s256
      %s260 = sphi 0, %s259
      %s276 = sphi 0, %s260
      %s282 = sphi 0, %s284
      %s285 = sphi 0, %s282
      %s286 = sphi 0, %s285
      %s302 = sphi 0, %s286
      %s308 = sphi 0, %s310
      %s311 = sphi 0, %s308
      %s312 = sphi 0, %s311
      %s328 = sphi 0, %s312
      %s334 = sphi 0, %s336
      %s337 = sphi 0, %s334
      %s338 = sphi 0, %s337
      %s354 = sphi 0, %s338
      %s360 = sphi 0, %s362
      %s363 = sphi 0, %s360
      %s364 = sphi 0, %s363
      %s380 = sphi 0, %s364
      %s388 = sphi 0, %s390
      %s391 = sphi 0, %s388
      %s392 = sphi 0, %s391
      %s408 = sphi 0, %s392
    $region4: #{tpu_custom_call.1} parent=1 // loop_header_branch
      %27 = sbr.rel (%p25) target = $region8
    $region5: #{tpu_custom_call.1} parent=1 // loop_body
      %s29 = ssub.s32 %s24, 1
      %s30 = ssub.s32 %s24, 2
      %s37 = sadd.s32 1, %s32
      %p38 = scmp.ge.s32.totalorder %s37, 1
      %s39 = scalar_select %p38, 0, %s37
      %s40 = sadd.s32 1, %s31
      %s41 = scalar_select %p38, %s40, %s31
      %p42 = scmp.ge.s32.totalorder %s41, 2
      %s43 = scalar_select %p42, 0, %s41
      %s44 = ssub.s32 %s31, %s43
      %s45 = ssub.s32 %s32, %s39
      %s46 = sor.u32 %s44, %s45
      %p47 = scmp.eq.s32.totalorder %s46, 0
      %s49 = sadd.s32 %s48, 1
      %s50 = scalar_select %p47, %s48, %s49
      %p53 = pneg %p47
      %p54 = scmp.eq.s32.totalorder %s24, 1
      %p55 = por %p53, %p54
      %p56 = scmp.ne.s32.totalorder %s48, %s51
      %p57 = scmp.eq.s32.totalorder %s24, 0
      %p58 = por %p56, %p57
      %p59 = scmp.ne.s32.totalorder %s48, %s51
      %p60 = scmp.eq.s32.totalorder %s29, 1
      %p61 = por %p59, %p60
      %p62 = scmp.ne.s32.totalorder %s51, %s52
      %p63 = scmp.eq.s32.totalorder %s29, 0
      %p64 = por %p62, %p63
      %p65 = scmp.ne.s32.totalorder %s51, %s52
      %p66 = scmp.eq.s32.totalorder %s30, 1
      %p67 = por %p65, %p66
      %p69 = scmp.ne.s32.totalorder %s52, %s68
      %p70 = scmp.eq.s32.totalorder %s30, 0
      %p71 = por %p69, %p70
      %s72 = ssub.s32 %s31, %s43
      %p73 = scmp.eq.s32.totalorder %s72, 0
      %s75 = sadd.s32 %s74, 1
      %s76 = scalar_select %p73, %s74, %s75
      %p79 = pneg %p73
      %p80 = scmp.eq.s32.totalorder %s24, 1
      %p81 = por %p79, %p80
      %p82 = scmp.ne.s32.totalorder %s74, %s77
      %p83 = scmp.eq.s32.totalorder %s24, 0
      %p84 = por %p82, %p83
      %p85 = scmp.ne.s32.totalorder %s74, %s77
      %p86 = scmp.eq.s32.totalorder %s29, 1
      %p87 = por %p85, %p86
      %p88 = scmp.ne.s32.totalorder %s77, %s78
      %p89 = scmp.eq.s32.totalorder %s29, 0
      %p90 = por %p88, %p89
      %p91 = scmp.ne.s32.totalorder %s77, %s78
      %p92 = scmp.eq.s32.totalorder %s30, 1
      %p93 = por %p91, %p92
      %p95 = scmp.ne.s32.totalorder %s78, %s94
      %p96 = scmp.eq.s32.totalorder %s30, 0
      %p97 = por %p95, %p96
      %s98 = ssub.s32 %s31, %s43
      %p99 = scmp.eq.s32.totalorder %s98, 0
      %s101 = sadd.s32 %s100, 1
      %s102 = scalar_select %p99, %s100, %s101
      %p105 = pneg %p99
      %p106 = scmp.eq.s32.totalorder %s24, 1
      %p107 = por %p105, %p106
      %p108 = scmp.ne.s32.totalorder %s100, %s103
      %p109 = scmp.eq.s32.totalorder %s24, 0
      %p110 = por %p108, %p109
      %p111 = scmp.ne.s32.totalorder %s100, %s103
      %p112 = scmp.eq.s32.totalorder %s29, 1
      %p113 = por %p111, %p112
      %p114 = scmp.ne.s32.totalorder %s103, %s104
      %p115 = scmp.eq.s32.totalorder %s29, 0
      %p116 = por %p114, %p115
      %p117 = scmp.ne.s32.totalorder %s103, %s104
      %p118 = scmp.eq.s32.totalorder %s30, 1
      %p119 = por %p117, %p118
      %p121 = scmp.ne.s32.totalorder %s104, %s120
      %p122 = scmp.eq.s32.totalorder %s30, 0
      %p123 = por %p121, %p122
      %s124 = ssub.s32 %s31, %s43
      %p125 = scmp.eq.s32.totalorder %s124, 0
      %s127 = sadd.s32 %s126, 1
      %s128 = scalar_select %p125, %s126, %s127
      %p131 = pneg %p125
      %p132 = scmp.eq.s32.totalorder %s24, 1
      %p133 = por %p131, %p132
      %p134 = scmp.ne.s32.totalorder %s126, %s129
      %p135 = scmp.eq.s32.totalorder %s24, 0
      %p136 = por %p134, %p135
      %p137 = scmp.ne.s32.totalorder %s126, %s129
      %p138 = scmp.eq.s32.totalorder %s29, 1
      %p139 = por %p137, %p138
      %p140 = scmp.ne.s32.totalorder %s129, %s130
      %p141 = scmp.eq.s32.totalorder %s29, 0
      %p142 = por %p140, %p141
      %p143 = scmp.ne.s32.totalorder %s129, %s130
      %p144 = scmp.eq.s32.totalorder %s30, 1
      %p145 = por %p143, %p144
      %p147 = scmp.ne.s32.totalorder %s130, %s146
      %p148 = scmp.eq.s32.totalorder %s30, 0
      %p149 = por %p147, %p148
      %s150 = ssub.s32 %s31, %s43
      %p151 = scmp.eq.s32.totalorder %s150, 0
      %s153 = sadd.s32 %s152, 1
      %s154 = scalar_select %p151, %s152, %s153
      %p157 = pneg %p151
      %p158 = scmp.eq.s32.totalorder %s24, 1
      %p159 = por %p157, %p158
      %p160 = scmp.ne.s32.totalorder %s152, %s155
      %p161 = scmp.eq.s32.totalorder %s24, 0
      %p162 = por %p160, %p161
      %p163 = scmp.ne.s32.totalorder %s152, %s155
      %p164 = scmp.eq.s32.totalorder %s29, 1
      %p165 = por %p163, %p164
      %p166 = scmp.ne.s32.totalorder %s155, %s156
      %p167 = scmp.eq.s32.totalorder %s29, 0
      %p168 = por %p166, %p167
      %p169 = scmp.ne.s32.totalorder %s155, %s156
      %p170 = scmp.eq.s32.totalorder %s30, 1
      %p171 = por %p169, %p170
      %p173 = scmp.ne.s32.totalorder %s156, %s172
      %p174 = scmp.eq.s32.totalorder %s30, 0
      %p175 = por %p173, %p174
      %s176 = ssub.s32 %s31, %s43
      %p177 = scmp.eq.s32.totalorder %s176, 0
      %s179 = sadd.s32 %s178, 1
      %s180 = scalar_select %p177, %s178, %s179
      %p183 = pneg %p177
      %p184 = scmp.eq.s32.totalorder %s24, 1
      %p185 = por %p183, %p184
      %p186 = scmp.ne.s32.totalorder %s178, %s181
      %p187 = scmp.eq.s32.totalorder %s24, 0
      %p188 = por %p186, %p187
      %p189 = scmp.ne.s32.totalorder %s178, %s181
      %p190 = scmp.eq.s32.totalorder %s29, 1
      %p191 = por %p189, %p190
      %p192 = scmp.ne.s32.totalorder %s181, %s182
      %p193 = scmp.eq.s32.totalorder %s29, 0
      %p194 = por %p192, %p193
      %p195 = scmp.ne.s32.totalorder %s181, %s182
      %p196 = scmp.eq.s32.totalorder %s30, 1
      %p197 = por %p195, %p196
      %p199 = scmp.ne.s32.totalorder %s182, %s198
      %p200 = scmp.eq.s32.totalorder %s30, 0
      %p201 = por %p199, %p200
      %s202 = ssub.s32 %s31, %s43
      %p203 = scmp.eq.s32.totalorder %s202, 0
      %s205 = sadd.s32 %s204, 1
      %s206 = scalar_select %p203, %s204, %s205
      %p209 = pneg %p203
      %p210 = scmp.eq.s32.totalorder %s24, 1
      %p211 = por %p209, %p210
      %p212 = scmp.ne.s32.totalorder %s204, %s207
      %p213 = scmp.eq.s32.totalorder %s24, 0
      %p214 = por %p212, %p213
      %p215 = scmp.ne.s32.totalorder %s204, %s207
      %p216 = scmp.eq.s32.totalorder %s29, 1
      %p217 = por %p215, %p216
      %p218 = scmp.ne.s32.totalorder %s207, %s208
      %p219 = scmp.eq.s32.totalorder %s29, 0
      %p220 = por %p218, %p219
      %p221 = scmp.ne.s32.totalorder %s207, %s208
      %p222 = scmp.eq.s32.totalorder %s30, 1
      %p223 = por %p221, %p222
      %p225 = scmp.ne.s32.totalorder %s208, %s224
      %p226 = scmp.eq.s32.totalorder %s30, 0
      %p227 = por %p225, %p226
      %s228 = ssub.s32 %s31, %s43
      %p229 = scmp.eq.s32.totalorder %s228, 0
      %s231 = sadd.s32 %s230, 1
      %s232 = scalar_select %p229, %s230, %s231
      %p235 = pneg %p229
      %p236 = scmp.eq.s32.totalorder %s24, 1
      %p237 = por %p235, %p236
      %p238 = scmp.ne.s32.totalorder %s230, %s233
      %p239 = scmp.eq.s32.totalorder %s24, 0
      %p240 = por %p238, %p239
      %p241 = scmp.ne.s32.totalorder %s230, %s233
      %p242 = scmp.eq.s32.totalorder %s29, 1
      %p243 = por %p241, %p242
      %p244 = scmp.ne.s32.totalorder %s233, %s234
      %p245 = scmp.eq.s32.totalorder %s29, 0
      %p246 = por %p244, %p245
      %p247 = scmp.ne.s32.totalorder %s233, %s234
      %p248 = scmp.eq.s32.totalorder %s30, 1
      %p249 = por %p247, %p248
      %p251 = scmp.ne.s32.totalorder %s234, %s250
      %p252 = scmp.eq.s32.totalorder %s30, 0
      %p253 = por %p251, %p252
      %s254 = ssub.s32 %s31, %s43
      %p255 = scmp.eq.s32.totalorder %s254, 0
      %s257 = sadd.s32 %s256, 1
      %s258 = scalar_select %p255, %s256, %s257
      %p261 = pneg %p255
      %p262 = scmp.eq.s32.totalorder %s24, 1
      %p263 = por %p261, %p262
      %p264 = scmp.ne.s32.totalorder %s256, %s259
      %p265 = scmp.eq.s32.totalorder %s24, 0
      %p266 = por %p264, %p265
      %p267 = scmp.ne.s32.totalorder %s256, %s259
      %p268 = scmp.eq.s32.totalorder %s29, 1
      %p269 = por %p267, %p268
      %p270 = scmp.ne.s32.totalorder %s259, %s260
      %p271 = scmp.eq.s32.totalorder %s29, 0
      %p272 = por %p270, %p271
      %p273 = scmp.ne.s32.totalorder %s259, %s260
      %p274 = scmp.eq.s32.totalorder %s30, 1
      %p275 = por %p273, %p274
      %p277 = scmp.ne.s32.totalorder %s260, %s276
      %p278 = scmp.eq.s32.totalorder %s30, 0
      %p279 = por %p277, %p278
      %s280 = ssub.s32 %s31, %s43
      %p281 = scmp.eq.s32.totalorder %s280, 0
      %s283 = sadd.s32 %s282, 1
      %s284 = scalar_select %p281, %s282, %s283
      %p287 = pneg %p281
      %p288 = scmp.eq.s32.totalorder %s24, 1
      %p289 = por %p287, %p288
      %p290 = scmp.ne.s32.totalorder %s282, %s285
      %p291 = scmp.eq.s32.totalorder %s24, 0
      %p292 = por %p290, %p291
      %p293 = scmp.ne.s32.totalorder %s282, %s285
      %p294 = scmp.eq.s32.totalorder %s29, 1
      %p295 = por %p293, %p294
      %p296 = scmp.ne.s32.totalorder %s285, %s286
      %p297 = scmp.eq.s32.totalorder %s29, 0
      %p298 = por %p296, %p297
      %p299 = scmp.ne.s32.totalorder %s285, %s286
      %p300 = scmp.eq.s32.totalorder %s30, 1
      %p301 = por %p299, %p300
      %p303 = scmp.ne.s32.totalorder %s286, %s302
      %p304 = scmp.eq.s32.totalorder %s30, 0
      %p305 = por %p303, %p304
      %s306 = ssub.s32 %s31, %s43
      %p307 = scmp.eq.s32.totalorder %s306, 0
      %s309 = sadd.s32 %s308, 1
      %s310 = scalar_select %p307, %s308, %s309
      %p313 = pneg %p307
      %p314 = scmp.eq.s32.totalorder %s24, 1
      %p315 = por %p313, %p314
      %p316 = scmp.ne.s32.totalorder %s308, %s311
      %p317 = scmp.eq.s32.totalorder %s24, 0
      %p318 = por %p316, %p317
      %p319 = scmp.ne.s32.totalorder %s308, %s311
      %p320 = scmp.eq.s32.totalorder %s29, 1
      %p321 = por %p319, %p320
      %p322 = scmp.ne.s32.totalorder %s311, %s312
      %p323 = scmp.eq.s32.totalorder %s29, 0
      %p324 = por %p322, %p323
      %p325 = scmp.ne.s32.totalorder %s311, %s312
      %p326 = scmp.eq.s32.totalorder %s30, 1
      %p327 = por %p325, %p326
      %p329 = scmp.ne.s32.totalorder %s312, %s328
      %p330 = scmp.eq.s32.totalorder %s30, 0
      %p331 = por %p329, %p330
      %s332 = ssub.s32 %s31, %s43
      %p333 = scmp.eq.s32.totalorder %s332, 0
      %s335 = sadd.s32 %s334, 1
      %s336 = scalar_select %p333, %s334, %s335
      %p339 = pneg %p333
      %p340 = scmp.eq.s32.totalorder %s24, 1
      %p341 = por %p339, %p340
      %p342 = scmp.ne.s32.totalorder %s334, %s337
      %p343 = scmp.eq.s32.totalorder %s24, 0
      %p344 = por %p342, %p343
      %p345 = scmp.ne.s32.totalorder %s334, %s337
      %p346 = scmp.eq.s32.totalorder %s29, 1
      %p347 = por %p345, %p346
      %p348 = scmp.ne.s32.totalorder %s337, %s338
      %p349 = scmp.eq.s32.totalorder %s29, 0
      %p350 = por %p348, %p349
      %p351 = scmp.ne.s32.totalorder %s337, %s338
      %p352 = scmp.eq.s32.totalorder %s30, 1
      %p353 = por %p351, %p352
      %p355 = scmp.ne.s32.totalorder %s338, %s354
      %p356 = scmp.eq.s32.totalorder %s30, 0
      %p357 = por %p355, %p356
      %s358 = ssub.s32 %s31, %s43
      %p359 = scmp.eq.s32.totalorder %s358, 0
      %s361 = sadd.s32 %s360, 1
      %s362 = scalar_select %p359, %s360, %s361
      %p365 = pneg %p359
      %p366 = scmp.eq.s32.totalorder %s24, 1
      %p367 = por %p365, %p366
      %p368 = scmp.ne.s32.totalorder %s360, %s363
      %p369 = scmp.eq.s32.totalorder %s24, 0
      %p370 = por %p368, %p369
      %p371 = scmp.ne.s32.totalorder %s360, %s363
      %p372 = scmp.eq.s32.totalorder %s29, 1
      %p373 = por %p371, %p372
      %p374 = scmp.ne.s32.totalorder %s363, %s364
      %p375 = scmp.eq.s32.totalorder %s29, 0
      %p376 = por %p374, %p375
      %p377 = scmp.ne.s32.totalorder %s363, %s364
      %p378 = scmp.eq.s32.totalorder %s30, 1
      %p379 = por %p377, %p378
      %p381 = scmp.ne.s32.totalorder %s364, %s380
      %p382 = scmp.eq.s32.totalorder %s30, 0
      %p383 = por %p381, %p382
      %s384 = ssub.s32 %s31, %s43
      %s385 = ssub.s32 %s32, %s39
      %s386 = sor.u32 %s384, %s385
      %p387 = scmp.eq.s32.totalorder %s386, 0
      %s389 = sadd.s32 %s388, 1
      %s390 = scalar_select %p387, %s388, %s389
      %p393 = pneg %p387
      %p394 = scmp.eq.s32.totalorder %s24, 1
      %p395 = por %p393, %p394
      %p396 = scmp.ne.s32.totalorder %s388, %s391
      %p397 = scmp.eq.s32.totalorder %s24, 0
      %p398 = por %p396, %p397
      %p399 = scmp.ne.s32.totalorder %s388, %s391
      %p400 = scmp.eq.s32.totalorder %s29, 1
      %p401 = por %p399, %p400
      %p402 = scmp.ne.s32.totalorder %s391, %s392
      %p403 = scmp.eq.s32.totalorder %s29, 0
      %p404 = por %p402, %p403
      %p405 = scmp.ne.s32.totalorder %s391, %s392
      %p406 = scmp.eq.s32.totalorder %s30, 1
      %p407 = por %p405, %p406
      %p409 = scmp.ne.s32.totalorder %s392, %s408
      %p410 = scmp.eq.s32.totalorder %s30, 0
      %p411 = por %p409, %p410
      %p412 = scmp.le.s32.totalorder 1, %s24
      %p413 = scmp.lt.s32.totalorder %s24, 3
      %p414 = pnand %p412, %p413
      %p415 = pneg %p414
      // Predicated region
      $region9: #{tpu_custom_call.1} parent=5 // pred_check
        _
      $region10: #{tpu_custom_call.1} parent=5 // pred_check_branch
        %417 = sbr.rel (%p414) target = $region12
      $region11: #{tpu_custom_call.1} parent=5 // pred_region
        %s418 = ssub.s32 %s24, 1
        // Predicated region
        $region13: #{tpu_custom_call.1} parent=11 // pred_check
          %p419 = pneg %p90
        $region14: #{tpu_custom_call.1} parent=11 // pred_check_branch
          %421 = sbr.rel (%p419) target = $region16
        $region15: #{tpu_custom_call.1} parent=11 // pred_region
          %p422 = scmp.lt.s32.totalorder %s33, 1
          %s423 = scalar_select %p422, %s33, 1
          %s424 = scalar_lea.vmem %s1, %s423
        $region16: #{tpu_custom_call.1} parent=11 // pred_fallthru
          _
        // Predicated region
        $region17: #{tpu_custom_call.1} parent=11 // pred_check
          %p425 = pneg %p116
        $region18: #{tpu_custom_call.1} parent=11 // pred_check_branch
          %427 = sbr.rel (%p425) target = $region20
        $region19: #{tpu_custom_call.1} parent=11 // pred_region
          %p428 = scmp.lt.s32.totalorder %s33, 1
          %s429 = scalar_select %p428, %s33, 1
          %s430 = scalar_lea.vmem %s2, %s429
        $region20: #{tpu_custom_call.1} parent=11 // pred_fallthru
          _
        // Predicated region
        $region21: #{tpu_custom_call.1} parent=11 // pred_check
          %p431 = pneg %p142
        $region22: #{tpu_custom_call.1} parent=11 // pred_check_branch
          %433 = sbr.rel (%p431) target = $region24
        $region23: #{tpu_custom_call.1} parent=11 // pred_region
          %p434 = scmp.lt.s32.totalorder %s33, 1
          %s435 = scalar_select %p434, %s33, 1
          %s436 = smul.addr %s435, 4
          %s437 = smul.addr %s436, 4
          %s438 = scalar_lea.vmem %s3, %s437
        $region24: #{tpu_custom_call.1} parent=11 // pred_fallthru
          _
        // Predicated region
        $region25: #{tpu_custom_call.1} parent=11 // pred_check
          %p439 = pneg %p168
        $region26: #{tpu_custom_call.1} parent=11 // pred_check_branch
          %441 = sbr.rel (%p439) target = $region28
        $region27: #{tpu_custom_call.1} parent=11 // pred_region
          %p442 = scmp.lt.s32.totalorder %s33, 1
          %s443 = scalar_select %p442, %s33, 1
          %s444 = scalar_lea.vmem %s4, %s443
        $region28: #{tpu_custom_call.1} parent=11 // pred_fallthru
          _
        // Predicated region
        $region29: #{tpu_custom_call.1} parent=11 // pred_check
          %p445 = pneg %p194
        $region30: #{tpu_custom_call.1} parent=11 // pred_check_branch
          %447 = sbr.rel (%p445) target = $region32
        $region31: #{tpu_custom_call.1} parent=11 // pred_region
          %p448 = scmp.lt.s32.totalorder %s33, 1
          %s449 = scalar_select %p448, %s33, 1
          %s450 = smul.addr %s449, 4
          %s451 = smul.addr %s450, 4
          %s452 = scalar_lea.vmem %s5, %s451
        $region32: #{tpu_custom_call.1} parent=11 // pred_fallthru
          _
        // Predicated region
        $region33: #{tpu_custom_call.1} parent=11 // pred_check
          %p453 = pneg %p220
        $region34: #{tpu_custom_call.1} parent=11 // pred_check_branch
          %455 = sbr.rel (%p453) target = $region36
        $region35: #{tpu_custom_call.1} parent=11 // pred_region
          %p456 = scmp.lt.s32.totalorder %s33, 1
          %s457 = scalar_select %p456, %s33, 1
          %s458 = scalar_lea.vmem %s6, %s457
        $region36: #{tpu_custom_call.1} parent=11 // pred_fallthru
          _
        // Predicated region
        $region37: #{tpu_custom_call.1} parent=11 // pred_check
          %p459 = pneg %p246
        $region38: #{tpu_custom_call.1} parent=11 // pred_check_branch
          %461 = sbr.rel (%p459) target = $region40
        $region39: #{tpu_custom_call.1} parent=11 // pred_region
          %s463 = ssub.s32 16, 16
          %464 = vsyncadd [#allocation3], %s463
          %s465 = smul.addr %s33, 16
          %s466 = scalar_lea.hbm %s7, %s465
          %s468 = sshll.u32 [#allocation2], 4
          %s469 = int_to_ptr.vmem [resolvable:$true] %s468
          %471 = dma.hbm_to_vmem [thread:$0]  %s466, 16, %s469, [#allocation3]
        $region40: #{tpu_custom_call.1} parent=11 // pred_fallthru
          _
        // Predicated region
        $region41: #{tpu_custom_call.1} parent=11 // pred_check
          %p472 = pneg %p272
        $region42: #{tpu_custom_call.1} parent=11 // pred_check_branch
          %474 = sbr.rel (%p472) target = $region44
        $region43: #{tpu_custom_call.1} parent=11 // pred_region
          %s476 = ssub.s32 16, 16
          %477 = vsyncadd [#allocation6], %s476
          %s478 = smul.addr %s33, 16
          %s479 = scalar_lea.hbm %s8, %s478
          %s481 = sshll.u32 [#allocation5], 4
          %s482 = int_to_ptr.vmem [resolvable:$true] %s481
          %484 = dma.hbm_to_vmem [thread:$0]  %s479, 16, %s482, [#allocation6]
        $region44: #{tpu_custom_call.1} parent=11 // pred_fallthru
          _
        // Predicated region
        $region45: #{tpu_custom_call.1} parent=11 // pred_check
          %p485 = pneg %p298
        $region46: #{tpu_custom_call.1} parent=11 // pred_check_branch
          %487 = sbr.rel (%p485) target = $region48
        $region47: #{tpu_custom_call.1} parent=11 // pred_region
          %p488 = scmp.lt.s32.totalorder %s33, 1
          %s489 = scalar_select %p488, %s33, 1
          %s490 = smul.addr %s489, 4
          %s491 = smul.addr %s490, 4
          %s492 = scalar_lea.vmem %s9, %s491
        $region48: #{tpu_custom_call.1} parent=11 // pred_fallthru
          _
        // Predicated region
        $region49: #{tpu_custom_call.1} parent=11 // pred_check
          %p493 = pneg %p324
        $region50: #{tpu_custom_call.1} parent=11 // pred_check_branch
          %495 = sbr.rel (%p493) target = $region52
        $region51: #{tpu_custom_call.1} parent=11 // pred_region
          %s497 = ssub.s32 16, 16
          %498 = vsyncadd [#allocation6], %s497
          %s499 = smul.addr %s33, 16
          %s500 = scalar_lea.hbm %s10, %s499
          %s502 = sshll.u32 [#allocation7], 4
          %s503 = int_to_ptr.vmem [resolvable:$true] %s502
          %505 = dma.hbm_to_vmem [thread:$0]  %s500, 16, %s503, [#allocation6]
        $region52: #{tpu_custom_call.1} parent=11 // pred_fallthru
          _
        // Predicated region
        $region53: #{tpu_custom_call.1} parent=11 // pred_check
          %p506 = pneg %p350
        $region54: #{tpu_custom_call.1} parent=11 // pred_check_branch
          %508 = sbr.rel (%p506) target = $region56
        $region55: #{tpu_custom_call.1} parent=11 // pred_region
          %p509 = scmp.lt.s32.totalorder %s33, 1
          %s510 = scalar_select %p509, %s33, 1
          %s511 = smul.addr %s510, 16
          %s512 = smul.addr %s511, 4
          %s513 = scalar_lea.vmem %s11, %s512
        $region56: #{tpu_custom_call.1} parent=11 // pred_fallthru
          _
        // Predicated region
        $region57: #{tpu_custom_call.1} parent=11 // pred_check
          %p514 = pneg %p376
        $region58: #{tpu_custom_call.1} parent=11 // pred_check_branch
          %516 = sbr.rel (%p514) target = $region60
        $region59: #{tpu_custom_call.1} parent=11 // pred_region
          %p517 = scmp.lt.s32.totalorder %s33, 1
          %s518 = scalar_select %p517, %s33, 1
          %s519 = scalar_lea.vmem %s12, %s518
        $region60: #{tpu_custom_call.1} parent=11 // pred_fallthru
          _
      $region12: #{tpu_custom_call.1} parent=5 // pred_fallthru
        _
      %p520 = scmp.lt.s32.totalorder %s24, 2
      // Predicated region
      $region61: #{tpu_custom_call.1} parent=5 // pred_check
        %p521 = pneg %p520
      $region62: #{tpu_custom_call.1} parent=5 // pred_check_branch
        %523 = sbr.rel (%p521) target = $region64
      $region63: #{tpu_custom_call.1} parent=5 // pred_region
        // Predicated region
        $region65: #{tpu_custom_call.1} parent=63 // pred_check
          %p524 = pneg %p58
        $region66: #{tpu_custom_call.1} parent=63 // pred_check_branch
          %526 = sbr.rel (%p524) target = $region68
        $region67: #{tpu_custom_call.1} parent=63 // pred_region
          %s527 = smul.u32 2, %s32
          %p528 = scmp.lt.s32.totalorder %s31, 1
          %s529 = scalar_select %p528, %s31, 1
          %p530 = scmp.lt.s32.totalorder %s527, 1
          %s531 = scalar_select %p530, %s527, 1
          %s532 = smul.addr %s531, 2
          %s533 = smul.addr %s529, 4
          %s534 = sadd.s32 %s532, %s533
          %s535 = smul.addr %s534, 8
          %s536 = scalar_lea.vmem %s0, %s535
          %s537 = smul.u32 2, %s32
        $region68: #{tpu_custom_call.1} parent=63 // pred_fallthru
          _
      $region64: #{tpu_custom_call.1} parent=5 // pred_fallthru
        _
      %p538 = scmp.le.s32.totalorder 1, %s24
      %p539 = scmp.lt.s32.totalorder %s24, 3
      %p540 = pnand %p538, %p539
      %p541 = pneg %p540
      // Predicated region
      $region69: #{tpu_custom_call.1} parent=5 // pred_check
        _
      $region70: #{tpu_custom_call.1} parent=5 // pred_check_branch
        %543 = sbr.rel (%p540) target = $region72
      $region71: #{tpu_custom_call.1} parent=5 // pred_region
        %s544 = ssub.s32 %s24, 1
        // Predicated region
        $region73: #{tpu_custom_call.1} parent=71 // pred_check
          %p545 = pneg %p246
        $region74: #{tpu_custom_call.1} parent=71 // pred_check_branch
          %547 = sbr.rel (%p545) target = $region76
        $region75: #{tpu_custom_call.1} parent=71 // pred_region
          %548 = dma.done [#allocation3], 16
        $region76: #{tpu_custom_call.1} parent=71 // pred_fallthru
          _
        // Predicated region
        $region77: #{tpu_custom_call.1} parent=71 // pred_check
          %p549 = pneg %p272
        $region78: #{tpu_custom_call.1} parent=71 // pred_check_branch
          %551 = sbr.rel (%p549) target = $region80
        $region79: #{tpu_custom_call.1} parent=71 // pred_region
          %552 = dma.done [#allocation6], 16
        $region80: #{tpu_custom_call.1} parent=71 // pred_fallthru
          _
        // Predicated region
        $region81: #{tpu_custom_call.1} parent=71 // pred_check
          %p553 = pneg %p324
        $region82: #{tpu_custom_call.1} parent=71 // pred_check_branch
          %555 = sbr.rel (%p553) target = $region84
        $region83: #{tpu_custom_call.1} parent=71 // pred_region
          %556 = dma.done [#allocation6], 16
        $region84: #{tpu_custom_call.1} parent=71 // pred_fallthru
          _
        %s557 = smul.u32 2, %s34
        %p558 = scmp.lt.s32.totalorder %s33, 1
        %s559 = scalar_select %p558, %s33, 1
        %p560 = scmp.lt.s32.totalorder %s557, 1
        %s561 = scalar_select %p560, %s557, 1
        %s562 = smul.addr %s561, 2
        %s563 = smul.addr %s559, 4
        %s564 = sadd.s32 %s562, %s563
        %s565 = smul.addr %s564, 8
        %s566 = scalar_lea.vmem %s0, %s565
        %p567 = pneg %p64
        %p568 = pneg %p61
        %p569 = scmp.lt.s32.totalorder %s33, 1
        %s570 = scalar_select %p569, %s33, 1
        %s571 = scalar_lea.vmem %s1, %s570
        %p572 = pneg %p90
        %p573 = pneg %p87
        %p574 = scmp.lt.s32.totalorder %s33, 1
        %s575 = scalar_select %p574, %s33, 1
        %s576 = scalar_lea.vmem %s2, %s575
        %p577 = pneg %p116
        %p578 = pneg %p113
        %p579 = scmp.lt.s32.totalorder %s33, 1
        %s580 = scalar_select %p579, %s33, 1
        %s581 = smul.addr %s580, 4
        %s582 = smul.addr %s581, 4
        %s583 = scalar_lea.vmem %s3, %s582
        %p584 = pneg %p142
        %p585 = pneg %p139
        %p586 = scmp.lt.s32.totalorder %s33, 1
        %s587 = scalar_select %p586, %s33, 1
        %s588 = scalar_lea.vmem %s4, %s587
        %p589 = pneg %p168
        %p590 = pneg %p165
        %p591 = scmp.lt.s32.totalorder %s33, 1
        %s592 = scalar_select %p591, %s33, 1
        %s593 = smul.addr %s592, 4
        %s594 = smul.addr %s593, 4
        %s595 = scalar_lea.vmem %s5, %s594
        %p596 = pneg %p194
        %p597 = pneg %p191
        %p598 = scmp.lt.s32.totalorder %s33, 1
        %s599 = scalar_select %p598, %s33, 1
        %s600 = scalar_lea.vmem %s6, %s599
        %p601 = pneg %p220
        %p602 = pneg %p217
        %p603 = pneg %p246
        %p604 = pneg %p243
        %p605 = pneg %p272
        %p606 = pneg %p269
        %p607 = scmp.lt.s32.totalorder %s33, 1
        %s608 = scalar_select %p607, %s33, 1
        %s609 = smul.addr %s608, 4
        %s610 = smul.addr %s609, 4
        %s611 = scalar_lea.vmem %s9, %s610
        %p612 = pneg %p298
        %p613 = pneg %p295
        %p614 = pneg %p324
        %p615 = pneg %p321
        %p616 = scmp.lt.s32.totalorder %s33, 1
        %s617 = scalar_select %p616, %s33, 1
        %s618 = smul.addr %s617, 16
        %s619 = smul.addr %s618, 4
        %s620 = scalar_lea.vmem %s11, %s619
        %p621 = pneg %p350
        %p622 = pneg %p347
        %p623 = scmp.lt.s32.totalorder %s33, 1
        %s624 = scalar_select %p623, %s33, 1
        %s625 = scalar_lea.vmem %s12, %s624
        %p626 = pneg %p376
        %p627 = pneg %p373
        %p628 = pneg %p404
        %p629 = pneg %p401
        %s630 = sand.u32 %s391, 1
        %s631 = scalar_lea.sflag [#allocation4], %s630
        %s632 = sand.u32 %s391, 1
        %s633 = smul.addr %s632, 32
        %s634 = scalar_lea.vmem [#allocation8], %s633
        %s635 = smul.u32 2, %s34
        %p636 = scmp.lt.s32.totalorder %s33, 1
        %s637 = scalar_select %p636, %s33, 1
        %p638 = scmp.lt.s32.totalorder %s635, 1
        %s639 = scalar_select %p638, %s635, 1
        %s640 = smul.addr %s639, 2
        %s641 = smul.addr %s637, 4
        %s642 = sadd.s32 %s640, %s641
        %s643 = smul.addr %s642, 8
        %s644 = scalar_lea.vmem %s0, %s643
        %s645 = smul.u32 2, %s34
        %p646 = scmp.lt.s32.totalorder %s33, 1
        %s647 = scalar_select %p646, %s33, 1
        %s648 = scalar_lea.vmem %s1, %s647
        %p649 = scmp.lt.s32.totalorder %s33, 1
        %s650 = scalar_select %p649, %s33, 1
        %s651 = scalar_lea.vmem %s2, %s650
        %p652 = scmp.lt.s32.totalorder %s33, 1
        %s653 = scalar_select %p652, %s33, 1
        %s654 = smul.addr %s653, 4
        %s655 = smul.addr %s654, 4
        %s656 = scalar_lea.vmem %s3, %s655
        %p657 = scmp.lt.s32.totalorder %s33, 1
        %s658 = scalar_select %p657, %s33, 1
        %s659 = scalar_lea.vmem %s4, %s658
        %p660 = scmp.lt.s32.totalorder %s33, 1
        %s661 = scalar_select %p660, %s33, 1
        %s662 = smul.addr %s661, 4
        %s663 = smul.addr %s662, 4
        %s664 = scalar_lea.vmem %s5, %s663
        %p665 = scmp.lt.s32.totalorder %s33, 1
        %s666 = scalar_select %p665, %s33, 1
        %s667 = scalar_lea.vmem %s6, %s666
        %p668 = scmp.lt.s32.totalorder %s33, 1
        %s669 = scalar_select %p668, %s33, 1
        %s670 = smul.addr %s669, 4
        %s671 = smul.addr %s670, 4
        %s672 = scalar_lea.vmem %s9, %s671
        %p673 = scmp.lt.s32.totalorder %s33, 1
        %s674 = scalar_select %p673, %s33, 1
        %s675 = smul.addr %s674, 16
        %s676 = smul.addr %s675, 4
        %s677 = scalar_lea.vmem %s11, %s676
        %p678 = scmp.lt.s32.totalorder %s33, 1
        %s679 = scalar_select %p678, %s33, 1
        %s680 = scalar_lea.vmem %s12, %s679
        %s681 = smul.u32 2, %s34
        %v683 = vld [vmem:[%s644] sm:$0xff]
        %v684 = vld [vmem:[%s644 + $0x8] sm:$0xff]
        %v685 = vld [vmem:[%s644 + $0x10] sm:$0xff]
        %v686 = vld [vmem:[%s644 + $0x18] sm:$0xff]
        %v687 = vld [vmem:[%s648] sm:$0x1]
        %v688 = vld [vmem:[%s651] sm:$0x1]
        %vm689 = vcmask 261120
        %v690 = vsel %vm689, %v683, 0.0
        %691 = vadd.xlane.f32.xlu0 %v690
        %v692 = vpop.xlane.xlu0 %691
        %v693 = vsel %vm689, %v684, 0.0
        %694 = vadd.xlane.f32.xlu0 %v693
        %v695 = vpop.xlane.xlu0 %694
        %v696 = vsel %vm689, %v685, 0.0
        %697 = vadd.xlane.f32.xlu0 %v696
        %v698 = vpop.xlane.xlu0 %697
        %v699 = vsel %vm689, %v686, 0.0
        %700 = vadd.xlane.f32.xlu0 %v699
        %v701 = vpop.xlane.xlu0 %700
        %v702 = vrcp.pop 32.0
        %v703 = vmul.f32 %v692, %v702
        %v704 = vmul.f32 %v695, %v702
        %v705 = vmul.f32 %v698, %v702
        %v706 = vmul.f32 %v701, %v702
        %v707 = vsub.f32 %v683, %v703
        %v708 = vsub.f32 %v684, %v704
        %v709 = vsub.f32 %v685, %v705
        %v710 = vsub.f32 %v686, %v706
        %v711 = vmul.f32 %v707, %v707
        %v712 = vmul.f32 %v708, %v708
        %v713 = vmul.f32 %v709, %v709
        %v714 = vmul.f32 %v710, %v710
        %v715 = vsel %vm689, %v711, 0.0
        %716 = vadd.xlane.f32.xlu0 %v715
        %v717 = vpop.xlane.xlu0 %716
        %v718 = vsel %vm689, %v712, 0.0
        %719 = vadd.xlane.f32.xlu0 %v718
        %v720 = vpop.xlane.xlu0 %719
        %v721 = vsel %vm689, %v713, 0.0
        %722 = vadd.xlane.f32.xlu0 %v721
        %v723 = vpop.xlane.xlu0 %722
        %v724 = vsel %vm689, %v714, 0.0
        %725 = vadd.xlane.f32.xlu0 %v724
        %v726 = vpop.xlane.xlu0 %725
        %v727 = vmul.f32 %v717, %v702
        %v728 = vmul.f32 %v720, %v702
        %v729 = vmul.f32 %v723, %v702
        %v730 = vmul.f32 %v726, %v702
        %v731 = vadd.f32 %v727, 1e-05
        %v732 = vadd.f32 %v728, 1e-05
        %v733 = vadd.f32 %v729, 1e-05
        %v734 = vadd.f32 %v730, 1e-05
        %v735 = vrsqrt.pop %v731
        %v736 = vrsqrt.pop %v732
        %v737 = vrsqrt.pop %v733
        %v738 = vrsqrt.pop %v734
        %v739 = vmul.f32 %v707, %v735
        %v740 = vmul.f32 %v708, %v736
        %v741 = vmul.f32 %v709, %v737
        %v742 = vmul.f32 %v710, %v738
        %v744 = vlaneseq
        %v745 = vshrl.u32 %v744, 7
        %v746 = vsub.s32 0, %v745
        %v747 = vrot.slane %v687, %v746
        %v749 = vmul.f32 %v739, %v747
        %v750 = vmul.f32 %v740, %v747
        %v751 = vmul.f32 %v741, %v747
        %v752 = vmul.f32 %v742, %v747
        %v754 = vlaneseq
        %v755 = vshrl.u32 %v754, 7
        %v756 = vsub.s32 0, %v755
        %v757 = vrot.slane %v688, %v756
        %v759 = vadd.f32 %v749, %v757
        %v760 = vadd.f32 %v750, %v757
        %v761 = vadd.f32 %v751, %v757
        %v762 = vadd.f32 %v752, %v757
        %v763 = vpack.c.bf16 %v760, %v759
        %v764 = vpack.c.bf16 %v762, %v761
        %v765 = vld [vmem:[%s656] sm:$0xf]
        %v766 = vld [vmem:[%s656 + $0x4] sm:$0xf]
        %v767 = vld [vmem:[%s656 + $0x8] sm:$0xf]
        %v768 = vld [vmem:[%s656 + $0xc] sm:$0xf]
        %v769 = vld [vmem:[%s659] sm:$0x1]
        %v771 = vlaneseq
        %v772 = vshrl.u32 %v771, 7
        %v773 = vsub.s32 0, %v772
        %v774 = vrot.slane %v769, %v773
        %v780 = vunpack.c.l.b16 %v765
        %v781 = vunpack.c.l.b16 %v766
        %v782 = vunpack.c.l.b16 %v767
        %v783 = vunpack.c.l.b16 %v768
        %v784 = vpack.c.b16 %v781, %v780
        %v785 = vpack.c.b16 %v783, %v782
        %v789 = vsel %vm689, %v763, 0
        %v792 = vsel %vm689, %v764, 0
        %794 = vmatprep.subr.bf16.mxu0 0
        %795 = vmatpush1.bf16.msra.mxu0 %v784
        %796 = vmatprep.subr.bf16.mxu0 0
        %797 = vmatpush1.bf16.msra.mxu0 %v785
        %798 = vmatprep.subr.bf16.mxu0 0
        %799 = vmatpush1.bf16.msra.mxu0 0
        %800 = vmatprep.subr.bf16.mxu0 0
        %801 = vmatpush1.bf16.msra.mxu0 0
        %802 = vmatprep.subr.bf16.mxu0 0
        %803 = vmatpush1.bf16.msra.mxu0 0
        %804 = vmatprep.subr.bf16.mxu0 0
        %805 = vmatpush1.bf16.msra.mxu0 0
        %806 = vmatprep.subr.bf16.mxu0 0
        %807 = vmatpush1.bf16.msra.mxu0 0
        %808 = vmatprep.subr.bf16.mxu0 0
        %809 = vmatpush1.bf16.msra.mxu0 0
        %810 = vmatprep.subr.bf16.mxu0 0
        %811 = vmatpush1.bf16.msra.mxu0 0
        %812 = vmatprep.subr.bf16.mxu0 0
        %813 = vmatpush1.bf16.msra.mxu0 0
        %814 = vmatprep.subr.bf16.mxu0 0
        %815 = vmatpush1.bf16.msra.mxu0 0
        %816 = vmatprep.subr.bf16.mxu0 0
        %817 = vmatpush1.bf16.msra.mxu0 0
        %818 = vmatprep.subr.bf16.mxu0 0
        %819 = vmatpush1.bf16.msra.mxu0 0
        %820 = vmatprep.subr.bf16.mxu0 0
        %821 = vmatpush1.bf16.msra.mxu0 0
        %822 = vmatprep.subr.bf16.mxu0 0
        %823 = vmatpush1.bf16.msra.mxu0 0
        %824 = vmatprep.subr.bf16.mxu0 0
        %825 = vmatpush1.bf16.msra.mxu0 0
        %826 = vmatprep.mubr.bf16.mxu0 0
        %827 = vmatmul.mubr.bf16.gmra.mrb[0].mxu0 %v789
        %v828 = vpop.f32.mrb[0].mxu0
        %v829 = vadd.f32 %v774, %v828
        %v830 = vpop.f32.mrb[0].mxu0
        %v831 = vpop.f32.mrb[0].mxu0
        %v832 = vadd.f32 %v774, %v831
        %v833 = vpop.f32.mrb[0].mxu0
        %834 = vmatprep.mubr.bf16.mxu0 0
        %835 = vmatmul.mubr.bf16.gmra.mrb[0].mxu0 %v792
        %v836 = vpop.f32.mrb[0].mxu0
        %v837 = vadd.f32 %v774, %v836
        %v838 = vpop.f32.mrb[0].mxu0
        %v839 = vpop.f32.mrb[0].mxu0
        %v840 = vadd.f32 %v774, %v839
        %v841 = vpop.f32.mrb[0].mxu0
        %842 = vdwg.mxu0
        %845 = vrot.lane.b32.xlu0 %v829, 120
        %v846 = vpop.permute.xlu0 %845
        %847 = vrot.lane.b32.xlu0 %v832, 120
        %v848 = vpop.permute.xlu0 %847
        %851 = vrot.lane.b32.xlu0 %v829, 112
        %v852 = vpop.permute.xlu0 %851
        %853 = vrot.lane.b32.xlu0 %v832, 112
        %v854 = vpop.permute.xlu0 %853
        %857 = vrot.lane.b32.xlu0 %v829, 104
        %v858 = vpop.permute.xlu0 %857
        %859 = vrot.lane.b32.xlu0 %v832, 104
        %v860 = vpop.permute.xlu0 %859
        %v863 = vcombine.low %v829, %v852
        %v864 = vcombine.high %v829, %v852
        %v866 = vunpack.c.l.s4 1983009808
        %v867 = vunpack.c.0.s8 %v866
        %v868 = vlaneseq
        %v869 = vshrl.u32 %v868, 7
        %v870 = vsub.s32 %v867, %v869
        %v871 = vrot.slane %v863, %v870
        %v873 = vunpack.c.l.s4 1983009808
        %v874 = vunpack.c.0.s8 %v873
        %v875 = vlaneseq
        %v876 = vshrl.u32 %v875, 7
        %v877 = vsub.s32 %v874, %v876
        %v878 = vrot.slane %v864, %v877
        %v879 = vcombine.low %v846, %v858
        %v880 = vcombine.high %v846, %v858
        %v882 = vunpack.c.l.s4 1983009808
        %v883 = vunpack.c.0.s8 %v882
        %v884 = vlaneseq
        %v885 = vshrl.u32 %v884, 7
        %v886 = vsub.s32 %v883, %v885
        %v887 = vrot.slane %v879, %v886
        %v889 = vunpack.c.l.s4 1983009808
        %v890 = vunpack.c.0.s8 %v889
        %v891 = vlaneseq
        %v892 = vshrl.u32 %v891, 7
        %v893 = vsub.s32 %v890, %v892
        %v894 = vrot.slane %v880, %v893
        %v895 = vcombine.low %v871, %v887
        %v896 = vcombine.high %v871, %v887
        %v898 = vunpack.c.l.s4 1934713408
        %v899 = vunpack.c.0.s8 %v898
        %v900 = vlaneseq
        %v901 = vshrl.u32 %v900, 7
        %v902 = vsub.s32 %v899, %v901
        %v903 = vrot.slane %v895, %v902
        %v905 = vunpack.c.l.s4 1934713408
        %v906 = vunpack.c.0.s8 %v905
        %v907 = vlaneseq
        %v908 = vshrl.u32 %v907, 7
        %v909 = vsub.s32 %v906, %v908
        %v910 = vrot.slane %v896, %v909
        %v911 = vcombine.low %v878, %v894
        %v912 = vcombine.high %v878, %v894
        %v914 = vunpack.c.l.s4 1934713408
        %v915 = vunpack.c.0.s8 %v914
        %v916 = vlaneseq
        %v917 = vshrl.u32 %v916, 7
        %v918 = vsub.s32 %v915, %v917
        %v919 = vrot.slane %v911, %v918
        %v921 = vunpack.c.l.s4 1934713408
        %v922 = vunpack.c.0.s8 %v921
        %v923 = vlaneseq
        %v924 = vshrl.u32 %v923, 7
        %v925 = vsub.s32 %v922, %v924
        %v926 = vrot.slane %v912, %v925
        %v927 = vcombine.high %v903, 0.0
        %v928 = vcombine.high %v910, 0.0
        %v929 = vcombine.high %v919, 0.0
        %v930 = vcombine.high %v926, 0.0
        %v931 = vcombine.low %v832, %v854
        %v932 = vcombine.high %v832, %v854
        %v934 = vunpack.c.l.s4 1983009808
        %v935 = vunpack.c.0.s8 %v934
        %v936 = vlaneseq
        %v937 = vshrl.u32 %v936, 7
        %v938 = vsub.s32 %v935, %v937
        %v939 = vrot.slane %v931, %v938
        %v941 = vunpack.c.l.s4 1983009808
        %v942 = vunpack.c.0.s8 %v941
        %v943 = vlaneseq
        %v944 = vshrl.u32 %v943, 7
        %v945 = vsub.s32 %v942, %v944
        %v946 = vrot.slane %v932, %v945
        %v947 = vcombine.low %v848, %v860
        %v948 = vcombine.high %v848, %v860
        %v950 = vunpack.c.l.s4 1983009808
        %v951 = vunpack.c.0.s8 %v950
        %v952 = vlaneseq
        %v953 = vshrl.u32 %v952, 7
        %v954 = vsub.s32 %v951, %v953
        %v955 = vrot.slane %v947, %v954
        %v957 = vunpack.c.l.s4 1983009808
        %v958 = vunpack.c.0.s8 %v957
        %v959 = vlaneseq
        %v960 = vshrl.u32 %v959, 7
        %v961 = vsub.s32 %v958, %v960
        %v962 = vrot.slane %v948, %v961
        %v963 = vcombine.low %v939, %v955
        %v964 = vcombine.high %v939, %v955
        %v966 = vunpack.c.l.s4 1934713408
        %v967 = vunpack.c.0.s8 %v966
        %v968 = vlaneseq
        %v969 = vshrl.u32 %v968, 7
        %v970 = vsub.s32 %v967, %v969
        %v971 = vrot.slane %v963, %v970
        %v973 = vunpack.c.l.s4 1934713408
        %v974 = vunpack.c.0.s8 %v973
        %v975 = vlaneseq
        %v976 = vshrl.u32 %v975, 7
        %v977 = vsub.s32 %v974, %v976
        %v978 = vrot.slane %v964, %v977
        %v979 = vcombine.low %v946, %v962
        %v980 = vcombine.high %v946, %v962
        %v982 = vunpack.c.l.s4 1934713408
        %v983 = vunpack.c.0.s8 %v982
        %v984 = vlaneseq
        %v985 = vshrl.u32 %v984, 7
        %v986 = vsub.s32 %v983, %v985
        %v987 = vrot.slane %v979, %v986
        %v989 = vunpack.c.l.s4 1934713408
        %v990 = vunpack.c.0.s8 %v989
        %v991 = vlaneseq
        %v992 = vshrl.u32 %v991, 7
        %v993 = vsub.s32 %v990, %v992
        %v994 = vrot.slane %v980, %v993
        %v995 = vcombine.high %v971, 0.0
        %v996 = vcombine.high %v978, 0.0
        %v997 = vcombine.high %v987, 0.0
        %v998 = vcombine.high %v994, 0.0
        %v999 = vcombine.low %v903, %v910
        %v1001 = vunpack.c.l.s4 1983009808
        %v1002 = vunpack.c.0.s8 %v1001
        %v1003 = vlaneseq
        %v1004 = vshrl.u32 %v1003, 7
        %v1005 = vsub.s32 %v1002, %v1004
        %v1006 = vrot.slane %v999, %v1005
        %v1007 = vcombine.low %v927, %v928
        %v1009 = vunpack.c.l.s4 1983009808
        %v1010 = vunpack.c.0.s8 %v1009
        %v1011 = vlaneseq
        %v1012 = vshrl.u32 %v1011, 7
        %v1013 = vsub.s32 %v1010, %v1012
        %v1014 = vrot.slane %v1007, %v1013
        %v1015 = vcombine.low %v919, %v926
        %v1017 = vunpack.c.l.s4 1983009808
        %v1018 = vunpack.c.0.s8 %v1017
        %v1019 = vlaneseq
        %v1020 = vshrl.u32 %v1019, 7
        %v1021 = vsub.s32 %v1018, %v1020
        %v1022 = vrot.slane %v1015, %v1021
        %v1023 = vcombine.low %v929, %v930
        %v1025 = vunpack.c.l.s4 1983009808
        %v1026 = vunpack.c.0.s8 %v1025
        %v1027 = vlaneseq
        %v1028 = vshrl.u32 %v1027, 7
        %v1029 = vsub.s32 %v1026, %v1028
        %v1030 = vrot.slane %v1023, %v1029
        %v1031 = vcombine.low %v1006, %v1014
        %v1032 = vcombine.high %v1006, %v1014
        %v1034 = vunpack.c.l.s4 1934713408
        %v1035 = vunpack.c.0.s8 %v1034
        %v1036 = vlaneseq
        %v1037 = vshrl.u32 %v1036, 7
        %v1038 = vsub.s32 %v1035, %v1037
        %v1039 = vrot.slane %v1031, %v1038
        %v1041 = vunpack.c.l.s4 1934713408
        %v1042 = vunpack.c.0.s8 %v1041
        %v1043 = vlaneseq
        %v1044 = vshrl.u32 %v1043, 7
        %v1045 = vsub.s32 %v1042, %v1044
        %v1046 = vrot.slane %v1032, %v1045
        %v1047 = vcombine.low %v1022, %v1030
        %v1048 = vcombine.high %v1022, %v1030
        %v1050 = vunpack.c.l.s4 1934713408
        %v1051 = vunpack.c.0.s8 %v1050
        %v1052 = vlaneseq
        %v1053 = vshrl.u32 %v1052, 7
        %v1054 = vsub.s32 %v1051, %v1053
        %v1055 = vrot.slane %v1047, %v1054
        %v1057 = vunpack.c.l.s4 1934713408
        %v1058 = vunpack.c.0.s8 %v1057
        %v1059 = vlaneseq
        %v1060 = vshrl.u32 %v1059, 7
        %v1061 = vsub.s32 %v1058, %v1060
        %v1062 = vrot.slane %v1048, %v1061
        %v1063 = vcombine.low %v1039, %v1055
        %v1064 = vcombine.high %v1039, %v1055
        %v1065 = vcombine.low %v1046, %v1062
        %v1066 = vcombine.high %v1046, %v1062
        %v1067 = vcombine.low %v971, %v978
        %v1069 = vunpack.c.l.s4 1983009808
        %v1070 = vunpack.c.0.s8 %v1069
        %v1071 = vlaneseq
        %v1072 = vshrl.u32 %v1071, 7
        %v1073 = vsub.s32 %v1070, %v1072
        %v1074 = vrot.slane %v1067, %v1073
        %v1075 = vcombine.low %v995, %v996
        %v1077 = vunpack.c.l.s4 1983009808
        %v1078 = vunpack.c.0.s8 %v1077
        %v1079 = vlaneseq
        %v1080 = vshrl.u32 %v1079, 7
        %v1081 = vsub.s32 %v1078, %v1080
        %v1082 = vrot.slane %v1075, %v1081
        %v1083 = vcombine.low %v987, %v994
        %v1085 = vunpack.c.l.s4 1983009808
        %v1086 = vunpack.c.0.s8 %v1085
        %v1087 = vlaneseq
        %v1088 = vshrl.u32 %v1087, 7
        %v1089 = vsub.s32 %v1086, %v1088
        %v1090 = vrot.slane %v1083, %v1089
        %v1091 = vcombine.low %v997, %v998
        %v1093 = vunpack.c.l.s4 1983009808
        %v1094 = vunpack.c.0.s8 %v1093
        %v1095 = vlaneseq
        %v1096 = vshrl.u32 %v1095, 7
        %v1097 = vsub.s32 %v1094, %v1096
        %v1098 = vrot.slane %v1091, %v1097
        %v1099 = vcombine.low %v1074, %v1082
        %v1100 = vcombine.high %v1074, %v1082
        %v1102 = vunpack.c.l.s4 1934713408
        %v1103 = vunpack.c.0.s8 %v1102
        %v1104 = vlaneseq
        %v1105 = vshrl.u32 %v1104, 7
        %v1106 = vsub.s32 %v1103, %v1105
        %v1107 = vrot.slane %v1099, %v1106
        %v1109 = vunpack.c.l.s4 1934713408
        %v1110 = vunpack.c.0.s8 %v1109
        %v1111 = vlaneseq
        %v1112 = vshrl.u32 %v1111, 7
        %v1113 = vsub.s32 %v1110, %v1112
        %v1114 = vrot.slane %v1100, %v1113
        %v1115 = vcombine.low %v1090, %v1098
        %v1116 = vcombine.high %v1090, %v1098
        %v1118 = vunpack.c.l.s4 1934713408
        %v1119 = vunpack.c.0.s8 %v1118
        %v1120 = vlaneseq
        %v1121 = vshrl.u32 %v1120, 7
        %v1122 = vsub.s32 %v1119, %v1121
        %v1123 = vrot.slane %v1115, %v1122
        %v1125 = vunpack.c.l.s4 1934713408
        %v1126 = vunpack.c.0.s8 %v1125
        %v1127 = vlaneseq
        %v1128 = vshrl.u32 %v1127, 7
        %v1129 = vsub.s32 %v1126, %v1128
        %v1130 = vrot.slane %v1116, %v1129
        %v1131 = vcombine.low %v1107, %v1123
        %v1132 = vcombine.high %v1107, %v1123
        %v1133 = vcombine.low %v1114, %v1130
        %v1134 = vcombine.high %v1114, %v1130
        %v1135 = vpack.c.bf16 %v1131, %v1063
        %v1136 = vpack.c.bf16 %v1132, %v1064
        %v1137 = vpack.c.bf16 %v1133, %v1065
        %v1138 = vpack.c.bf16 %v1134, %v1066
        %1139 = vrot.lane.b32.xlu0 %v829, 96
        %v1140 = vpop.permute.xlu0 %1139
        %1141 = vrot.lane.b32.xlu0 %v832, 96
        %v1142 = vpop.permute.xlu0 %1141
        %1143 = vrot.lane.b32.xlu0 %v846, 96
        %v1144 = vpop.permute.xlu0 %1143
        %1145 = vrot.lane.b32.xlu0 %v848, 96
        %v1146 = vpop.permute.xlu0 %1145
        %1147 = vrot.lane.b32.xlu0 %v852, 96
        %v1148 = vpop.permute.xlu0 %1147
        %1149 = vrot.lane.b32.xlu0 %v854, 96
        %v1150 = vpop.permute.xlu0 %1149
        %1151 = vrot.lane.b32.xlu0 %v858, 96
        %v1152 = vpop.permute.xlu0 %1151
        %1153 = vrot.lane.b32.xlu0 %v860, 96
        %v1154 = vpop.permute.xlu0 %1153
        %v1163 = vcombine.low %v1140, %v1148
        %v1164 = vcombine.high %v1140, %v1148
        %v1166 = vunpack.c.l.s4 1983009808
        %v1167 = vunpack.c.0.s8 %v1166
        %v1168 = vlaneseq
        %v1169 = vshrl.u32 %v1168, 7
        %v1170 = vsub.s32 %v1167, %v1169
        %v1171 = vrot.slane %v1163, %v1170
        %v1173 = vunpack.c.l.s4 1983009808
        %v1174 = vunpack.c.0.s8 %v1173
        %v1175 = vlaneseq
        %v1176 = vshrl.u32 %v1175, 7
        %v1177 = vsub.s32 %v1174, %v1176
        %v1178 = vrot.slane %v1164, %v1177
        %v1179 = vcombine.low %v1144, %v1152
        %v1180 = vcombine.high %v1144, %v1152
        %v1182 = vunpack.c.l.s4 1983009808
        %v1183 = vunpack.c.0.s8 %v1182
        %v1184 = vlaneseq
        %v1185 = vshrl.u32 %v1184, 7
        %v1186 = vsub.s32 %v1183, %v1185
        %v1187 = vrot.slane %v1179, %v1186
        %v1189 = vunpack.c.l.s4 1983009808
        %v1190 = vunpack.c.0.s8 %v1189
        %v1191 = vlaneseq
        %v1192 = vshrl.u32 %v1191, 7
        %v1193 = vsub.s32 %v1190, %v1192
        %v1194 = vrot.slane %v1180, %v1193
        %v1195 = vcombine.low %v1171, %v1187
        %v1196 = vcombine.high %v1171, %v1187
        %v1198 = vunpack.c.l.s4 1934713408
        %v1199 = vunpack.c.0.s8 %v1198
        %v1200 = vlaneseq
        %v1201 = vshrl.u32 %v1200, 7
        %v1202 = vsub.s32 %v1199, %v1201
        %v1203 = vrot.slane %v1195, %v1202
        %v1205 = vunpack.c.l.s4 1934713408
        %v1206 = vunpack.c.0.s8 %v1205
        %v1207 = vlaneseq
        %v1208 = vshrl.u32 %v1207, 7
        %v1209 = vsub.s32 %v1206, %v1208
        %v1210 = vrot.slane %v1196, %v1209
        %v1211 = vcombine.low %v1178, %v1194
        %v1212 = vcombine.high %v1178, %v1194
        %v1214 = vunpack.c.l.s4 1934713408
        %v1215 = vunpack.c.0.s8 %v1214
        %v1216 = vlaneseq
        %v1217 = vshrl.u32 %v1216, 7
        %v1218 = vsub.s32 %v1215, %v1217
        %v1219 = vrot.slane %v1211, %v1218
        %v1221 = vunpack.c.l.s4 1934713408
        %v1222 = vunpack.c.0.s8 %v1221
        %v1223 = vlaneseq
        %v1224 = vshrl.u32 %v1223, 7
        %v1225 = vsub.s32 %v1222, %v1224
        %v1226 = vrot.slane %v1212, %v1225
        %v1227 = vcombine.high %v1203, 0.0
        %v1228 = vcombine.high %v1210, 0.0
        %v1229 = vcombine.high %v1219, 0.0
        %v1230 = vcombine.high %v1226, 0.0
        %v1231 = vcombine.low %v1142, %v1150
        %v1232 = vcombine.high %v1142, %v1150
        %v1234 = vunpack.c.l.s4 1983009808
        %v1235 = vunpack.c.0.s8 %v1234
        %v1236 = vlaneseq
        %v1237 = vshrl.u32 %v1236, 7
        %v1238 = vsub.s32 %v1235, %v1237
        %v1239 = vrot.slane %v1231, %v1238
        %v1241 = vunpack.c.l.s4 1983009808
        %v1242 = vunpack.c.0.s8 %v1241
        %v1243 = vlaneseq
        %v1244 = vshrl.u32 %v1243, 7
        %v1245 = vsub.s32 %v1242, %v1244
        %v1246 = vrot.slane %v1232, %v1245
        %v1247 = vcombine.low %v1146, %v1154
        %v1248 = vcombine.high %v1146, %v1154
        %v1250 = vunpack.c.l.s4 1983009808
        %v1251 = vunpack.c.0.s8 %v1250
        %v1252 = vlaneseq
        %v1253 = vshrl.u32 %v1252, 7
        %v1254 = vsub.s32 %v1251, %v1253
        %v1255 = vrot.slane %v1247, %v1254
        %v1257 = vunpack.c.l.s4 1983009808
        %v1258 = vunpack.c.0.s8 %v1257
        %v1259 = vlaneseq
        %v1260 = vshrl.u32 %v1259, 7
        %v1261 = vsub.s32 %v1258, %v1260
        %v1262 = vrot.slane %v1248, %v1261
        %v1263 = vcombine.low %v1239, %v1255
        %v1264 = vcombine.high %v1239, %v1255
        %v1266 = vunpack.c.l.s4 1934713408
        %v1267 = vunpack.c.0.s8 %v1266
        %v1268 = vlaneseq
        %v1269 = vshrl.u32 %v1268, 7
        %v1270 = vsub.s32 %v1267, %v1269
        %v1271 = vrot.slane %v1263, %v1270
        %v1273 = vunpack.c.l.s4 1934713408
        %v1274 = vunpack.c.0.s8 %v1273
        %v1275 = vlaneseq
        %v1276 = vshrl.u32 %v1275, 7
        %v1277 = vsub.s32 %v1274, %v1276
        %v1278 = vrot.slane %v1264, %v1277
        %v1279 = vcombine.low %v1246, %v1262
        %v1280 = vcombine.high %v1246, %v1262
        %v1282 = vunpack.c.l.s4 1934713408
        %v1283 = vunpack.c.0.s8 %v1282
        %v1284 = vlaneseq
        %v1285 = vshrl.u32 %v1284, 7
        %v1286 = vsub.s32 %v1283, %v1285
        %v1287 = vrot.slane %v1279, %v1286
        %v1289 = vunpack.c.l.s4 1934713408
        %v1290 = vunpack.c.0.s8 %v1289
        %v1291 = vlaneseq
        %v1292 = vshrl.u32 %v1291, 7
        %v1293 = vsub.s32 %v1290, %v1292
        %v1294 = vrot.slane %v1280, %v1293
        %v1295 = vcombine.high %v1271, 0.0
        %v1296 = vcombine.high %v1278, 0.0
        %v1297 = vcombine.high %v1287, 0.0
        %v1298 = vcombine.high %v1294, 0.0
        %v1299 = vcombine.low %v1203, %v1210
        %v1301 = vunpack.c.l.s4 1983009808
        %v1302 = vunpack.c.0.s8 %v1301
        %v1303 = vlaneseq
        %v1304 = vshrl.u32 %v1303, 7
        %v1305 = vsub.s32 %v1302, %v1304
        %v1306 = vrot.slane %v1299, %v1305
        %v1307 = vcombine.low %v1227, %v1228
        %v1309 = vunpack.c.l.s4 1983009808
        %v1310 = vunpack.c.0.s8 %v1309
        %v1311 = vlaneseq
        %v1312 = vshrl.u32 %v1311, 7
        %v1313 = vsub.s32 %v1310, %v1312
        %v1314 = vrot.slane %v1307, %v1313
        %v1315 = vcombine.low %v1219, %v1226
        %v1317 = vunpack.c.l.s4 1983009808
        %v1318 = vunpack.c.0.s8 %v1317
        %v1319 = vlaneseq
        %v1320 = vshrl.u32 %v1319, 7
        %v1321 = vsub.s32 %v1318, %v1320
        %v1322 = vrot.slane %v1315, %v1321
        %v1323 = vcombine.low %v1229, %v1230
        %v1325 = vunpack.c.l.s4 1983009808
        %v1326 = vunpack.c.0.s8 %v1325
        %v1327 = vlaneseq
        %v1328 = vshrl.u32 %v1327, 7
        %v1329 = vsub.s32 %v1326, %v1328
        %v1330 = vrot.slane %v1323, %v1329
        %v1331 = vcombine.low %v1306, %v1314
        %v1332 = vcombine.high %v1306, %v1314
        %v1334 = vunpack.c.l.s4 1934713408
        %v1335 = vunpack.c.0.s8 %v1334
        %v1336 = vlaneseq
        %v1337 = vshrl.u32 %v1336, 7
        %v1338 = vsub.s32 %v1335, %v1337
        %v1339 = vrot.slane %v1331, %v1338
        %v1341 = vunpack.c.l.s4 1934713408
        %v1342 = vunpack.c.0.s8 %v1341
        %v1343 = vlaneseq
        %v1344 = vshrl.u32 %v1343, 7
        %v1345 = vsub.s32 %v1342, %v1344
        %v1346 = vrot.slane %v1332, %v1345
        %v1347 = vcombine.low %v1322, %v1330
        %v1348 = vcombine.high %v1322, %v1330
        %v1350 = vunpack.c.l.s4 1934713408
        %v1351 = vunpack.c.0.s8 %v1350
        %v1352 = vlaneseq
        %v1353 = vshrl.u32 %v1352, 7
        %v1354 = vsub.s32 %v1351, %v1353
        %v1355 = vrot.slane %v1347, %v1354
        %v1357 = vunpack.c.l.s4 1934713408
        %v1358 = vunpack.c.0.s8 %v1357
        %v1359 = vlaneseq
        %v1360 = vshrl.u32 %v1359, 7
        %v1361 = vsub.s32 %v1358, %v1360
        %v1362 = vrot.slane %v1348, %v1361
        %v1363 = vcombine.low %v1339, %v1355
        %v1364 = vcombine.high %v1339, %v1355
        %v1365 = vcombine.low %v1346, %v1362
        %v1366 = vcombine.high %v1346, %v1362
        %v1367 = vcombine.low %v1271, %v1278
        %v1369 = vunpack.c.l.s4 1983009808
        %v1370 = vunpack.c.0.s8 %v1369
        %v1371 = vlaneseq
        %v1372 = vshrl.u32 %v1371, 7
        %v1373 = vsub.s32 %v1370, %v1372
        %v1374 = vrot.slane %v1367, %v1373
        %v1375 = vcombine.low %v1295, %v1296
        %v1377 = vunpack.c.l.s4 1983009808
        %v1378 = vunpack.c.0.s8 %v1377
        %v1379 = vlaneseq
        %v1380 = vshrl.u32 %v1379, 7
        %v1381 = vsub.s32 %v1378, %v1380
        %v1382 = vrot.slane %v1375, %v1381
        %v1383 = vcombine.low %v1287, %v1294
        %v1385 = vunpack.c.l.s4 1983009808
        %v1386 = vunpack.c.0.s8 %v1385
        %v1387 = vlaneseq
        %v1388 = vshrl.u32 %v1387, 7
        %v1389 = vsub.s32 %v1386, %v1388
        %v1390 = vrot.slane %v1383, %v1389
        %v1391 = vcombine.low %v1297, %v1298
        %v1393 = vunpack.c.l.s4 1983009808
        %v1394 = vunpack.c.0.s8 %v1393
        %v1395 = vlaneseq
        %v1396 = vshrl.u32 %v1395, 7
        %v1397 = vsub.s32 %v1394, %v1396
        %v1398 = vrot.slane %v1391, %v1397
        %v1399 = vcombine.low %v1374, %v1382
        %v1400 = vcombine.high %v1374, %v1382
        %v1402 = vunpack.c.l.s4 1934713408
        %v1403 = vunpack.c.0.s8 %v1402
        %v1404 = vlaneseq
        %v1405 = vshrl.u32 %v1404, 7
        %v1406 = vsub.s32 %v1403, %v1405
        %v1407 = vrot.slane %v1399, %v1406
        %v1409 = vunpack.c.l.s4 1934713408
        %v1410 = vunpack.c.0.s8 %v1409
        %v1411 = vlaneseq
        %v1412 = vshrl.u32 %v1411, 7
        %v1413 = vsub.s32 %v1410, %v1412
        %v1414 = vrot.slane %v1400, %v1413
        %v1415 = vcombine.low %v1390, %v1398
        %v1416 = vcombine.high %v1390, %v1398
        %v1418 = vunpack.c.l.s4 1934713408
        %v1419 = vunpack.c.0.s8 %v1418
        %v1420 = vlaneseq
        %v1421 = vshrl.u32 %v1420, 7
        %v1422 = vsub.s32 %v1419, %v1421
        %v1423 = vrot.slane %v1415, %v1422
        %v1425 = vunpack.c.l.s4 1934713408
        %v1426 = vunpack.c.0.s8 %v1425
        %v1427 = vlaneseq
        %v1428 = vshrl.u32 %v1427, 7
        %v1429 = vsub.s32 %v1426, %v1428
        %v1430 = vrot.slane %v1416, %v1429
        %v1431 = vcombine.low %v1407, %v1423
        %v1432 = vcombine.high %v1407, %v1423
        %v1433 = vcombine.low %v1414, %v1430
        %v1434 = vcombine.high %v1414, %v1430
        %v1435 = vpack.c.bf16 %v1431, %v1363
        %v1436 = vpack.c.bf16 %v1432, %v1364
        %v1437 = vpack.c.bf16 %v1433, %v1365
        %v1438 = vpack.c.bf16 %v1434, %v1366
        %1439 = vrot.lane.b32.xlu0 %v829, 64
        %v1440 = vpop.permute.xlu0 %1439
        %1441 = vrot.lane.b32.xlu0 %v832, 64
        %v1442 = vpop.permute.xlu0 %1441
        %1443 = vrot.lane.b32.xlu0 %v846, 64
        %v1444 = vpop.permute.xlu0 %1443
        %1445 = vrot.lane.b32.xlu0 %v848, 64
        %v1446 = vpop.permute.xlu0 %1445
        %1447 = vrot.lane.b32.xlu0 %v852, 64
        %v1448 = vpop.permute.xlu0 %1447
        %1449 = vrot.lane.b32.xlu0 %v854, 64
        %v1450 = vpop.permute.xlu0 %1449
        %1451 = vrot.lane.b32.xlu0 %v858, 64
        %v1452 = vpop.permute.xlu0 %1451
        %1453 = vrot.lane.b32.xlu0 %v860, 64
        %v1454 = vpop.permute.xlu0 %1453
        %v1463 = vcombine.low %v1440, %v1448
        %v1464 = vcombine.high %v1440, %v1448
        %v1466 = vunpack.c.l.s4 1983009808
        %v1467 = vunpack.c.0.s8 %v1466
        %v1468 = vlaneseq
        %v1469 = vshrl.u32 %v1468, 7
        %v1470 = vsub.s32 %v1467, %v1469
        %v1471 = vrot.slane %v1463, %v1470
        %v1473 = vunpack.c.l.s4 1983009808
        %v1474 = vunpack.c.0.s8 %v1473
        %v1475 = vlaneseq
        %v1476 = vshrl.u32 %v1475, 7
        %v1477 = vsub.s32 %v1474, %v1476
        %v1478 = vrot.slane %v1464, %v1477
        %v1479 = vcombine.low %v1444, %v1452
        %v1480 = vcombine.high %v1444, %v1452
        %v1482 = vunpack.c.l.s4 1983009808
        %v1483 = vunpack.c.0.s8 %v1482
        %v1484 = vlaneseq
        %v1485 = vshrl.u32 %v1484, 7
        %v1486 = vsub.s32 %v1483, %v1485
        %v1487 = vrot.slane %v1479, %v1486
        %v1489 = vunpack.c.l.s4 1983009808
        %v1490 = vunpack.c.0.s8 %v1489
        %v1491 = vlaneseq
        %v1492 = vshrl.u32 %v1491, 7
        %v1493 = vsub.s32 %v1490, %v1492
        %v1494 = vrot.slane %v1480, %v1493
        %v1495 = vcombine.low %v1471, %v1487
        %v1496 = vcombine.high %v1471, %v1487
        %v1498 = vunpack.c.l.s4 1934713408
        %v1499 = vunpack.c.0.s8 %v1498
        %v1500 = vlaneseq
        %v1501 = vshrl.u32 %v1500, 7
        %v1502 = vsub.s32 %v1499, %v1501
        %v1503 = vrot.slane %v1495, %v1502
        %v1505 = vunpack.c.l.s4 1934713408
        %v1506 = vunpack.c.0.s8 %v1505
        %v1507 = vlaneseq
        %v1508 = vshrl.u32 %v1507, 7
        %v1509 = vsub.s32 %v1506, %v1508
        %v1510 = vrot.slane %v1496, %v1509
        %v1511 = vcombine.low %v1478, %v1494
        %v1512 = vcombine.high %v1478, %v1494
        %v1514 = vunpack.c.l.s4 1934713408
        %v1515 = vunpack.c.0.s8 %v1514
        %v1516 = vlaneseq
        %v1517 = vshrl.u32 %v1516, 7
        %v1518 = vsub.s32 %v1515, %v1517
        %v1519 = vrot.slane %v1511, %v1518
        %v1521 = vunpack.c.l.s4 1934713408
        %v1522 = vunpack.c.0.s8 %v1521
        %v1523 = vlaneseq
        %v1524 = vshrl.u32 %v1523, 7
        %v1525 = vsub.s32 %v1522, %v1524
        %v1526 = vrot.slane %v1512, %v1525
        %v1527 = vcombine.high %v1503, 0.0
        %v1528 = vcombine.high %v1510, 0.0
        %v1529 = vcombine.high %v1519, 0.0
        %v1530 = vcombine.high %v1526, 0.0
        %v1531 = vcombine.low %v1442, %v1450
        %v1532 = vcombine.high %v1442, %v1450
        %v1534 = vunpack.c.l.s4 1983009808
        %v1535 = vunpack.c.0.s8 %v1534
        %v1536 = vlaneseq
        %v1537 = vshrl.u32 %v1536, 7
        %v1538 = vsub.s32 %v1535, %v1537
        %v1539 = vrot.slane %v1531, %v1538
        %v1541 = vunpack.c.l.s4 1983009808
        %v1542 = vunpack.c.0.s8 %v1541
        %v1543 = vlaneseq
        %v1544 = vshrl.u32 %v1543, 7
        %v1545 = vsub.s32 %v1542, %v1544
        %v1546 = vrot.slane %v1532, %v1545
        %v1547 = vcombine.low %v1446, %v1454
        %v1548 = vcombine.high %v1446, %v1454
        %v1550 = vunpack.c.l.s4 1983009808
        %v1551 = vunpack.c.0.s8 %v1550
        %v1552 = vlaneseq
        %v1553 = vshrl.u32 %v1552, 7
        %v1554 = vsub.s32 %v1551, %v1553
        %v1555 = vrot.slane %v1547, %v1554
        %v1557 = vunpack.c.l.s4 1983009808
        %v1558 = vunpack.c.0.s8 %v1557
        %v1559 = vlaneseq
        %v1560 = vshrl.u32 %v1559, 7
        %v1561 = vsub.s32 %v1558, %v1560
        %v1562 = vrot.slane %v1548, %v1561
        %v1563 = vcombine.low %v1539, %v1555
        %v1564 = vcombine.high %v1539, %v1555
        %v1566 = vunpack.c.l.s4 1934713408
        %v1567 = vunpack.c.0.s8 %v1566
        %v1568 = vlaneseq
        %v1569 = vshrl.u32 %v1568, 7
        %v1570 = vsub.s32 %v1567, %v1569
        %v1571 = vrot.slane %v1563, %v1570
        %v1573 = vunpack.c.l.s4 1934713408
        %v1574 = vunpack.c.0.s8 %v1573
        %v1575 = vlaneseq
        %v1576 = vshrl.u32 %v1575, 7
        %v1577 = vsub.s32 %v1574, %v1576
        %v1578 = vrot.slane %v1564, %v1577
        %v1579 = vcombine.low %v1546, %v1562
        %v1580 = vcombine.high %v1546, %v1562
        %v1582 = vunpack.c.l.s4 1934713408
        %v1583 = vunpack.c.0.s8 %v1582
        %v1584 = vlaneseq
        %v1585 = vshrl.u32 %v1584, 7
        %v1586 = vsub.s32 %v1583, %v1585
        %v1587 = vrot.slane %v1579, %v1586
        %v1589 = vunpack.c.l.s4 1934713408
        %v1590 = vunpack.c.0.s8 %v1589
        %v1591 = vlaneseq
        %v1592 = vshrl.u32 %v1591, 7
        %v1593 = vsub.s32 %v1590, %v1592
        %v1594 = vrot.slane %v1580, %v1593
        %v1595 = vcombine.high %v1571, 0.0
        %v1596 = vcombine.high %v1578, 0.0
        %v1597 = vcombine.high %v1587, 0.0
        %v1598 = vcombine.high %v1594, 0.0
        %v1599 = vcombine.low %v1503, %v1510
        %v1601 = vunpack.c.l.s4 1983009808
        %v1602 = vunpack.c.0.s8 %v1601
        %v1603 = vlaneseq
        %v1604 = vshrl.u32 %v1603, 7
        %v1605 = vsub.s32 %v1602, %v1604
        %v1606 = vrot.slane %v1599, %v1605
        %v1607 = vcombine.low %v1527, %v1528
        %v1609 = vunpack.c.l.s4 1983009808
        %v1610 = vunpack.c.0.s8 %v1609
        %v1611 = vlaneseq
        %v1612 = vshrl.u32 %v1611, 7
        %v1613 = vsub.s32 %v1610, %v1612
        %v1614 = vrot.slane %v1607, %v1613
        %v1615 = vcombine.low %v1519, %v1526
        %v1617 = vunpack.c.l.s4 1983009808
        %v1618 = vunpack.c.0.s8 %v1617
        %v1619 = vlaneseq
        %v1620 = vshrl.u32 %v1619, 7
        %v1621 = vsub.s32 %v1618, %v1620
        %v1622 = vrot.slane %v1615, %v1621
        %v1623 = vcombine.low %v1529, %v1530
        %v1625 = vunpack.c.l.s4 1983009808
        %v1626 = vunpack.c.0.s8 %v1625
        %v1627 = vlaneseq
        %v1628 = vshrl.u32 %v1627, 7
        %v1629 = vsub.s32 %v1626, %v1628
        %v1630 = vrot.slane %v1623, %v1629
        %v1631 = vcombine.low %v1606, %v1614
        %v1632 = vcombine.high %v1606, %v1614
        %v1634 = vunpack.c.l.s4 1934713408
        %v1635 = vunpack.c.0.s8 %v1634
        %v1636 = vlaneseq
        %v1637 = vshrl.u32 %v1636, 7
        %v1638 = vsub.s32 %v1635, %v1637
        %v1639 = vrot.slane %v1631, %v1638
        %v1641 = vunpack.c.l.s4 1934713408
        %v1642 = vunpack.c.0.s8 %v1641
        %v1643 = vlaneseq
        %v1644 = vshrl.u32 %v1643, 7
        %v1645 = vsub.s32 %v1642, %v1644
        %v1646 = vrot.slane %v1632, %v1645
        %v1647 = vcombine.low %v1622, %v1630
        %v1648 = vcombine.high %v1622, %v1630
        %v1650 = vunpack.c.l.s4 1934713408
        %v1651 = vunpack.c.0.s8 %v1650
        %v1652 = vlaneseq
        %v1653 = vshrl.u32 %v1652, 7
        %v1654 = vsub.s32 %v1651, %v1653
        %v1655 = vrot.slane %v1647, %v1654
        %v1657 = vunpack.c.l.s4 1934713408
        %v1658 = vunpack.c.0.s8 %v1657
        %v1659 = vlaneseq
        %v1660 = vshrl.u32 %v1659, 7
        %v1661 = vsub.s32 %v1658, %v1660
        %v1662 = vrot.slane %v1648, %v1661
        %v1663 = vcombine.low %v1639, %v1655
        %v1664 = vcombine.high %v1639, %v1655
        %v1665 = vcombine.low %v1646, %v1662
        %v1666 = vcombine.high %v1646, %v1662
        %v1667 = vcombine.low %v1571, %v1578
        %v1669 = vunpack.c.l.s4 1983009808
        %v1670 = vunpack.c.0.s8 %v1669
        %v1671 = vlaneseq
        %v1672 = vshrl.u32 %v1671, 7
        %v1673 = vsub.s32 %v1670, %v1672
        %v1674 = vrot.slane %v1667, %v1673
        %v1675 = vcombine.low %v1595, %v1596
        %v1677 = vunpack.c.l.s4 1983009808
        %v1678 = vunpack.c.0.s8 %v1677
        %v1679 = vlaneseq
        %v1680 = vshrl.u32 %v1679, 7
        %v1681 = vsub.s32 %v1678, %v1680
        %v1682 = vrot.slane %v1675, %v1681
        %v1683 = vcombine.low %v1587, %v1594
        %v1685 = vunpack.c.l.s4 1983009808
        %v1686 = vunpack.c.0.s8 %v1685
        %v1687 = vlaneseq
        %v1688 = vshrl.u32 %v1687, 7
        %v1689 = vsub.s32 %v1686, %v1688
        %v1690 = vrot.slane %v1683, %v1689
        %v1691 = vcombine.low %v1597, %v1598
        %v1693 = vunpack.c.l.s4 1983009808
        %v1694 = vunpack.c.0.s8 %v1693
        %v1695 = vlaneseq
        %v1696 = vshrl.u32 %v1695, 7
        %v1697 = vsub.s32 %v1694, %v1696
        %v1698 = vrot.slane %v1691, %v1697
        %v1699 = vcombine.low %v1674, %v1682
        %v1700 = vcombine.high %v1674, %v1682
        %v1702 = vunpack.c.l.s4 1934713408
        %v1703 = vunpack.c.0.s8 %v1702
        %v1704 = vlaneseq
        %v1705 = vshrl.u32 %v1704, 7
        %v1706 = vsub.s32 %v1703, %v1705
        %v1707 = vrot.slane %v1699, %v1706
        %v1709 = vunpack.c.l.s4 1934713408
        %v1710 = vunpack.c.0.s8 %v1709
        %v1711 = vlaneseq
        %v1712 = vshrl.u32 %v1711, 7
        %v1713 = vsub.s32 %v1710, %v1712
        %v1714 = vrot.slane %v1700, %v1713
        %v1715 = vcombine.low %v1690, %v1698
        %v1716 = vcombine.high %v1690, %v1698
        %v1718 = vunpack.c.l.s4 1934713408
        %v1719 = vunpack.c.0.s8 %v1718
        %v1720 = vlaneseq
        %v1721 = vshrl.u32 %v1720, 7
        %v1722 = vsub.s32 %v1719, %v1721
        %v1723 = vrot.slane %v1715, %v1722
        %v1725 = vunpack.c.l.s4 1934713408
        %v1726 = vunpack.c.0.s8 %v1725
        %v1727 = vlaneseq
        %v1728 = vshrl.u32 %v1727, 7
        %v1729 = vsub.s32 %v1726, %v1728
        %v1730 = vrot.slane %v1716, %v1729
        %v1731 = vcombine.low %v1707, %v1723
        %v1732 = vcombine.high %v1707, %v1723
        %v1733 = vcombine.low %v1714, %v1730
        %v1734 = vcombine.high %v1714, %v1730
        %v1735 = vpack.c.bf16 %v1731, %v1663
        %v1736 = vpack.c.bf16 %v1732, %v1664
        %v1737 = vpack.c.bf16 %v1733, %v1665
        %v1738 = vpack.c.bf16 %v1734, %v1666
        %vm1739 = vcmask 64512
        %v1741 = vsel %vm1739, %v1135, 0
        %v1744 = vsel %vm1739, %v1435, 0
        %1746 = vmatprep.subr.bf16.mxu0 0
        %1747 = vmatpush1.bf16.xpose.msra.mxu0 %v1744
        %1748 = vmatprep.subr.bf16.mxu0 0
        %1749 = vmatpush1.bf16.xpose.msra.mxu0 0
        %1750 = vmatprep.subr.bf16.mxu0 0
        %1751 = vmatpush1.bf16.xpose.msra.mxu0 0
        %1752 = vmatprep.subr.bf16.mxu0 0
        %1753 = vmatpush1.bf16.xpose.msra.mxu0 0
        %1754 = vmatprep.subr.bf16.mxu0 0
        %1755 = vmatpush1.bf16.xpose.msra.mxu0 0
        %1756 = vmatprep.subr.bf16.mxu0 0
        %1757 = vmatpush1.bf16.xpose.msra.mxu0 0
        %1758 = vmatprep.subr.bf16.mxu0 0
        %1759 = vmatpush1.bf16.xpose.msra.mxu0 0
        %1760 = vmatprep.subr.bf16.mxu0 0
        %1761 = vmatpush1.bf16.xpose.msra.mxu0 0
        %1762 = vmatprep.subr.bf16.mxu0 0
        %1763 = vmatpush1.bf16.xpose.msra.mxu0 0
        %1764 = vmatprep.subr.bf16.mxu0 0
        %1765 = vmatpush1.bf16.xpose.msra.mxu0 0
        %1766 = vmatprep.subr.bf16.mxu0 0
        %1767 = vmatpush1.bf16.xpose.msra.mxu0 0
        %1768 = vmatprep.subr.bf16.mxu0 0
        %1769 = vmatpush1.bf16.xpose.msra.mxu0 0
        %1770 = vmatprep.subr.bf16.mxu0 0
        %1771 = vmatpush1.bf16.xpose.msra.mxu0 0
        %1772 = vmatprep.subr.bf16.mxu0 0
        %1773 = vmatpush1.bf16.xpose.msra.mxu0 0
        %1774 = vmatprep.subr.bf16.mxu0 0
        %1775 = vmatpush1.bf16.xpose.msra.mxu0 0
        %1776 = vmatprep.subr.bf16.mxu0 0
        %1777 = vmatpush1.bf16.xpose.msra.mxu0 0
        %1778 = vmatprep.mubr.bf16.mxu0 0
        %1779 = vmatmul.mubr.bf16.gmra.mrb[0].mxu0 %v1741
        %v1780 = vpop.f32.mrb[0].mxu0
        %v1781 = vadd.f32 0.0, %v1780
        %v1782 = vpop.f32.mrb[0].mxu0
        %v1783 = vpop.f32.mrb[0].mxu0
        %v1784 = vadd.f32 0.0, %v1783
        %v1785 = vpop.f32.mrb[0].mxu0
        %1786 = vdwg.mxu0
        %v1788 = vsel %vm1739, %v1136, 0
        %v1791 = vsel %vm1739, %v1436, 0
        %1793 = vmatprep.subr.bf16.mxu0 0
        %1794 = vmatpush1.bf16.xpose.msra.mxu0 %v1791
        %1795 = vmatprep.subr.bf16.mxu0 0
        %1796 = vmatpush1.bf16.xpose.msra.mxu0 0
        %1797 = vmatprep.subr.bf16.mxu0 0
        %1798 = vmatpush1.bf16.xpose.msra.mxu0 0
        %1799 = vmatprep.subr.bf16.mxu0 0
        %1800 = vmatpush1.bf16.xpose.msra.mxu0 0
        %1801 = vmatprep.subr.bf16.mxu0 0
        %1802 = vmatpush1.bf16.xpose.msra.mxu0 0
        %1803 = vmatprep.subr.bf16.mxu0 0
        %1804 = vmatpush1.bf16.xpose.msra.mxu0 0
        %1805 = vmatprep.subr.bf16.mxu0 0
        %1806 = vmatpush1.bf16.xpose.msra.mxu0 0
        %1807 = vmatprep.subr.bf16.mxu0 0
        %1808 = vmatpush1.bf16.xpose.msra.mxu0 0
        %1809 = vmatprep.subr.bf16.mxu0 0
        %1810 = vmatpush1.bf16.xpose.msra.mxu0 0
        %1811 = vmatprep.subr.bf16.mxu0 0
        %1812 = vmatpush1.bf16.xpose.msra.mxu0 0
        %1813 = vmatprep.subr.bf16.mxu0 0
        %1814 = vmatpush1.bf16.xpose.msra.mxu0 0
        %1815 = vmatprep.subr.bf16.mxu0 0
        %1816 = vmatpush1.bf16.xpose.msra.mxu0 0
        %1817 = vmatprep.subr.bf16.mxu0 0
        %1818 = vmatpush1.bf16.xpose.msra.mxu0 0
        %1819 = vmatprep.subr.bf16.mxu0 0
        %1820 = vmatpush1.bf16.xpose.msra.mxu0 0
        %1821 = vmatprep.subr.bf16.mxu0 0
        %1822 = vmatpush1.bf16.xpose.msra.mxu0 0
        %1823 = vmatprep.subr.bf16.mxu0 0
        %1824 = vmatpush1.bf16.xpose.msra.mxu0 0
        %1825 = vmatprep.mubr.bf16.mxu0 0
        %1826 = vmatmul.mubr.bf16.gmra.mrb[0].mxu0 %v1788
        %v1827 = vpop.f32.mrb[0].mxu0
        %v1828 = vadd.f32 0.0, %v1827
        %v1829 = vpop.f32.mrb[0].mxu0
        %v1830 = vpop.f32.mrb[0].mxu0
        %v1831 = vadd.f32 0.0, %v1830
        %v1832 = vpop.f32.mrb[0].mxu0
        %1833 = vdwg.mxu0
        %v1835 = vsel %vm1739, %v1137, 0
        %v1838 = vsel %vm1739, %v1437, 0
        %1840 = vmatprep.subr.bf16.mxu0 0
        %1841 = vmatpush1.bf16.xpose.msra.mxu0 %v1838
        %1842 = vmatprep.subr.bf16.mxu0 0
        %1843 = vmatpush1.bf16.xpose.msra.mxu0 0
        %1844 = vmatprep.subr.bf16.mxu0 0
        %1845 = vmatpush1.bf16.xpose.msra.mxu0 0
        %1846 = vmatprep.subr.bf16.mxu0 0
        %1847 = vmatpush1.bf16.xpose.msra.mxu0 0
        %1848 = vmatprep.subr.bf16.mxu0 0
        %1849 = vmatpush1.bf16.xpose.msra.mxu0 0
        %1850 = vmatprep.subr.bf16.mxu0 0
        %1851 = vmatpush1.bf16.xpose.msra.mxu0 0
        %1852 = vmatprep.subr.bf16.mxu0 0
        %1853 = vmatpush1.bf16.xpose.msra.mxu0 0
        %1854 = vmatprep.subr.bf16.mxu0 0
        %1855 = vmatpush1.bf16.xpose.msra.mxu0 0
        %1856 = vmatprep.subr.bf16.mxu0 0
        %1857 = vmatpush1.bf16.xpose.msra.mxu0 0
        %1858 = vmatprep.subr.bf16.mxu0 0
        %1859 = vmatpush1.bf16.xpose.msra.mxu0 0
        %1860 = vmatprep.subr.bf16.mxu0 0
        %1861 = vmatpush1.bf16.xpose.msra.mxu0 0
        %1862 = vmatprep.subr.bf16.mxu0 0
        %1863 = vmatpush1.bf16.xpose.msra.mxu0 0
        %1864 = vmatprep.subr.bf16.mxu0 0
        %1865 = vmatpush1.bf16.xpose.msra.mxu0 0
        %1866 = vmatprep.subr.bf16.mxu0 0
        %1867 = vmatpush1.bf16.xpose.msra.mxu0 0
        %1868 = vmatprep.subr.bf16.mxu0 0
        %1869 = vmatpush1.bf16.xpose.msra.mxu0 0
        %1870 = vmatprep.subr.bf16.mxu0 0
        %1871 = vmatpush1.bf16.xpose.msra.mxu0 0
        %1872 = vmatprep.mubr.bf16.mxu0 0
        %1873 = vmatmul.mubr.bf16.gmra.mrb[0].mxu0 %v1835
        %v1874 = vpop.f32.mrb[0].mxu0
        %v1875 = vadd.f32 0.0, %v1874
        %v1876 = vpop.f32.mrb[0].mxu0
        %v1877 = vpop.f32.mrb[0].mxu0
        %v1878 = vadd.f32 0.0, %v1877
        %v1879 = vpop.f32.mrb[0].mxu0
        %1880 = vdwg.mxu0
        %v1882 = vsel %vm1739, %v1138, 0
        %v1885 = vsel %vm1739, %v1438, 0
        %1887 = vmatprep.subr.bf16.mxu0 0
        %1888 = vmatpush1.bf16.xpose.msra.mxu0 %v1885
        %1889 = vmatprep.subr.bf16.mxu0 0
        %1890 = vmatpush1.bf16.xpose.msra.mxu0 0
        %1891 = vmatprep.subr.bf16.mxu0 0
        %1892 = vmatpush1.bf16.xpose.msra.mxu0 0
        %1893 = vmatprep.subr.bf16.mxu0 0
        %1894 = vmatpush1.bf16.xpose.msra.mxu0 0
        %1895 = vmatprep.subr.bf16.mxu0 0
        %1896 = vmatpush1.bf16.xpose.msra.mxu0 0
        %1897 = vmatprep.subr.bf16.mxu0 0
        %1898 = vmatpush1.bf16.xpose.msra.mxu0 0
        %1899 = vmatprep.subr.bf16.mxu0 0
        %1900 = vmatpush1.bf16.xpose.msra.mxu0 0
        %1901 = vmatprep.subr.bf16.mxu0 0
        %1902 = vmatpush1.bf16.xpose.msra.mxu0 0
        %1903 = vmatprep.subr.bf16.mxu0 0
        %1904 = vmatpush1.bf16.xpose.msra.mxu0 0
        %1905 = vmatprep.subr.bf16.mxu0 0
        %1906 = vmatpush1.bf16.xpose.msra.mxu0 0
        %1907 = vmatprep.subr.bf16.mxu0 0
        %1908 = vmatpush1.bf16.xpose.msra.mxu0 0
        %1909 = vmatprep.subr.bf16.mxu0 0
        %1910 = vmatpush1.bf16.xpose.msra.mxu0 0
        %1911 = vmatprep.subr.bf16.mxu0 0
        %1912 = vmatpush1.bf16.xpose.msra.mxu0 0
        %1913 = vmatprep.subr.bf16.mxu0 0
        %1914 = vmatpush1.bf16.xpose.msra.mxu0 0
        %1915 = vmatprep.subr.bf16.mxu0 0
        %1916 = vmatpush1.bf16.xpose.msra.mxu0 0
        %1917 = vmatprep.subr.bf16.mxu0 0
        %1918 = vmatpush1.bf16.xpose.msra.mxu0 0
        %1919 = vmatprep.mubr.bf16.mxu0 0
        %1920 = vmatmul.mubr.bf16.gmra.mrb[0].mxu0 %v1882
        %v1921 = vpop.f32.mrb[0].mxu0
        %v1922 = vadd.f32 0.0, %v1921
        %v1923 = vpop.f32.mrb[0].mxu0
        %v1924 = vpop.f32.mrb[0].mxu0
        %v1925 = vadd.f32 0.0, %v1924
        %v1926 = vpop.f32.mrb[0].mxu0
        %1927 = vdwg.mxu0
        %vm1928 = vcmask 130048
        %v1929 = vsel %vm1928, %v1781, -inf
        %1930 = vmax.xlane.f32.xlu0 %v1929
        %v1931 = vpop.xlane.xlu0 %1930
        %v1932 = vsel %vm1928, %v1784, -inf
        %1933 = vmax.xlane.f32.xlu0 %v1932
        %v1934 = vpop.xlane.xlu0 %1933
        %v1935 = vsel %vm1928, %v1828, -inf
        %1936 = vmax.xlane.f32.xlu0 %v1935
        %v1937 = vpop.xlane.xlu0 %1936
        %v1938 = vsel %vm1928, %v1831, -inf
        %1939 = vmax.xlane.f32.xlu0 %v1938
        %v1940 = vpop.xlane.xlu0 %1939
        %v1941 = vsel %vm1928, %v1875, -inf
        %1942 = vmax.xlane.f32.xlu0 %v1941
        %v1943 = vpop.xlane.xlu0 %1942
        %v1944 = vsel %vm1928, %v1878, -inf
        %1945 = vmax.xlane.f32.xlu0 %v1944
        %v1946 = vpop.xlane.xlu0 %1945
        %v1947 = vsel %vm1928, %v1922, -inf
        %1948 = vmax.xlane.f32.xlu0 %v1947
        %v1949 = vpop.xlane.xlu0 %1948
        %v1950 = vsel %vm1928, %v1925, -inf
        %1951 = vmax.xlane.f32.xlu0 %v1950
        %v1952 = vpop.xlane.xlu0 %1951
        %v1953 = vsub.f32 %v1781, %v1931
        %v1954 = vsub.f32 %v1784, %v1934
        %v1955 = vsub.f32 %v1828, %v1937
        %v1956 = vsub.f32 %v1831, %v1940
        %v1957 = vsub.f32 %v1875, %v1943
        %v1958 = vsub.f32 %v1878, %v1946
        %v1959 = vsub.f32 %v1922, %v1949
        %v1960 = vsub.f32 %v1925, %v1952
        %v1961 = vmul.f32 %v1953, 1.442695
        %v1962 = vpow.pop %v1961
        %v1963 = vmul.f32 %v1954, 1.442695
        %v1964 = vpow.pop %v1963
        %v1965 = vmul.f32 %v1955, 1.442695
        %v1966 = vpow.pop %v1965
        %v1967 = vmul.f32 %v1956, 1.442695
        %v1968 = vpow.pop %v1967
        %v1969 = vmul.f32 %v1957, 1.442695
        %v1970 = vpow.pop %v1969
        %v1971 = vmul.f32 %v1958, 1.442695
        %v1972 = vpow.pop %v1971
        %v1973 = vmul.f32 %v1959, 1.442695
        %v1974 = vpow.pop %v1973
        %v1975 = vmul.f32 %v1960, 1.442695
        %v1976 = vpow.pop %v1975
        %v1977 = vpack.c.bf16 %v1964, %v1962
        %v1978 = vpack.c.bf16 %v1968, %v1966
        %v1979 = vpack.c.bf16 %v1972, %v1970
        %v1980 = vpack.c.bf16 %v1976, %v1974
        %v1982 = vsel %vm1928, %v1977, 0
        %1984 = vmatprep.subr.bf16.mxu0 0
        %1985 = vmatpush1.bf16.msra.mxu0 %v1735
        %1986 = vmatprep.subr.bf16.mxu0 0
        %1987 = vmatpush1.bf16.msra.mxu0 0
        %1988 = vmatprep.subr.bf16.mxu0 0
        %1989 = vmatpush1.bf16.msra.mxu0 0
        %1990 = vmatprep.subr.bf16.mxu0 0
        %1991 = vmatpush1.bf16.msra.mxu0 0
        %1992 = vmatprep.subr.bf16.mxu0 0
        %1993 = vmatpush1.bf16.msra.mxu0 0
        %1994 = vmatprep.subr.bf16.mxu0 0
        %1995 = vmatpush1.bf16.msra.mxu0 0
        %1996 = vmatprep.subr.bf16.mxu0 0
        %1997 = vmatpush1.bf16.msra.mxu0 0
        %1998 = vmatprep.subr.bf16.mxu0 0
        %1999 = vmatpush1.bf16.msra.mxu0 0
        %2000 = vmatprep.subr.bf16.mxu0 0
        %2001 = vmatpush1.bf16.msra.mxu0 0
        %2002 = vmatprep.subr.bf16.mxu0 0
        %2003 = vmatpush1.bf16.msra.mxu0 0
        %2004 = vmatprep.subr.bf16.mxu0 0
        %2005 = vmatpush1.bf16.msra.mxu0 0
        %2006 = vmatprep.subr.bf16.mxu0 0
        %2007 = vmatpush1.bf16.msra.mxu0 0
        %2008 = vmatprep.subr.bf16.mxu0 0
        %2009 = vmatpush1.bf16.msra.mxu0 0
        %2010 = vmatprep.subr.bf16.mxu0 0
        %2011 = vmatpush1.bf16.msra.mxu0 0
        %2012 = vmatprep.subr.bf16.mxu0 0
        %2013 = vmatpush1.bf16.msra.mxu0 0
        %2014 = vmatprep.subr.bf16.mxu0 0
        %2015 = vmatpush1.bf16.msra.mxu0 0
        %2016 = vmatprep.mubr.bf16.mxu0 0
        %2017 = vmatmul.mubr.bf16.gmra.mrb[0].mxu0 %v1982
        %v2018 = vpop.f32.mrb[0].mxu0
        %v2019 = vadd.f32 0.0, %v2018
        %v2020 = vpop.f32.mrb[0].mxu0
        %v2021 = vpop.f32.mrb[0].mxu0
        %v2022 = vadd.f32 0.0, %v2021
        %v2023 = vpop.f32.mrb[0].mxu0
        %2024 = vdwg.mxu0
        %v2026 = vsel %vm1928, %v1978, 0
        %2028 = vmatprep.subr.bf16.mxu0 0
        %2029 = vmatpush1.bf16.msra.mxu0 %v1736
        %2030 = vmatprep.subr.bf16.mxu0 0
        %2031 = vmatpush1.bf16.msra.mxu0 0
        %2032 = vmatprep.subr.bf16.mxu0 0
        %2033 = vmatpush1.bf16.msra.mxu0 0
        %2034 = vmatprep.subr.bf16.mxu0 0
        %2035 = vmatpush1.bf16.msra.mxu0 0
        %2036 = vmatprep.subr.bf16.mxu0 0
        %2037 = vmatpush1.bf16.msra.mxu0 0
        %2038 = vmatprep.subr.bf16.mxu0 0
        %2039 = vmatpush1.bf16.msra.mxu0 0
        %2040 = vmatprep.subr.bf16.mxu0 0
        %2041 = vmatpush1.bf16.msra.mxu0 0
        %2042 = vmatprep.subr.bf16.mxu0 0
        %2043 = vmatpush1.bf16.msra.mxu0 0
        %2044 = vmatprep.subr.bf16.mxu0 0
        %2045 = vmatpush1.bf16.msra.mxu0 0
        %2046 = vmatprep.subr.bf16.mxu0 0
        %2047 = vmatpush1.bf16.msra.mxu0 0
        %2048 = vmatprep.subr.bf16.mxu0 0
        %2049 = vmatpush1.bf16.msra.mxu0 0
        %2050 = vmatprep.subr.bf16.mxu0 0
        %2051 = vmatpush1.bf16.msra.mxu0 0
        %2052 = vmatprep.subr.bf16.mxu0 0
        %2053 = vmatpush1.bf16.msra.mxu0 0
        %2054 = vmatprep.subr.bf16.mxu0 0
        %2055 = vmatpush1.bf16.msra.mxu0 0
        %2056 = vmatprep.subr.bf16.mxu0 0
        %2057 = vmatpush1.bf16.msra.mxu0 0
        %2058 = vmatprep.subr.bf16.mxu0 0
        %2059 = vmatpush1.bf16.msra.mxu0 0
        %2060 = vmatprep.mubr.bf16.mxu0 0
        %2061 = vmatmul.mubr.bf16.gmra.mrb[0].mxu0 %v2026
        %v2062 = vpop.f32.mrb[0].mxu0
        %v2063 = vadd.f32 0.0, %v2062
        %v2064 = vpop.f32.mrb[0].mxu0
        %v2065 = vpop.f32.mrb[0].mxu0
        %v2066 = vadd.f32 0.0, %v2065
        %v2067 = vpop.f32.mrb[0].mxu0
        %2068 = vdwg.mxu0
        %v2070 = vsel %vm1928, %v1979, 0
        %2072 = vmatprep.subr.bf16.mxu0 0
        %2073 = vmatpush1.bf16.msra.mxu0 %v1737
        %2074 = vmatprep.subr.bf16.mxu0 0
        %2075 = vmatpush1.bf16.msra.mxu0 0
        %2076 = vmatprep.subr.bf16.mxu0 0
        %2077 = vmatpush1.bf16.msra.mxu0 0
        %2078 = vmatprep.subr.bf16.mxu0 0
        %2079 = vmatpush1.bf16.msra.mxu0 0
        %2080 = vmatprep.subr.bf16.mxu0 0
        %2081 = vmatpush1.bf16.msra.mxu0 0
        %2082 = vmatprep.subr.bf16.mxu0 0
        %2083 = vmatpush1.bf16.msra.mxu0 0
        %2084 = vmatprep.subr.bf16.mxu0 0
        %2085 = vmatpush1.bf16.msra.mxu0 0
        %2086 = vmatprep.subr.bf16.mxu0 0
        %2087 = vmatpush1.bf16.msra.mxu0 0
        %2088 = vmatprep.subr.bf16.mxu0 0
        %2089 = vmatpush1.bf16.msra.mxu0 0
        %2090 = vmatprep.subr.bf16.mxu0 0
        %2091 = vmatpush1.bf16.msra.mxu0 0
        %2092 = vmatprep.subr.bf16.mxu0 0
        %2093 = vmatpush1.bf16.msra.mxu0 0
        %2094 = vmatprep.subr.bf16.mxu0 0
        %2095 = vmatpush1.bf16.msra.mxu0 0
        %2096 = vmatprep.subr.bf16.mxu0 0
        %2097 = vmatpush1.bf16.msra.mxu0 0
        %2098 = vmatprep.subr.bf16.mxu0 0
        %2099 = vmatpush1.bf16.msra.mxu0 0
        %2100 = vmatprep.subr.bf16.mxu0 0
        %2101 = vmatpush1.bf16.msra.mxu0 0
        %2102 = vmatprep.subr.bf16.mxu0 0
        %2103 = vmatpush1.bf16.msra.mxu0 0
        %2104 = vmatprep.mubr.bf16.mxu0 0
        %2105 = vmatmul.mubr.bf16.gmra.mrb[0].mxu0 %v2070
        %v2106 = vpop.f32.mrb[0].mxu0
        %v2107 = vadd.f32 0.0, %v2106
        %v2108 = vpop.f32.mrb[0].mxu0
        %v2109 = vpop.f32.mrb[0].mxu0
        %v2110 = vadd.f32 0.0, %v2109
        %v2111 = vpop.f32.mrb[0].mxu0
        %2112 = vdwg.mxu0
        %v2114 = vsel %vm1928, %v1980, 0
        %2116 = vmatprep.subr.bf16.mxu0 0
        %2117 = vmatpush1.bf16.msra.mxu0 %v1738
        %2118 = vmatprep.subr.bf16.mxu0 0
        %2119 = vmatpush1.bf16.msra.mxu0 0
        %2120 = vmatprep.subr.bf16.mxu0 0
        %2121 = vmatpush1.bf16.msra.mxu0 0
        %2122 = vmatprep.subr.bf16.mxu0 0
        %2123 = vmatpush1.bf16.msra.mxu0 0
        %2124 = vmatprep.subr.bf16.mxu0 0
        %2125 = vmatpush1.bf16.msra.mxu0 0
        %2126 = vmatprep.subr.bf16.mxu0 0
        %2127 = vmatpush1.bf16.msra.mxu0 0
        %2128 = vmatprep.subr.bf16.mxu0 0
        %2129 = vmatpush1.bf16.msra.mxu0 0
        %2130 = vmatprep.subr.bf16.mxu0 0
        %2131 = vmatpush1.bf16.msra.mxu0 0
        %2132 = vmatprep.subr.bf16.mxu0 0
        %2133 = vmatpush1.bf16.msra.mxu0 0
        %2134 = vmatprep.subr.bf16.mxu0 0
        %2135 = vmatpush1.bf16.msra.mxu0 0
        %2136 = vmatprep.subr.bf16.mxu0 0
        %2137 = vmatpush1.bf16.msra.mxu0 0
        %2138 = vmatprep.subr.bf16.mxu0 0
        %2139 = vmatpush1.bf16.msra.mxu0 0
        %2140 = vmatprep.subr.bf16.mxu0 0
        %2141 = vmatpush1.bf16.msra.mxu0 0
        %2142 = vmatprep.subr.bf16.mxu0 0
        %2143 = vmatpush1.bf16.msra.mxu0 0
        %2144 = vmatprep.subr.bf16.mxu0 0
        %2145 = vmatpush1.bf16.msra.mxu0 0
        %2146 = vmatprep.subr.bf16.mxu0 0
        %2147 = vmatpush1.bf16.msra.mxu0 0
        %2148 = vmatprep.mubr.bf16.mxu0 0
        %2149 = vmatmul.mubr.bf16.gmra.mrb[0].mxu0 %v2114
        %v2150 = vpop.f32.mrb[0].mxu0
        %v2151 = vadd.f32 0.0, %v2150
        %v2152 = vpop.f32.mrb[0].mxu0
        %v2153 = vpop.f32.mrb[0].mxu0
        %v2154 = vadd.f32 0.0, %v2153
        %v2155 = vpop.f32.mrb[0].mxu0
        %2156 = vdwg.mxu0
        %v2157 = vsel %vm1928, %v1962, 0.0
        %2158 = vadd.xlane.f32.xlu0 %v2157
        %v2159 = vpop.xlane.xlu0 %2158
        %v2160 = vsel %vm1928, %v1964, 0.0
        %2161 = vadd.xlane.f32.xlu0 %v2160
        %v2162 = vpop.xlane.xlu0 %2161
        %v2163 = vsel %vm1928, %v1966, 0.0
        %2164 = vadd.xlane.f32.xlu0 %v2163
        %v2165 = vpop.xlane.xlu0 %2164
        %v2166 = vsel %vm1928, %v1968, 0.0
        %2167 = vadd.xlane.f32.xlu0 %v2166
        %v2168 = vpop.xlane.xlu0 %2167
        %v2169 = vsel %vm1928, %v1970, 0.0
        %2170 = vadd.xlane.f32.xlu0 %v2169
        %v2171 = vpop.xlane.xlu0 %2170
        %v2172 = vsel %vm1928, %v1972, 0.0
        %2173 = vadd.xlane.f32.xlu0 %v2172
        %v2174 = vpop.xlane.xlu0 %2173
        %v2175 = vsel %vm1928, %v1974, 0.0
        %2176 = vadd.xlane.f32.xlu0 %v2175
        %v2177 = vpop.xlane.xlu0 %2176
        %v2178 = vsel %vm1928, %v1976, 0.0
        %2179 = vadd.xlane.f32.xlu0 %v2178
        %v2180 = vpop.xlane.xlu0 %2179
        %v2181 = vrcp.pop %v2159
        %v2182 = vrcp.pop %v2162
        %v2183 = vrcp.pop %v2165
        %v2184 = vrcp.pop %v2168
        %v2185 = vrcp.pop %v2171
        %v2186 = vrcp.pop %v2174
        %v2187 = vrcp.pop %v2177
        %v2188 = vrcp.pop %v2180
        %v2189 = vmul.f32 %v2019, %v2181
        %v2190 = vmul.f32 %v2022, %v2182
        %v2191 = vmul.f32 %v2063, %v2183
        %v2192 = vmul.f32 %v2066, %v2184
        %v2193 = vmul.f32 %v2107, %v2185
        %v2194 = vmul.f32 %v2110, %v2186
        %v2195 = vmul.f32 %v2151, %v2187
        %v2196 = vmul.f32 %v2154, %v2188
        %v2197 = vcombine.low %v2189, %v2193
        %v2198 = vcombine.high %v2189, %v2193
        %v2200 = vunpack.c.l.s4 1983009808
        %v2201 = vunpack.c.0.s8 %v2200
        %v2202 = vlaneseq
        %v2203 = vshrl.u32 %v2202, 7
        %v2204 = vsub.s32 %v2201, %v2203
        %v2205 = vrot.slane %v2197, %v2204
        %v2207 = vunpack.c.l.s4 1983009808
        %v2208 = vunpack.c.0.s8 %v2207
        %v2209 = vlaneseq
        %v2210 = vshrl.u32 %v2209, 7
        %v2211 = vsub.s32 %v2208, %v2210
        %v2212 = vrot.slane %v2198, %v2211
        %v2213 = vcombine.low %v2191, %v2195
        %v2214 = vcombine.high %v2191, %v2195
        %v2216 = vunpack.c.l.s4 1983009808
        %v2217 = vunpack.c.0.s8 %v2216
        %v2218 = vlaneseq
        %v2219 = vshrl.u32 %v2218, 7
        %v2220 = vsub.s32 %v2217, %v2219
        %v2221 = vrot.slane %v2213, %v2220
        %v2223 = vunpack.c.l.s4 1983009808
        %v2224 = vunpack.c.0.s8 %v2223
        %v2225 = vlaneseq
        %v2226 = vshrl.u32 %v2225, 7
        %v2227 = vsub.s32 %v2224, %v2226
        %v2228 = vrot.slane %v2214, %v2227
        %v2229 = vcombine.low %v2205, %v2221
        %v2230 = vcombine.high %v2205, %v2221
        %v2232 = vunpack.c.l.s4 1934713408
        %v2233 = vunpack.c.0.s8 %v2232
        %v2234 = vlaneseq
        %v2235 = vshrl.u32 %v2234, 7
        %v2236 = vsub.s32 %v2233, %v2235
        %v2237 = vrot.slane %v2229, %v2236
        %v2239 = vunpack.c.l.s4 1934713408
        %v2240 = vunpack.c.0.s8 %v2239
        %v2241 = vlaneseq
        %v2242 = vshrl.u32 %v2241, 7
        %v2243 = vsub.s32 %v2240, %v2242
        %v2244 = vrot.slane %v2230, %v2243
        %v2245 = vcombine.low %v2212, %v2228
        %v2246 = vcombine.high %v2212, %v2228
        %v2248 = vunpack.c.l.s4 1934713408
        %v2249 = vunpack.c.0.s8 %v2248
        %v2250 = vlaneseq
        %v2251 = vshrl.u32 %v2250, 7
        %v2252 = vsub.s32 %v2249, %v2251
        %v2253 = vrot.slane %v2245, %v2252
        %v2255 = vunpack.c.l.s4 1934713408
        %v2256 = vunpack.c.0.s8 %v2255
        %v2257 = vlaneseq
        %v2258 = vshrl.u32 %v2257, 7
        %v2259 = vsub.s32 %v2256, %v2258
        %v2260 = vrot.slane %v2246, %v2259
        %v2261 = vcombine.high %v2237, 0.0
        %v2262 = vcombine.high %v2244, 0.0
        %v2263 = vcombine.high %v2253, 0.0
        %v2264 = vcombine.high %v2260, 0.0
        %v2265 = vcombine.low %v2190, %v2194
        %v2266 = vcombine.high %v2190, %v2194
        %v2268 = vunpack.c.l.s4 1983009808
        %v2269 = vunpack.c.0.s8 %v2268
        %v2270 = vlaneseq
        %v2271 = vshrl.u32 %v2270, 7
        %v2272 = vsub.s32 %v2269, %v2271
        %v2273 = vrot.slane %v2265, %v2272
        %v2275 = vunpack.c.l.s4 1983009808
        %v2276 = vunpack.c.0.s8 %v2275
        %v2277 = vlaneseq
        %v2278 = vshrl.u32 %v2277, 7
        %v2279 = vsub.s32 %v2276, %v2278
        %v2280 = vrot.slane %v2266, %v2279
        %v2281 = vcombine.low %v2192, %v2196
        %v2282 = vcombine.high %v2192, %v2196
        %v2284 = vunpack.c.l.s4 1983009808
        %v2285 = vunpack.c.0.s8 %v2284
        %v2286 = vlaneseq
        %v2287 = vshrl.u32 %v2286, 7
        %v2288 = vsub.s32 %v2285, %v2287
        %v2289 = vrot.slane %v2281, %v2288
        %v2291 = vunpack.c.l.s4 1983009808
        %v2292 = vunpack.c.0.s8 %v2291
        %v2293 = vlaneseq
        %v2294 = vshrl.u32 %v2293, 7
        %v2295 = vsub.s32 %v2292, %v2294
        %v2296 = vrot.slane %v2282, %v2295
        %v2297 = vcombine.low %v2273, %v2289
        %v2298 = vcombine.high %v2273, %v2289
        %v2300 = vunpack.c.l.s4 1934713408
        %v2301 = vunpack.c.0.s8 %v2300
        %v2302 = vlaneseq
        %v2303 = vshrl.u32 %v2302, 7
        %v2304 = vsub.s32 %v2301, %v2303
        %v2305 = vrot.slane %v2297, %v2304
        %v2307 = vunpack.c.l.s4 1934713408
        %v2308 = vunpack.c.0.s8 %v2307
        %v2309 = vlaneseq
        %v2310 = vshrl.u32 %v2309, 7
        %v2311 = vsub.s32 %v2308, %v2310
        %v2312 = vrot.slane %v2298, %v2311
        %v2313 = vcombine.low %v2280, %v2296
        %v2314 = vcombine.high %v2280, %v2296
        %v2316 = vunpack.c.l.s4 1934713408
        %v2317 = vunpack.c.0.s8 %v2316
        %v2318 = vlaneseq
        %v2319 = vshrl.u32 %v2318, 7
        %v2320 = vsub.s32 %v2317, %v2319
        %v2321 = vrot.slane %v2313, %v2320
        %v2323 = vunpack.c.l.s4 1934713408
        %v2324 = vunpack.c.0.s8 %v2323
        %v2325 = vlaneseq
        %v2326 = vshrl.u32 %v2325, 7
        %v2327 = vsub.s32 %v2324, %v2326
        %v2328 = vrot.slane %v2314, %v2327
        %v2329 = vcombine.high %v2305, 0.0
        %v2330 = vcombine.high %v2312, 0.0
        %v2331 = vcombine.high %v2321, 0.0
        %v2332 = vcombine.high %v2328, 0.0
        %v2333 = vcombine.low %v2237, %v2244
        %v2335 = vunpack.c.l.s4 1983009808
        %v2336 = vunpack.c.0.s8 %v2335
        %v2337 = vlaneseq
        %v2338 = vshrl.u32 %v2337, 7
        %v2339 = vsub.s32 %v2336, %v2338
        %v2340 = vrot.slane %v2333, %v2339
        %v2341 = vcombine.low %v2261, %v2262
        %v2343 = vunpack.c.l.s4 1983009808
        %v2344 = vunpack.c.0.s8 %v2343
        %v2345 = vlaneseq
        %v2346 = vshrl.u32 %v2345, 7
        %v2347 = vsub.s32 %v2344, %v2346
        %v2348 = vrot.slane %v2341, %v2347
        %v2349 = vcombine.low %v2253, %v2260
        %v2351 = vunpack.c.l.s4 1983009808
        %v2352 = vunpack.c.0.s8 %v2351
        %v2353 = vlaneseq
        %v2354 = vshrl.u32 %v2353, 7
        %v2355 = vsub.s32 %v2352, %v2354
        %v2356 = vrot.slane %v2349, %v2355
        %v2357 = vcombine.low %v2263, %v2264
        %v2359 = vunpack.c.l.s4 1983009808
        %v2360 = vunpack.c.0.s8 %v2359
        %v2361 = vlaneseq
        %v2362 = vshrl.u32 %v2361, 7
        %v2363 = vsub.s32 %v2360, %v2362
        %v2364 = vrot.slane %v2357, %v2363
        %v2365 = vcombine.low %v2340, %v2348
        %v2366 = vcombine.high %v2340, %v2348
        %v2368 = vunpack.c.l.s4 1934713408
        %v2369 = vunpack.c.0.s8 %v2368
        %v2370 = vlaneseq
        %v2371 = vshrl.u32 %v2370, 7
        %v2372 = vsub.s32 %v2369, %v2371
        %v2373 = vrot.slane %v2365, %v2372
        %v2375 = vunpack.c.l.s4 1934713408
        %v2376 = vunpack.c.0.s8 %v2375
        %v2377 = vlaneseq
        %v2378 = vshrl.u32 %v2377, 7
        %v2379 = vsub.s32 %v2376, %v2378
        %v2380 = vrot.slane %v2366, %v2379
        %v2381 = vcombine.low %v2356, %v2364
        %v2382 = vcombine.high %v2356, %v2364
        %v2384 = vunpack.c.l.s4 1934713408
        %v2385 = vunpack.c.0.s8 %v2384
        %v2386 = vlaneseq
        %v2387 = vshrl.u32 %v2386, 7
        %v2388 = vsub.s32 %v2385, %v2387
        %v2389 = vrot.slane %v2381, %v2388
        %v2391 = vunpack.c.l.s4 1934713408
        %v2392 = vunpack.c.0.s8 %v2391
        %v2393 = vlaneseq
        %v2394 = vshrl.u32 %v2393, 7
        %v2395 = vsub.s32 %v2392, %v2394
        %v2396 = vrot.slane %v2382, %v2395
        %v2397 = vcombine.low %v2373, %v2389
        %v2398 = vcombine.high %v2373, %v2389
        %v2399 = vcombine.low %v2380, %v2396
        %v2400 = vcombine.high %v2380, %v2396
        %v2401 = vcombine.low %v2305, %v2312
        %v2403 = vunpack.c.l.s4 1983009808
        %v2404 = vunpack.c.0.s8 %v2403
        %v2405 = vlaneseq
        %v2406 = vshrl.u32 %v2405, 7
        %v2407 = vsub.s32 %v2404, %v2406
        %v2408 = vrot.slane %v2401, %v2407
        %v2409 = vcombine.low %v2329, %v2330
        %v2411 = vunpack.c.l.s4 1983009808
        %v2412 = vunpack.c.0.s8 %v2411
        %v2413 = vlaneseq
        %v2414 = vshrl.u32 %v2413, 7
        %v2415 = vsub.s32 %v2412, %v2414
        %v2416 = vrot.slane %v2409, %v2415
        %v2417 = vcombine.low %v2321, %v2328
        %v2419 = vunpack.c.l.s4 1983009808
        %v2420 = vunpack.c.0.s8 %v2419
        %v2421 = vlaneseq
        %v2422 = vshrl.u32 %v2421, 7
        %v2423 = vsub.s32 %v2420, %v2422
        %v2424 = vrot.slane %v2417, %v2423
        %v2425 = vcombine.low %v2331, %v2332
        %v2427 = vunpack.c.l.s4 1983009808
        %v2428 = vunpack.c.0.s8 %v2427
        %v2429 = vlaneseq
        %v2430 = vshrl.u32 %v2429, 7
        %v2431 = vsub.s32 %v2428, %v2430
        %v2432 = vrot.slane %v2425, %v2431
        %v2433 = vcombine.low %v2408, %v2416
        %v2434 = vcombine.high %v2408, %v2416
        %v2436 = vunpack.c.l.s4 1934713408
        %v2437 = vunpack.c.0.s8 %v2436
        %v2438 = vlaneseq
        %v2439 = vshrl.u32 %v2438, 7
        %v2440 = vsub.s32 %v2437, %v2439
        %v2441 = vrot.slane %v2433, %v2440
        %v2443 = vunpack.c.l.s4 1934713408
        %v2444 = vunpack.c.0.s8 %v2443
        %v2445 = vlaneseq
        %v2446 = vshrl.u32 %v2445, 7
        %v2447 = vsub.s32 %v2444, %v2446
        %v2448 = vrot.slane %v2434, %v2447
        %v2449 = vcombine.low %v2424, %v2432
        %v2450 = vcombine.high %v2424, %v2432
        %v2452 = vunpack.c.l.s4 1934713408
        %v2453 = vunpack.c.0.s8 %v2452
        %v2454 = vlaneseq
        %v2455 = vshrl.u32 %v2454, 7
        %v2456 = vsub.s32 %v2453, %v2455
        %v2457 = vrot.slane %v2449, %v2456
        %v2459 = vunpack.c.l.s4 1934713408
        %v2460 = vunpack.c.0.s8 %v2459
        %v2461 = vlaneseq
        %v2462 = vshrl.u32 %v2461, 7
        %v2463 = vsub.s32 %v2460, %v2462
        %v2464 = vrot.slane %v2450, %v2463
        %v2465 = vcombine.low %v2441, %v2457
        %v2466 = vcombine.high %v2441, %v2457
        %v2467 = vcombine.low %v2448, %v2464
        %v2468 = vcombine.high %v2448, %v2464
        %2471 = vrot.lane.b32.xlu0 %v2398, 8
        %v2472 = vpop.permute.xlu0 %2471
        %2473 = vrot.lane.b32.xlu0 %v2466, 8
        %v2474 = vpop.permute.xlu0 %2473
        %2479 = vrot.lane.b32.xlu0 %v2399, 16
        %v2480 = vpop.permute.xlu0 %2479
        %2481 = vrot.lane.b32.xlu0 %v2467, 16
        %v2482 = vpop.permute.xlu0 %2481
        %2487 = vrot.lane.b32.xlu0 %v2400, 24
        %v2488 = vpop.permute.xlu0 %2487
        %2489 = vrot.lane.b32.xlu0 %v2468, 24
        %v2490 = vpop.permute.xlu0 %2489
        %v2493 = vsel %vm1739, %v2397, %v2472
        %v2494 = vsel %vm1739, %v2465, %v2474
        %v2495 = vsel %vm1928, %v2493, %v2480
        %v2496 = vsel %vm1928, %v2494, %v2482
        %vm2497 = vcmask 195584
        %v2498 = vsel %vm2497, %v2495, %v2488
        %v2499 = vsel %vm2497, %v2496, %v2490
        %2502 = vrot.lane.b32.xlu0 %v837, 120
        %v2503 = vpop.permute.xlu0 %2502
        %2504 = vrot.lane.b32.xlu0 %v840, 120
        %v2505 = vpop.permute.xlu0 %2504
        %2508 = vrot.lane.b32.xlu0 %v837, 112
        %v2509 = vpop.permute.xlu0 %2508
        %2510 = vrot.lane.b32.xlu0 %v840, 112
        %v2511 = vpop.permute.xlu0 %2510
        %2514 = vrot.lane.b32.xlu0 %v837, 104
        %v2515 = vpop.permute.xlu0 %2514
        %2516 = vrot.lane.b32.xlu0 %v840, 104
        %v2517 = vpop.permute.xlu0 %2516
        %v2520 = vcombine.low %v837, %v2509
        %v2521 = vcombine.high %v837, %v2509
        %v2523 = vunpack.c.l.s4 1983009808
        %v2524 = vunpack.c.0.s8 %v2523
        %v2525 = vlaneseq
        %v2526 = vshrl.u32 %v2525, 7
        %v2527 = vsub.s32 %v2524, %v2526
        %v2528 = vrot.slane %v2520, %v2527
        %v2530 = vunpack.c.l.s4 1983009808
        %v2531 = vunpack.c.0.s8 %v2530
        %v2532 = vlaneseq
        %v2533 = vshrl.u32 %v2532, 7
        %v2534 = vsub.s32 %v2531, %v2533
        %v2535 = vrot.slane %v2521, %v2534
        %v2536 = vcombine.low %v2503, %v2515
        %v2537 = vcombine.high %v2503, %v2515
        %v2539 = vunpack.c.l.s4 1983009808
        %v2540 = vunpack.c.0.s8 %v2539
        %v2541 = vlaneseq
        %v2542 = vshrl.u32 %v2541, 7
        %v2543 = vsub.s32 %v2540, %v2542
        %v2544 = vrot.slane %v2536, %v2543
        %v2546 = vunpack.c.l.s4 1983009808
        %v2547 = vunpack.c.0.s8 %v2546
        %v2548 = vlaneseq
        %v2549 = vshrl.u32 %v2548, 7
        %v2550 = vsub.s32 %v2547, %v2549
        %v2551 = vrot.slane %v2537, %v2550
        %v2552 = vcombine.low %v2528, %v2544
        %v2553 = vcombine.high %v2528, %v2544
        %v2555 = vunpack.c.l.s4 1934713408
        %v2556 = vunpack.c.0.s8 %v2555
        %v2557 = vlaneseq
        %v2558 = vshrl.u32 %v2557, 7
        %v2559 = vsub.s32 %v2556, %v2558
        %v2560 = vrot.slane %v2552, %v2559
        %v2562 = vunpack.c.l.s4 1934713408
        %v2563 = vunpack.c.0.s8 %v2562
        %v2564 = vlaneseq
        %v2565 = vshrl.u32 %v2564, 7
        %v2566 = vsub.s32 %v2563, %v2565
        %v2567 = vrot.slane %v2553, %v2566
        %v2568 = vcombine.low %v2535, %v2551
        %v2569 = vcombine.high %v2535, %v2551
        %v2571 = vunpack.c.l.s4 1934713408
        %v2572 = vunpack.c.0.s8 %v2571
        %v2573 = vlaneseq
        %v2574 = vshrl.u32 %v2573, 7
        %v2575 = vsub.s32 %v2572, %v2574
        %v2576 = vrot.slane %v2568, %v2575
        %v2578 = vunpack.c.l.s4 1934713408
        %v2579 = vunpack.c.0.s8 %v2578
        %v2580 = vlaneseq
        %v2581 = vshrl.u32 %v2580, 7
        %v2582 = vsub.s32 %v2579, %v2581
        %v2583 = vrot.slane %v2569, %v2582
        %v2584 = vcombine.high %v2560, 0.0
        %v2585 = vcombine.high %v2567, 0.0
        %v2586 = vcombine.high %v2576, 0.0
        %v2587 = vcombine.high %v2583, 0.0
        %v2588 = vcombine.low %v840, %v2511
        %v2589 = vcombine.high %v840, %v2511
        %v2591 = vunpack.c.l.s4 1983009808
        %v2592 = vunpack.c.0.s8 %v2591
        %v2593 = vlaneseq
        %v2594 = vshrl.u32 %v2593, 7
        %v2595 = vsub.s32 %v2592, %v2594
        %v2596 = vrot.slane %v2588, %v2595
        %v2598 = vunpack.c.l.s4 1983009808
        %v2599 = vunpack.c.0.s8 %v2598
        %v2600 = vlaneseq
        %v2601 = vshrl.u32 %v2600, 7
        %v2602 = vsub.s32 %v2599, %v2601
        %v2603 = vrot.slane %v2589, %v2602
        %v2604 = vcombine.low %v2505, %v2517
        %v2605 = vcombine.high %v2505, %v2517
        %v2607 = vunpack.c.l.s4 1983009808
        %v2608 = vunpack.c.0.s8 %v2607
        %v2609 = vlaneseq
        %v2610 = vshrl.u32 %v2609, 7
        %v2611 = vsub.s32 %v2608, %v2610
        %v2612 = vrot.slane %v2604, %v2611
        %v2614 = vunpack.c.l.s4 1983009808
        %v2615 = vunpack.c.0.s8 %v2614
        %v2616 = vlaneseq
        %v2617 = vshrl.u32 %v2616, 7
        %v2618 = vsub.s32 %v2615, %v2617
        %v2619 = vrot.slane %v2605, %v2618
        %v2620 = vcombine.low %v2596, %v2612
        %v2621 = vcombine.high %v2596, %v2612
        %v2623 = vunpack.c.l.s4 1934713408
        %v2624 = vunpack.c.0.s8 %v2623
        %v2625 = vlaneseq
        %v2626 = vshrl.u32 %v2625, 7
        %v2627 = vsub.s32 %v2624, %v2626
        %v2628 = vrot.slane %v2620, %v2627
        %v2630 = vunpack.c.l.s4 1934713408
        %v2631 = vunpack.c.0.s8 %v2630
        %v2632 = vlaneseq
        %v2633 = vshrl.u32 %v2632, 7
        %v2634 = vsub.s32 %v2631, %v2633
        %v2635 = vrot.slane %v2621, %v2634
        %v2636 = vcombine.low %v2603, %v2619
        %v2637 = vcombine.high %v2603, %v2619
        %v2639 = vunpack.c.l.s4 1934713408
        %v2640 = vunpack.c.0.s8 %v2639
        %v2641 = vlaneseq
        %v2642 = vshrl.u32 %v2641, 7
        %v2643 = vsub.s32 %v2640, %v2642
        %v2644 = vrot.slane %v2636, %v2643
        %v2646 = vunpack.c.l.s4 1934713408
        %v2647 = vunpack.c.0.s8 %v2646
        %v2648 = vlaneseq
        %v2649 = vshrl.u32 %v2648, 7
        %v2650 = vsub.s32 %v2647, %v2649
        %v2651 = vrot.slane %v2637, %v2650
        %v2652 = vcombine.high %v2628, 0.0
        %v2653 = vcombine.high %v2635, 0.0
        %v2654 = vcombine.high %v2644, 0.0
        %v2655 = vcombine.high %v2651, 0.0
        %v2656 = vcombine.low %v2560, %v2567
        %v2658 = vunpack.c.l.s4 1983009808
        %v2659 = vunpack.c.0.s8 %v2658
        %v2660 = vlaneseq
        %v2661 = vshrl.u32 %v2660, 7
        %v2662 = vsub.s32 %v2659, %v2661
        %v2663 = vrot.slane %v2656, %v2662
        %v2664 = vcombine.low %v2584, %v2585
        %v2666 = vunpack.c.l.s4 1983009808
        %v2667 = vunpack.c.0.s8 %v2666
        %v2668 = vlaneseq
        %v2669 = vshrl.u32 %v2668, 7
        %v2670 = vsub.s32 %v2667, %v2669
        %v2671 = vrot.slane %v2664, %v2670
        %v2672 = vcombine.low %v2576, %v2583
        %v2674 = vunpack.c.l.s4 1983009808
        %v2675 = vunpack.c.0.s8 %v2674
        %v2676 = vlaneseq
        %v2677 = vshrl.u32 %v2676, 7
        %v2678 = vsub.s32 %v2675, %v2677
        %v2679 = vrot.slane %v2672, %v2678
        %v2680 = vcombine.low %v2586, %v2587
        %v2682 = vunpack.c.l.s4 1983009808
        %v2683 = vunpack.c.0.s8 %v2682
        %v2684 = vlaneseq
        %v2685 = vshrl.u32 %v2684, 7
        %v2686 = vsub.s32 %v2683, %v2685
        %v2687 = vrot.slane %v2680, %v2686
        %v2688 = vcombine.low %v2663, %v2671
        %v2689 = vcombine.high %v2663, %v2671
        %v2691 = vunpack.c.l.s4 1934713408
        %v2692 = vunpack.c.0.s8 %v2691
        %v2693 = vlaneseq
        %v2694 = vshrl.u32 %v2693, 7
        %v2695 = vsub.s32 %v2692, %v2694
        %v2696 = vrot.slane %v2688, %v2695
        %v2698 = vunpack.c.l.s4 1934713408
        %v2699 = vunpack.c.0.s8 %v2698
        %v2700 = vlaneseq
        %v2701 = vshrl.u32 %v2700, 7
        %v2702 = vsub.s32 %v2699, %v2701
        %v2703 = vrot.slane %v2689, %v2702
        %v2704 = vcombine.low %v2679, %v2687
        %v2705 = vcombine.high %v2679, %v2687
        %v2707 = vunpack.c.l.s4 1934713408
        %v2708 = vunpack.c.0.s8 %v2707
        %v2709 = vlaneseq
        %v2710 = vshrl.u32 %v2709, 7
        %v2711 = vsub.s32 %v2708, %v2710
        %v2712 = vrot.slane %v2704, %v2711
        %v2714 = vunpack.c.l.s4 1934713408
        %v2715 = vunpack.c.0.s8 %v2714
        %v2716 = vlaneseq
        %v2717 = vshrl.u32 %v2716, 7
        %v2718 = vsub.s32 %v2715, %v2717
        %v2719 = vrot.slane %v2705, %v2718
        %v2720 = vcombine.low %v2696, %v2712
        %v2721 = vcombine.high %v2696, %v2712
        %v2722 = vcombine.low %v2703, %v2719
        %v2723 = vcombine.high %v2703, %v2719
        %v2724 = vcombine.low %v2628, %v2635
        %v2726 = vunpack.c.l.s4 1983009808
        %v2727 = vunpack.c.0.s8 %v2726
        %v2728 = vlaneseq
        %v2729 = vshrl.u32 %v2728, 7
        %v2730 = vsub.s32 %v2727, %v2729
        %v2731 = vrot.slane %v2724, %v2730
        %v2732 = vcombine.low %v2652, %v2653
        %v2734 = vunpack.c.l.s4 1983009808
        %v2735 = vunpack.c.0.s8 %v2734
        %v2736 = vlaneseq
        %v2737 = vshrl.u32 %v2736, 7
        %v2738 = vsub.s32 %v2735, %v2737
        %v2739 = vrot.slane %v2732, %v2738
        %v2740 = vcombine.low %v2644, %v2651
        %v2742 = vunpack.c.l.s4 1983009808
        %v2743 = vunpack.c.0.s8 %v2742
        %v2744 = vlaneseq
        %v2745 = vshrl.u32 %v2744, 7
        %v2746 = vsub.s32 %v2743, %v2745
        %v2747 = vrot.slane %v2740, %v2746
        %v2748 = vcombine.low %v2654, %v2655
        %v2750 = vunpack.c.l.s4 1983009808
        %v2751 = vunpack.c.0.s8 %v2750
        %v2752 = vlaneseq
        %v2753 = vshrl.u32 %v2752, 7
        %v2754 = vsub.s32 %v2751, %v2753
        %v2755 = vrot.slane %v2748, %v2754
        %v2756 = vcombine.low %v2731, %v2739
        %v2757 = vcombine.high %v2731, %v2739
        %v2759 = vunpack.c.l.s4 1934713408
        %v2760 = vunpack.c.0.s8 %v2759
        %v2761 = vlaneseq
        %v2762 = vshrl.u32 %v2761, 7
        %v2763 = vsub.s32 %v2760, %v2762
        %v2764 = vrot.slane %v2756, %v2763
        %v2766 = vunpack.c.l.s4 1934713408
        %v2767 = vunpack.c.0.s8 %v2766
        %v2768 = vlaneseq
        %v2769 = vshrl.u32 %v2768, 7
        %v2770 = vsub.s32 %v2767, %v2769
        %v2771 = vrot.slane %v2757, %v2770
        %v2772 = vcombine.low %v2747, %v2755
        %v2773 = vcombine.high %v2747, %v2755
        %v2775 = vunpack.c.l.s4 1934713408
        %v2776 = vunpack.c.0.s8 %v2775
        %v2777 = vlaneseq
        %v2778 = vshrl.u32 %v2777, 7
        %v2779 = vsub.s32 %v2776, %v2778
        %v2780 = vrot.slane %v2772, %v2779
        %v2782 = vunpack.c.l.s4 1934713408
        %v2783 = vunpack.c.0.s8 %v2782
        %v2784 = vlaneseq
        %v2785 = vshrl.u32 %v2784, 7
        %v2786 = vsub.s32 %v2783, %v2785
        %v2787 = vrot.slane %v2773, %v2786
        %v2788 = vcombine.low %v2764, %v2780
        %v2789 = vcombine.high %v2764, %v2780
        %v2790 = vcombine.low %v2771, %v2787
        %v2791 = vcombine.high %v2771, %v2787
        %v2792 = vpack.c.bf16 %v2788, %v2720
        %v2793 = vpack.c.bf16 %v2789, %v2721
        %v2794 = vpack.c.bf16 %v2790, %v2722
        %v2795 = vpack.c.bf16 %v2791, %v2723
        %2796 = vrot.lane.b32.xlu0 %v837, 96
        %v2797 = vpop.permute.xlu0 %2796
        %2798 = vrot.lane.b32.xlu0 %v840, 96
        %v2799 = vpop.permute.xlu0 %2798
        %2800 = vrot.lane.b32.xlu0 %v2503, 96
        %v2801 = vpop.permute.xlu0 %2800
        %2802 = vrot.lane.b32.xlu0 %v2505, 96
        %v2803 = vpop.permute.xlu0 %2802
        %2804 = vrot.lane.b32.xlu0 %v2509, 96
        %v2805 = vpop.permute.xlu0 %2804
        %2806 = vrot.lane.b32.xlu0 %v2511, 96
        %v2807 = vpop.permute.xlu0 %2806
        %2808 = vrot.lane.b32.xlu0 %v2515, 96
        %v2809 = vpop.permute.xlu0 %2808
        %2810 = vrot.lane.b32.xlu0 %v2517, 96
        %v2811 = vpop.permute.xlu0 %2810
        %v2820 = vcombine.low %v2797, %v2805
        %v2821 = vcombine.high %v2797, %v2805
        %v2823 = vunpack.c.l.s4 1983009808
        %v2824 = vunpack.c.0.s8 %v2823
        %v2825 = vlaneseq
        %v2826 = vshrl.u32 %v2825, 7
        %v2827 = vsub.s32 %v2824, %v2826
        %v2828 = vrot.slane %v2820, %v2827
        %v2830 = vunpack.c.l.s4 1983009808
        %v2831 = vunpack.c.0.s8 %v2830
        %v2832 = vlaneseq
        %v2833 = vshrl.u32 %v2832, 7
        %v2834 = vsub.s32 %v2831, %v2833
        %v2835 = vrot.slane %v2821, %v2834
        %v2836 = vcombine.low %v2801, %v2809
        %v2837 = vcombine.high %v2801, %v2809
        %v2839 = vunpack.c.l.s4 1983009808
        %v2840 = vunpack.c.0.s8 %v2839
        %v2841 = vlaneseq
        %v2842 = vshrl.u32 %v2841, 7
        %v2843 = vsub.s32 %v2840, %v2842
        %v2844 = vrot.slane %v2836, %v2843
        %v2846 = vunpack.c.l.s4 1983009808
        %v2847 = vunpack.c.0.s8 %v2846
        %v2848 = vlaneseq
        %v2849 = vshrl.u32 %v2848, 7
        %v2850 = vsub.s32 %v2847, %v2849
        %v2851 = vrot.slane %v2837, %v2850
        %v2852 = vcombine.low %v2828, %v2844
        %v2853 = vcombine.high %v2828, %v2844
        %v2855 = vunpack.c.l.s4 1934713408
        %v2856 = vunpack.c.0.s8 %v2855
        %v2857 = vlaneseq
        %v2858 = vshrl.u32 %v2857, 7
        %v2859 = vsub.s32 %v2856, %v2858
        %v2860 = vrot.slane %v2852, %v2859
        %v2862 = vunpack.c.l.s4 1934713408
        %v2863 = vunpack.c.0.s8 %v2862
        %v2864 = vlaneseq
        %v2865 = vshrl.u32 %v2864, 7
        %v2866 = vsub.s32 %v2863, %v2865
        %v2867 = vrot.slane %v2853, %v2866
        %v2868 = vcombine.low %v2835, %v2851
        %v2869 = vcombine.high %v2835, %v2851
        %v2871 = vunpack.c.l.s4 1934713408
        %v2872 = vunpack.c.0.s8 %v2871
        %v2873 = vlaneseq
        %v2874 = vshrl.u32 %v2873, 7
        %v2875 = vsub.s32 %v2872, %v2874
        %v2876 = vrot.slane %v2868, %v2875
        %v2878 = vunpack.c.l.s4 1934713408
        %v2879 = vunpack.c.0.s8 %v2878
        %v2880 = vlaneseq
        %v2881 = vshrl.u32 %v2880, 7
        %v2882 = vsub.s32 %v2879, %v2881
        %v2883 = vrot.slane %v2869, %v2882
        %v2884 = vcombine.high %v2860, 0.0
        %v2885 = vcombine.high %v2867, 0.0
        %v2886 = vcombine.high %v2876, 0.0
        %v2887 = vcombine.high %v2883, 0.0
        %v2888 = vcombine.low %v2799, %v2807
        %v2889 = vcombine.high %v2799, %v2807
        %v2891 = vunpack.c.l.s4 1983009808
        %v2892 = vunpack.c.0.s8 %v2891
        %v2893 = vlaneseq
        %v2894 = vshrl.u32 %v2893, 7
        %v2895 = vsub.s32 %v2892, %v2894
        %v2896 = vrot.slane %v2888, %v2895
        %v2898 = vunpack.c.l.s4 1983009808
        %v2899 = vunpack.c.0.s8 %v2898
        %v2900 = vlaneseq
        %v2901 = vshrl.u32 %v2900, 7
        %v2902 = vsub.s32 %v2899, %v2901
        %v2903 = vrot.slane %v2889, %v2902
        %v2904 = vcombine.low %v2803, %v2811
        %v2905 = vcombine.high %v2803, %v2811
        %v2907 = vunpack.c.l.s4 1983009808
        %v2908 = vunpack.c.0.s8 %v2907
        %v2909 = vlaneseq
        %v2910 = vshrl.u32 %v2909, 7
        %v2911 = vsub.s32 %v2908, %v2910
        %v2912 = vrot.slane %v2904, %v2911
        %v2914 = vunpack.c.l.s4 1983009808
        %v2915 = vunpack.c.0.s8 %v2914
        %v2916 = vlaneseq
        %v2917 = vshrl.u32 %v2916, 7
        %v2918 = vsub.s32 %v2915, %v2917
        %v2919 = vrot.slane %v2905, %v2918
        %v2920 = vcombine.low %v2896, %v2912
        %v2921 = vcombine.high %v2896, %v2912
        %v2923 = vunpack.c.l.s4 1934713408
        %v2924 = vunpack.c.0.s8 %v2923
        %v2925 = vlaneseq
        %v2926 = vshrl.u32 %v2925, 7
        %v2927 = vsub.s32 %v2924, %v2926
        %v2928 = vrot.slane %v2920, %v2927
        %v2930 = vunpack.c.l.s4 1934713408
        %v2931 = vunpack.c.0.s8 %v2930
        %v2932 = vlaneseq
        %v2933 = vshrl.u32 %v2932, 7
        %v2934 = vsub.s32 %v2931, %v2933
        %v2935 = vrot.slane %v2921, %v2934
        %v2936 = vcombine.low %v2903, %v2919
        %v2937 = vcombine.high %v2903, %v2919
        %v2939 = vunpack.c.l.s4 1934713408
        %v2940 = vunpack.c.0.s8 %v2939
        %v2941 = vlaneseq
        %v2942 = vshrl.u32 %v2941, 7
        %v2943 = vsub.s32 %v2940, %v2942
        %v2944 = vrot.slane %v2936, %v2943
        %v2946 = vunpack.c.l.s4 1934713408
        %v2947 = vunpack.c.0.s8 %v2946
        %v2948 = vlaneseq
        %v2949 = vshrl.u32 %v2948, 7
        %v2950 = vsub.s32 %v2947, %v2949
        %v2951 = vrot.slane %v2937, %v2950
        %v2952 = vcombine.high %v2928, 0.0
        %v2953 = vcombine.high %v2935, 0.0
        %v2954 = vcombine.high %v2944, 0.0
        %v2955 = vcombine.high %v2951, 0.0
        %v2956 = vcombine.low %v2860, %v2867
        %v2958 = vunpack.c.l.s4 1983009808
        %v2959 = vunpack.c.0.s8 %v2958
        %v2960 = vlaneseq
        %v2961 = vshrl.u32 %v2960, 7
        %v2962 = vsub.s32 %v2959, %v2961
        %v2963 = vrot.slane %v2956, %v2962
        %v2964 = vcombine.low %v2884, %v2885
        %v2966 = vunpack.c.l.s4 1983009808
        %v2967 = vunpack.c.0.s8 %v2966
        %v2968 = vlaneseq
        %v2969 = vshrl.u32 %v2968, 7
        %v2970 = vsub.s32 %v2967, %v2969
        %v2971 = vrot.slane %v2964, %v2970
        %v2972 = vcombine.low %v2876, %v2883
        %v2974 = vunpack.c.l.s4 1983009808
        %v2975 = vunpack.c.0.s8 %v2974
        %v2976 = vlaneseq
        %v2977 = vshrl.u32 %v2976, 7
        %v2978 = vsub.s32 %v2975, %v2977
        %v2979 = vrot.slane %v2972, %v2978
        %v2980 = vcombine.low %v2886, %v2887
        %v2982 = vunpack.c.l.s4 1983009808
        %v2983 = vunpack.c.0.s8 %v2982
        %v2984 = vlaneseq
        %v2985 = vshrl.u32 %v2984, 7
        %v2986 = vsub.s32 %v2983, %v2985
        %v2987 = vrot.slane %v2980, %v2986
        %v2988 = vcombine.low %v2963, %v2971
        %v2989 = vcombine.high %v2963, %v2971
        %v2991 = vunpack.c.l.s4 1934713408
        %v2992 = vunpack.c.0.s8 %v2991
        %v2993 = vlaneseq
        %v2994 = vshrl.u32 %v2993, 7
        %v2995 = vsub.s32 %v2992, %v2994
        %v2996 = vrot.slane %v2988, %v2995
        %v2998 = vunpack.c.l.s4 1934713408
        %v2999 = vunpack.c.0.s8 %v2998
        %v3000 = vlaneseq
        %v3001 = vshrl.u32 %v3000, 7
        %v3002 = vsub.s32 %v2999, %v3001
        %v3003 = vrot.slane %v2989, %v3002
        %v3004 = vcombine.low %v2979, %v2987
        %v3005 = vcombine.high %v2979, %v2987
        %v3007 = vunpack.c.l.s4 1934713408
        %v3008 = vunpack.c.0.s8 %v3007
        %v3009 = vlaneseq
        %v3010 = vshrl.u32 %v3009, 7
        %v3011 = vsub.s32 %v3008, %v3010
        %v3012 = vrot.slane %v3004, %v3011
        %v3014 = vunpack.c.l.s4 1934713408
        %v3015 = vunpack.c.0.s8 %v3014
        %v3016 = vlaneseq
        %v3017 = vshrl.u32 %v3016, 7
        %v3018 = vsub.s32 %v3015, %v3017
        %v3019 = vrot.slane %v3005, %v3018
        %v3020 = vcombine.low %v2996, %v3012
        %v3021 = vcombine.high %v2996, %v3012
        %v3022 = vcombine.low %v3003, %v3019
        %v3023 = vcombine.high %v3003, %v3019
        %v3024 = vcombine.low %v2928, %v2935
        %v3026 = vunpack.c.l.s4 1983009808
        %v3027 = vunpack.c.0.s8 %v3026
        %v3028 = vlaneseq
        %v3029 = vshrl.u32 %v3028, 7
        %v3030 = vsub.s32 %v3027, %v3029
        %v3031 = vrot.slane %v3024, %v3030
        %v3032 = vcombine.low %v2952, %v2953
        %v3034 = vunpack.c.l.s4 1983009808
        %v3035 = vunpack.c.0.s8 %v3034
        %v3036 = vlaneseq
        %v3037 = vshrl.u32 %v3036, 7
        %v3038 = vsub.s32 %v3035, %v3037
        %v3039 = vrot.slane %v3032, %v3038
        %v3040 = vcombine.low %v2944, %v2951
        %v3042 = vunpack.c.l.s4 1983009808
        %v3043 = vunpack.c.0.s8 %v3042
        %v3044 = vlaneseq
        %v3045 = vshrl.u32 %v3044, 7
        %v3046 = vsub.s32 %v3043, %v3045
        %v3047 = vrot.slane %v3040, %v3046
        %v3048 = vcombine.low %v2954, %v2955
        %v3050 = vunpack.c.l.s4 1983009808
        %v3051 = vunpack.c.0.s8 %v3050
        %v3052 = vlaneseq
        %v3053 = vshrl.u32 %v3052, 7
        %v3054 = vsub.s32 %v3051, %v3053
        %v3055 = vrot.slane %v3048, %v3054
        %v3056 = vcombine.low %v3031, %v3039
        %v3057 = vcombine.high %v3031, %v3039
        %v3059 = vunpack.c.l.s4 1934713408
        %v3060 = vunpack.c.0.s8 %v3059
        %v3061 = vlaneseq
        %v3062 = vshrl.u32 %v3061, 7
        %v3063 = vsub.s32 %v3060, %v3062
        %v3064 = vrot.slane %v3056, %v3063
        %v3066 = vunpack.c.l.s4 1934713408
        %v3067 = vunpack.c.0.s8 %v3066
        %v3068 = vlaneseq
        %v3069 = vshrl.u32 %v3068, 7
        %v3070 = vsub.s32 %v3067, %v3069
        %v3071 = vrot.slane %v3057, %v3070
        %v3072 = vcombine.low %v3047, %v3055
        %v3073 = vcombine.high %v3047, %v3055
        %v3075 = vunpack.c.l.s4 1934713408
        %v3076 = vunpack.c.0.s8 %v3075
        %v3077 = vlaneseq
        %v3078 = vshrl.u32 %v3077, 7
        %v3079 = vsub.s32 %v3076, %v3078
        %v3080 = vrot.slane %v3072, %v3079
        %v3082 = vunpack.c.l.s4 1934713408
        %v3083 = vunpack.c.0.s8 %v3082
        %v3084 = vlaneseq
        %v3085 = vshrl.u32 %v3084, 7
        %v3086 = vsub.s32 %v3083, %v3085
        %v3087 = vrot.slane %v3073, %v3086
        %v3088 = vcombine.low %v3064, %v3080
        %v3089 = vcombine.high %v3064, %v3080
        %v3090 = vcombine.low %v3071, %v3087
        %v3091 = vcombine.high %v3071, %v3087
        %v3092 = vpack.c.bf16 %v3088, %v3020
        %v3093 = vpack.c.bf16 %v3089, %v3021
        %v3094 = vpack.c.bf16 %v3090, %v3022
        %v3095 = vpack.c.bf16 %v3091, %v3023
        %3096 = vrot.lane.b32.xlu0 %v837, 64
        %v3097 = vpop.permute.xlu0 %3096
        %3098 = vrot.lane.b32.xlu0 %v840, 64
        %v3099 = vpop.permute.xlu0 %3098
        %3100 = vrot.lane.b32.xlu0 %v2503, 64
        %v3101 = vpop.permute.xlu0 %3100
        %3102 = vrot.lane.b32.xlu0 %v2505, 64
        %v3103 = vpop.permute.xlu0 %3102
        %3104 = vrot.lane.b32.xlu0 %v2509, 64
        %v3105 = vpop.permute.xlu0 %3104
        %3106 = vrot.lane.b32.xlu0 %v2511, 64
        %v3107 = vpop.permute.xlu0 %3106
        %3108 = vrot.lane.b32.xlu0 %v2515, 64
        %v3109 = vpop.permute.xlu0 %3108
        %3110 = vrot.lane.b32.xlu0 %v2517, 64
        %v3111 = vpop.permute.xlu0 %3110
        %v3120 = vcombine.low %v3097, %v3105
        %v3121 = vcombine.high %v3097, %v3105
        %v3123 = vunpack.c.l.s4 1983009808
        %v3124 = vunpack.c.0.s8 %v3123
        %v3125 = vlaneseq
        %v3126 = vshrl.u32 %v3125, 7
        %v3127 = vsub.s32 %v3124, %v3126
        %v3128 = vrot.slane %v3120, %v3127
        %v3130 = vunpack.c.l.s4 1983009808
        %v3131 = vunpack.c.0.s8 %v3130
        %v3132 = vlaneseq
        %v3133 = vshrl.u32 %v3132, 7
        %v3134 = vsub.s32 %v3131, %v3133
        %v3135 = vrot.slane %v3121, %v3134
        %v3136 = vcombine.low %v3101, %v3109
        %v3137 = vcombine.high %v3101, %v3109
        %v3139 = vunpack.c.l.s4 1983009808
        %v3140 = vunpack.c.0.s8 %v3139
        %v3141 = vlaneseq
        %v3142 = vshrl.u32 %v3141, 7
        %v3143 = vsub.s32 %v3140, %v3142
        %v3144 = vrot.slane %v3136, %v3143
        %v3146 = vunpack.c.l.s4 1983009808
        %v3147 = vunpack.c.0.s8 %v3146
        %v3148 = vlaneseq
        %v3149 = vshrl.u32 %v3148, 7
        %v3150 = vsub.s32 %v3147, %v3149
        %v3151 = vrot.slane %v3137, %v3150
        %v3152 = vcombine.low %v3128, %v3144
        %v3153 = vcombine.high %v3128, %v3144
        %v3155 = vunpack.c.l.s4 1934713408
        %v3156 = vunpack.c.0.s8 %v3155
        %v3157 = vlaneseq
        %v3158 = vshrl.u32 %v3157, 7
        %v3159 = vsub.s32 %v3156, %v3158
        %v3160 = vrot.slane %v3152, %v3159
        %v3162 = vunpack.c.l.s4 1934713408
        %v3163 = vunpack.c.0.s8 %v3162
        %v3164 = vlaneseq
        %v3165 = vshrl.u32 %v3164, 7
        %v3166 = vsub.s32 %v3163, %v3165
        %v3167 = vrot.slane %v3153, %v3166
        %v3168 = vcombine.low %v3135, %v3151
        %v3169 = vcombine.high %v3135, %v3151
        %v3171 = vunpack.c.l.s4 1934713408
        %v3172 = vunpack.c.0.s8 %v3171
        %v3173 = vlaneseq
        %v3174 = vshrl.u32 %v3173, 7
        %v3175 = vsub.s32 %v3172, %v3174
        %v3176 = vrot.slane %v3168, %v3175
        %v3178 = vunpack.c.l.s4 1934713408
        %v3179 = vunpack.c.0.s8 %v3178
        %v3180 = vlaneseq
        %v3181 = vshrl.u32 %v3180, 7
        %v3182 = vsub.s32 %v3179, %v3181
        %v3183 = vrot.slane %v3169, %v3182
        %v3184 = vcombine.high %v3160, 0.0
        %v3185 = vcombine.high %v3167, 0.0
        %v3186 = vcombine.high %v3176, 0.0
        %v3187 = vcombine.high %v3183, 0.0
        %v3188 = vcombine.low %v3099, %v3107
        %v3189 = vcombine.high %v3099, %v3107
        %v3191 = vunpack.c.l.s4 1983009808
        %v3192 = vunpack.c.0.s8 %v3191
        %v3193 = vlaneseq
        %v3194 = vshrl.u32 %v3193, 7
        %v3195 = vsub.s32 %v3192, %v3194
        %v3196 = vrot.slane %v3188, %v3195
        %v3198 = vunpack.c.l.s4 1983009808
        %v3199 = vunpack.c.0.s8 %v3198
        %v3200 = vlaneseq
        %v3201 = vshrl.u32 %v3200, 7
        %v3202 = vsub.s32 %v3199, %v3201
        %v3203 = vrot.slane %v3189, %v3202
        %v3204 = vcombine.low %v3103, %v3111
        %v3205 = vcombine.high %v3103, %v3111
        %v3207 = vunpack.c.l.s4 1983009808
        %v3208 = vunpack.c.0.s8 %v3207
        %v3209 = vlaneseq
        %v3210 = vshrl.u32 %v3209, 7
        %v3211 = vsub.s32 %v3208, %v3210
        %v3212 = vrot.slane %v3204, %v3211
        %v3214 = vunpack.c.l.s4 1983009808
        %v3215 = vunpack.c.0.s8 %v3214
        %v3216 = vlaneseq
        %v3217 = vshrl.u32 %v3216, 7
        %v3218 = vsub.s32 %v3215, %v3217
        %v3219 = vrot.slane %v3205, %v3218
        %v3220 = vcombine.low %v3196, %v3212
        %v3221 = vcombine.high %v3196, %v3212
        %v3223 = vunpack.c.l.s4 1934713408
        %v3224 = vunpack.c.0.s8 %v3223
        %v3225 = vlaneseq
        %v3226 = vshrl.u32 %v3225, 7
        %v3227 = vsub.s32 %v3224, %v3226
        %v3228 = vrot.slane %v3220, %v3227
        %v3230 = vunpack.c.l.s4 1934713408
        %v3231 = vunpack.c.0.s8 %v3230
        %v3232 = vlaneseq
        %v3233 = vshrl.u32 %v3232, 7
        %v3234 = vsub.s32 %v3231, %v3233
        %v3235 = vrot.slane %v3221, %v3234
        %v3236 = vcombine.low %v3203, %v3219
        %v3237 = vcombine.high %v3203, %v3219
        %v3239 = vunpack.c.l.s4 1934713408
        %v3240 = vunpack.c.0.s8 %v3239
        %v3241 = vlaneseq
        %v3242 = vshrl.u32 %v3241, 7
        %v3243 = vsub.s32 %v3240, %v3242
        %v3244 = vrot.slane %v3236, %v3243
        %v3246 = vunpack.c.l.s4 1934713408
        %v3247 = vunpack.c.0.s8 %v3246
        %v3248 = vlaneseq
        %v3249 = vshrl.u32 %v3248, 7
        %v3250 = vsub.s32 %v3247, %v3249
        %v3251 = vrot.slane %v3237, %v3250
        %v3252 = vcombine.high %v3228, 0.0
        %v3253 = vcombine.high %v3235, 0.0
        %v3254 = vcombine.high %v3244, 0.0
        %v3255 = vcombine.high %v3251, 0.0
        %v3256 = vcombine.low %v3160, %v3167
        %v3258 = vunpack.c.l.s4 1983009808
        %v3259 = vunpack.c.0.s8 %v3258
        %v3260 = vlaneseq
        %v3261 = vshrl.u32 %v3260, 7
        %v3262 = vsub.s32 %v3259, %v3261
        %v3263 = vrot.slane %v3256, %v3262
        %v3264 = vcombine.low %v3184, %v3185
        %v3266 = vunpack.c.l.s4 1983009808
        %v3267 = vunpack.c.0.s8 %v3266
        %v3268 = vlaneseq
        %v3269 = vshrl.u32 %v3268, 7
        %v3270 = vsub.s32 %v3267, %v3269
        %v3271 = vrot.slane %v3264, %v3270
        %v3272 = vcombine.low %v3176, %v3183
        %v3274 = vunpack.c.l.s4 1983009808
        %v3275 = vunpack.c.0.s8 %v3274
        %v3276 = vlaneseq
        %v3277 = vshrl.u32 %v3276, 7
        %v3278 = vsub.s32 %v3275, %v3277
        %v3279 = vrot.slane %v3272, %v3278
        %v3280 = vcombine.low %v3186, %v3187
        %v3282 = vunpack.c.l.s4 1983009808
        %v3283 = vunpack.c.0.s8 %v3282
        %v3284 = vlaneseq
        %v3285 = vshrl.u32 %v3284, 7
        %v3286 = vsub.s32 %v3283, %v3285
        %v3287 = vrot.slane %v3280, %v3286
        %v3288 = vcombine.low %v3263, %v3271
        %v3289 = vcombine.high %v3263, %v3271
        %v3291 = vunpack.c.l.s4 1934713408
        %v3292 = vunpack.c.0.s8 %v3291
        %v3293 = vlaneseq
        %v3294 = vshrl.u32 %v3293, 7
        %v3295 = vsub.s32 %v3292, %v3294
        %v3296 = vrot.slane %v3288, %v3295
        %v3298 = vunpack.c.l.s4 1934713408
        %v3299 = vunpack.c.0.s8 %v3298
        %v3300 = vlaneseq
        %v3301 = vshrl.u32 %v3300, 7
        %v3302 = vsub.s32 %v3299, %v3301
        %v3303 = vrot.slane %v3289, %v3302
        %v3304 = vcombine.low %v3279, %v3287
        %v3305 = vcombine.high %v3279, %v3287
        %v3307 = vunpack.c.l.s4 1934713408
        %v3308 = vunpack.c.0.s8 %v3307
        %v3309 = vlaneseq
        %v3310 = vshrl.u32 %v3309, 7
        %v3311 = vsub.s32 %v3308, %v3310
        %v3312 = vrot.slane %v3304, %v3311
        %v3314 = vunpack.c.l.s4 1934713408
        %v3315 = vunpack.c.0.s8 %v3314
        %v3316 = vlaneseq
        %v3317 = vshrl.u32 %v3316, 7
        %v3318 = vsub.s32 %v3315, %v3317
        %v3319 = vrot.slane %v3305, %v3318
        %v3320 = vcombine.low %v3296, %v3312
        %v3321 = vcombine.high %v3296, %v3312
        %v3322 = vcombine.low %v3303, %v3319
        %v3323 = vcombine.high %v3303, %v3319
        %v3324 = vcombine.low %v3228, %v3235
        %v3326 = vunpack.c.l.s4 1983009808
        %v3327 = vunpack.c.0.s8 %v3326
        %v3328 = vlaneseq
        %v3329 = vshrl.u32 %v3328, 7
        %v3330 = vsub.s32 %v3327, %v3329
        %v3331 = vrot.slane %v3324, %v3330
        %v3332 = vcombine.low %v3252, %v3253
        %v3334 = vunpack.c.l.s4 1983009808
        %v3335 = vunpack.c.0.s8 %v3334
        %v3336 = vlaneseq
        %v3337 = vshrl.u32 %v3336, 7
        %v3338 = vsub.s32 %v3335, %v3337
        %v3339 = vrot.slane %v3332, %v3338
        %v3340 = vcombine.low %v3244, %v3251
        %v3342 = vunpack.c.l.s4 1983009808
        %v3343 = vunpack.c.0.s8 %v3342
        %v3344 = vlaneseq
        %v3345 = vshrl.u32 %v3344, 7
        %v3346 = vsub.s32 %v3343, %v3345
        %v3347 = vrot.slane %v3340, %v3346
        %v3348 = vcombine.low %v3254, %v3255
        %v3350 = vunpack.c.l.s4 1983009808
        %v3351 = vunpack.c.0.s8 %v3350
        %v3352 = vlaneseq
        %v3353 = vshrl.u32 %v3352, 7
        %v3354 = vsub.s32 %v3351, %v3353
        %v3355 = vrot.slane %v3348, %v3354
        %v3356 = vcombine.low %v3331, %v3339
        %v3357 = vcombine.high %v3331, %v3339
        %v3359 = vunpack.c.l.s4 1934713408
        %v3360 = vunpack.c.0.s8 %v3359
        %v3361 = vlaneseq
        %v3362 = vshrl.u32 %v3361, 7
        %v3363 = vsub.s32 %v3360, %v3362
        %v3364 = vrot.slane %v3356, %v3363
        %v3366 = vunpack.c.l.s4 1934713408
        %v3367 = vunpack.c.0.s8 %v3366
        %v3368 = vlaneseq
        %v3369 = vshrl.u32 %v3368, 7
        %v3370 = vsub.s32 %v3367, %v3369
        %v3371 = vrot.slane %v3357, %v3370
        %v3372 = vcombine.low %v3347, %v3355
        %v3373 = vcombine.high %v3347, %v3355
        %v3375 = vunpack.c.l.s4 1934713408
        %v3376 = vunpack.c.0.s8 %v3375
        %v3377 = vlaneseq
        %v3378 = vshrl.u32 %v3377, 7
        %v3379 = vsub.s32 %v3376, %v3378
        %v3380 = vrot.slane %v3372, %v3379
        %v3382 = vunpack.c.l.s4 1934713408
        %v3383 = vunpack.c.0.s8 %v3382
        %v3384 = vlaneseq
        %v3385 = vshrl.u32 %v3384, 7
        %v3386 = vsub.s32 %v3383, %v3385
        %v3387 = vrot.slane %v3373, %v3386
        %v3388 = vcombine.low %v3364, %v3380
        %v3389 = vcombine.high %v3364, %v3380
        %v3390 = vcombine.low %v3371, %v3387
        %v3391 = vcombine.high %v3371, %v3387
        %v3392 = vpack.c.bf16 %v3388, %v3320
        %v3393 = vpack.c.bf16 %v3389, %v3321
        %v3394 = vpack.c.bf16 %v3390, %v3322
        %v3395 = vpack.c.bf16 %v3391, %v3323
        %v3397 = vsel %vm1739, %v2792, 0
        %v3400 = vsel %vm1739, %v3092, 0
        %3402 = vmatprep.subr.bf16.mxu0 0
        %3403 = vmatpush1.bf16.xpose.msra.mxu0 %v3400
        %3404 = vmatprep.subr.bf16.mxu0 0
        %3405 = vmatpush1.bf16.xpose.msra.mxu0 0
        %3406 = vmatprep.subr.bf16.mxu0 0
        %3407 = vmatpush1.bf16.xpose.msra.mxu0 0
        %3408 = vmatprep.subr.bf16.mxu0 0
        %3409 = vmatpush1.bf16.xpose.msra.mxu0 0
        %3410 = vmatprep.subr.bf16.mxu0 0
        %3411 = vmatpush1.bf16.xpose.msra.mxu0 0
        %3412 = vmatprep.subr.bf16.mxu0 0
        %3413 = vmatpush1.bf16.xpose.msra.mxu0 0
        %3414 = vmatprep.subr.bf16.mxu0 0
        %3415 = vmatpush1.bf16.xpose.msra.mxu0 0
        %3416 = vmatprep.subr.bf16.mxu0 0
        %3417 = vmatpush1.bf16.xpose.msra.mxu0 0
        %3418 = vmatprep.subr.bf16.mxu0 0
        %3419 = vmatpush1.bf16.xpose.msra.mxu0 0
        %3420 = vmatprep.subr.bf16.mxu0 0
        %3421 = vmatpush1.bf16.xpose.msra.mxu0 0
        %3422 = vmatprep.subr.bf16.mxu0 0
        %3423 = vmatpush1.bf16.xpose.msra.mxu0 0
        %3424 = vmatprep.subr.bf16.mxu0 0
        %3425 = vmatpush1.bf16.xpose.msra.mxu0 0
        %3426 = vmatprep.subr.bf16.mxu0 0
        %3427 = vmatpush1.bf16.xpose.msra.mxu0 0
        %3428 = vmatprep.subr.bf16.mxu0 0
        %3429 = vmatpush1.bf16.xpose.msra.mxu0 0
        %3430 = vmatprep.subr.bf16.mxu0 0
        %3431 = vmatpush1.bf16.xpose.msra.mxu0 0
        %3432 = vmatprep.subr.bf16.mxu0 0
        %3433 = vmatpush1.bf16.xpose.msra.mxu0 0
        %3434 = vmatprep.mubr.bf16.mxu0 0
        %3435 = vmatmul.mubr.bf16.gmra.mrb[0].mxu0 %v3397
        %v3436 = vpop.f32.mrb[0].mxu0
        %v3437 = vadd.f32 0.0, %v3436
        %v3438 = vpop.f32.mrb[0].mxu0
        %v3439 = vpop.f32.mrb[0].mxu0
        %v3440 = vadd.f32 0.0, %v3439
        %v3441 = vpop.f32.mrb[0].mxu0
        %3442 = vdwg.mxu0
        %v3444 = vsel %vm1739, %v2793, 0
        %v3447 = vsel %vm1739, %v3093, 0
        %3449 = vmatprep.subr.bf16.mxu0 0
        %3450 = vmatpush1.bf16.xpose.msra.mxu0 %v3447
        %3451 = vmatprep.subr.bf16.mxu0 0
        %3452 = vmatpush1.bf16.xpose.msra.mxu0 0
        %3453 = vmatprep.subr.bf16.mxu0 0
        %3454 = vmatpush1.bf16.xpose.msra.mxu0 0
        %3455 = vmatprep.subr.bf16.mxu0 0
        %3456 = vmatpush1.bf16.xpose.msra.mxu0 0
        %3457 = vmatprep.subr.bf16.mxu0 0
        %3458 = vmatpush1.bf16.xpose.msra.mxu0 0
        %3459 = vmatprep.subr.bf16.mxu0 0
        %3460 = vmatpush1.bf16.xpose.msra.mxu0 0
        %3461 = vmatprep.subr.bf16.mxu0 0
        %3462 = vmatpush1.bf16.xpose.msra.mxu0 0
        %3463 = vmatprep.subr.bf16.mxu0 0
        %3464 = vmatpush1.bf16.xpose.msra.mxu0 0
        %3465 = vmatprep.subr.bf16.mxu0 0
        %3466 = vmatpush1.bf16.xpose.msra.mxu0 0
        %3467 = vmatprep.subr.bf16.mxu0 0
        %3468 = vmatpush1.bf16.xpose.msra.mxu0 0
        %3469 = vmatprep.subr.bf16.mxu0 0
        %3470 = vmatpush1.bf16.xpose.msra.mxu0 0
        %3471 = vmatprep.subr.bf16.mxu0 0
        %3472 = vmatpush1.bf16.xpose.msra.mxu0 0
        %3473 = vmatprep.subr.bf16.mxu0 0
        %3474 = vmatpush1.bf16.xpose.msra.mxu0 0
        %3475 = vmatprep.subr.bf16.mxu0 0
        %3476 = vmatpush1.bf16.xpose.msra.mxu0 0
        %3477 = vmatprep.subr.bf16.mxu0 0
        %3478 = vmatpush1.bf16.xpose.msra.mxu0 0
        %3479 = vmatprep.subr.bf16.mxu0 0
        %3480 = vmatpush1.bf16.xpose.msra.mxu0 0
        %3481 = vmatprep.mubr.bf16.mxu0 0
        %3482 = vmatmul.mubr.bf16.gmra.mrb[0].mxu0 %v3444
        %v3483 = vpop.f32.mrb[0].mxu0
        %v3484 = vadd.f32 0.0, %v3483
        %v3485 = vpop.f32.mrb[0].mxu0
        %v3486 = vpop.f32.mrb[0].mxu0
        %v3487 = vadd.f32 0.0, %v3486
        %v3488 = vpop.f32.mrb[0].mxu0
        %3489 = vdwg.mxu0
        %v3491 = vsel %vm1739, %v2794, 0
        %v3494 = vsel %vm1739, %v3094, 0
        %3496 = vmatprep.subr.bf16.mxu0 0
        %3497 = vmatpush1.bf16.xpose.msra.mxu0 %v3494
        %3498 = vmatprep.subr.bf16.mxu0 0
        %3499 = vmatpush1.bf16.xpose.msra.mxu0 0
        %3500 = vmatprep.subr.bf16.mxu0 0
        %3501 = vmatpush1.bf16.xpose.msra.mxu0 0
        %3502 = vmatprep.subr.bf16.mxu0 0
        %3503 = vmatpush1.bf16.xpose.msra.mxu0 0
        %3504 = vmatprep.subr.bf16.mxu0 0
        %3505 = vmatpush1.bf16.xpose.msra.mxu0 0
        %3506 = vmatprep.subr.bf16.mxu0 0
        %3507 = vmatpush1.bf16.xpose.msra.mxu0 0
        %3508 = vmatprep.subr.bf16.mxu0 0
        %3509 = vmatpush1.bf16.xpose.msra.mxu0 0
        %3510 = vmatprep.subr.bf16.mxu0 0
        %3511 = vmatpush1.bf16.xpose.msra.mxu0 0
        %3512 = vmatprep.subr.bf16.mxu0 0
        %3513 = vmatpush1.bf16.xpose.msra.mxu0 0
        %3514 = vmatprep.subr.bf16.mxu0 0
        %3515 = vmatpush1.bf16.xpose.msra.mxu0 0
        %3516 = vmatprep.subr.bf16.mxu0 0
        %3517 = vmatpush1.bf16.xpose.msra.mxu0 0
        %3518 = vmatprep.subr.bf16.mxu0 0
        %3519 = vmatpush1.bf16.xpose.msra.mxu0 0
        %3520 = vmatprep.subr.bf16.mxu0 0
        %3521 = vmatpush1.bf16.xpose.msra.mxu0 0
        %3522 = vmatprep.subr.bf16.mxu0 0
        %3523 = vmatpush1.bf16.xpose.msra.mxu0 0
        %3524 = vmatprep.subr.bf16.mxu0 0
        %3525 = vmatpush1.bf16.xpose.msra.mxu0 0
        %3526 = vmatprep.subr.bf16.mxu0 0
        %3527 = vmatpush1.bf16.xpose.msra.mxu0 0
        %3528 = vmatprep.mubr.bf16.mxu0 0
        %3529 = vmatmul.mubr.bf16.gmra.mrb[0].mxu0 %v3491
        %v3530 = vpop.f32.mrb[0].mxu0
        %v3531 = vadd.f32 0.0, %v3530
        %v3532 = vpop.f32.mrb[0].mxu0
        %v3533 = vpop.f32.mrb[0].mxu0
        %v3534 = vadd.f32 0.0, %v3533
        %v3535 = vpop.f32.mrb[0].mxu0
        %3536 = vdwg.mxu0
        %v3538 = vsel %vm1739, %v2795, 0
        %v3541 = vsel %vm1739, %v3095, 0
        %3543 = vmatprep.subr.bf16.mxu0 0
        %3544 = vmatpush1.bf16.xpose.msra.mxu0 %v3541
        %3545 = vmatprep.subr.bf16.mxu0 0
        %3546 = vmatpush1.bf16.xpose.msra.mxu0 0
        %3547 = vmatprep.subr.bf16.mxu0 0
        %3548 = vmatpush1.bf16.xpose.msra.mxu0 0
        %3549 = vmatprep.subr.bf16.mxu0 0
        %3550 = vmatpush1.bf16.xpose.msra.mxu0 0
        %3551 = vmatprep.subr.bf16.mxu0 0
        %3552 = vmatpush1.bf16.xpose.msra.mxu0 0
        %3553 = vmatprep.subr.bf16.mxu0 0
        %3554 = vmatpush1.bf16.xpose.msra.mxu0 0
        %3555 = vmatprep.subr.bf16.mxu0 0
        %3556 = vmatpush1.bf16.xpose.msra.mxu0 0
        %3557 = vmatprep.subr.bf16.mxu0 0
        %3558 = vmatpush1.bf16.xpose.msra.mxu0 0
        %3559 = vmatprep.subr.bf16.mxu0 0
        %3560 = vmatpush1.bf16.xpose.msra.mxu0 0
        %3561 = vmatprep.subr.bf16.mxu0 0
        %3562 = vmatpush1.bf16.xpose.msra.mxu0 0
        %3563 = vmatprep.subr.bf16.mxu0 0
        %3564 = vmatpush1.bf16.xpose.msra.mxu0 0
        %3565 = vmatprep.subr.bf16.mxu0 0
        %3566 = vmatpush1.bf16.xpose.msra.mxu0 0
        %3567 = vmatprep.subr.bf16.mxu0 0
        %3568 = vmatpush1.bf16.xpose.msra.mxu0 0
        %3569 = vmatprep.subr.bf16.mxu0 0
        %3570 = vmatpush1.bf16.xpose.msra.mxu0 0
        %3571 = vmatprep.subr.bf16.mxu0 0
        %3572 = vmatpush1.bf16.xpose.msra.mxu0 0
        %3573 = vmatprep.subr.bf16.mxu0 0
        %3574 = vmatpush1.bf16.xpose.msra.mxu0 0
        %3575 = vmatprep.mubr.bf16.mxu0 0
        %3576 = vmatmul.mubr.bf16.gmra.mrb[0].mxu0 %v3538
        %v3577 = vpop.f32.mrb[0].mxu0
        %v3578 = vadd.f32 0.0, %v3577
        %v3579 = vpop.f32.mrb[0].mxu0
        %v3580 = vpop.f32.mrb[0].mxu0
        %v3581 = vadd.f32 0.0, %v3580
        %v3582 = vpop.f32.mrb[0].mxu0
        %3583 = vdwg.mxu0
        %v3584 = vsel %vm1928, %v3437, -inf
        %3585 = vmax.xlane.f32.xlu0 %v3584
        %v3586 = vpop.xlane.xlu0 %3585
        %v3587 = vsel %vm1928, %v3440, -inf
        %3588 = vmax.xlane.f32.xlu0 %v3587
        %v3589 = vpop.xlane.xlu0 %3588
        %v3590 = vsel %vm1928, %v3484, -inf
        %3591 = vmax.xlane.f32.xlu0 %v3590
        %v3592 = vpop.xlane.xlu0 %3591
        %v3593 = vsel %vm1928, %v3487, -inf
        %3594 = vmax.xlane.f32.xlu0 %v3593
        %v3595 = vpop.xlane.xlu0 %3594
        %v3596 = vsel %vm1928, %v3531, -inf
        %3597 = vmax.xlane.f32.xlu0 %v3596
        %v3598 = vpop.xlane.xlu0 %3597
        %v3599 = vsel %vm1928, %v3534, -inf
        %3600 = vmax.xlane.f32.xlu0 %v3599
        %v3601 = vpop.xlane.xlu0 %3600
        %v3602 = vsel %vm1928, %v3578, -inf
        %3603 = vmax.xlane.f32.xlu0 %v3602
        %v3604 = vpop.xlane.xlu0 %3603
        %v3605 = vsel %vm1928, %v3581, -inf
        %3606 = vmax.xlane.f32.xlu0 %v3605
        %v3607 = vpop.xlane.xlu0 %3606
        %v3608 = vsub.f32 %v3437, %v3586
        %v3609 = vsub.f32 %v3440, %v3589
        %v3610 = vsub.f32 %v3484, %v3592
        %v3611 = vsub.f32 %v3487, %v3595
        %v3612 = vsub.f32 %v3531, %v3598
        %v3613 = vsub.f32 %v3534, %v3601
        %v3614 = vsub.f32 %v3578, %v3604
        %v3615 = vsub.f32 %v3581, %v3607
        %v3616 = vmul.f32 %v3608, 1.442695
        %v3617 = vpow.pop %v3616
        %v3618 = vmul.f32 %v3609, 1.442695
        %v3619 = vpow.pop %v3618
        %v3620 = vmul.f32 %v3610, 1.442695
        %v3621 = vpow.pop %v3620
        %v3622 = vmul.f32 %v3611, 1.442695
        %v3623 = vpow.pop %v3622
        %v3624 = vmul.f32 %v3612, 1.442695
        %v3625 = vpow.pop %v3624
        %v3626 = vmul.f32 %v3613, 1.442695
        %v3627 = vpow.pop %v3626
        %v3628 = vmul.f32 %v3614, 1.442695
        %v3629 = vpow.pop %v3628
        %v3630 = vmul.f32 %v3615, 1.442695
        %v3631 = vpow.pop %v3630
        %v3632 = vpack.c.bf16 %v3619, %v3617
        %v3633 = vpack.c.bf16 %v3623, %v3621
        %v3634 = vpack.c.bf16 %v3627, %v3625
        %v3635 = vpack.c.bf16 %v3631, %v3629
        %v3637 = vsel %vm1928, %v3632, 0
        %3639 = vmatprep.subr.bf16.mxu0 0
        %3640 = vmatpush1.bf16.msra.mxu0 %v3392
        %3641 = vmatprep.subr.bf16.mxu0 0
        %3642 = vmatpush1.bf16.msra.mxu0 0
        %3643 = vmatprep.subr.bf16.mxu0 0
        %3644 = vmatpush1.bf16.msra.mxu0 0
        %3645 = vmatprep.subr.bf16.mxu0 0
        %3646 = vmatpush1.bf16.msra.mxu0 0
        %3647 = vmatprep.subr.bf16.mxu0 0
        %3648 = vmatpush1.bf16.msra.mxu0 0
        %3649 = vmatprep.subr.bf16.mxu0 0
        %3650 = vmatpush1.bf16.msra.mxu0 0
        %3651 = vmatprep.subr.bf16.mxu0 0
        %3652 = vmatpush1.bf16.msra.mxu0 0
        %3653 = vmatprep.subr.bf16.mxu0 0
        %3654 = vmatpush1.bf16.msra.mxu0 0
        %3655 = vmatprep.subr.bf16.mxu0 0
        %3656 = vmatpush1.bf16.msra.mxu0 0
        %3657 = vmatprep.subr.bf16.mxu0 0
        %3658 = vmatpush1.bf16.msra.mxu0 0
        %3659 = vmatprep.subr.bf16.mxu0 0
        %3660 = vmatpush1.bf16.msra.mxu0 0
        %3661 = vmatprep.subr.bf16.mxu0 0
        %3662 = vmatpush1.bf16.msra.mxu0 0
        %3663 = vmatprep.subr.bf16.mxu0 0
        %3664 = vmatpush1.bf16.msra.mxu0 0
        %3665 = vmatprep.subr.bf16.mxu0 0
        %3666 = vmatpush1.bf16.msra.mxu0 0
        %3667 = vmatprep.subr.bf16.mxu0 0
        %3668 = vmatpush1.bf16.msra.mxu0 0
        %3669 = vmatprep.subr.bf16.mxu0 0
        %3670 = vmatpush1.bf16.msra.mxu0 0
        %3671 = vmatprep.mubr.bf16.mxu0 0
        %3672 = vmatmul.mubr.bf16.gmra.mrb[0].mxu0 %v3637
        %v3673 = vpop.f32.mrb[0].mxu0
        %v3674 = vadd.f32 0.0, %v3673
        %v3675 = vpop.f32.mrb[0].mxu0
        %v3676 = vpop.f32.mrb[0].mxu0
        %v3677 = vadd.f32 0.0, %v3676
        %v3678 = vpop.f32.mrb[0].mxu0
        %3679 = vdwg.mxu0
        %v3681 = vsel %vm1928, %v3633, 0
        %3683 = vmatprep.subr.bf16.mxu0 0
        %3684 = vmatpush1.bf16.msra.mxu0 %v3393
        %3685 = vmatprep.subr.bf16.mxu0 0
        %3686 = vmatpush1.bf16.msra.mxu0 0
        %3687 = vmatprep.subr.bf16.mxu0 0
        %3688 = vmatpush1.bf16.msra.mxu0 0
        %3689 = vmatprep.subr.bf16.mxu0 0
        %3690 = vmatpush1.bf16.msra.mxu0 0
        %3691 = vmatprep.subr.bf16.mxu0 0
        %3692 = vmatpush1.bf16.msra.mxu0 0
        %3693 = vmatprep.subr.bf16.mxu0 0
        %3694 = vmatpush1.bf16.msra.mxu0 0
        %3695 = vmatprep.subr.bf16.mxu0 0
        %3696 = vmatpush1.bf16.msra.mxu0 0
        %3697 = vmatprep.subr.bf16.mxu0 0
        %3698 = vmatpush1.bf16.msra.mxu0 0
        %3699 = vmatprep.subr.bf16.mxu0 0
        %3700 = vmatpush1.bf16.msra.mxu0 0
        %3701 = vmatprep.subr.bf16.mxu0 0
        %3702 = vmatpush1.bf16.msra.mxu0 0
        %3703 = vmatprep.subr.bf16.mxu0 0
        %3704 = vmatpush1.bf16.msra.mxu0 0
        %3705 = vmatprep.subr.bf16.mxu0 0
        %3706 = vmatpush1.bf16.msra.mxu0 0
        %3707 = vmatprep.subr.bf16.mxu0 0
        %3708 = vmatpush1.bf16.msra.mxu0 0
        %3709 = vmatprep.subr.bf16.mxu0 0
        %3710 = vmatpush1.bf16.msra.mxu0 0
        %3711 = vmatprep.subr.bf16.mxu0 0
        %3712 = vmatpush1.bf16.msra.mxu0 0
        %3713 = vmatprep.subr.bf16.mxu0 0
        %3714 = vmatpush1.bf16.msra.mxu0 0
        %3715 = vmatprep.mubr.bf16.mxu0 0
        %3716 = vmatmul.mubr.bf16.gmra.mrb[0].mxu0 %v3681
        %v3717 = vpop.f32.mrb[0].mxu0
        %v3718 = vadd.f32 0.0, %v3717
        %v3719 = vpop.f32.mrb[0].mxu0
        %v3720 = vpop.f32.mrb[0].mxu0
        %v3721 = vadd.f32 0.0, %v3720
        %v3722 = vpop.f32.mrb[0].mxu0
        %3723 = vdwg.mxu0
        %v3725 = vsel %vm1928, %v3634, 0
        %3727 = vmatprep.subr.bf16.mxu0 0
        %3728 = vmatpush1.bf16.msra.mxu0 %v3394
        %3729 = vmatprep.subr.bf16.mxu0 0
        %3730 = vmatpush1.bf16.msra.mxu0 0
        %3731 = vmatprep.subr.bf16.mxu0 0
        %3732 = vmatpush1.bf16.msra.mxu0 0
        %3733 = vmatprep.subr.bf16.mxu0 0
        %3734 = vmatpush1.bf16.msra.mxu0 0
        %3735 = vmatprep.subr.bf16.mxu0 0
        %3736 = vmatpush1.bf16.msra.mxu0 0
        %3737 = vmatprep.subr.bf16.mxu0 0
        %3738 = vmatpush1.bf16.msra.mxu0 0
        %3739 = vmatprep.subr.bf16.mxu0 0
        %3740 = vmatpush1.bf16.msra.mxu0 0
        %3741 = vmatprep.subr.bf16.mxu0 0
        %3742 = vmatpush1.bf16.msra.mxu0 0
        %3743 = vmatprep.subr.bf16.mxu0 0
        %3744 = vmatpush1.bf16.msra.mxu0 0
        %3745 = vmatprep.subr.bf16.mxu0 0
        %3746 = vmatpush1.bf16.msra.mxu0 0
        %3747 = vmatprep.subr.bf16.mxu0 0
        %3748 = vmatpush1.bf16.msra.mxu0 0
        %3749 = vmatprep.subr.bf16.mxu0 0
        %3750 = vmatpush1.bf16.msra.mxu0 0
        %3751 = vmatprep.subr.bf16.mxu0 0
        %3752 = vmatpush1.bf16.msra.mxu0 0
        %3753 = vmatprep.subr.bf16.mxu0 0
        %3754 = vmatpush1.bf16.msra.mxu0 0
        %3755 = vmatprep.subr.bf16.mxu0 0
        %3756 = vmatpush1.bf16.msra.mxu0 0
        %3757 = vmatprep.subr.bf16.mxu0 0
        %3758 = vmatpush1.bf16.msra.mxu0 0
        %3759 = vmatprep.mubr.bf16.mxu0 0
        %3760 = vmatmul.mubr.bf16.gmra.mrb[0].mxu0 %v3725
        %v3761 = vpop.f32.mrb[0].mxu0
        %v3762 = vadd.f32 0.0, %v3761
        %v3763 = vpop.f32.mrb[0].mxu0
        %v3764 = vpop.f32.mrb[0].mxu0
        %v3765 = vadd.f32 0.0, %v3764
        %v3766 = vpop.f32.mrb[0].mxu0
        %3767 = vdwg.mxu0
        %v3769 = vsel %vm1928, %v3635, 0
        %3771 = vmatprep.subr.bf16.mxu0 0
        %3772 = vmatpush1.bf16.msra.mxu0 %v3395
        %3773 = vmatprep.subr.bf16.mxu0 0
        %3774 = vmatpush1.bf16.msra.mxu0 0
        %3775 = vmatprep.subr.bf16.mxu0 0
        %3776 = vmatpush1.bf16.msra.mxu0 0
        %3777 = vmatprep.subr.bf16.mxu0 0
        %3778 = vmatpush1.bf16.msra.mxu0 0
        %3779 = vmatprep.subr.bf16.mxu0 0
        %3780 = vmatpush1.bf16.msra.mxu0 0
        %3781 = vmatprep.subr.bf16.mxu0 0
        %3782 = vmatpush1.bf16.msra.mxu0 0
        %3783 = vmatprep.subr.bf16.mxu0 0
        %3784 = vmatpush1.bf16.msra.mxu0 0
        %3785 = vmatprep.subr.bf16.mxu0 0
        %3786 = vmatpush1.bf16.msra.mxu0 0
        %3787 = vmatprep.subr.bf16.mxu0 0
        %3788 = vmatpush1.bf16.msra.mxu0 0
        %3789 = vmatprep.subr.bf16.mxu0 0
        %3790 = vmatpush1.bf16.msra.mxu0 0
        %3791 = vmatprep.subr.bf16.mxu0 0
        %3792 = vmatpush1.bf16.msra.mxu0 0
        %3793 = vmatprep.subr.bf16.mxu0 0
        %3794 = vmatpush1.bf16.msra.mxu0 0
        %3795 = vmatprep.subr.bf16.mxu0 0
        %3796 = vmatpush1.bf16.msra.mxu0 0
        %3797 = vmatprep.subr.bf16.mxu0 0
        %3798 = vmatpush1.bf16.msra.mxu0 0
        %3799 = vmatprep.subr.bf16.mxu0 0
        %3800 = vmatpush1.bf16.msra.mxu0 0
        %3801 = vmatprep.subr.bf16.mxu0 0
        %3802 = vmatpush1.bf16.msra.mxu0 0
        %3803 = vmatprep.mubr.bf16.mxu0 0
        %3804 = vmatmul.mubr.bf16.gmra.mrb[0].mxu0 %v3769
        %v3805 = vpop.f32.mrb[0].mxu0
        %v3806 = vadd.f32 0.0, %v3805
        %v3807 = vpop.f32.mrb[0].mxu0
        %v3808 = vpop.f32.mrb[0].mxu0
        %v3809 = vadd.f32 0.0, %v3808
        %v3810 = vpop.f32.mrb[0].mxu0
        %3811 = vdwg.mxu0
        %v3812 = vsel %vm1928, %v3617, 0.0
        %3813 = vadd.xlane.f32.xlu0 %v3812
        %v3814 = vpop.xlane.xlu0 %3813
        %v3815 = vsel %vm1928, %v3619, 0.0
        %3816 = vadd.xlane.f32.xlu0 %v3815
        %v3817 = vpop.xlane.xlu0 %3816
        %v3818 = vsel %vm1928, %v3621, 0.0
        %3819 = vadd.xlane.f32.xlu0 %v3818
        %v3820 = vpop.xlane.xlu0 %3819
        %v3821 = vsel %vm1928, %v3623, 0.0
        %3822 = vadd.xlane.f32.xlu0 %v3821
        %v3823 = vpop.xlane.xlu0 %3822
        %v3824 = vsel %vm1928, %v3625, 0.0
        %3825 = vadd.xlane.f32.xlu0 %v3824
        %v3826 = vpop.xlane.xlu0 %3825
        %v3827 = vsel %vm1928, %v3627, 0.0
        %3828 = vadd.xlane.f32.xlu0 %v3827
        %v3829 = vpop.xlane.xlu0 %3828
        %v3830 = vsel %vm1928, %v3629, 0.0
        %3831 = vadd.xlane.f32.xlu0 %v3830
        %v3832 = vpop.xlane.xlu0 %3831
        %v3833 = vsel %vm1928, %v3631, 0.0
        %3834 = vadd.xlane.f32.xlu0 %v3833
        %v3835 = vpop.xlane.xlu0 %3834
        %v3836 = vrcp.pop %v3814
        %v3837 = vrcp.pop %v3817
        %v3838 = vrcp.pop %v3820
        %v3839 = vrcp.pop %v3823
        %v3840 = vrcp.pop %v3826
        %v3841 = vrcp.pop %v3829
        %v3842 = vrcp.pop %v3832
        %v3843 = vrcp.pop %v3835
        %v3844 = vmul.f32 %v3674, %v3836
        %v3845 = vmul.f32 %v3677, %v3837
        %v3846 = vmul.f32 %v3718, %v3838
        %v3847 = vmul.f32 %v3721, %v3839
        %v3848 = vmul.f32 %v3762, %v3840
        %v3849 = vmul.f32 %v3765, %v3841
        %v3850 = vmul.f32 %v3806, %v3842
        %v3851 = vmul.f32 %v3809, %v3843
        %v3852 = vcombine.low %v3844, %v3848
        %v3853 = vcombine.high %v3844, %v3848
        %v3855 = vunpack.c.l.s4 1983009808
        %v3856 = vunpack.c.0.s8 %v3855
        %v3857 = vlaneseq
        %v3858 = vshrl.u32 %v3857, 7
        %v3859 = vsub.s32 %v3856, %v3858
        %v3860 = vrot.slane %v3852, %v3859
        %v3862 = vunpack.c.l.s4 1983009808
        %v3863 = vunpack.c.0.s8 %v3862
        %v3864 = vlaneseq
        %v3865 = vshrl.u32 %v3864, 7
        %v3866 = vsub.s32 %v3863, %v3865
        %v3867 = vrot.slane %v3853, %v3866
        %v3868 = vcombine.low %v3846, %v3850
        %v3869 = vcombine.high %v3846, %v3850
        %v3871 = vunpack.c.l.s4 1983009808
        %v3872 = vunpack.c.0.s8 %v3871
        %v3873 = vlaneseq
        %v3874 = vshrl.u32 %v3873, 7
        %v3875 = vsub.s32 %v3872, %v3874
        %v3876 = vrot.slane %v3868, %v3875
        %v3878 = vunpack.c.l.s4 1983009808
        %v3879 = vunpack.c.0.s8 %v3878
        %v3880 = vlaneseq
        %v3881 = vshrl.u32 %v3880, 7
        %v3882 = vsub.s32 %v3879, %v3881
        %v3883 = vrot.slane %v3869, %v3882
        %v3884 = vcombine.low %v3860, %v3876
        %v3885 = vcombine.high %v3860, %v3876
        %v3887 = vunpack.c.l.s4 1934713408
        %v3888 = vunpack.c.0.s8 %v3887
        %v3889 = vlaneseq
        %v3890 = vshrl.u32 %v3889, 7
        %v3891 = vsub.s32 %v3888, %v3890
        %v3892 = vrot.slane %v3884, %v3891
        %v3894 = vunpack.c.l.s4 1934713408
        %v3895 = vunpack.c.0.s8 %v3894
        %v3896 = vlaneseq
        %v3897 = vshrl.u32 %v3896, 7
        %v3898 = vsub.s32 %v3895, %v3897
        %v3899 = vrot.slane %v3885, %v3898
        %v3900 = vcombine.low %v3867, %v3883
        %v3901 = vcombine.high %v3867, %v3883
        %v3903 = vunpack.c.l.s4 1934713408
        %v3904 = vunpack.c.0.s8 %v3903
        %v3905 = vlaneseq
        %v3906 = vshrl.u32 %v3905, 7
        %v3907 = vsub.s32 %v3904, %v3906
        %v3908 = vrot.slane %v3900, %v3907
        %v3910 = vunpack.c.l.s4 1934713408
        %v3911 = vunpack.c.0.s8 %v3910
        %v3912 = vlaneseq
        %v3913 = vshrl.u32 %v3912, 7
        %v3914 = vsub.s32 %v3911, %v3913
        %v3915 = vrot.slane %v3901, %v3914
        %v3916 = vcombine.high %v3892, 0.0
        %v3917 = vcombine.high %v3899, 0.0
        %v3918 = vcombine.high %v3908, 0.0
        %v3919 = vcombine.high %v3915, 0.0
        %v3920 = vcombine.low %v3845, %v3849
        %v3921 = vcombine.high %v3845, %v3849
        %v3923 = vunpack.c.l.s4 1983009808
        %v3924 = vunpack.c.0.s8 %v3923
        %v3925 = vlaneseq
        %v3926 = vshrl.u32 %v3925, 7
        %v3927 = vsub.s32 %v3924, %v3926
        %v3928 = vrot.slane %v3920, %v3927
        %v3930 = vunpack.c.l.s4 1983009808
        %v3931 = vunpack.c.0.s8 %v3930
        %v3932 = vlaneseq
        %v3933 = vshrl.u32 %v3932, 7
        %v3934 = vsub.s32 %v3931, %v3933
        %v3935 = vrot.slane %v3921, %v3934
        %v3936 = vcombine.low %v3847, %v3851
        %v3937 = vcombine.high %v3847, %v3851
        %v3939 = vunpack.c.l.s4 1983009808
        %v3940 = vunpack.c.0.s8 %v3939
        %v3941 = vlaneseq
        %v3942 = vshrl.u32 %v3941, 7
        %v3943 = vsub.s32 %v3940, %v3942
        %v3944 = vrot.slane %v3936, %v3943
        %v3946 = vunpack.c.l.s4 1983009808
        %v3947 = vunpack.c.0.s8 %v3946
        %v3948 = vlaneseq
        %v3949 = vshrl.u32 %v3948, 7
        %v3950 = vsub.s32 %v3947, %v3949
        %v3951 = vrot.slane %v3937, %v3950
        %v3952 = vcombine.low %v3928, %v3944
        %v3953 = vcombine.high %v3928, %v3944
        %v3955 = vunpack.c.l.s4 1934713408
        %v3956 = vunpack.c.0.s8 %v3955
        %v3957 = vlaneseq
        %v3958 = vshrl.u32 %v3957, 7
        %v3959 = vsub.s32 %v3956, %v3958
        %v3960 = vrot.slane %v3952, %v3959
        %v3962 = vunpack.c.l.s4 1934713408
        %v3963 = vunpack.c.0.s8 %v3962
        %v3964 = vlaneseq
        %v3965 = vshrl.u32 %v3964, 7
        %v3966 = vsub.s32 %v3963, %v3965
        %v3967 = vrot.slane %v3953, %v3966
        %v3968 = vcombine.low %v3935, %v3951
        %v3969 = vcombine.high %v3935, %v3951
        %v3971 = vunpack.c.l.s4 1934713408
        %v3972 = vunpack.c.0.s8 %v3971
        %v3973 = vlaneseq
        %v3974 = vshrl.u32 %v3973, 7
        %v3975 = vsub.s32 %v3972, %v3974
        %v3976 = vrot.slane %v3968, %v3975
        %v3978 = vunpack.c.l.s4 1934713408
        %v3979 = vunpack.c.0.s8 %v3978
        %v3980 = vlaneseq
        %v3981 = vshrl.u32 %v3980, 7
        %v3982 = vsub.s32 %v3979, %v3981
        %v3983 = vrot.slane %v3969, %v3982
        %v3984 = vcombine.high %v3960, 0.0
        %v3985 = vcombine.high %v3967, 0.0
        %v3986 = vcombine.high %v3976, 0.0
        %v3987 = vcombine.high %v3983, 0.0
        %v3988 = vcombine.low %v3892, %v3899
        %v3990 = vunpack.c.l.s4 1983009808
        %v3991 = vunpack.c.0.s8 %v3990
        %v3992 = vlaneseq
        %v3993 = vshrl.u32 %v3992, 7
        %v3994 = vsub.s32 %v3991, %v3993
        %v3995 = vrot.slane %v3988, %v3994
        %v3996 = vcombine.low %v3916, %v3917
        %v3998 = vunpack.c.l.s4 1983009808
        %v3999 = vunpack.c.0.s8 %v3998
        %v4000 = vlaneseq
        %v4001 = vshrl.u32 %v4000, 7
        %v4002 = vsub.s32 %v3999, %v4001
        %v4003 = vrot.slane %v3996, %v4002
        %v4004 = vcombine.low %v3908, %v3915
        %v4006 = vunpack.c.l.s4 1983009808
        %v4007 = vunpack.c.0.s8 %v4006
        %v4008 = vlaneseq
        %v4009 = vshrl.u32 %v4008, 7
        %v4010 = vsub.s32 %v4007, %v4009
        %v4011 = vrot.slane %v4004, %v4010
        %v4012 = vcombine.low %v3918, %v3919
        %v4014 = vunpack.c.l.s4 1983009808
        %v4015 = vunpack.c.0.s8 %v4014
        %v4016 = vlaneseq
        %v4017 = vshrl.u32 %v4016, 7
        %v4018 = vsub.s32 %v4015, %v4017
        %v4019 = vrot.slane %v4012, %v4018
        %v4020 = vcombine.low %v3995, %v4003
        %v4021 = vcombine.high %v3995, %v4003
        %v4023 = vunpack.c.l.s4 1934713408
        %v4024 = vunpack.c.0.s8 %v4023
        %v4025 = vlaneseq
        %v4026 = vshrl.u32 %v4025, 7
        %v4027 = vsub.s32 %v4024, %v4026
        %v4028 = vrot.slane %v4020, %v4027
        %v4030 = vunpack.c.l.s4 1934713408
        %v4031 = vunpack.c.0.s8 %v4030
        %v4032 = vlaneseq
        %v4033 = vshrl.u32 %v4032, 7
        %v4034 = vsub.s32 %v4031, %v4033
        %v4035 = vrot.slane %v4021, %v4034
        %v4036 = vcombine.low %v4011, %v4019
        %v4037 = vcombine.high %v4011, %v4019
        %v4039 = vunpack.c.l.s4 1934713408
        %v4040 = vunpack.c.0.s8 %v4039
        %v4041 = vlaneseq
        %v4042 = vshrl.u32 %v4041, 7
        %v4043 = vsub.s32 %v4040, %v4042
        %v4044 = vrot.slane %v4036, %v4043
        %v4046 = vunpack.c.l.s4 1934713408
        %v4047 = vunpack.c.0.s8 %v4046
        %v4048 = vlaneseq
        %v4049 = vshrl.u32 %v4048, 7
        %v4050 = vsub.s32 %v4047, %v4049
        %v4051 = vrot.slane %v4037, %v4050
        %v4052 = vcombine.low %v4028, %v4044
        %v4053 = vcombine.high %v4028, %v4044
        %v4054 = vcombine.low %v4035, %v4051
        %v4055 = vcombine.high %v4035, %v4051
        %v4056 = vcombine.low %v3960, %v3967
        %v4058 = vunpack.c.l.s4 1983009808
        %v4059 = vunpack.c.0.s8 %v4058
        %v4060 = vlaneseq
        %v4061 = vshrl.u32 %v4060, 7
        %v4062 = vsub.s32 %v4059, %v4061
        %v4063 = vrot.slane %v4056, %v4062
        %v4064 = vcombine.low %v3984, %v3985
        %v4066 = vunpack.c.l.s4 1983009808
        %v4067 = vunpack.c.0.s8 %v4066
        %v4068 = vlaneseq
        %v4069 = vshrl.u32 %v4068, 7
        %v4070 = vsub.s32 %v4067, %v4069
        %v4071 = vrot.slane %v4064, %v4070
        %v4072 = vcombine.low %v3976, %v3983
        %v4074 = vunpack.c.l.s4 1983009808
        %v4075 = vunpack.c.0.s8 %v4074
        %v4076 = vlaneseq
        %v4077 = vshrl.u32 %v4076, 7
        %v4078 = vsub.s32 %v4075, %v4077
        %v4079 = vrot.slane %v4072, %v4078
        %v4080 = vcombine.low %v3986, %v3987
        %v4082 = vunpack.c.l.s4 1983009808
        %v4083 = vunpack.c.0.s8 %v4082
        %v4084 = vlaneseq
        %v4085 = vshrl.u32 %v4084, 7
        %v4086 = vsub.s32 %v4083, %v4085
        %v4087 = vrot.slane %v4080, %v4086
        %v4088 = vcombine.low %v4063, %v4071
        %v4089 = vcombine.high %v4063, %v4071
        %v4091 = vunpack.c.l.s4 1934713408
        %v4092 = vunpack.c.0.s8 %v4091
        %v4093 = vlaneseq
        %v4094 = vshrl.u32 %v4093, 7
        %v4095 = vsub.s32 %v4092, %v4094
        %v4096 = vrot.slane %v4088, %v4095
        %v4098 = vunpack.c.l.s4 1934713408
        %v4099 = vunpack.c.0.s8 %v4098
        %v4100 = vlaneseq
        %v4101 = vshrl.u32 %v4100, 7
        %v4102 = vsub.s32 %v4099, %v4101
        %v4103 = vrot.slane %v4089, %v4102
        %v4104 = vcombine.low %v4079, %v4087
        %v4105 = vcombine.high %v4079, %v4087
        %v4107 = vunpack.c.l.s4 1934713408
        %v4108 = vunpack.c.0.s8 %v4107
        %v4109 = vlaneseq
        %v4110 = vshrl.u32 %v4109, 7
        %v4111 = vsub.s32 %v4108, %v4110
        %v4112 = vrot.slane %v4104, %v4111
        %v4114 = vunpack.c.l.s4 1934713408
        %v4115 = vunpack.c.0.s8 %v4114
        %v4116 = vlaneseq
        %v4117 = vshrl.u32 %v4116, 7
        %v4118 = vsub.s32 %v4115, %v4117
        %v4119 = vrot.slane %v4105, %v4118
        %v4120 = vcombine.low %v4096, %v4112
        %v4121 = vcombine.high %v4096, %v4112
        %v4122 = vcombine.low %v4103, %v4119
        %v4123 = vcombine.high %v4103, %v4119
        %4126 = vrot.lane.b32.xlu0 %v4053, 8
        %v4127 = vpop.permute.xlu0 %4126
        %4128 = vrot.lane.b32.xlu0 %v4121, 8
        %v4129 = vpop.permute.xlu0 %4128
        %4134 = vrot.lane.b32.xlu0 %v4054, 16
        %v4135 = vpop.permute.xlu0 %4134
        %4136 = vrot.lane.b32.xlu0 %v4122, 16
        %v4137 = vpop.permute.xlu0 %4136
        %4142 = vrot.lane.b32.xlu0 %v4055, 24
        %v4143 = vpop.permute.xlu0 %4142
        %4144 = vrot.lane.b32.xlu0 %v4123, 24
        %v4145 = vpop.permute.xlu0 %4144
        %v4148 = vsel %vm1739, %v4052, %v4127
        %v4149 = vsel %vm1739, %v4120, %v4129
        %v4150 = vsel %vm1928, %v4148, %v4135
        %v4151 = vsel %vm1928, %v4149, %v4137
        %v4152 = vsel %vm2497, %v4150, %v4143
        %v4153 = vsel %vm2497, %v4151, %v4145
        %v4154 = vpack.c.bf16 %v2499, %v2498
        %v4155 = vpack.c.bf16 %v4153, %v4152
        %v4156 = vld [vmem:[%s664] sm:$0xf]
        %v4157 = vld [vmem:[%s664 + $0x4] sm:$0xf]
        %v4158 = vld [vmem:[%s664 + $0x8] sm:$0xf]
        %v4159 = vld [vmem:[%s664 + $0xc] sm:$0xf]
        %v4160 = vld [vmem:[%s667] sm:$0x1]
        %v4162 = vlaneseq
        %v4163 = vshrl.u32 %v4162, 7
        %v4164 = vsub.s32 0, %v4163
        %v4165 = vrot.slane %v4160, %v4164
        %v4171 = vunpack.c.l.b16 %v4156
        %v4172 = vunpack.c.l.b16 %v4157
        %v4173 = vunpack.c.l.b16 %v4158
        %v4174 = vunpack.c.l.b16 %v4159
        %v4175 = vpack.c.b16 %v4172, %v4171
        %v4176 = vpack.c.b16 %v4174, %v4173
        %v4180 = vsel %vm689, %v4154, 0
        %v4183 = vsel %vm689, %v4155, 0
        %4185 = vmatprep.subr.bf16.mxu0 0
        %4186 = vmatpush1.bf16.msra.mxu0 %v4175
        %4187 = vmatprep.subr.bf16.mxu0 0
        %4188 = vmatpush1.bf16.msra.mxu0 %v4176
        %4189 = vmatprep.subr.bf16.mxu0 0
        %4190 = vmatpush1.bf16.msra.mxu0 0
        %4191 = vmatprep.subr.bf16.mxu0 0
        %4192 = vmatpush1.bf16.msra.mxu0 0
        %4193 = vmatprep.subr.bf16.mxu0 0
        %4194 = vmatpush1.bf16.msra.mxu0 0
        %4195 = vmatprep.subr.bf16.mxu0 0
        %4196 = vmatpush1.bf16.msra.mxu0 0
        %4197 = vmatprep.subr.bf16.mxu0 0
        %4198 = vmatpush1.bf16.msra.mxu0 0
        %4199 = vmatprep.subr.bf16.mxu0 0
        %4200 = vmatpush1.bf16.msra.mxu0 0
        %4201 = vmatprep.subr.bf16.mxu0 0
        %4202 = vmatpush1.bf16.msra.mxu0 0
        %4203 = vmatprep.subr.bf16.mxu0 0
        %4204 = vmatpush1.bf16.msra.mxu0 0
        %4205 = vmatprep.subr.bf16.mxu0 0
        %4206 = vmatpush1.bf16.msra.mxu0 0
        %4207 = vmatprep.subr.bf16.mxu0 0
        %4208 = vmatpush1.bf16.msra.mxu0 0
        %4209 = vmatprep.subr.bf16.mxu0 0
        %4210 = vmatpush1.bf16.msra.mxu0 0
        %4211 = vmatprep.subr.bf16.mxu0 0
        %4212 = vmatpush1.bf16.msra.mxu0 0
        %4213 = vmatprep.subr.bf16.mxu0 0
        %4214 = vmatpush1.bf16.msra.mxu0 0
        %4215 = vmatprep.subr.bf16.mxu0 0
        %4216 = vmatpush1.bf16.msra.mxu0 0
        %4217 = vmatprep.mubr.bf16.mxu0 0
        %4218 = vmatmul.mubr.bf16.gmra.mrb[0].mxu0 %v4180
        %v4219 = vpop.f32.mrb[0].mxu0
        %v4220 = vadd.f32 %v4165, %v4219
        %v4221 = vpop.f32.mrb[0].mxu0
        %v4222 = vpop.f32.mrb[0].mxu0
        %v4223 = vadd.f32 %v4165, %v4222
        %v4224 = vpop.f32.mrb[0].mxu0
        %4225 = vmatprep.mubr.bf16.mxu0 0
        %4226 = vmatmul.mubr.bf16.gmra.mrb[0].mxu0 %v4183
        %v4227 = vpop.f32.mrb[0].mxu0
        %v4228 = vadd.f32 %v4165, %v4227
        %v4229 = vpop.f32.mrb[0].mxu0
        %v4230 = vpop.f32.mrb[0].mxu0
        %v4231 = vadd.f32 %v4165, %v4230
        %v4232 = vpop.f32.mrb[0].mxu0
        %4233 = vdwg.mxu0
        %v4234 = vadd.f32 %v683, %v4220
        %v4235 = vadd.f32 %v684, %v4223
        %v4236 = vadd.f32 %v685, %v4228
        %v4237 = vadd.f32 %v686, %v4231
        %v4238 = vld [vmem:[#allocation2] sm:$0x1]
        %v4239 = vld [vmem:[#allocation5] sm:$0x1]
        %v4240 = vsel %vm689, %v4234, 0.0
        %4241 = vadd.xlane.f32.xlu0 %v4240
        %v4242 = vpop.xlane.xlu0 %4241
        %v4243 = vsel %vm689, %v4235, 0.0
        %4244 = vadd.xlane.f32.xlu0 %v4243
        %v4245 = vpop.xlane.xlu0 %4244
        %v4246 = vsel %vm689, %v4236, 0.0
        %4247 = vadd.xlane.f32.xlu0 %v4246
        %v4248 = vpop.xlane.xlu0 %4247
        %v4249 = vsel %vm689, %v4237, 0.0
        %4250 = vadd.xlane.f32.xlu0 %v4249
        %v4251 = vpop.xlane.xlu0 %4250
        %v4252 = vmul.f32 %v4242, %v702
        %v4253 = vmul.f32 %v4245, %v702
        %v4254 = vmul.f32 %v4248, %v702
        %v4255 = vmul.f32 %v4251, %v702
        %v4256 = vsub.f32 %v4234, %v4252
        %v4257 = vsub.f32 %v4235, %v4253
        %v4258 = vsub.f32 %v4236, %v4254
        %v4259 = vsub.f32 %v4237, %v4255
        %v4260 = vmul.f32 %v4256, %v4256
        %v4261 = vmul.f32 %v4257, %v4257
        %v4262 = vmul.f32 %v4258, %v4258
        %v4263 = vmul.f32 %v4259, %v4259
        %v4264 = vsel %vm689, %v4260, 0.0
        %4265 = vadd.xlane.f32.xlu0 %v4264
        %v4266 = vpop.xlane.xlu0 %4265
        %v4267 = vsel %vm689, %v4261, 0.0
        %4268 = vadd.xlane.f32.xlu0 %v4267
        %v4269 = vpop.xlane.xlu0 %4268
        %v4270 = vsel %vm689, %v4262, 0.0
        %4271 = vadd.xlane.f32.xlu0 %v4270
        %v4272 = vpop.xlane.xlu0 %4271
        %v4273 = vsel %vm689, %v4263, 0.0
        %4274 = vadd.xlane.f32.xlu0 %v4273
        %v4275 = vpop.xlane.xlu0 %4274
        %v4276 = vmul.f32 %v4266, %v702
        %v4277 = vmul.f32 %v4269, %v702
        %v4278 = vmul.f32 %v4272, %v702
        %v4279 = vmul.f32 %v4275, %v702
        %v4280 = vadd.f32 %v4276, 1e-05
        %v4281 = vadd.f32 %v4277, 1e-05
        %v4282 = vadd.f32 %v4278, 1e-05
        %v4283 = vadd.f32 %v4279, 1e-05
        %v4284 = vrsqrt.pop %v4280
        %v4285 = vrsqrt.pop %v4281
        %v4286 = vrsqrt.pop %v4282
        %v4287 = vrsqrt.pop %v4283
        %v4288 = vmul.f32 %v4256, %v4284
        %v4289 = vmul.f32 %v4257, %v4285
        %v4290 = vmul.f32 %v4258, %v4286
        %v4291 = vmul.f32 %v4259, %v4287
        %v4293 = vlaneseq
        %v4294 = vshrl.u32 %v4293, 7
        %v4295 = vsub.s32 0, %v4294
        %v4296 = vrot.slane %v4238, %v4295
        %v4298 = vmul.f32 %v4288, %v4296
        %v4299 = vmul.f32 %v4289, %v4296
        %v4300 = vmul.f32 %v4290, %v4296
        %v4301 = vmul.f32 %v4291, %v4296
        %v4303 = vlaneseq
        %v4304 = vshrl.u32 %v4303, 7
        %v4305 = vsub.s32 0, %v4304
        %v4306 = vrot.slane %v4239, %v4305
        %v4308 = vadd.f32 %v4298, %v4306
        %v4309 = vadd.f32 %v4299, %v4306
        %v4310 = vadd.f32 %v4300, %v4306
        %v4311 = vadd.f32 %v4301, %v4306
        %v4312 = vpack.c.bf16 %v4309, %v4308
        %v4313 = vpack.c.bf16 %v4311, %v4310
        %v4314 = vld [vmem:[%s672] sm:$0xf]
        %v4315 = vld [vmem:[%s672 + $0x4] sm:$0xf]
        %v4316 = vld [vmem:[%s672 + $0x8] sm:$0xf]
        %v4317 = vld [vmem:[%s672 + $0xc] sm:$0xf]
        %v4318 = vld [vmem:[#allocation7] sm:$0x1]
        %v4320 = vlaneseq
        %v4321 = vshrl.u32 %v4320, 7
        %v4322 = vsub.s32 0, %v4321
        %v4323 = vrot.slane %v4318, %v4322
        %v4329 = vunpack.c.l.b16 %v4314
        %v4330 = vunpack.c.l.b16 %v4315
        %v4331 = vunpack.c.l.b16 %v4316
        %v4332 = vunpack.c.l.b16 %v4317
        %v4333 = vpack.c.b16 %v4330, %v4329
        %v4334 = vpack.c.b16 %v4332, %v4331
        %v4338 = vsel %vm689, %v4312, 0
        %v4341 = vsel %vm689, %v4313, 0
        %4343 = vmatprep.subr.bf16.mxu0 0
        %4344 = vmatpush1.bf16.msra.mxu0 %v4333
        %4345 = vmatprep.subr.bf16.mxu0 0
        %4346 = vmatpush1.bf16.msra.mxu0 %v4334
        %4347 = vmatprep.subr.bf16.mxu0 0
        %4348 = vmatpush1.bf16.msra.mxu0 0
        %4349 = vmatprep.subr.bf16.mxu0 0
        %4350 = vmatpush1.bf16.msra.mxu0 0
        %4351 = vmatprep.subr.bf16.mxu0 0
        %4352 = vmatpush1.bf16.msra.mxu0 0
        %4353 = vmatprep.subr.bf16.mxu0 0
        %4354 = vmatpush1.bf16.msra.mxu0 0
        %4355 = vmatprep.subr.bf16.mxu0 0
        %4356 = vmatpush1.bf16.msra.mxu0 0
        %4357 = vmatprep.subr.bf16.mxu0 0
        %4358 = vmatpush1.bf16.msra.mxu0 0
        %4359 = vmatprep.subr.bf16.mxu0 0
        %4360 = vmatpush1.bf16.msra.mxu0 0
        %4361 = vmatprep.subr.bf16.mxu0 0
        %4362 = vmatpush1.bf16.msra.mxu0 0
        %4363 = vmatprep.subr.bf16.mxu0 0
        %4364 = vmatpush1.bf16.msra.mxu0 0
        %4365 = vmatprep.subr.bf16.mxu0 0
        %4366 = vmatpush1.bf16.msra.mxu0 0
        %4367 = vmatprep.subr.bf16.mxu0 0
        %4368 = vmatpush1.bf16.msra.mxu0 0
        %4369 = vmatprep.subr.bf16.mxu0 0
        %4370 = vmatpush1.bf16.msra.mxu0 0
        %4371 = vmatprep.subr.bf16.mxu0 0
        %4372 = vmatpush1.bf16.msra.mxu0 0
        %4373 = vmatprep.subr.bf16.mxu0 0
        %4374 = vmatpush1.bf16.msra.mxu0 0
        %4375 = vmatprep.mubr.bf16.mxu0 0
        %4376 = vmatmul.mubr.bf16.gmra.mrb[0].mxu0 %v4338
        %v4377 = vpop.f32.mrb[0].mxu0
        %v4378 = vadd.f32 %v4323, %v4377
        %v4379 = vpop.f32.mrb[0].mxu0
        %v4380 = vpop.f32.mrb[0].mxu0
        %v4381 = vadd.f32 %v4323, %v4380
        %v4382 = vpop.f32.mrb[0].mxu0
        %4383 = vmatprep.mubr.bf16.mxu0 0
        %4384 = vmatmul.mubr.bf16.gmra.mrb[0].mxu0 %v4341
        %v4385 = vpop.f32.mrb[0].mxu0
        %v4386 = vadd.f32 %v4323, %v4385
        %v4387 = vpop.f32.mrb[0].mxu0
        %v4388 = vpop.f32.mrb[0].mxu0
        %v4389 = vadd.f32 %v4323, %v4388
        %v4390 = vpop.f32.mrb[0].mxu0
        %4391 = vdwg.mxu0
        %v4392 = vmul.f32 %v4378, 0.5
        %v4393 = vmul.f32 %v4381, 0.5
        %v4394 = vmul.f32 %v4386, 0.5
        %v4395 = vmul.f32 %v4389, 0.5
        %v4396 = vmul.f32 %v4378, 0.70710677
        %v4397 = vmul.f32 %v4381, 0.70710677
        %v4398 = vmul.f32 %v4386, 0.70710677
        %v4399 = vmul.f32 %v4389, 0.70710677
        %v4400 = verf.f32.pop %v4396
        %v4401 = verf.f32.pop %v4397
        %v4402 = verf.f32.pop %v4398
        %v4403 = verf.f32.pop %v4399
        %v4404 = vadd.f32 %v4400, 1.0
        %v4405 = vadd.f32 %v4401, 1.0
        %v4406 = vadd.f32 %v4402, 1.0
        %v4407 = vadd.f32 %v4403, 1.0
        %v4408 = vmul.f32 %v4392, %v4404
        %v4409 = vmul.f32 %v4393, %v4405
        %v4410 = vmul.f32 %v4394, %v4406
        %v4411 = vmul.f32 %v4395, %v4407
        %v4412 = vpack.c.bf16 %v4409, %v4408
        %v4413 = vpack.c.bf16 %v4411, %v4410
        %v4414 = vld [vmem:[%s677] sm:$0xf]
        %v4415 = vld [vmem:[%s677 + $0x4] sm:$0xf]
        %v4416 = vld [vmem:[%s677 + $0x8] sm:$0xf]
        %v4417 = vld [vmem:[%s677 + $0xc] sm:$0xf]
        %v4418 = vld [vmem:[%s677 + $0x10] sm:$0xf]
        %v4419 = vld [vmem:[%s677 + $0x14] sm:$0xf]
        %v4420 = vld [vmem:[%s677 + $0x18] sm:$0xf]
        %v4421 = vld [vmem:[%s677 + $0x1c] sm:$0xf]
        %v4422 = vld [vmem:[%s677 + $0x20] sm:$0xf]
        %v4423 = vld [vmem:[%s677 + $0x24] sm:$0xf]
        %v4424 = vld [vmem:[%s677 + $0x28] sm:$0xf]
        %v4425 = vld [vmem:[%s677 + $0x2c] sm:$0xf]
        %v4426 = vld [vmem:[%s677 + $0x30] sm:$0xf]
        %v4427 = vld [vmem:[%s677 + $0x34] sm:$0xf]
        %v4428 = vld [vmem:[%s677 + $0x38] sm:$0xf]
        %v4429 = vld [vmem:[%s677 + $0x3c] sm:$0xf]
        %v4430 = vld [vmem:[%s680] sm:$0x1]
        %v4432 = vlaneseq
        %v4433 = vshrl.u32 %v4432, 7
        %v4434 = vsub.s32 0, %v4433
        %v4435 = vrot.slane %v4430, %v4434
        %v4453 = vunpack.c.l.b16 %v4414
        %v4454 = vunpack.c.l.b16 %v4415
        %v4455 = vunpack.c.l.b16 %v4416
        %v4456 = vunpack.c.l.b16 %v4417
        %v4457 = vunpack.c.l.b16 %v4418
        %v4458 = vunpack.c.l.b16 %v4419
        %v4459 = vunpack.c.l.b16 %v4420
        %v4460 = vunpack.c.l.b16 %v4421
        %v4461 = vunpack.c.l.b16 %v4422
        %v4462 = vunpack.c.l.b16 %v4423
        %v4463 = vunpack.c.l.b16 %v4424
        %v4464 = vunpack.c.l.b16 %v4425
        %v4465 = vunpack.c.l.b16 %v4426
        %v4466 = vunpack.c.l.b16 %v4427
        %v4467 = vunpack.c.l.b16 %v4428
        %v4468 = vunpack.c.l.b16 %v4429
        %v4469 = vpack.c.b16 %v4454, %v4453
        %v4470 = vpack.c.b16 %v4456, %v4455
        %v4471 = vpack.c.b16 %v4458, %v4457
        %v4472 = vpack.c.b16 %v4460, %v4459
        %v4473 = vpack.c.b16 %v4462, %v4461
        %v4474 = vpack.c.b16 %v4464, %v4463
        %v4475 = vpack.c.b16 %v4466, %v4465
        %v4476 = vpack.c.b16 %v4468, %v4467
        %4485 = vmatprep.subr.bf16.mxu0 0
        %4486 = vmatpush1.bf16.msra.mxu0 %v4469
        %4487 = vmatprep.subr.bf16.mxu0 0
        %4488 = vmatpush1.bf16.msra.mxu0 %v4470
        %4489 = vmatprep.subr.bf16.mxu0 0
        %4490 = vmatpush1.bf16.msra.mxu0 %v4471
        %4491 = vmatprep.subr.bf16.mxu0 0
        %4492 = vmatpush1.bf16.msra.mxu0 %v4472
        %4493 = vmatprep.subr.bf16.mxu0 0
        %4494 = vmatpush1.bf16.msra.mxu0 %v4473
        %4495 = vmatprep.subr.bf16.mxu0 0
        %4496 = vmatpush1.bf16.msra.mxu0 %v4474
        %4497 = vmatprep.subr.bf16.mxu0 0
        %4498 = vmatpush1.bf16.msra.mxu0 %v4475
        %4499 = vmatprep.subr.bf16.mxu0 0
        %4500 = vmatpush1.bf16.msra.mxu0 %v4476
        %4501 = vmatprep.subr.bf16.mxu0 0
        %4502 = vmatpush1.bf16.msra.mxu0 0
        %4503 = vmatprep.subr.bf16.mxu0 0
        %4504 = vmatpush1.bf16.msra.mxu0 0
        %4505 = vmatprep.subr.bf16.mxu0 0
        %4506 = vmatpush1.bf16.msra.mxu0 0
        %4507 = vmatprep.subr.bf16.mxu0 0
        %4508 = vmatpush1.bf16.msra.mxu0 0
        %4509 = vmatprep.subr.bf16.mxu0 0
        %4510 = vmatpush1.bf16.msra.mxu0 0
        %4511 = vmatprep.subr.bf16.mxu0 0
        %4512 = vmatpush1.bf16.msra.mxu0 0
        %4513 = vmatprep.subr.bf16.mxu0 0
        %4514 = vmatpush1.bf16.msra.mxu0 0
        %4515 = vmatprep.subr.bf16.mxu0 0
        %4516 = vmatpush1.bf16.msra.mxu0 0
        %4517 = vmatprep.mubr.bf16.mxu0 0
        %4518 = vmatmul.mubr.bf16.gmra.mrb[0].mxu0 %v4412
        %v4519 = vpop.f32.mrb[0].mxu0
        %v4520 = vadd.f32 %v4435, %v4519
        %v4521 = vpop.f32.mrb[0].mxu0
        %v4522 = vpop.f32.mrb[0].mxu0
        %v4523 = vadd.f32 %v4435, %v4522
        %v4524 = vpop.f32.mrb[0].mxu0
        %4525 = vmatprep.mubr.bf16.mxu0 0
        %4526 = vmatmul.mubr.bf16.gmra.mrb[0].mxu0 %v4413
        %v4527 = vpop.f32.mrb[0].mxu0
        %v4528 = vadd.f32 %v4435, %v4527
        %v4529 = vpop.f32.mrb[0].mxu0
        %v4530 = vpop.f32.mrb[0].mxu0
        %v4531 = vadd.f32 %v4435, %v4530
        %v4532 = vpop.f32.mrb[0].mxu0
        %4533 = vdwg.mxu0
        %v4534 = vadd.f32 %v4234, %v4520
        %v4535 = vadd.f32 %v4235, %v4523
        %v4536 = vadd.f32 %v4236, %v4528
        %v4537 = vadd.f32 %v4237, %v4531
        %4538 = vst.msk [vmem:[%s634] sm:$0xff] %vm689, %v4534
        %4539 = vst.msk [vmem:[%s634 + $0x8] sm:$0xff] %vm689, %v4535
        %4540 = vst.msk [vmem:[%s634 + $0x10] sm:$0xff] %vm689, %v4536
        %4541 = vst.msk [vmem:[%s634 + $0x18] sm:$0xff] %vm689, %v4537
        %s4542 = sand.u32 %s391, 1
        %s4543 = scalar_lea.sflag [#allocation4], %s4542
        %s4544 = sand.u32 %s391, 1
        %s4545 = smul.addr %s4544, 32
        %s4546 = scalar_lea.vmem [#allocation8], %s4545
        // Predicated region
        $region85: #{tpu_custom_call.1} parent=71 // pred_check
          %p4547 = pneg %p401
        $region86: #{tpu_custom_call.1} parent=71 // pred_check_branch
          %4549 = sbr.rel (%p4547) target = $region88
        $region87: #{tpu_custom_call.1} parent=71 // pred_region
          %s4550 = smul.u32 2, %s34
          %s4552 = ssub.s32 512, 512
          %4553 = vsyncadd %s4543, %s4552
          %s4554 = smul.addr %s4550, 2
          %s4555 = smul.addr %s33, 4
          %s4556 = sadd.s32 %s4554, %s4555
          %s4557 = smul.addr %s4556, 128
          %s4558 = scalar_lea.hbm %s13, %s4557
          %s4559 = sshll.u32 %s4546, 4
          %s4560 = int_to_ptr.vmem [resolvable:$true] %s4559
          %4565 = dma.vmem_to_hbm [thread:$0]  %s4560, 512, %s4558, %s4543, 128, 128, 8
        $region88: #{tpu_custom_call.1} parent=71 // pred_fallthru
          _
      $region72: #{tpu_custom_call.1} parent=5 // pred_fallthru
        _
      %p4566 = scmp.le.s32.totalorder 2, %s24
      // Predicated region
      $region89: #{tpu_custom_call.1} parent=5 // pred_check
        %p4567 = pneg %p4566
      $region90: #{tpu_custom_call.1} parent=5 // pred_check_branch
        %4569 = sbr.rel (%p4567) target = $region92
      $region91: #{tpu_custom_call.1} parent=5 // pred_region
        %s4570 = ssub.s32 %s24, 2
        // Predicated region
        $region93: #{tpu_custom_call.1} parent=91 // pred_check
          %p4571 = pneg %p407
        $region94: #{tpu_custom_call.1} parent=91 // pred_check_branch
          %4573 = sbr.rel (%p4571) target = $region96
        $region95: #{tpu_custom_call.1} parent=91 // pred_region
          %s4574 = sand.u32 %s392, 1
          %s4575 = scalar_lea.sflag [#allocation4], %s4574
          %s4576 = sand.u32 %s392, 1
          %s4577 = smul.addr %s4576, 32
          %s4578 = scalar_lea.vmem [#allocation8], %s4577
          %4579 = dma.done %s4575, 512
        $region96: #{tpu_custom_call.1} parent=91 // pred_fallthru
          _
      $region92: #{tpu_custom_call.1} parent=5 // pred_fallthru
        _
    $region6: #{tpu_custom_call.1} parent=1 // loop_footer
      %s28 = sadd.s32 1, %s24
    $region7: #{tpu_custom_call.1} parent=1 // loop_footer_branch
      %23 = sbr.rel target = $region3
    $region8: #{tpu_custom_call.1} parent=1 // loop_exit
      _
    %4580 = vsyncpa [#allocation3], 1
    %s4581 = scalar_lea.sflag [#allocation3], 1
    %4582 = vsyncpa %s4581, 1
    %4583 = vsyncpa [#allocation6], 1
    %4584 = vsyncpa [#allocation4], 1
    %s4585 = scalar_lea.sflag [#allocation4], 1
    %4586 = vsyncpa %s4585, 1

// kernel: tpu_custom_call.1
$region0: #{tpu_custom_call.1}
  #allocation0 [shape = 'u32[]', space=smem, size = 0x4, offset = 0x4, fixed_abs, tag = 'smem constant byte address 0x4 - core index']
  #allocation1 [shape = 'u32[144,128]{1,0:T(1,128)}', space=vmem, size = 0x12000, scoped, tag = 'internal scratch']
  %s0 = inlined_call_operand.vmem [shape: f32[2,2,16,32], index: 0, kind: input, shape index: {}]
  %s1 = inlined_call_operand.vmem [shape: f32[2,1,32], index: 1, kind: input, shape index: {}]
  %s2 = inlined_call_operand.vmem [shape: f32[2,1,32], index: 2, kind: input, shape index: {}]
  %s3 = inlined_call_operand.vmem [shape: bf16[2,32,96], index: 3, kind: input, shape index: {}]
  %s4 = inlined_call_operand.vmem [shape: f32[2,1,96], index: 4, kind: input, shape index: {}]
  %s5 = inlined_call_operand.vmem [shape: bf16[2,32,32], index: 5, kind: input, shape index: {}]
  %s6 = inlined_call_operand.vmem [shape: f32[2,1,32], index: 6, kind: input, shape index: {}]
  %s7 = inlined_call_operand.hbm [shape: f32[2,1,32], index: 7, kind: input, shape index: {}]
  %s8 = inlined_call_operand.hbm [shape: f32[2,1,32], index: 8, kind: input, shape index: {}]
  %s9 = inlined_call_operand.vmem [shape: bf16[2,32,128], index: 9, kind: input, shape index: {}]
  %s10 = inlined_call_operand.hbm [shape: f32[2,1,128], index: 10, kind: input, shape index: {}]
  %s11 = inlined_call_operand.vmem [shape: bf16[2,128,32], index: 11, kind: input, shape index: {}]
  %s12 = inlined_call_operand.vmem [shape: f32[2,1,32], index: 12, kind: input, shape index: {}]
  %s13 = inlined_call_operand.hbm [shape: f32[2,2,16,32], index: 13, kind: output, shape index: {}]
  %s14 = sld [smem:[#allocation0]]
  $region97: #{tpu_custom_call.1} parent=0
    _
  %s16 = ssub.s32 1, %s14
  %s17 = scalar_select 0, %s16, %s14
  $region1: #{tpu_custom_call.1} parent=0
    #allocation2 [shape = 'u8[1024]{0}', space=vmem, size = 0x400, scoped, tag = 'input window, operand 7']
    #allocation3 [shape = 's32[2]{0}', space=sflag, size = 0x8, scoped, tag = 'scoped memory for tpu_custom_call.1']
    #allocation4 [shape = 's32[2]{0}', space=sflag, size = 0x8, scoped, tag = 'scoped memory for tpu_custom_call.1']
    #allocation5 [shape = 'u8[1024]{0}', space=vmem, size = 0x400, scoped, tag = 'input window, operand 8']
    #allocation6 [shape = 's32[2]{0}', space=sflag, size = 0x8, scoped, tag = 'scoped memory for tpu_custom_call.1']
    #allocation7 [shape = 'u8[1024]{0}', space=vmem, size = 0x400, scoped, tag = 'input window, operand 10']
    #allocation8 [shape = 'u8[32768]{0}', space=vmem, size = 0x8000, scoped, tag = 'output window, operand 0']
    %18 = vsyncpa [#allocation3], 0
    %s19 = scalar_lea.sflag [#allocation3], 1
    %20 = vsyncpa %s19, 0
    %21 = vsyncpa [#allocation6], 0
    %s22 = scalar_lea.sflag [#allocation6], 1
    %23 = vsyncpa %s22, 0
    %24 = vsyncpa [#allocation4], 0
    %s25 = scalar_lea.sflag [#allocation4], 1
    %26 = vsyncpa %s25, 0
    loop: start=0, step=1, limit=4
    $region2: #{tpu_custom_call.1} parent=1 // loop_pre_header
      _
    $region3: #{tpu_custom_call.1} parent=1 // loop_header
      %s28 = sphi 0, %s32
      %p29 = scmp.ge.s32.totalorder %s28, 4
      %s35 = sphi 0, %s47
      %s36 = sphi 0, %s43
      %s37 = sphi 0, %s35
      %s38 = sphi 0, %s36
      %s39 = sphi 0, %s37
      %s40 = sphi 0, %s38
      %s52 = sphi 0, %s54
      %s55 = sphi 0, %s52
      %s56 = sphi 0, %s55
      %s72 = sphi 0, %s56
      %s78 = sphi 0, %s80
      %s81 = sphi 0, %s78
      %s82 = sphi 0, %s81
      %s98 = sphi 0, %s82
      %s104 = sphi 0, %s106
      %s107 = sphi 0, %s104
      %s108 = sphi 0, %s107
      %s124 = sphi 0, %s108
      %s130 = sphi 0, %s132
      %s133 = sphi 0, %s130
      %s134 = sphi 0, %s133
      %s150 = sphi 0, %s134
      %s156 = sphi 0, %s158
      %s159 = sphi 0, %s156
      %s160 = sphi 0, %s159
      %s176 = sphi 0, %s160
      %s182 = sphi 0, %s184
      %s185 = sphi 0, %s182
      %s186 = sphi 0, %s185
      %s202 = sphi 0, %s186
      %s208 = sphi 0, %s210
      %s211 = sphi 0, %s208
      %s212 = sphi 0, %s211
      %s228 = sphi 0, %s212
      %s234 = sphi 0, %s236
      %s237 = sphi 0, %s234
      %s238 = sphi 0, %s237
      %s254 = sphi 0, %s238
      %s260 = sphi 0, %s262
      %s263 = sphi 0, %s260
      %s264 = sphi 0, %s263
      %s280 = sphi 0, %s264
      %s286 = sphi 0, %s288
      %s289 = sphi 0, %s286
      %s290 = sphi 0, %s289
      %s306 = sphi 0, %s290
      %s312 = sphi 0, %s314
      %s315 = sphi 0, %s312
      %s316 = sphi 0, %s315
      %s332 = sphi 0, %s316
      %s338 = sphi 0, %s340
      %s341 = sphi 0, %s338
      %s342 = sphi 0, %s341
      %s358 = sphi 0, %s342
      %s364 = sphi 0, %s366
      %s367 = sphi 0, %s364
      %s368 = sphi 0, %s367
      %s384 = sphi 0, %s368
      %s392 = sphi 0, %s394
      %s395 = sphi 0, %s392
      %s396 = sphi 0, %s395
      %s412 = sphi 0, %s396
    $region4: #{tpu_custom_call.1} parent=1 // loop_header_branch
      %31 = sbr.rel (%p29) target = $region8
    $region5: #{tpu_custom_call.1} parent=1 // loop_body
      %s33 = ssub.s32 %s28, 1
      %s34 = ssub.s32 %s28, 2
      %s41 = sadd.s32 1, %s36
      %p42 = scmp.ge.s32.totalorder %s41, 1
      %s43 = scalar_select %p42, 0, %s41
      %s44 = sadd.s32 1, %s35
      %s45 = scalar_select %p42, %s44, %s35
      %p46 = scmp.ge.s32.totalorder %s45, 2
      %s47 = scalar_select %p46, 0, %s45
      %s48 = ssub.s32 %s35, %s47
      %s49 = ssub.s32 %s36, %s43
      %s50 = sor.u32 %s48, %s49
      %p51 = scmp.eq.s32.totalorder %s50, 0
      %s53 = sadd.s32 %s52, 1
      %s54 = scalar_select %p51, %s52, %s53
      %p57 = pneg %p51
      %p58 = scmp.eq.s32.totalorder %s28, 1
      %p59 = por %p57, %p58
      %p60 = scmp.ne.s32.totalorder %s52, %s55
      %p61 = scmp.eq.s32.totalorder %s28, 0
      %p62 = por %p60, %p61
      %p63 = scmp.ne.s32.totalorder %s52, %s55
      %p64 = scmp.eq.s32.totalorder %s33, 1
      %p65 = por %p63, %p64
      %p66 = scmp.ne.s32.totalorder %s55, %s56
      %p67 = scmp.eq.s32.totalorder %s33, 0
      %p68 = por %p66, %p67
      %p69 = scmp.ne.s32.totalorder %s55, %s56
      %p70 = scmp.eq.s32.totalorder %s34, 1
      %p71 = por %p69, %p70
      %p73 = scmp.ne.s32.totalorder %s56, %s72
      %p74 = scmp.eq.s32.totalorder %s34, 0
      %p75 = por %p73, %p74
      %s76 = ssub.s32 %s35, %s47
      %p77 = scmp.eq.s32.totalorder %s76, 0
      %s79 = sadd.s32 %s78, 1
      %s80 = scalar_select %p77, %s78, %s79
      %p83 = pneg %p77
      %p84 = scmp.eq.s32.totalorder %s28, 1
      %p85 = por %p83, %p84
      %p86 = scmp.ne.s32.totalorder %s78, %s81
      %p87 = scmp.eq.s32.totalorder %s28, 0
      %p88 = por %p86, %p87
      %p89 = scmp.ne.s32.totalorder %s78, %s81
      %p90 = scmp.eq.s32.totalorder %s33, 1
      %p91 = por %p89, %p90
      %p92 = scmp.ne.s32.totalorder %s81, %s82
      %p93 = scmp.eq.s32.totalorder %s33, 0
      %p94 = por %p92, %p93
      %p95 = scmp.ne.s32.totalorder %s81, %s82
      %p96 = scmp.eq.s32.totalorder %s34, 1
      %p97 = por %p95, %p96
      %p99 = scmp.ne.s32.totalorder %s82, %s98
      %p100 = scmp.eq.s32.totalorder %s34, 0
      %p101 = por %p99, %p100
      %s102 = ssub.s32 %s35, %s47
      %p103 = scmp.eq.s32.totalorder %s102, 0
      %s105 = sadd.s32 %s104, 1
      %s106 = scalar_select %p103, %s104, %s105
      %p109 = pneg %p103
      %p110 = scmp.eq.s32.totalorder %s28, 1
      %p111 = por %p109, %p110
      %p112 = scmp.ne.s32.totalorder %s104, %s107
      %p113 = scmp.eq.s32.totalorder %s28, 0
      %p114 = por %p112, %p113
      %p115 = scmp.ne.s32.totalorder %s104, %s107
      %p116 = scmp.eq.s32.totalorder %s33, 1
      %p117 = por %p115, %p116
      %p118 = scmp.ne.s32.totalorder %s107, %s108
      %p119 = scmp.eq.s32.totalorder %s33, 0
      %p120 = por %p118, %p119
      %p121 = scmp.ne.s32.totalorder %s107, %s108
      %p122 = scmp.eq.s32.totalorder %s34, 1
      %p123 = por %p121, %p122
      %p125 = scmp.ne.s32.totalorder %s108, %s124
      %p126 = scmp.eq.s32.totalorder %s34, 0
      %p127 = por %p125, %p126
      %s128 = ssub.s32 %s35, %s47
      %p129 = scmp.eq.s32.totalorder %s128, 0
      %s131 = sadd.s32 %s130, 1
      %s132 = scalar_select %p129, %s130, %s131
      %p135 = pneg %p129
      %p136 = scmp.eq.s32.totalorder %s28, 1
      %p137 = por %p135, %p136
      %p138 = scmp.ne.s32.totalorder %s130, %s133
      %p139 = scmp.eq.s32.totalorder %s28, 0
      %p140 = por %p138, %p139
      %p141 = scmp.ne.s32.totalorder %s130, %s133
      %p142 = scmp.eq.s32.totalorder %s33, 1
      %p143 = por %p141, %p142
      %p144 = scmp.ne.s32.totalorder %s133, %s134
      %p145 = scmp.eq.s32.totalorder %s33, 0
      %p146 = por %p144, %p145
      %p147 = scmp.ne.s32.totalorder %s133, %s134
      %p148 = scmp.eq.s32.totalorder %s34, 1
      %p149 = por %p147, %p148
      %p151 = scmp.ne.s32.totalorder %s134, %s150
      %p152 = scmp.eq.s32.totalorder %s34, 0
      %p153 = por %p151, %p152
      %s154 = ssub.s32 %s35, %s47
      %p155 = scmp.eq.s32.totalorder %s154, 0
      %s157 = sadd.s32 %s156, 1
      %s158 = scalar_select %p155, %s156, %s157
      %p161 = pneg %p155
      %p162 = scmp.eq.s32.totalorder %s28, 1
      %p163 = por %p161, %p162
      %p164 = scmp.ne.s32.totalorder %s156, %s159
      %p165 = scmp.eq.s32.totalorder %s28, 0
      %p166 = por %p164, %p165
      %p167 = scmp.ne.s32.totalorder %s156, %s159
      %p168 = scmp.eq.s32.totalorder %s33, 1
      %p169 = por %p167, %p168
      %p170 = scmp.ne.s32.totalorder %s159, %s160
      %p171 = scmp.eq.s32.totalorder %s33, 0
      %p172 = por %p170, %p171
      %p173 = scmp.ne.s32.totalorder %s159, %s160
      %p174 = scmp.eq.s32.totalorder %s34, 1
      %p175 = por %p173, %p174
      %p177 = scmp.ne.s32.totalorder %s160, %s176
      %p178 = scmp.eq.s32.totalorder %s34, 0
      %p179 = por %p177, %p178
      %s180 = ssub.s32 %s35, %s47
      %p181 = scmp.eq.s32.totalorder %s180, 0
      %s183 = sadd.s32 %s182, 1
      %s184 = scalar_select %p181, %s182, %s183
      %p187 = pneg %p181
      %p188 = scmp.eq.s32.totalorder %s28, 1
      %p189 = por %p187, %p188
      %p190 = scmp.ne.s32.totalorder %s182, %s185
      %p191 = scmp.eq.s32.totalorder %s28, 0
      %p192 = por %p190, %p191
      %p193 = scmp.ne.s32.totalorder %s182, %s185
      %p194 = scmp.eq.s32.totalorder %s33, 1
      %p195 = por %p193, %p194
      %p196 = scmp.ne.s32.totalorder %s185, %s186
      %p197 = scmp.eq.s32.totalorder %s33, 0
      %p198 = por %p196, %p197
      %p199 = scmp.ne.s32.totalorder %s185, %s186
      %p200 = scmp.eq.s32.totalorder %s34, 1
      %p201 = por %p199, %p200
      %p203 = scmp.ne.s32.totalorder %s186, %s202
      %p204 = scmp.eq.s32.totalorder %s34, 0
      %p205 = por %p203, %p204
      %s206 = ssub.s32 %s35, %s47
      %p207 = scmp.eq.s32.totalorder %s206, 0
      %s209 = sadd.s32 %s208, 1
      %s210 = scalar_select %p207, %s208, %s209
      %p213 = pneg %p207
      %p214 = scmp.eq.s32.totalorder %s28, 1
      %p215 = por %p213, %p214
      %p216 = scmp.ne.s32.totalorder %s208, %s211
      %p217 = scmp.eq.s32.totalorder %s28, 0
      %p218 = por %p216, %p217
      %p219 = scmp.ne.s32.totalorder %s208, %s211
      %p220 = scmp.eq.s32.totalorder %s33, 1
      %p221 = por %p219, %p220
      %p222 = scmp.ne.s32.totalorder %s211, %s212
      %p223 = scmp.eq.s32.totalorder %s33, 0
      %p224 = por %p222, %p223
      %p225 = scmp.ne.s32.totalorder %s211, %s212
      %p226 = scmp.eq.s32.totalorder %s34, 1
      %p227 = por %p225, %p226
      %p229 = scmp.ne.s32.totalorder %s212, %s228
      %p230 = scmp.eq.s32.totalorder %s34, 0
      %p231 = por %p229, %p230
      %s232 = ssub.s32 %s35, %s47
      %p233 = scmp.eq.s32.totalorder %s232, 0
      %s235 = sadd.s32 %s234, 1
      %s236 = scalar_select %p233, %s234, %s235
      %p239 = pneg %p233
      %p240 = scmp.eq.s32.totalorder %s28, 1
      %p241 = por %p239, %p240
      %p242 = scmp.ne.s32.totalorder %s234, %s237
      %p243 = scmp.eq.s32.totalorder %s28, 0
      %p244 = por %p242, %p243
      %p245 = scmp.ne.s32.totalorder %s234, %s237
      %p246 = scmp.eq.s32.totalorder %s33, 1
      %p247 = por %p245, %p246
      %p248 = scmp.ne.s32.totalorder %s237, %s238
      %p249 = scmp.eq.s32.totalorder %s33, 0
      %p250 = por %p248, %p249
      %p251 = scmp.ne.s32.totalorder %s237, %s238
      %p252 = scmp.eq.s32.totalorder %s34, 1
      %p253 = por %p251, %p252
      %p255 = scmp.ne.s32.totalorder %s238, %s254
      %p256 = scmp.eq.s32.totalorder %s34, 0
      %p257 = por %p255, %p256
      %s258 = ssub.s32 %s35, %s47
      %p259 = scmp.eq.s32.totalorder %s258, 0
      %s261 = sadd.s32 %s260, 1
      %s262 = scalar_select %p259, %s260, %s261
      %p265 = pneg %p259
      %p266 = scmp.eq.s32.totalorder %s28, 1
      %p267 = por %p265, %p266
      %p268 = scmp.ne.s32.totalorder %s260, %s263
      %p269 = scmp.eq.s32.totalorder %s28, 0
      %p270 = por %p268, %p269
      %p271 = scmp.ne.s32.totalorder %s260, %s263
      %p272 = scmp.eq.s32.totalorder %s33, 1
      %p273 = por %p271, %p272
      %p274 = scmp.ne.s32.totalorder %s263, %s264
      %p275 = scmp.eq.s32.totalorder %s33, 0
      %p276 = por %p274, %p275
      %p277 = scmp.ne.s32.totalorder %s263, %s264
      %p278 = scmp.eq.s32.totalorder %s34, 1
      %p279 = por %p277, %p278
      %p281 = scmp.ne.s32.totalorder %s264, %s280
      %p282 = scmp.eq.s32.totalorder %s34, 0
      %p283 = por %p281, %p282
      %s284 = ssub.s32 %s35, %s47
      %p285 = scmp.eq.s32.totalorder %s284, 0
      %s287 = sadd.s32 %s286, 1
      %s288 = scalar_select %p285, %s286, %s287
      %p291 = pneg %p285
      %p292 = scmp.eq.s32.totalorder %s28, 1
      %p293 = por %p291, %p292
      %p294 = scmp.ne.s32.totalorder %s286, %s289
      %p295 = scmp.eq.s32.totalorder %s28, 0
      %p296 = por %p294, %p295
      %p297 = scmp.ne.s32.totalorder %s286, %s289
      %p298 = scmp.eq.s32.totalorder %s33, 1
      %p299 = por %p297, %p298
      %p300 = scmp.ne.s32.totalorder %s289, %s290
      %p301 = scmp.eq.s32.totalorder %s33, 0
      %p302 = por %p300, %p301
      %p303 = scmp.ne.s32.totalorder %s289, %s290
      %p304 = scmp.eq.s32.totalorder %s34, 1
      %p305 = por %p303, %p304
      %p307 = scmp.ne.s32.totalorder %s290, %s306
      %p308 = scmp.eq.s32.totalorder %s34, 0
      %p309 = por %p307, %p308
      %s310 = ssub.s32 %s35, %s47
      %p311 = scmp.eq.s32.totalorder %s310, 0
      %s313 = sadd.s32 %s312, 1
      %s314 = scalar_select %p311, %s312, %s313
      %p317 = pneg %p311
      %p318 = scmp.eq.s32.totalorder %s28, 1
      %p319 = por %p317, %p318
      %p320 = scmp.ne.s32.totalorder %s312, %s315
      %p321 = scmp.eq.s32.totalorder %s28, 0
      %p322 = por %p320, %p321
      %p323 = scmp.ne.s32.totalorder %s312, %s315
      %p324 = scmp.eq.s32.totalorder %s33, 1
      %p325 = por %p323, %p324
      %p326 = scmp.ne.s32.totalorder %s315, %s316
      %p327 = scmp.eq.s32.totalorder %s33, 0
      %p328 = por %p326, %p327
      %p329 = scmp.ne.s32.totalorder %s315, %s316
      %p330 = scmp.eq.s32.totalorder %s34, 1
      %p331 = por %p329, %p330
      %p333 = scmp.ne.s32.totalorder %s316, %s332
      %p334 = scmp.eq.s32.totalorder %s34, 0
      %p335 = por %p333, %p334
      %s336 = ssub.s32 %s35, %s47
      %p337 = scmp.eq.s32.totalorder %s336, 0
      %s339 = sadd.s32 %s338, 1
      %s340 = scalar_select %p337, %s338, %s339
      %p343 = pneg %p337
      %p344 = scmp.eq.s32.totalorder %s28, 1
      %p345 = por %p343, %p344
      %p346 = scmp.ne.s32.totalorder %s338, %s341
      %p347 = scmp.eq.s32.totalorder %s28, 0
      %p348 = por %p346, %p347
      %p349 = scmp.ne.s32.totalorder %s338, %s341
      %p350 = scmp.eq.s32.totalorder %s33, 1
      %p351 = por %p349, %p350
      %p352 = scmp.ne.s32.totalorder %s341, %s342
      %p353 = scmp.eq.s32.totalorder %s33, 0
      %p354 = por %p352, %p353
      %p355 = scmp.ne.s32.totalorder %s341, %s342
      %p356 = scmp.eq.s32.totalorder %s34, 1
      %p357 = por %p355, %p356
      %p359 = scmp.ne.s32.totalorder %s342, %s358
      %p360 = scmp.eq.s32.totalorder %s34, 0
      %p361 = por %p359, %p360
      %s362 = ssub.s32 %s35, %s47
      %p363 = scmp.eq.s32.totalorder %s362, 0
      %s365 = sadd.s32 %s364, 1
      %s366 = scalar_select %p363, %s364, %s365
      %p369 = pneg %p363
      %p370 = scmp.eq.s32.totalorder %s28, 1
      %p371 = por %p369, %p370
      %p372 = scmp.ne.s32.totalorder %s364, %s367
      %p373 = scmp.eq.s32.totalorder %s28, 0
      %p374 = por %p372, %p373
      %p375 = scmp.ne.s32.totalorder %s364, %s367
      %p376 = scmp.eq.s32.totalorder %s33, 1
      %p377 = por %p375, %p376
      %p378 = scmp.ne.s32.totalorder %s367, %s368
      %p379 = scmp.eq.s32.totalorder %s33, 0
      %p380 = por %p378, %p379
      %p381 = scmp.ne.s32.totalorder %s367, %s368
      %p382 = scmp.eq.s32.totalorder %s34, 1
      %p383 = por %p381, %p382
      %p385 = scmp.ne.s32.totalorder %s368, %s384
      %p386 = scmp.eq.s32.totalorder %s34, 0
      %p387 = por %p385, %p386
      %s388 = ssub.s32 %s35, %s47
      %s389 = ssub.s32 %s36, %s43
      %s390 = sor.u32 %s388, %s389
      %p391 = scmp.eq.s32.totalorder %s390, 0
      %s393 = sadd.s32 %s392, 1
      %s394 = scalar_select %p391, %s392, %s393
      %p397 = pneg %p391
      %p398 = scmp.eq.s32.totalorder %s28, 1
      %p399 = por %p397, %p398
      %p400 = scmp.ne.s32.totalorder %s392, %s395
      %p401 = scmp.eq.s32.totalorder %s28, 0
      %p402 = por %p400, %p401
      %p403 = scmp.ne.s32.totalorder %s392, %s395
      %p404 = scmp.eq.s32.totalorder %s33, 1
      %p405 = por %p403, %p404
      %p406 = scmp.ne.s32.totalorder %s395, %s396
      %p407 = scmp.eq.s32.totalorder %s33, 0
      %p408 = por %p406, %p407
      %p409 = scmp.ne.s32.totalorder %s395, %s396
      %p410 = scmp.eq.s32.totalorder %s34, 1
      %p411 = por %p409, %p410
      %p413 = scmp.ne.s32.totalorder %s396, %s412
      %p414 = scmp.eq.s32.totalorder %s34, 0
      %p415 = por %p413, %p414
      %p416 = scmp.le.s32.totalorder 1, %s28
      %p417 = scmp.lt.s32.totalorder %s28, 3
      %p418 = pnand %p416, %p417
      %p419 = pneg %p418
      // Predicated region
      $region9: #{tpu_custom_call.1} parent=5 // pred_check
        _
      $region10: #{tpu_custom_call.1} parent=5 // pred_check_branch
        %421 = sbr.rel (%p418) target = $region12
      $region11: #{tpu_custom_call.1} parent=5 // pred_region
        %s422 = ssub.s32 %s28, 1
      $region12: #{tpu_custom_call.1} parent=5 // pred_fallthru
        _
      %p423 = scmp.lt.s32.totalorder %s28, 2
      // Predicated region
      $region13: #{tpu_custom_call.1} parent=5 // pred_check
        %p424 = pneg %p423
      $region14: #{tpu_custom_call.1} parent=5 // pred_check_branch
        %426 = sbr.rel (%p424) target = $region16
      $region15: #{tpu_custom_call.1} parent=5 // pred_region
        // Predicated region
        $region17: #{tpu_custom_call.1} parent=15 // pred_check
          %p427 = pneg %p62
        $region18: #{tpu_custom_call.1} parent=15 // pred_check_branch
          %429 = sbr.rel (%p427) target = $region20
        $region19: #{tpu_custom_call.1} parent=15 // pred_region
          %s430 = smul.u32 2, %s36
          %p431 = scmp.lt.s32.totalorder %s35, 1
          %s432 = scalar_select %p431, %s35, 1
          %p433 = scmp.lt.s32.totalorder %s430, 1
          %s434 = scalar_select %p433, %s430, 1
          %s435 = smul.addr %s434, 2
          %s436 = smul.addr %s432, 4
          %s437 = sadd.s32 %s435, %s436
          %s438 = smul.addr %s437, 8
          %s439 = scalar_lea.vmem %s0, %s438
          %s440 = smul.u32 2, %s36
        $region20: #{tpu_custom_call.1} parent=15 // pred_fallthru
          _
        // Predicated region
        $region21: #{tpu_custom_call.1} parent=15 // pred_check
          %p441 = pneg %p88
        $region22: #{tpu_custom_call.1} parent=15 // pred_check_branch
          %443 = sbr.rel (%p441) target = $region24
        $region23: #{tpu_custom_call.1} parent=15 // pred_region
          %p444 = scmp.lt.s32.totalorder %s35, 1
          %s445 = scalar_select %p444, %s35, 1
          %s446 = scalar_lea.vmem %s1, %s445
        $region24: #{tpu_custom_call.1} parent=15 // pred_fallthru
          _
        // Predicated region
        $region25: #{tpu_custom_call.1} parent=15 // pred_check
          %p447 = pneg %p114
        $region26: #{tpu_custom_call.1} parent=15 // pred_check_branch
          %449 = sbr.rel (%p447) target = $region28
        $region27: #{tpu_custom_call.1} parent=15 // pred_region
          %p450 = scmp.lt.s32.totalorder %s35, 1
          %s451 = scalar_select %p450, %s35, 1
          %s452 = scalar_lea.vmem %s2, %s451
        $region28: #{tpu_custom_call.1} parent=15 // pred_fallthru
          _
        // Predicated region
        $region29: #{tpu_custom_call.1} parent=15 // pred_check
          %p453 = pneg %p140
        $region30: #{tpu_custom_call.1} parent=15 // pred_check_branch
          %455 = sbr.rel (%p453) target = $region32
        $region31: #{tpu_custom_call.1} parent=15 // pred_region
          %p456 = scmp.lt.s32.totalorder %s35, 1
          %s457 = scalar_select %p456, %s35, 1
          %s458 = smul.addr %s457, 4
          %s459 = smul.addr %s458, 4
          %s460 = scalar_lea.vmem %s3, %s459
        $region32: #{tpu_custom_call.1} parent=15 // pred_fallthru
          _
        // Predicated region
        $region33: #{tpu_custom_call.1} parent=15 // pred_check
          %p461 = pneg %p166
        $region34: #{tpu_custom_call.1} parent=15 // pred_check_branch
          %463 = sbr.rel (%p461) target = $region36
        $region35: #{tpu_custom_call.1} parent=15 // pred_region
          %p464 = scmp.lt.s32.totalorder %s35, 1
          %s465 = scalar_select %p464, %s35, 1
          %s466 = scalar_lea.vmem %s4, %s465
        $region36: #{tpu_custom_call.1} parent=15 // pred_fallthru
          _
        // Predicated region
        $region37: #{tpu_custom_call.1} parent=15 // pred_check
          %p467 = pneg %p192
        $region38: #{tpu_custom_call.1} parent=15 // pred_check_branch
          %469 = sbr.rel (%p467) target = $region40
        $region39: #{tpu_custom_call.1} parent=15 // pred_region
          %p470 = scmp.lt.s32.totalorder %s35, 1
          %s471 = scalar_select %p470, %s35, 1
          %s472 = smul.addr %s471, 4
          %s473 = smul.addr %s472, 4
          %s474 = scalar_lea.vmem %s5, %s473
        $region40: #{tpu_custom_call.1} parent=15 // pred_fallthru
          _
        // Predicated region
        $region41: #{tpu_custom_call.1} parent=15 // pred_check
          %p475 = pneg %p218
        $region42: #{tpu_custom_call.1} parent=15 // pred_check_branch
          %477 = sbr.rel (%p475) target = $region44
        $region43: #{tpu_custom_call.1} parent=15 // pred_region
          %p478 = scmp.lt.s32.totalorder %s35, 1
          %s479 = scalar_select %p478, %s35, 1
          %s480 = scalar_lea.vmem %s6, %s479
        $region44: #{tpu_custom_call.1} parent=15 // pred_fallthru
          _
        // Predicated region
        $region45: #{tpu_custom_call.1} parent=15 // pred_check
          %p481 = pneg %p244
        $region46: #{tpu_custom_call.1} parent=15 // pred_check_branch
          %483 = sbr.rel (%p481) target = $region48
        $region47: #{tpu_custom_call.1} parent=15 // pred_region
          %s484 = sand.u32 %s234, 1
          %s485 = scalar_lea.sflag [#allocation3], %s484
          %s486 = sand.u32 %s234, 1
          %s487 = scalar_lea.vmem [#allocation2], %s486
          %s489 = ssub.s32 16, 16
          %490 = vsyncadd %s485, %s489
          %s491 = smul.addr %s35, 16
          %s492 = scalar_lea.hbm %s7, %s491
          %s494 = sshll.u32 %s487, 4
          %s495 = int_to_ptr.vmem [resolvable:$true] %s494
          %497 = dma.hbm_to_vmem [thread:$0]  %s492, 16, %s495, %s485
        $region48: #{tpu_custom_call.1} parent=15 // pred_fallthru
          _
        // Predicated region
        $region49: #{tpu_custom_call.1} parent=15 // pred_check
          %p498 = pneg %p270
        $region50: #{tpu_custom_call.1} parent=15 // pred_check_branch
          %500 = sbr.rel (%p498) target = $region52
        $region51: #{tpu_custom_call.1} parent=15 // pred_region
          %s501 = sand.u32 %s28, 1
          %s502 = scalar_lea.sflag [#allocation6], %s501
          %s503 = sand.u32 %s260, 1
          %s504 = scalar_lea.vmem [#allocation5], %s503
          %s506 = ssub.s32 16, 16
          %507 = vsyncadd %s502, %s506
          %s508 = smul.addr %s35, 16
          %s509 = scalar_lea.hbm %s8, %s508
          %s511 = sshll.u32 %s504, 4
          %s512 = int_to_ptr.vmem [resolvable:$true] %s511
          %514 = dma.hbm_to_vmem [thread:$0]  %s509, 16, %s512, %s502
        $region52: #{tpu_custom_call.1} parent=15 // pred_fallthru
          _
        // Predicated region
        $region53: #{tpu_custom_call.1} parent=15 // pred_check
          %p515 = pneg %p296
        $region54: #{tpu_custom_call.1} parent=15 // pred_check_branch
          %517 = sbr.rel (%p515) target = $region56
        $region55: #{tpu_custom_call.1} parent=15 // pred_region
          %p518 = scmp.lt.s32.totalorder %s35, 1
          %s519 = scalar_select %p518, %s35, 1
          %s520 = smul.addr %s519, 4
          %s521 = smul.addr %s520, 4
          %s522 = scalar_lea.vmem %s9, %s521
        $region56: #{tpu_custom_call.1} parent=15 // pred_fallthru
          _
        // Predicated region
        $region57: #{tpu_custom_call.1} parent=15 // pred_check
          %p523 = pneg %p322
        $region58: #{tpu_custom_call.1} parent=15 // pred_check_branch
          %525 = sbr.rel (%p523) target = $region60
        $region59: #{tpu_custom_call.1} parent=15 // pred_region
          %s526 = sand.u32 %s28, 1
          %s527 = scalar_lea.sflag [#allocation6], %s526
          %s528 = sand.u32 %s312, 1
          %s529 = scalar_lea.vmem [#allocation7], %s528
          %s531 = ssub.s32 16, 16
          %532 = vsyncadd %s527, %s531
          %s533 = smul.addr %s35, 16
          %s534 = scalar_lea.hbm %s10, %s533
          %s536 = sshll.u32 %s529, 4
          %s537 = int_to_ptr.vmem [resolvable:$true] %s536
          %539 = dma.hbm_to_vmem [thread:$0]  %s534, 16, %s537, %s527
        $region60: #{tpu_custom_call.1} parent=15 // pred_fallthru
          _
        // Predicated region
        $region61: #{tpu_custom_call.1} parent=15 // pred_check
          %p540 = pneg %p348
        $region62: #{tpu_custom_call.1} parent=15 // pred_check_branch
          %542 = sbr.rel (%p540) target = $region64
        $region63: #{tpu_custom_call.1} parent=15 // pred_region
          %p543 = scmp.lt.s32.totalorder %s35, 1
          %s544 = scalar_select %p543, %s35, 1
          %s545 = smul.addr %s544, 16
          %s546 = smul.addr %s545, 4
          %s547 = scalar_lea.vmem %s11, %s546
        $region64: #{tpu_custom_call.1} parent=15 // pred_fallthru
          _
        // Predicated region
        $region65: #{tpu_custom_call.1} parent=15 // pred_check
          %p548 = pneg %p374
        $region66: #{tpu_custom_call.1} parent=15 // pred_check_branch
          %550 = sbr.rel (%p548) target = $region68
        $region67: #{tpu_custom_call.1} parent=15 // pred_region
          %p551 = scmp.lt.s32.totalorder %s35, 1
          %s552 = scalar_select %p551, %s35, 1
          %s553 = scalar_lea.vmem %s12, %s552
        $region68: #{tpu_custom_call.1} parent=15 // pred_fallthru
          _
      $region16: #{tpu_custom_call.1} parent=5 // pred_fallthru
        _
      %p554 = scmp.le.s32.totalorder 1, %s28
      %p555 = scmp.lt.s32.totalorder %s28, 3
      %p556 = pnand %p554, %p555
      %p557 = pneg %p556
      // Predicated region
      $region69: #{tpu_custom_call.1} parent=5 // pred_check
        _
      $region70: #{tpu_custom_call.1} parent=5 // pred_check_branch
        %559 = sbr.rel (%p556) target = $region72
      $region71: #{tpu_custom_call.1} parent=5 // pred_region
        %s560 = ssub.s32 %s28, 1
        %s561 = sand.u32 %s237, 1
        %s562 = scalar_lea.sflag [#allocation3], %s561
        %s563 = sand.u32 %s237, 1
        %s564 = scalar_lea.vmem [#allocation2], %s563
        // Predicated region
        $region73: #{tpu_custom_call.1} parent=71 // pred_check
          %p565 = pneg %p250
        $region74: #{tpu_custom_call.1} parent=71 // pred_check_branch
          %567 = sbr.rel (%p565) target = $region76
        $region75: #{tpu_custom_call.1} parent=71 // pred_region
          %568 = dma.done %s562, 16
        $region76: #{tpu_custom_call.1} parent=71 // pred_fallthru
          _
        %s569 = sand.u32 %s33, 1
        %s570 = scalar_lea.sflag [#allocation6], %s569
        %s571 = sand.u32 %s263, 1
        %s572 = scalar_lea.vmem [#allocation5], %s571
        // Predicated region
        $region77: #{tpu_custom_call.1} parent=71 // pred_check
          %p573 = pneg %p276
        $region78: #{tpu_custom_call.1} parent=71 // pred_check_branch
          %575 = sbr.rel (%p573) target = $region80
        $region79: #{tpu_custom_call.1} parent=71 // pred_region
          %576 = dma.done %s570, 16
        $region80: #{tpu_custom_call.1} parent=71 // pred_fallthru
          _
        %s577 = sand.u32 %s33, 1
        %s578 = scalar_lea.sflag [#allocation6], %s577
        %s579 = sand.u32 %s315, 1
        %s580 = scalar_lea.vmem [#allocation7], %s579
        // Predicated region
        $region81: #{tpu_custom_call.1} parent=71 // pred_check
          %p581 = pneg %p328
        $region82: #{tpu_custom_call.1} parent=71 // pred_check_branch
          %583 = sbr.rel (%p581) target = $region84
        $region83: #{tpu_custom_call.1} parent=71 // pred_region
          %584 = dma.done %s578, 16
        $region84: #{tpu_custom_call.1} parent=71 // pred_fallthru
          _
        %s585 = smul.u32 2, %s38
        %p586 = scmp.lt.s32.totalorder %s37, 1
        %s587 = scalar_select %p586, %s37, 1
        %p588 = scmp.lt.s32.totalorder %s585, 1
        %s589 = scalar_select %p588, %s585, 1
        %s590 = smul.addr %s589, 2
        %s591 = smul.addr %s587, 4
        %s592 = sadd.s32 %s590, %s591
        %s593 = smul.addr %s592, 8
        %s594 = scalar_lea.vmem %s0, %s593
        %p595 = pneg %p68
        %p596 = pneg %p65
        %p597 = scmp.lt.s32.totalorder %s37, 1
        %s598 = scalar_select %p597, %s37, 1
        %s599 = scalar_lea.vmem %s1, %s598
        %p600 = pneg %p94
        %p601 = pneg %p91
        %p602 = scmp.lt.s32.totalorder %s37, 1
        %s603 = scalar_select %p602, %s37, 1
        %s604 = scalar_lea.vmem %s2, %s603
        %p605 = pneg %p120
        %p606 = pneg %p117
        %p607 = scmp.lt.s32.totalorder %s37, 1
        %s608 = scalar_select %p607, %s37, 1
        %s609 = smul.addr %s608, 4
        %s610 = smul.addr %s609, 4
        %s611 = scalar_lea.vmem %s3, %s610
        %p612 = pneg %p146
        %p613 = pneg %p143
        %p614 = scmp.lt.s32.totalorder %s37, 1
        %s615 = scalar_select %p614, %s37, 1
        %s616 = scalar_lea.vmem %s4, %s615
        %p617 = pneg %p172
        %p618 = pneg %p169
        %p619 = scmp.lt.s32.totalorder %s37, 1
        %s620 = scalar_select %p619, %s37, 1
        %s621 = smul.addr %s620, 4
        %s622 = smul.addr %s621, 4
        %s623 = scalar_lea.vmem %s5, %s622
        %p624 = pneg %p198
        %p625 = pneg %p195
        %p626 = scmp.lt.s32.totalorder %s37, 1
        %s627 = scalar_select %p626, %s37, 1
        %s628 = scalar_lea.vmem %s6, %s627
        %p629 = pneg %p224
        %p630 = pneg %p221
        %s631 = sand.u32 %s237, 1
        %s632 = scalar_lea.sflag [#allocation3], %s631
        %s633 = sand.u32 %s237, 1
        %s634 = scalar_lea.vmem [#allocation2], %s633
        %p635 = pneg %p250
        %p636 = pneg %p247
        %s637 = sand.u32 %s33, 1
        %s638 = scalar_lea.sflag [#allocation6], %s637
        %s639 = sand.u32 %s263, 1
        %s640 = scalar_lea.vmem [#allocation5], %s639
        %p641 = pneg %p276
        %p642 = pneg %p273
        %p643 = scmp.lt.s32.totalorder %s37, 1
        %s644 = scalar_select %p643, %s37, 1
        %s645 = smul.addr %s644, 4
        %s646 = smul.addr %s645, 4
        %s647 = scalar_lea.vmem %s9, %s646
        %p648 = pneg %p302
        %p649 = pneg %p299
        %s650 = sand.u32 %s33, 1
        %s651 = scalar_lea.sflag [#allocation6], %s650
        %s652 = sand.u32 %s315, 1
        %s653 = scalar_lea.vmem [#allocation7], %s652
        %p654 = pneg %p328
        %p655 = pneg %p325
        %p656 = scmp.lt.s32.totalorder %s37, 1
        %s657 = scalar_select %p656, %s37, 1
        %s658 = smul.addr %s657, 16
        %s659 = smul.addr %s658, 4
        %s660 = scalar_lea.vmem %s11, %s659
        %p661 = pneg %p354
        %p662 = pneg %p351
        %p663 = scmp.lt.s32.totalorder %s37, 1
        %s664 = scalar_select %p663, %s37, 1
        %s665 = scalar_lea.vmem %s12, %s664
        %p666 = pneg %p380
        %p667 = pneg %p377
        %p668 = pneg %p408
        %p669 = pneg %p405
        %s670 = sand.u32 %s395, 1
        %s671 = scalar_lea.sflag [#allocation4], %s670
        %s672 = sand.u32 %s395, 1
        %s673 = smul.addr %s672, 32
        %s674 = scalar_lea.vmem [#allocation8], %s673
        %s675 = smul.u32 2, %s38
        %p676 = scmp.lt.s32.totalorder %s37, 1
        %s677 = scalar_select %p676, %s37, 1
        %p678 = scmp.lt.s32.totalorder %s675, 1
        %s679 = scalar_select %p678, %s675, 1
        %s680 = smul.addr %s679, 2
        %s681 = smul.addr %s677, 4
        %s682 = sadd.s32 %s680, %s681
        %s683 = smul.addr %s682, 8
        %s684 = scalar_lea.vmem %s0, %s683
        %s685 = smul.u32 2, %s38
        %p686 = scmp.lt.s32.totalorder %s37, 1
        %s687 = scalar_select %p686, %s37, 1
        %s688 = scalar_lea.vmem %s1, %s687
        %p689 = scmp.lt.s32.totalorder %s37, 1
        %s690 = scalar_select %p689, %s37, 1
        %s691 = scalar_lea.vmem %s2, %s690
        %p692 = scmp.lt.s32.totalorder %s37, 1
        %s693 = scalar_select %p692, %s37, 1
        %s694 = smul.addr %s693, 4
        %s695 = smul.addr %s694, 4
        %s696 = scalar_lea.vmem %s3, %s695
        %p697 = scmp.lt.s32.totalorder %s37, 1
        %s698 = scalar_select %p697, %s37, 1
        %s699 = scalar_lea.vmem %s4, %s698
        %p700 = scmp.lt.s32.totalorder %s37, 1
        %s701 = scalar_select %p700, %s37, 1
        %s702 = smul.addr %s701, 4
        %s703 = smul.addr %s702, 4
        %s704 = scalar_lea.vmem %s5, %s703
        %p705 = scmp.lt.s32.totalorder %s37, 1
        %s706 = scalar_select %p705, %s37, 1
        %s707 = scalar_lea.vmem %s6, %s706
        %p708 = scmp.lt.s32.totalorder %s37, 1
        %s709 = scalar_select %p708, %s37, 1
        %s710 = smul.addr %s709, 4
        %s711 = smul.addr %s710, 4
        %s712 = scalar_lea.vmem %s9, %s711
        %p713 = scmp.lt.s32.totalorder %s37, 1
        %s714 = scalar_select %p713, %s37, 1
        %s715 = smul.addr %s714, 16
        %s716 = smul.addr %s715, 4
        %s717 = scalar_lea.vmem %s11, %s716
        %p718 = scmp.lt.s32.totalorder %s37, 1
        %s719 = scalar_select %p718, %s37, 1
        %s720 = scalar_lea.vmem %s12, %s719
        %s721 = smul.u32 2, %s38
        %v723 = vld [vmem:[%s684] sm:$0xff]
        %v724 = vld [vmem:[%s684 + $0x8] sm:$0xff]
        %v725 = vld [vmem:[%s684 + $0x10] sm:$0xff]
        %v726 = vld [vmem:[%s684 + $0x18] sm:$0xff]
        %v727 = vld [vmem:[%s688] sm:$0x1]
        %v728 = vld [vmem:[%s691] sm:$0x1]
        %vm729 = vcmask 261120
        %v730 = vsel %vm729, %v723, 0.0
        %731 = vadd.xlane.f32.xlu0 %v730
        %v732 = vpop.xlane.xlu0 %731
        %v733 = vsel %vm729, %v724, 0.0
        %734 = vadd.xlane.f32.xlu0 %v733
        %v735 = vpop.xlane.xlu0 %734
        %v736 = vsel %vm729, %v725, 0.0
        %737 = vadd.xlane.f32.xlu0 %v736
        %v738 = vpop.xlane.xlu0 %737
        %v739 = vsel %vm729, %v726, 0.0
        %740 = vadd.xlane.f32.xlu0 %v739
        %v741 = vpop.xlane.xlu0 %740
        %v742 = vrcp.pop 32.0
        %v743 = vmul.f32 %v732, %v742
        %v744 = vmul.f32 %v735, %v742
        %v745 = vmul.f32 %v738, %v742
        %v746 = vmul.f32 %v741, %v742
        %v747 = vsub.f32 %v723, %v743
        %v748 = vsub.f32 %v724, %v744
        %v749 = vsub.f32 %v725, %v745
        %v750 = vsub.f32 %v726, %v746
        %v751 = vmul.f32 %v747, %v747
        %v752 = vmul.f32 %v748, %v748
        %v753 = vmul.f32 %v749, %v749
        %v754 = vmul.f32 %v750, %v750
        %v755 = vsel %vm729, %v751, 0.0
        %756 = vadd.xlane.f32.xlu0 %v755
        %v757 = vpop.xlane.xlu0 %756
        %v758 = vsel %vm729, %v752, 0.0
        %759 = vadd.xlane.f32.xlu0 %v758
        %v760 = vpop.xlane.xlu0 %759
        %v761 = vsel %vm729, %v753, 0.0
        %762 = vadd.xlane.f32.xlu0 %v761
        %v763 = vpop.xlane.xlu0 %762
        %v764 = vsel %vm729, %v754, 0.0
        %765 = vadd.xlane.f32.xlu0 %v764
        %v766 = vpop.xlane.xlu0 %765
        %v767 = vmul.f32 %v757, %v742
        %v768 = vmul.f32 %v760, %v742
        %v769 = vmul.f32 %v763, %v742
        %v770 = vmul.f32 %v766, %v742
        %v771 = vadd.f32 %v767, 1e-05
        %v772 = vadd.f32 %v768, 1e-05
        %v773 = vadd.f32 %v769, 1e-05
        %v774 = vadd.f32 %v770, 1e-05
        %v775 = vrsqrt.pop %v771
        %v776 = vrsqrt.pop %v772
        %v777 = vrsqrt.pop %v773
        %v778 = vrsqrt.pop %v774
        %v779 = vmul.f32 %v747, %v775
        %v780 = vmul.f32 %v748, %v776
        %v781 = vmul.f32 %v749, %v777
        %v782 = vmul.f32 %v750, %v778
        %v784 = vlaneseq
        %v785 = vshrl.u32 %v784, 7
        %v786 = vsub.s32 0, %v785
        %v787 = vrot.slane %v727, %v786
        %v789 = vmul.f32 %v779, %v787
        %v790 = vmul.f32 %v780, %v787
        %v791 = vmul.f32 %v781, %v787
        %v792 = vmul.f32 %v782, %v787
        %v794 = vlaneseq
        %v795 = vshrl.u32 %v794, 7
        %v796 = vsub.s32 0, %v795
        %v797 = vrot.slane %v728, %v796
        %v799 = vadd.f32 %v789, %v797
        %v800 = vadd.f32 %v790, %v797
        %v801 = vadd.f32 %v791, %v797
        %v802 = vadd.f32 %v792, %v797
        %v803 = vpack.c.bf16 %v800, %v799
        %v804 = vpack.c.bf16 %v802, %v801
        %v805 = vld [vmem:[%s696] sm:$0xf]
        %v806 = vld [vmem:[%s696 + $0x4] sm:$0xf]
        %v807 = vld [vmem:[%s696 + $0x8] sm:$0xf]
        %v808 = vld [vmem:[%s696 + $0xc] sm:$0xf]
        %v809 = vld [vmem:[%s699] sm:$0x1]
        %v811 = vlaneseq
        %v812 = vshrl.u32 %v811, 7
        %v813 = vsub.s32 0, %v812
        %v814 = vrot.slane %v809, %v813
        %v820 = vunpack.c.l.b16 %v805
        %v821 = vunpack.c.l.b16 %v806
        %v822 = vunpack.c.l.b16 %v807
        %v823 = vunpack.c.l.b16 %v808
        %v824 = vpack.c.b16 %v821, %v820
        %v825 = vpack.c.b16 %v823, %v822
        %v829 = vsel %vm729, %v803, 0
        %v832 = vsel %vm729, %v804, 0
        %834 = vmatprep.subr.bf16.mxu0 0
        %835 = vmatpush1.bf16.msra.mxu0 %v824
        %836 = vmatprep.subr.bf16.mxu0 0
        %837 = vmatpush1.bf16.msra.mxu0 %v825
        %838 = vmatprep.subr.bf16.mxu0 0
        %839 = vmatpush1.bf16.msra.mxu0 0
        %840 = vmatprep.subr.bf16.mxu0 0
        %841 = vmatpush1.bf16.msra.mxu0 0
        %842 = vmatprep.subr.bf16.mxu0 0
        %843 = vmatpush1.bf16.msra.mxu0 0
        %844 = vmatprep.subr.bf16.mxu0 0
        %845 = vmatpush1.bf16.msra.mxu0 0
        %846 = vmatprep.subr.bf16.mxu0 0
        %847 = vmatpush1.bf16.msra.mxu0 0
        %848 = vmatprep.subr.bf16.mxu0 0
        %849 = vmatpush1.bf16.msra.mxu0 0
        %850 = vmatprep.subr.bf16.mxu0 0
        %851 = vmatpush1.bf16.msra.mxu0 0
        %852 = vmatprep.subr.bf16.mxu0 0
        %853 = vmatpush1.bf16.msra.mxu0 0
        %854 = vmatprep.subr.bf16.mxu0 0
        %855 = vmatpush1.bf16.msra.mxu0 0
        %856 = vmatprep.subr.bf16.mxu0 0
        %857 = vmatpush1.bf16.msra.mxu0 0
        %858 = vmatprep.subr.bf16.mxu0 0
        %859 = vmatpush1.bf16.msra.mxu0 0
        %860 = vmatprep.subr.bf16.mxu0 0
        %861 = vmatpush1.bf16.msra.mxu0 0
        %862 = vmatprep.subr.bf16.mxu0 0
        %863 = vmatpush1.bf16.msra.mxu0 0
        %864 = vmatprep.subr.bf16.mxu0 0
        %865 = vmatpush1.bf16.msra.mxu0 0
        %866 = vmatprep.mubr.bf16.mxu0 0
        %867 = vmatmul.mubr.bf16.gmra.mrb[0].mxu0 %v829
        %v868 = vpop.f32.mrb[0].mxu0
        %v869 = vadd.f32 %v814, %v868
        %v870 = vpop.f32.mrb[0].mxu0
        %v871 = vpop.f32.mrb[0].mxu0
        %v872 = vadd.f32 %v814, %v871
        %v873 = vpop.f32.mrb[0].mxu0
        %874 = vmatprep.mubr.bf16.mxu0 0
        %875 = vmatmul.mubr.bf16.gmra.mrb[0].mxu0 %v832
        %v876 = vpop.f32.mrb[0].mxu0
        %v877 = vadd.f32 %v814, %v876
        %v878 = vpop.f32.mrb[0].mxu0
        %v879 = vpop.f32.mrb[0].mxu0
        %v880 = vadd.f32 %v814, %v879
        %v881 = vpop.f32.mrb[0].mxu0
        %882 = vdwg.mxu0
        %885 = vrot.lane.b32.xlu0 %v869, 120
        %v886 = vpop.permute.xlu0 %885
        %887 = vrot.lane.b32.xlu0 %v872, 120
        %v888 = vpop.permute.xlu0 %887
        %891 = vrot.lane.b32.xlu0 %v869, 112
        %v892 = vpop.permute.xlu0 %891
        %893 = vrot.lane.b32.xlu0 %v872, 112
        %v894 = vpop.permute.xlu0 %893
        %897 = vrot.lane.b32.xlu0 %v869, 104
        %v898 = vpop.permute.xlu0 %897
        %899 = vrot.lane.b32.xlu0 %v872, 104
        %v900 = vpop.permute.xlu0 %899
        %v903 = vpack.c.bf16 %v872, %v869
        %v904 = vpack.c.bf16 %v888, %v886
        %v905 = vpack.c.bf16 %v894, %v892
        %v906 = vpack.c.bf16 %v900, %v898
        %908 = vrot.lane.b32.xlu0 %v903, 96
        %v909 = vpop.permute.xlu0 %908
        %vm910 = vcmask 64512
        %v912 = vsel %vm910, %v903, 0
        %v915 = vsel %vm910, %v909, 0
        %917 = vmatprep.subr.bf16.mxu0 0
        %918 = vmatpush1.bf16.xpose.msra.mxu0 %v915
        %919 = vmatprep.subr.bf16.mxu0 0
        %920 = vmatpush1.bf16.xpose.msra.mxu0 0
        %921 = vmatprep.subr.bf16.mxu0 0
        %922 = vmatpush1.bf16.xpose.msra.mxu0 0
        %923 = vmatprep.subr.bf16.mxu0 0
        %924 = vmatpush1.bf16.xpose.msra.mxu0 0
        %925 = vmatprep.subr.bf16.mxu0 0
        %926 = vmatpush1.bf16.xpose.msra.mxu0 0
        %927 = vmatprep.subr.bf16.mxu0 0
        %928 = vmatpush1.bf16.xpose.msra.mxu0 0
        %929 = vmatprep.subr.bf16.mxu0 0
        %930 = vmatpush1.bf16.xpose.msra.mxu0 0
        %931 = vmatprep.subr.bf16.mxu0 0
        %932 = vmatpush1.bf16.xpose.msra.mxu0 0
        %933 = vmatprep.subr.bf16.mxu0 0
        %934 = vmatpush1.bf16.xpose.msra.mxu0 0
        %935 = vmatprep.subr.bf16.mxu0 0
        %936 = vmatpush1.bf16.xpose.msra.mxu0 0
        %937 = vmatprep.subr.bf16.mxu0 0
        %938 = vmatpush1.bf16.xpose.msra.mxu0 0
        %939 = vmatprep.subr.bf16.mxu0 0
        %940 = vmatpush1.bf16.xpose.msra.mxu0 0
        %941 = vmatprep.subr.bf16.mxu0 0
        %942 = vmatpush1.bf16.xpose.msra.mxu0 0
        %943 = vmatprep.subr.bf16.mxu0 0
        %944 = vmatpush1.bf16.xpose.msra.mxu0 0
        %945 = vmatprep.subr.bf16.mxu0 0
        %946 = vmatpush1.bf16.xpose.msra.mxu0 0
        %947 = vmatprep.subr.bf16.mxu0 0
        %948 = vmatpush1.bf16.xpose.msra.mxu0 0
        %949 = vmatprep.mubr.bf16.mxu0 0
        %950 = vmatmul.mubr.bf16.gmra.mrb[0].mxu0 %v912
        %v951 = vpop.f32.mrb[0].mxu0
        %v952 = vadd.f32 0.0, %v951
        %v953 = vpop.f32.mrb[0].mxu0
        %v954 = vpop.f32.mrb[0].mxu0
        %v955 = vadd.f32 0.0, %v954
        %v956 = vpop.f32.mrb[0].mxu0
        %957 = vdwg.mxu0
        %959 = vrot.lane.b32.xlu0 %v904, 96
        %v960 = vpop.permute.xlu0 %959
        %v962 = vsel %vm910, %v904, 0
        %v965 = vsel %vm910, %v960, 0
        %967 = vmatprep.subr.bf16.mxu0 0
        %968 = vmatpush1.bf16.xpose.msra.mxu0 %v965
        %969 = vmatprep.subr.bf16.mxu0 0
        %970 = vmatpush1.bf16.xpose.msra.mxu0 0
        %971 = vmatprep.subr.bf16.mxu0 0
        %972 = vmatpush1.bf16.xpose.msra.mxu0 0
        %973 = vmatprep.subr.bf16.mxu0 0
        %974 = vmatpush1.bf16.xpose.msra.mxu0 0
        %975 = vmatprep.subr.bf16.mxu0 0
        %976 = vmatpush1.bf16.xpose.msra.mxu0 0
        %977 = vmatprep.subr.bf16.mxu0 0
        %978 = vmatpush1.bf16.xpose.msra.mxu0 0
        %979 = vmatprep.subr.bf16.mxu0 0
        %980 = vmatpush1.bf16.xpose.msra.mxu0 0
        %981 = vmatprep.subr.bf16.mxu0 0
        %982 = vmatpush1.bf16.xpose.msra.mxu0 0
        %983 = vmatprep.subr.bf16.mxu0 0
        %984 = vmatpush1.bf16.xpose.msra.mxu0 0
        %985 = vmatprep.subr.bf16.mxu0 0
        %986 = vmatpush1.bf16.xpose.msra.mxu0 0
        %987 = vmatprep.subr.bf16.mxu0 0
        %988 = vmatpush1.bf16.xpose.msra.mxu0 0
        %989 = vmatprep.subr.bf16.mxu0 0
        %990 = vmatpush1.bf16.xpose.msra.mxu0 0
        %991 = vmatprep.subr.bf16.mxu0 0
        %992 = vmatpush1.bf16.xpose.msra.mxu0 0
        %993 = vmatprep.subr.bf16.mxu0 0
        %994 = vmatpush1.bf16.xpose.msra.mxu0 0
        %995 = vmatprep.subr.bf16.mxu0 0
        %996 = vmatpush1.bf16.xpose.msra.mxu0 0
        %997 = vmatprep.subr.bf16.mxu0 0
        %998 = vmatpush1.bf16.xpose.msra.mxu0 0
        %999 = vmatprep.mubr.bf16.mxu0 0
        %1000 = vmatmul.mubr.bf16.gmra.mrb[0].mxu0 %v962
        %v1001 = vpop.f32.mrb[0].mxu0
        %v1002 = vadd.f32 0.0, %v1001
        %v1003 = vpop.f32.mrb[0].mxu0
        %v1004 = vpop.f32.mrb[0].mxu0
        %v1005 = vadd.f32 0.0, %v1004
        %v1006 = vpop.f32.mrb[0].mxu0
        %1007 = vdwg.mxu0
        %1009 = vrot.lane.b32.xlu0 %v905, 96
        %v1010 = vpop.permute.xlu0 %1009
        %v1012 = vsel %vm910, %v905, 0
        %v1015 = vsel %vm910, %v1010, 0
        %1017 = vmatprep.subr.bf16.mxu0 0
        %1018 = vmatpush1.bf16.xpose.msra.mxu0 %v1015
        %1019 = vmatprep.subr.bf16.mxu0 0
        %1020 = vmatpush1.bf16.xpose.msra.mxu0 0
        %1021 = vmatprep.subr.bf16.mxu0 0
        %1022 = vmatpush1.bf16.xpose.msra.mxu0 0
        %1023 = vmatprep.subr.bf16.mxu0 0
        %1024 = vmatpush1.bf16.xpose.msra.mxu0 0
        %1025 = vmatprep.subr.bf16.mxu0 0
        %1026 = vmatpush1.bf16.xpose.msra.mxu0 0
        %1027 = vmatprep.subr.bf16.mxu0 0
        %1028 = vmatpush1.bf16.xpose.msra.mxu0 0
        %1029 = vmatprep.subr.bf16.mxu0 0
        %1030 = vmatpush1.bf16.xpose.msra.mxu0 0
        %1031 = vmatprep.subr.bf16.mxu0 0
        %1032 = vmatpush1.bf16.xpose.msra.mxu0 0
        %1033 = vmatprep.subr.bf16.mxu0 0
        %1034 = vmatpush1.bf16.xpose.msra.mxu0 0
        %1035 = vmatprep.subr.bf16.mxu0 0
        %1036 = vmatpush1.bf16.xpose.msra.mxu0 0
        %1037 = vmatprep.subr.bf16.mxu0 0
        %1038 = vmatpush1.bf16.xpose.msra.mxu0 0
        %1039 = vmatprep.subr.bf16.mxu0 0
        %1040 = vmatpush1.bf16.xpose.msra.mxu0 0
        %1041 = vmatprep.subr.bf16.mxu0 0
        %1042 = vmatpush1.bf16.xpose.msra.mxu0 0
        %1043 = vmatprep.subr.bf16.mxu0 0
        %1044 = vmatpush1.bf16.xpose.msra.mxu0 0
        %1045 = vmatprep.subr.bf16.mxu0 0
        %1046 = vmatpush1.bf16.xpose.msra.mxu0 0
        %1047 = vmatprep.subr.bf16.mxu0 0
        %1048 = vmatpush1.bf16.xpose.msra.mxu0 0
        %1049 = vmatprep.mubr.bf16.mxu0 0
        %1050 = vmatmul.mubr.bf16.gmra.mrb[0].mxu0 %v1012
        %v1051 = vpop.f32.mrb[0].mxu0
        %v1052 = vadd.f32 0.0, %v1051
        %v1053 = vpop.f32.mrb[0].mxu0
        %v1054 = vpop.f32.mrb[0].mxu0
        %v1055 = vadd.f32 0.0, %v1054
        %v1056 = vpop.f32.mrb[0].mxu0
        %1057 = vdwg.mxu0
        %1059 = vrot.lane.b32.xlu0 %v906, 96
        %v1060 = vpop.permute.xlu0 %1059
        %v1062 = vsel %vm910, %v906, 0
        %v1065 = vsel %vm910, %v1060, 0
        %1067 = vmatprep.subr.bf16.mxu0 0
        %1068 = vmatpush1.bf16.xpose.msra.mxu0 %v1065
        %1069 = vmatprep.subr.bf16.mxu0 0
        %1070 = vmatpush1.bf16.xpose.msra.mxu0 0
        %1071 = vmatprep.subr.bf16.mxu0 0
        %1072 = vmatpush1.bf16.xpose.msra.mxu0 0
        %1073 = vmatprep.subr.bf16.mxu0 0
        %1074 = vmatpush1.bf16.xpose.msra.mxu0 0
        %1075 = vmatprep.subr.bf16.mxu0 0
        %1076 = vmatpush1.bf16.xpose.msra.mxu0 0
        %1077 = vmatprep.subr.bf16.mxu0 0
        %1078 = vmatpush1.bf16.xpose.msra.mxu0 0
        %1079 = vmatprep.subr.bf16.mxu0 0
        %1080 = vmatpush1.bf16.xpose.msra.mxu0 0
        %1081 = vmatprep.subr.bf16.mxu0 0
        %1082 = vmatpush1.bf16.xpose.msra.mxu0 0
        %1083 = vmatprep.subr.bf16.mxu0 0
        %1084 = vmatpush1.bf16.xpose.msra.mxu0 0
        %1085 = vmatprep.subr.bf16.mxu0 0
        %1086 = vmatpush1.bf16.xpose.msra.mxu0 0
        %1087 = vmatprep.subr.bf16.mxu0 0
        %1088 = vmatpush1.bf16.xpose.msra.mxu0 0
        %1089 = vmatprep.subr.bf16.mxu0 0
        %1090 = vmatpush1.bf16.xpose.msra.mxu0 0
        %1091 = vmatprep.subr.bf16.mxu0 0
        %1092 = vmatpush1.bf16.xpose.msra.mxu0 0
        %1093 = vmatprep.subr.bf16.mxu0 0
        %1094 = vmatpush1.bf16.xpose.msra.mxu0 0
        %1095 = vmatprep.subr.bf16.mxu0 0
        %1096 = vmatpush1.bf16.xpose.msra.mxu0 0
        %1097 = vmatprep.subr.bf16.mxu0 0
        %1098 = vmatpush1.bf16.xpose.msra.mxu0 0
        %1099 = vmatprep.mubr.bf16.mxu0 0
        %1100 = vmatmul.mubr.bf16.gmra.mrb[0].mxu0 %v1062
        %v1101 = vpop.f32.mrb[0].mxu0
        %v1102 = vadd.f32 0.0, %v1101
        %v1103 = vpop.f32.mrb[0].mxu0
        %v1104 = vpop.f32.mrb[0].mxu0
        %v1105 = vadd.f32 0.0, %v1104
        %v1106 = vpop.f32.mrb[0].mxu0
        %1107 = vdwg.mxu0
        %vm1108 = vcmask 130048
        %v1109 = vsel %vm1108, %v952, -inf
        %1110 = vmax.xlane.f32.xlu0 %v1109
        %v1111 = vpop.xlane.xlu0 %1110
        %v1112 = vsel %vm1108, %v955, -inf
        %1113 = vmax.xlane.f32.xlu0 %v1112
        %v1114 = vpop.xlane.xlu0 %1113
        %v1115 = vsel %vm1108, %v1002, -inf
        %1116 = vmax.xlane.f32.xlu0 %v1115
        %v1117 = vpop.xlane.xlu0 %1116
        %v1118 = vsel %vm1108, %v1005, -inf
        %1119 = vmax.xlane.f32.xlu0 %v1118
        %v1120 = vpop.xlane.xlu0 %1119
        %v1121 = vsel %vm1108, %v1052, -inf
        %1122 = vmax.xlane.f32.xlu0 %v1121
        %v1123 = vpop.xlane.xlu0 %1122
        %v1124 = vsel %vm1108, %v1055, -inf
        %1125 = vmax.xlane.f32.xlu0 %v1124
        %v1126 = vpop.xlane.xlu0 %1125
        %v1127 = vsel %vm1108, %v1102, -inf
        %1128 = vmax.xlane.f32.xlu0 %v1127
        %v1129 = vpop.xlane.xlu0 %1128
        %v1130 = vsel %vm1108, %v1105, -inf
        %1131 = vmax.xlane.f32.xlu0 %v1130
        %v1132 = vpop.xlane.xlu0 %1131
        %v1133 = vsub.f32 %v952, %v1111
        %v1134 = vsub.f32 %v955, %v1114
        %v1135 = vsub.f32 %v1002, %v1117
        %v1136 = vsub.f32 %v1005, %v1120
        %v1137 = vsub.f32 %v1052, %v1123
        %v1138 = vsub.f32 %v1055, %v1126
        %v1139 = vsub.f32 %v1102, %v1129
        %v1140 = vsub.f32 %v1105, %v1132
        %v1141 = vmul.f32 %v1133, 1.442695
        %v1142 = vpow.pop %v1141
        %v1143 = vmul.f32 %v1134, 1.442695
        %v1144 = vpow.pop %v1143
        %v1145 = vmul.f32 %v1135, 1.442695
        %v1146 = vpow.pop %v1145
        %v1147 = vmul.f32 %v1136, 1.442695
        %v1148 = vpow.pop %v1147
        %v1149 = vmul.f32 %v1137, 1.442695
        %v1150 = vpow.pop %v1149
        %v1151 = vmul.f32 %v1138, 1.442695
        %v1152 = vpow.pop %v1151
        %v1153 = vmul.f32 %v1139, 1.442695
        %v1154 = vpow.pop %v1153
        %v1155 = vmul.f32 %v1140, 1.442695
        %v1156 = vpow.pop %v1155
        %v1157 = vpack.c.bf16 %v1144, %v1142
        %v1158 = vpack.c.bf16 %v1148, %v1146
        %v1159 = vpack.c.bf16 %v1152, %v1150
        %v1160 = vpack.c.bf16 %v1156, %v1154
        %1161 = vrot.lane.b32.xlu0 %v903, 64
        %v1162 = vpop.permute.xlu0 %1161
        %v1165 = vsel %vm1108, %v1157, 0
        %1167 = vmatprep.subr.bf16.mxu0 0
        %1168 = vmatpush1.bf16.msra.mxu0 %v1162
        %1169 = vmatprep.subr.bf16.mxu0 0
        %1170 = vmatpush1.bf16.msra.mxu0 0
        %1171 = vmatprep.subr.bf16.mxu0 0
        %1172 = vmatpush1.bf16.msra.mxu0 0
        %1173 = vmatprep.subr.bf16.mxu0 0
        %1174 = vmatpush1.bf16.msra.mxu0 0
        %1175 = vmatprep.subr.bf16.mxu0 0
        %1176 = vmatpush1.bf16.msra.mxu0 0
        %1177 = vmatprep.subr.bf16.mxu0 0
        %1178 = vmatpush1.bf16.msra.mxu0 0
        %1179 = vmatprep.subr.bf16.mxu0 0
        %1180 = vmatpush1.bf16.msra.mxu0 0
        %1181 = vmatprep.subr.bf16.mxu0 0
        %1182 = vmatpush1.bf16.msra.mxu0 0
        %1183 = vmatprep.subr.bf16.mxu0 0
        %1184 = vmatpush1.bf16.msra.mxu0 0
        %1185 = vmatprep.subr.bf16.mxu0 0
        %1186 = vmatpush1.bf16.msra.mxu0 0
        %1187 = vmatprep.subr.bf16.mxu0 0
        %1188 = vmatpush1.bf16.msra.mxu0 0
        %1189 = vmatprep.subr.bf16.mxu0 0
        %1190 = vmatpush1.bf16.msra.mxu0 0
        %1191 = vmatprep.subr.bf16.mxu0 0
        %1192 = vmatpush1.bf16.msra.mxu0 0
        %1193 = vmatprep.subr.bf16.mxu0 0
        %1194 = vmatpush1.bf16.msra.mxu0 0
        %1195 = vmatprep.subr.bf16.mxu0 0
        %1196 = vmatpush1.bf16.msra.mxu0 0
        %1197 = vmatprep.subr.bf16.mxu0 0
        %1198 = vmatpush1.bf16.msra.mxu0 0
        %1199 = vmatprep.mubr.bf16.mxu0 0
        %1200 = vmatmul.mubr.bf16.gmra.mrb[0].mxu0 %v1165
        %v1201 = vpop.f32.mrb[0].mxu0
        %v1202 = vadd.f32 0.0, %v1201
        %v1203 = vpop.f32.mrb[0].mxu0
        %v1204 = vpop.f32.mrb[0].mxu0
        %v1205 = vadd.f32 0.0, %v1204
        %v1206 = vpop.f32.mrb[0].mxu0
        %1207 = vdwg.mxu0
        %1208 = vrot.lane.b32.xlu0 %v904, 64
        %v1209 = vpop.permute.xlu0 %1208
        %v1212 = vsel %vm1108, %v1158, 0
        %1214 = vmatprep.subr.bf16.mxu0 0
        %1215 = vmatpush1.bf16.msra.mxu0 %v1209
        %1216 = vmatprep.subr.bf16.mxu0 0
        %1217 = vmatpush1.bf16.msra.mxu0 0
        %1218 = vmatprep.subr.bf16.mxu0 0
        %1219 = vmatpush1.bf16.msra.mxu0 0
        %1220 = vmatprep.subr.bf16.mxu0 0
        %1221 = vmatpush1.bf16.msra.mxu0 0
        %1222 = vmatprep.subr.bf16.mxu0 0
        %1223 = vmatpush1.bf16.msra.mxu0 0
        %1224 = vmatprep.subr.bf16.mxu0 0
        %1225 = vmatpush1.bf16.msra.mxu0 0
        %1226 = vmatprep.subr.bf16.mxu0 0
        %1227 = vmatpush1.bf16.msra.mxu0 0
        %1228 = vmatprep.subr.bf16.mxu0 0
        %1229 = vmatpush1.bf16.msra.mxu0 0
        %1230 = vmatprep.subr.bf16.mxu0 0
        %1231 = vmatpush1.bf16.msra.mxu0 0
        %1232 = vmatprep.subr.bf16.mxu0 0
        %1233 = vmatpush1.bf16.msra.mxu0 0
        %1234 = vmatprep.subr.bf16.mxu0 0
        %1235 = vmatpush1.bf16.msra.mxu0 0
        %1236 = vmatprep.subr.bf16.mxu0 0
        %1237 = vmatpush1.bf16.msra.mxu0 0
        %1238 = vmatprep.subr.bf16.mxu0 0
        %1239 = vmatpush1.bf16.msra.mxu0 0
        %1240 = vmatprep.subr.bf16.mxu0 0
        %1241 = vmatpush1.bf16.msra.mxu0 0
        %1242 = vmatprep.subr.bf16.mxu0 0
        %1243 = vmatpush1.bf16.msra.mxu0 0
        %1244 = vmatprep.subr.bf16.mxu0 0
        %1245 = vmatpush1.bf16.msra.mxu0 0
        %1246 = vmatprep.mubr.bf16.mxu0 0
        %1247 = vmatmul.mubr.bf16.gmra.mrb[0].mxu0 %v1212
        %v1248 = vpop.f32.mrb[0].mxu0
        %v1249 = vadd.f32 0.0, %v1248
        %v1250 = vpop.f32.mrb[0].mxu0
        %v1251 = vpop.f32.mrb[0].mxu0
        %v1252 = vadd.f32 0.0, %v1251
        %v1253 = vpop.f32.mrb[0].mxu0
        %1254 = vdwg.mxu0
        %1255 = vrot.lane.b32.xlu0 %v905, 64
        %v1256 = vpop.permute.xlu0 %1255
        %v1259 = vsel %vm1108, %v1159, 0
        %1261 = vmatprep.subr.bf16.mxu0 0
        %1262 = vmatpush1.bf16.msra.mxu0 %v1256
        %1263 = vmatprep.subr.bf16.mxu0 0
        %1264 = vmatpush1.bf16.msra.mxu0 0
        %1265 = vmatprep.subr.bf16.mxu0 0
        %1266 = vmatpush1.bf16.msra.mxu0 0
        %1267 = vmatprep.subr.bf16.mxu0 0
        %1268 = vmatpush1.bf16.msra.mxu0 0
        %1269 = vmatprep.subr.bf16.mxu0 0
        %1270 = vmatpush1.bf16.msra.mxu0 0
        %1271 = vmatprep.subr.bf16.mxu0 0
        %1272 = vmatpush1.bf16.msra.mxu0 0
        %1273 = vmatprep.subr.bf16.mxu0 0
        %1274 = vmatpush1.bf16.msra.mxu0 0
        %1275 = vmatprep.subr.bf16.mxu0 0
        %1276 = vmatpush1.bf16.msra.mxu0 0
        %1277 = vmatprep.subr.bf16.mxu0 0
        %1278 = vmatpush1.bf16.msra.mxu0 0
        %1279 = vmatprep.subr.bf16.mxu0 0
        %1280 = vmatpush1.bf16.msra.mxu0 0
        %1281 = vmatprep.subr.bf16.mxu0 0
        %1282 = vmatpush1.bf16.msra.mxu0 0
        %1283 = vmatprep.subr.bf16.mxu0 0
        %1284 = vmatpush1.bf16.msra.mxu0 0
        %1285 = vmatprep.subr.bf16.mxu0 0
        %1286 = vmatpush1.bf16.msra.mxu0 0
        %1287 = vmatprep.subr.bf16.mxu0 0
        %1288 = vmatpush1.bf16.msra.mxu0 0
        %1289 = vmatprep.subr.bf16.mxu0 0
        %1290 = vmatpush1.bf16.msra.mxu0 0
        %1291 = vmatprep.subr.bf16.mxu0 0
        %1292 = vmatpush1.bf16.msra.mxu0 0
        %1293 = vmatprep.mubr.bf16.mxu0 0
        %1294 = vmatmul.mubr.bf16.gmra.mrb[0].mxu0 %v1259
        %v1295 = vpop.f32.mrb[0].mxu0
        %v1296 = vadd.f32 0.0, %v1295
        %v1297 = vpop.f32.mrb[0].mxu0
        %v1298 = vpop.f32.mrb[0].mxu0
        %v1299 = vadd.f32 0.0, %v1298
        %v1300 = vpop.f32.mrb[0].mxu0
        %1301 = vdwg.mxu0
        %1302 = vrot.lane.b32.xlu0 %v906, 64
        %v1303 = vpop.permute.xlu0 %1302
        %v1306 = vsel %vm1108, %v1160, 0
        %1308 = vmatprep.subr.bf16.mxu0 0
        %1309 = vmatpush1.bf16.msra.mxu0 %v1303
        %1310 = vmatprep.subr.bf16.mxu0 0
        %1311 = vmatpush1.bf16.msra.mxu0 0
        %1312 = vmatprep.subr.bf16.mxu0 0
        %1313 = vmatpush1.bf16.msra.mxu0 0
        %1314 = vmatprep.subr.bf16.mxu0 0
        %1315 = vmatpush1.bf16.msra.mxu0 0
        %1316 = vmatprep.subr.bf16.mxu0 0
        %1317 = vmatpush1.bf16.msra.mxu0 0
        %1318 = vmatprep.subr.bf16.mxu0 0
        %1319 = vmatpush1.bf16.msra.mxu0 0
        %1320 = vmatprep.subr.bf16.mxu0 0
        %1321 = vmatpush1.bf16.msra.mxu0 0
        %1322 = vmatprep.subr.bf16.mxu0 0
        %1323 = vmatpush1.bf16.msra.mxu0 0
        %1324 = vmatprep.subr.bf16.mxu0 0
        %1325 = vmatpush1.bf16.msra.mxu0 0
        %1326 = vmatprep.subr.bf16.mxu0 0
        %1327 = vmatpush1.bf16.msra.mxu0 0
        %1328 = vmatprep.subr.bf16.mxu0 0
        %1329 = vmatpush1.bf16.msra.mxu0 0
        %1330 = vmatprep.subr.bf16.mxu0 0
        %1331 = vmatpush1.bf16.msra.mxu0 0
        %1332 = vmatprep.subr.bf16.mxu0 0
        %1333 = vmatpush1.bf16.msra.mxu0 0
        %1334 = vmatprep.subr.bf16.mxu0 0
        %1335 = vmatpush1.bf16.msra.mxu0 0
        %1336 = vmatprep.subr.bf16.mxu0 0
        %1337 = vmatpush1.bf16.msra.mxu0 0
        %1338 = vmatprep.subr.bf16.mxu0 0
        %1339 = vmatpush1.bf16.msra.mxu0 0
        %1340 = vmatprep.mubr.bf16.mxu0 0
        %1341 = vmatmul.mubr.bf16.gmra.mrb[0].mxu0 %v1306
        %v1342 = vpop.f32.mrb[0].mxu0
        %v1343 = vadd.f32 0.0, %v1342
        %v1344 = vpop.f32.mrb[0].mxu0
        %v1345 = vpop.f32.mrb[0].mxu0
        %v1346 = vadd.f32 0.0, %v1345
        %v1347 = vpop.f32.mrb[0].mxu0
        %1348 = vdwg.mxu0
        %v1349 = vsel %vm1108, %v1142, 0.0
        %1350 = vadd.xlane.f32.xlu0 %v1349
        %v1351 = vpop.xlane.xlu0 %1350
        %v1352 = vsel %vm1108, %v1144, 0.0
        %1353 = vadd.xlane.f32.xlu0 %v1352
        %v1354 = vpop.xlane.xlu0 %1353
        %v1355 = vsel %vm1108, %v1146, 0.0
        %1356 = vadd.xlane.f32.xlu0 %v1355
        %v1357 = vpop.xlane.xlu0 %1356
        %v1358 = vsel %vm1108, %v1148, 0.0
        %1359 = vadd.xlane.f32.xlu0 %v1358
        %v1360 = vpop.xlane.xlu0 %1359
        %v1361 = vsel %vm1108, %v1150, 0.0
        %1362 = vadd.xlane.f32.xlu0 %v1361
        %v1363 = vpop.xlane.xlu0 %1362
        %v1364 = vsel %vm1108, %v1152, 0.0
        %1365 = vadd.xlane.f32.xlu0 %v1364
        %v1366 = vpop.xlane.xlu0 %1365
        %v1367 = vsel %vm1108, %v1154, 0.0
        %1368 = vadd.xlane.f32.xlu0 %v1367
        %v1369 = vpop.xlane.xlu0 %1368
        %v1370 = vsel %vm1108, %v1156, 0.0
        %1371 = vadd.xlane.f32.xlu0 %v1370
        %v1372 = vpop.xlane.xlu0 %1371
        %v1373 = vrcp.pop %v1351
        %v1374 = vrcp.pop %v1354
        %v1375 = vrcp.pop %v1357
        %v1376 = vrcp.pop %v1360
        %v1377 = vrcp.pop %v1363
        %v1378 = vrcp.pop %v1366
        %v1379 = vrcp.pop %v1369
        %v1380 = vrcp.pop %v1372
        %v1381 = vmul.f32 %v1202, %v1373
        %v1382 = vmul.f32 %v1205, %v1374
        %v1383 = vmul.f32 %v1249, %v1375
        %v1384 = vmul.f32 %v1252, %v1376
        %v1385 = vmul.f32 %v1296, %v1377
        %v1386 = vmul.f32 %v1299, %v1378
        %v1387 = vmul.f32 %v1343, %v1379
        %v1388 = vmul.f32 %v1346, %v1380
        %1391 = vrot.lane.b32.xlu0 %v1383, 8
        %v1392 = vpop.permute.xlu0 %1391
        %1393 = vrot.lane.b32.xlu0 %v1384, 8
        %v1394 = vpop.permute.xlu0 %1393
        %1399 = vrot.lane.b32.xlu0 %v1385, 16
        %v1400 = vpop.permute.xlu0 %1399
        %1401 = vrot.lane.b32.xlu0 %v1386, 16
        %v1402 = vpop.permute.xlu0 %1401
        %1407 = vrot.lane.b32.xlu0 %v1387, 24
        %v1408 = vpop.permute.xlu0 %1407
        %1409 = vrot.lane.b32.xlu0 %v1388, 24
        %v1410 = vpop.permute.xlu0 %1409
        %v1413 = vsel %vm910, %v1381, %v1392
        %v1414 = vsel %vm910, %v1382, %v1394
        %v1415 = vsel %vm1108, %v1413, %v1400
        %v1416 = vsel %vm1108, %v1414, %v1402
        %vm1417 = vcmask 195584
        %v1418 = vsel %vm1417, %v1415, %v1408
        %v1419 = vsel %vm1417, %v1416, %v1410
        %1422 = vrot.lane.b32.xlu0 %v877, 120
        %v1423 = vpop.permute.xlu0 %1422
        %1424 = vrot.lane.b32.xlu0 %v880, 120
        %v1425 = vpop.permute.xlu0 %1424
        %1428 = vrot.lane.b32.xlu0 %v877, 112
        %v1429 = vpop.permute.xlu0 %1428
        %1430 = vrot.lane.b32.xlu0 %v880, 112
        %v1431 = vpop.permute.xlu0 %1430
        %1434 = vrot.lane.b32.xlu0 %v877, 104
        %v1435 = vpop.permute.xlu0 %1434
        %1436 = vrot.lane.b32.xlu0 %v880, 104
        %v1437 = vpop.permute.xlu0 %1436
        %v1440 = vpack.c.bf16 %v880, %v877
        %v1441 = vpack.c.bf16 %v1425, %v1423
        %v1442 = vpack.c.bf16 %v1431, %v1429
        %v1443 = vpack.c.bf16 %v1437, %v1435
        %1445 = vrot.lane.b32.xlu0 %v1440, 96
        %v1446 = vpop.permute.xlu0 %1445
        %v1448 = vsel %vm910, %v1440, 0
        %v1451 = vsel %vm910, %v1446, 0
        %1453 = vmatprep.subr.bf16.mxu0 0
        %1454 = vmatpush1.bf16.xpose.msra.mxu0 %v1451
        %1455 = vmatprep.subr.bf16.mxu0 0
        %1456 = vmatpush1.bf16.xpose.msra.mxu0 0
        %1457 = vmatprep.subr.bf16.mxu0 0
        %1458 = vmatpush1.bf16.xpose.msra.mxu0 0
        %1459 = vmatprep.subr.bf16.mxu0 0
        %1460 = vmatpush1.bf16.xpose.msra.mxu0 0
        %1461 = vmatprep.subr.bf16.mxu0 0
        %1462 = vmatpush1.bf16.xpose.msra.mxu0 0
        %1463 = vmatprep.subr.bf16.mxu0 0
        %1464 = vmatpush1.bf16.xpose.msra.mxu0 0
        %1465 = vmatprep.subr.bf16.mxu0 0
        %1466 = vmatpush1.bf16.xpose.msra.mxu0 0
        %1467 = vmatprep.subr.bf16.mxu0 0
        %1468 = vmatpush1.bf16.xpose.msra.mxu0 0
        %1469 = vmatprep.subr.bf16.mxu0 0
        %1470 = vmatpush1.bf16.xpose.msra.mxu0 0
        %1471 = vmatprep.subr.bf16.mxu0 0
        %1472 = vmatpush1.bf16.xpose.msra.mxu0 0
        %1473 = vmatprep.subr.bf16.mxu0 0
        %1474 = vmatpush1.bf16.xpose.msra.mxu0 0
        %1475 = vmatprep.subr.bf16.mxu0 0
        %1476 = vmatpush1.bf16.xpose.msra.mxu0 0
        %1477 = vmatprep.subr.bf16.mxu0 0
        %1478 = vmatpush1.bf16.xpose.msra.mxu0 0
        %1479 = vmatprep.subr.bf16.mxu0 0
        %1480 = vmatpush1.bf16.xpose.msra.mxu0 0
        %1481 = vmatprep.subr.bf16.mxu0 0
        %1482 = vmatpush1.bf16.xpose.msra.mxu0 0
        %1483 = vmatprep.subr.bf16.mxu0 0
        %1484 = vmatpush1.bf16.xpose.msra.mxu0 0
        %1485 = vmatprep.mubr.bf16.mxu0 0
        %1486 = vmatmul.mubr.bf16.gmra.mrb[0].mxu0 %v1448
        %v1487 = vpop.f32.mrb[0].mxu0
        %v1488 = vadd.f32 0.0, %v1487
        %v1489 = vpop.f32.mrb[0].mxu0
        %v1490 = vpop.f32.mrb[0].mxu0
        %v1491 = vadd.f32 0.0, %v1490
        %v1492 = vpop.f32.mrb[0].mxu0
        %1493 = vdwg.mxu0
        %1495 = vrot.lane.b32.xlu0 %v1441, 96
        %v1496 = vpop.permute.xlu0 %1495
        %v1498 = vsel %vm910, %v1441, 0
        %v1501 = vsel %vm910, %v1496, 0
        %1503 = vmatprep.subr.bf16.mxu0 0
        %1504 = vmatpush1.bf16.xpose.msra.mxu0 %v1501
        %1505 = vmatprep.subr.bf16.mxu0 0
        %1506 = vmatpush1.bf16.xpose.msra.mxu0 0
        %1507 = vmatprep.subr.bf16.mxu0 0
        %1508 = vmatpush1.bf16.xpose.msra.mxu0 0
        %1509 = vmatprep.subr.bf16.mxu0 0
        %1510 = vmatpush1.bf16.xpose.msra.mxu0 0
        %1511 = vmatprep.subr.bf16.mxu0 0
        %1512 = vmatpush1.bf16.xpose.msra.mxu0 0
        %1513 = vmatprep.subr.bf16.mxu0 0
        %1514 = vmatpush1.bf16.xpose.msra.mxu0 0
        %1515 = vmatprep.subr.bf16.mxu0 0
        %1516 = vmatpush1.bf16.xpose.msra.mxu0 0
        %1517 = vmatprep.subr.bf16.mxu0 0
        %1518 = vmatpush1.bf16.xpose.msra.mxu0 0
        %1519 = vmatprep.subr.bf16.mxu0 0
        %1520 = vmatpush1.bf16.xpose.msra.mxu0 0
        %1521 = vmatprep.subr.bf16.mxu0 0
        %1522 = vmatpush1.bf16.xpose.msra.mxu0 0
        %1523 = vmatprep.subr.bf16.mxu0 0
        %1524 = vmatpush1.bf16.xpose.msra.mxu0 0
        %1525 = vmatprep.subr.bf16.mxu0 0
        %1526 = vmatpush1.bf16.xpose.msra.mxu0 0
        %1527 = vmatprep.subr.bf16.mxu0 0
        %1528 = vmatpush1.bf16.xpose.msra.mxu0 0
        %1529 = vmatprep.subr.bf16.mxu0 0
        %1530 = vmatpush1.bf16.xpose.msra.mxu0 0
        %1531 = vmatprep.subr.bf16.mxu0 0
        %1532 = vmatpush1.bf16.xpose.msra.mxu0 0
        %1533 = vmatprep.subr.bf16.mxu0 0
        %1534 = vmatpush1.bf16.xpose.msra.mxu0 0
        %1535 = vmatprep.mubr.bf16.mxu0 0
        %1536 = vmatmul.mubr.bf16.gmra.mrb[0].mxu0 %v1498
        %v1537 = vpop.f32.mrb[0].mxu0
        %v1538 = vadd.f32 0.0, %v1537
        %v1539 = vpop.f32.mrb[0].mxu0
        %v1540 = vpop.f32.mrb[0].mxu0
        %v1541 = vadd.f32 0.0, %v1540
        %v1542 = vpop.f32.mrb[0].mxu0
        %1543 = vdwg.mxu0
        %1545 = vrot.lane.b32.xlu0 %v1442, 96
        %v1546 = vpop.permute.xlu0 %1545
        %v1548 = vsel %vm910, %v1442, 0
        %v1551 = vsel %vm910, %v1546, 0
        %1553 = vmatprep.subr.bf16.mxu0 0
        %1554 = vmatpush1.bf16.xpose.msra.mxu0 %v1551
        %1555 = vmatprep.subr.bf16.mxu0 0
        %1556 = vmatpush1.bf16.xpose.msra.mxu0 0
        %1557 = vmatprep.subr.bf16.mxu0 0
        %1558 = vmatpush1.bf16.xpose.msra.mxu0 0
        %1559 = vmatprep.subr.bf16.mxu0 0
        %1560 = vmatpush1.bf16.xpose.msra.mxu0 0
        %1561 = vmatprep.subr.bf16.mxu0 0
        %1562 = vmatpush1.bf16.xpose.msra.mxu0 0
        %1563 = vmatprep.subr.bf16.mxu0 0
        %1564 = vmatpush1.bf16.xpose.msra.mxu0 0
        %1565 = vmatprep.subr.bf16.mxu0 0
        %1566 = vmatpush1.bf16.xpose.msra.mxu0 0
        %1567 = vmatprep.subr.bf16.mxu0 0
        %1568 = vmatpush1.bf16.xpose.msra.mxu0 0
        %1569 = vmatprep.subr.bf16.mxu0 0
        %1570 = vmatpush1.bf16.xpose.msra.mxu0 0
        %1571 = vmatprep.subr.bf16.mxu0 0
        %1572 = vmatpush1.bf16.xpose.msra.mxu0 0
        %1573 = vmatprep.subr.bf16.mxu0 0
        %1574 = vmatpush1.bf16.xpose.msra.mxu0 0
        %1575 = vmatprep.subr.bf16.mxu0 0
        %1576 = vmatpush1.bf16.xpose.msra.mxu0 0
        %1577 = vmatprep.subr.bf16.mxu0 0
        %1578 = vmatpush1.bf16.xpose.msra.mxu0 0
        %1579 = vmatprep.subr.bf16.mxu0 0
        %1580 = vmatpush1.bf16.xpose.msra.mxu0 0
        %1581 = vmatprep.subr.bf16.mxu0 0
        %1582 = vmatpush1.bf16.xpose.msra.mxu0 0
        %1583 = vmatprep.subr.bf16.mxu0 0
        %1584 = vmatpush1.bf16.xpose.msra.mxu0 0
        %1585 = vmatprep.mubr.bf16.mxu0 0
        %1586 = vmatmul.mubr.bf16.gmra.mrb[0].mxu0 %v1548
        %v1587 = vpop.f32.mrb[0].mxu0
        %v1588 = vadd.f32 0.0, %v1587
        %v1589 = vpop.f32.mrb[0].mxu0
        %v1590 = vpop.f32.mrb[0].mxu0
        %v1591 = vadd.f32 0.0, %v1590
        %v1592 = vpop.f32.mrb[0].mxu0
        %1593 = vdwg.mxu0
        %1595 = vrot.lane.b32.xlu0 %v1443, 96
        %v1596 = vpop.permute.xlu0 %1595
        %v1598 = vsel %vm910, %v1443, 0
        %v1601 = vsel %vm910, %v1596, 0
        %1603 = vmatprep.subr.bf16.mxu0 0
        %1604 = vmatpush1.bf16.xpose.msra.mxu0 %v1601
        %1605 = vmatprep.subr.bf16.mxu0 0
        %1606 = vmatpush1.bf16.xpose.msra.mxu0 0
        %1607 = vmatprep.subr.bf16.mxu0 0
        %1608 = vmatpush1.bf16.xpose.msra.mxu0 0
        %1609 = vmatprep.subr.bf16.mxu0 0
        %1610 = vmatpush1.bf16.xpose.msra.mxu0 0
        %1611 = vmatprep.subr.bf16.mxu0 0
        %1612 = vmatpush1.bf16.xpose.msra.mxu0 0
        %1613 = vmatprep.subr.bf16.mxu0 0
        %1614 = vmatpush1.bf16.xpose.msra.mxu0 0
        %1615 = vmatprep.subr.bf16.mxu0 0
        %1616 = vmatpush1.bf16.xpose.msra.mxu0 0
        %1617 = vmatprep.subr.bf16.mxu0 0
        %1618 = vmatpush1.bf16.xpose.msra.mxu0 0
        %1619 = vmatprep.subr.bf16.mxu0 0
        %1620 = vmatpush1.bf16.xpose.msra.mxu0 0
        %1621 = vmatprep.subr.bf16.mxu0 0
        %1622 = vmatpush1.bf16.xpose.msra.mxu0 0
        %1623 = vmatprep.subr.bf16.mxu0 0
        %1624 = vmatpush1.bf16.xpose.msra.mxu0 0
        %1625 = vmatprep.subr.bf16.mxu0 0
        %1626 = vmatpush1.bf16.xpose.msra.mxu0 0
        %1627 = vmatprep.subr.bf16.mxu0 0
        %1628 = vmatpush1.bf16.xpose.msra.mxu0 0
        %1629 = vmatprep.subr.bf16.mxu0 0
        %1630 = vmatpush1.bf16.xpose.msra.mxu0 0
        %1631 = vmatprep.subr.bf16.mxu0 0
        %1632 = vmatpush1.bf16.xpose.msra.mxu0 0
        %1633 = vmatprep.subr.bf16.mxu0 0
        %1634 = vmatpush1.bf16.xpose.msra.mxu0 0
        %1635 = vmatprep.mubr.bf16.mxu0 0
        %1636 = vmatmul.mubr.bf16.gmra.mrb[0].mxu0 %v1598
        %v1637 = vpop.f32.mrb[0].mxu0
        %v1638 = vadd.f32 0.0, %v1637
        %v1639 = vpop.f32.mrb[0].mxu0
        %v1640 = vpop.f32.mrb[0].mxu0
        %v1641 = vadd.f32 0.0, %v1640
        %v1642 = vpop.f32.mrb[0].mxu0
        %1643 = vdwg.mxu0
        %v1644 = vsel %vm1108, %v1488, -inf
        %1645 = vmax.xlane.f32.xlu0 %v1644
        %v1646 = vpop.xlane.xlu0 %1645
        %v1647 = vsel %vm1108, %v1491, -inf
        %1648 = vmax.xlane.f32.xlu0 %v1647
        %v1649 = vpop.xlane.xlu0 %1648
        %v1650 = vsel %vm1108, %v1538, -inf
        %1651 = vmax.xlane.f32.xlu0 %v1650
        %v1652 = vpop.xlane.xlu0 %1651
        %v1653 = vsel %vm1108, %v1541, -inf
        %1654 = vmax.xlane.f32.xlu0 %v1653
        %v1655 = vpop.xlane.xlu0 %1654
        %v1656 = vsel %vm1108, %v1588, -inf
        %1657 = vmax.xlane.f32.xlu0 %v1656
        %v1658 = vpop.xlane.xlu0 %1657
        %v1659 = vsel %vm1108, %v1591, -inf
        %1660 = vmax.xlane.f32.xlu0 %v1659
        %v1661 = vpop.xlane.xlu0 %1660
        %v1662 = vsel %vm1108, %v1638, -inf
        %1663 = vmax.xlane.f32.xlu0 %v1662
        %v1664 = vpop.xlane.xlu0 %1663
        %v1665 = vsel %vm1108, %v1641, -inf
        %1666 = vmax.xlane.f32.xlu0 %v1665
        %v1667 = vpop.xlane.xlu0 %1666
        %v1668 = vsub.f32 %v1488, %v1646
        %v1669 = vsub.f32 %v1491, %v1649
        %v1670 = vsub.f32 %v1538, %v1652
        %v1671 = vsub.f32 %v1541, %v1655
        %v1672 = vsub.f32 %v1588, %v1658
        %v1673 = vsub.f32 %v1591, %v1661
        %v1674 = vsub.f32 %v1638, %v1664
        %v1675 = vsub.f32 %v1641, %v1667
        %v1676 = vmul.f32 %v1668, 1.442695
        %v1677 = vpow.pop %v1676
        %v1678 = vmul.f32 %v1669, 1.442695
        %v1679 = vpow.pop %v1678
        %v1680 = vmul.f32 %v1670, 1.442695
        %v1681 = vpow.pop %v1680
        %v1682 = vmul.f32 %v1671, 1.442695
        %v1683 = vpow.pop %v1682
        %v1684 = vmul.f32 %v1672, 1.442695
        %v1685 = vpow.pop %v1684
        %v1686 = vmul.f32 %v1673, 1.442695
        %v1687 = vpow.pop %v1686
        %v1688 = vmul.f32 %v1674, 1.442695
        %v1689 = vpow.pop %v1688
        %v1690 = vmul.f32 %v1675, 1.442695
        %v1691 = vpow.pop %v1690
        %v1692 = vpack.c.bf16 %v1679, %v1677
        %v1693 = vpack.c.bf16 %v1683, %v1681
        %v1694 = vpack.c.bf16 %v1687, %v1685
        %v1695 = vpack.c.bf16 %v1691, %v1689
        %1696 = vrot.lane.b32.xlu0 %v1440, 64
        %v1697 = vpop.permute.xlu0 %1696
        %v1700 = vsel %vm1108, %v1692, 0
        %1702 = vmatprep.subr.bf16.mxu0 0
        %1703 = vmatpush1.bf16.msra.mxu0 %v1697
        %1704 = vmatprep.subr.bf16.mxu0 0
        %1705 = vmatpush1.bf16.msra.mxu0 0
        %1706 = vmatprep.subr.bf16.mxu0 0
        %1707 = vmatpush1.bf16.msra.mxu0 0
        %1708 = vmatprep.subr.bf16.mxu0 0
        %1709 = vmatpush1.bf16.msra.mxu0 0
        %1710 = vmatprep.subr.bf16.mxu0 0
        %1711 = vmatpush1.bf16.msra.mxu0 0
        %1712 = vmatprep.subr.bf16.mxu0 0
        %1713 = vmatpush1.bf16.msra.mxu0 0
        %1714 = vmatprep.subr.bf16.mxu0 0
        %1715 = vmatpush1.bf16.msra.mxu0 0
        %1716 = vmatprep.subr.bf16.mxu0 0
        %1717 = vmatpush1.bf16.msra.mxu0 0
        %1718 = vmatprep.subr.bf16.mxu0 0
        %1719 = vmatpush1.bf16.msra.mxu0 0
        %1720 = vmatprep.subr.bf16.mxu0 0
        %1721 = vmatpush1.bf16.msra.mxu0 0
        %1722 = vmatprep.subr.bf16.mxu0 0
        %1723 = vmatpush1.bf16.msra.mxu0 0
        %1724 = vmatprep.subr.bf16.mxu0 0
        %1725 = vmatpush1.bf16.msra.mxu0 0
        %1726 = vmatprep.subr.bf16.mxu0 0
        %1727 = vmatpush1.bf16.msra.mxu0 0
        %1728 = vmatprep.subr.bf16.mxu0 0
        %1729 = vmatpush1.bf16.msra.mxu0 0
        %1730 = vmatprep.subr.bf16.mxu0 0
        %1731 = vmatpush1.bf16.msra.mxu0 0
        %1732 = vmatprep.subr.bf16.mxu0 0
        %1733 = vmatpush1.bf16.msra.mxu0 0
        %1734 = vmatprep.mubr.bf16.mxu0 0
        %1735 = vmatmul.mubr.bf16.gmra.mrb[0].mxu0 %v1700
        %v1736 = vpop.f32.mrb[0].mxu0
        %v1737 = vadd.f32 0.0, %v1736
        %v1738 = vpop.f32.mrb[0].mxu0
        %v1739 = vpop.f32.mrb[0].mxu0
        %v1740 = vadd.f32 0.0, %v1739
        %v1741 = vpop.f32.mrb[0].mxu0
        %1742 = vdwg.mxu0
        %1743 = vrot.lane.b32.xlu0 %v1441, 64
        %v1744 = vpop.permute.xlu0 %1743
        %v1747 = vsel %vm1108, %v1693, 0
        %1749 = vmatprep.subr.bf16.mxu0 0
        %1750 = vmatpush1.bf16.msra.mxu0 %v1744
        %1751 = vmatprep.subr.bf16.mxu0 0
        %1752 = vmatpush1.bf16.msra.mxu0 0
        %1753 = vmatprep.subr.bf16.mxu0 0
        %1754 = vmatpush1.bf16.msra.mxu0 0
        %1755 = vmatprep.subr.bf16.mxu0 0
        %1756 = vmatpush1.bf16.msra.mxu0 0
        %1757 = vmatprep.subr.bf16.mxu0 0
        %1758 = vmatpush1.bf16.msra.mxu0 0
        %1759 = vmatprep.subr.bf16.mxu0 0
        %1760 = vmatpush1.bf16.msra.mxu0 0
        %1761 = vmatprep.subr.bf16.mxu0 0
        %1762 = vmatpush1.bf16.msra.mxu0 0
        %1763 = vmatprep.subr.bf16.mxu0 0
        %1764 = vmatpush1.bf16.msra.mxu0 0
        %1765 = vmatprep.subr.bf16.mxu0 0
        %1766 = vmatpush1.bf16.msra.mxu0 0
        %1767 = vmatprep.subr.bf16.mxu0 0
        %1768 = vmatpush1.bf16.msra.mxu0 0
        %1769 = vmatprep.subr.bf16.mxu0 0
        %1770 = vmatpush1.bf16.msra.mxu0 0
        %1771 = vmatprep.subr.bf16.mxu0 0
        %1772 = vmatpush1.bf16.msra.mxu0 0
        %1773 = vmatprep.subr.bf16.mxu0 0
        %1774 = vmatpush1.bf16.msra.mxu0 0
        %1775 = vmatprep.subr.bf16.mxu0 0
        %1776 = vmatpush1.bf16.msra.mxu0 0
        %1777 = vmatprep.subr.bf16.mxu0 0
        %1778 = vmatpush1.bf16.msra.mxu0 0
        %1779 = vmatprep.subr.bf16.mxu0 0
        %1780 = vmatpush1.bf16.msra.mxu0 0
        %1781 = vmatprep.mubr.bf16.mxu0 0
        %1782 = vmatmul.mubr.bf16.gmra.mrb[0].mxu0 %v1747
        %v1783 = vpop.f32.mrb[0].mxu0
        %v1784 = vadd.f32 0.0, %v1783
        %v1785 = vpop.f32.mrb[0].mxu0
        %v1786 = vpop.f32.mrb[0].mxu0
        %v1787 = vadd.f32 0.0, %v1786
        %v1788 = vpop.f32.mrb[0].mxu0
        %1789 = vdwg.mxu0
        %1790 = vrot.lane.b32.xlu0 %v1442, 64
        %v1791 = vpop.permute.xlu0 %1790
        %v1794 = vsel %vm1108, %v1694, 0
        %1796 = vmatprep.subr.bf16.mxu0 0
        %1797 = vmatpush1.bf16.msra.mxu0 %v1791
        %1798 = vmatprep.subr.bf16.mxu0 0
        %1799 = vmatpush1.bf16.msra.mxu0 0
        %1800 = vmatprep.subr.bf16.mxu0 0
        %1801 = vmatpush1.bf16.msra.mxu0 0
        %1802 = vmatprep.subr.bf16.mxu0 0
        %1803 = vmatpush1.bf16.msra.mxu0 0
        %1804 = vmatprep.subr.bf16.mxu0 0
        %1805 = vmatpush1.bf16.msra.mxu0 0
        %1806 = vmatprep.subr.bf16.mxu0 0
        %1807 = vmatpush1.bf16.msra.mxu0 0
        %1808 = vmatprep.subr.bf16.mxu0 0
        %1809 = vmatpush1.bf16.msra.mxu0 0
        %1810 = vmatprep.subr.bf16.mxu0 0
        %1811 = vmatpush1.bf16.msra.mxu0 0
        %1812 = vmatprep.subr.bf16.mxu0 0
        %1813 = vmatpush1.bf16.msra.mxu0 0
        %1814 = vmatprep.subr.bf16.mxu0 0
        %1815 = vmatpush1.bf16.msra.mxu0 0
        %1816 = vmatprep.subr.bf16.mxu0 0
        %1817 = vmatpush1.bf16.msra.mxu0 0
        %1818 = vmatprep.subr.bf16.mxu0 0
        %1819 = vmatpush1.bf16.msra.mxu0 0
        %1820 = vmatprep.subr.bf16.mxu0 0
        %1821 = vmatpush1.bf16.msra.mxu0 0
        %1822 = vmatprep.subr.bf16.mxu0 0
        %1823 = vmatpush1.bf16.msra.mxu0 0
        %1824 = vmatprep.subr.bf16.mxu0 0
        %1825 = vmatpush1.bf16.msra.mxu0 0
        %1826 = vmatprep.subr.bf16.mxu0 0
        %1827 = vmatpush1.bf16.msra.mxu0 0
        %1828 = vmatprep.mubr.bf16.mxu0 0
        %1829 = vmatmul.mubr.bf16.gmra.mrb[0].mxu0 %v1794
        %v1830 = vpop.f32.mrb[0].mxu0
        %v1831 = vadd.f32 0.0, %v1830
        %v1832 = vpop.f32.mrb[0].mxu0
        %v1833 = vpop.f32.mrb[0].mxu0
        %v1834 = vadd.f32 0.0, %v1833
        %v1835 = vpop.f32.mrb[0].mxu0
        %1836 = vdwg.mxu0
        %1837 = vrot.lane.b32.xlu0 %v1443, 64
        %v1838 = vpop.permute.xlu0 %1837
        %v1841 = vsel %vm1108, %v1695, 0
        %1843 = vmatprep.subr.bf16.mxu0 0
        %1844 = vmatpush1.bf16.msra.mxu0 %v1838
        %1845 = vmatprep.subr.bf16.mxu0 0
        %1846 = vmatpush1.bf16.msra.mxu0 0
        %1847 = vmatprep.subr.bf16.mxu0 0
        %1848 = vmatpush1.bf16.msra.mxu0 0
        %1849 = vmatprep.subr.bf16.mxu0 0
        %1850 = vmatpush1.bf16.msra.mxu0 0
        %1851 = vmatprep.subr.bf16.mxu0 0
        %1852 = vmatpush1.bf16.msra.mxu0 0
        %1853 = vmatprep.subr.bf16.mxu0 0
        %1854 = vmatpush1.bf16.msra.mxu0 0
        %1855 = vmatprep.subr.bf16.mxu0 0
        %1856 = vmatpush1.bf16.msra.mxu0 0
        %1857 = vmatprep.subr.bf16.mxu0 0
        %1858 = vmatpush1.bf16.msra.mxu0 0
        %1859 = vmatprep.subr.bf16.mxu0 0
        %1860 = vmatpush1.bf16.msra.mxu0 0
        %1861 = vmatprep.subr.bf16.mxu0 0
        %1862 = vmatpush1.bf16.msra.mxu0 0
        %1863 = vmatprep.subr.bf16.mxu0 0
        %1864 = vmatpush1.bf16.msra.mxu0 0
        %1865 = vmatprep.subr.bf16.mxu0 0
        %1866 = vmatpush1.bf16.msra.mxu0 0
        %1867 = vmatprep.subr.bf16.mxu0 0
        %1868 = vmatpush1.bf16.msra.mxu0 0
        %1869 = vmatprep.subr.bf16.mxu0 0
        %1870 = vmatpush1.bf16.msra.mxu0 0
        %1871 = vmatprep.subr.bf16.mxu0 0
        %1872 = vmatpush1.bf16.msra.mxu0 0
        %1873 = vmatprep.subr.bf16.mxu0 0
        %1874 = vmatpush1.bf16.msra.mxu0 0
        %1875 = vmatprep.mubr.bf16.mxu0 0
        %1876 = vmatmul.mubr.bf16.gmra.mrb[0].mxu0 %v1841
        %v1877 = vpop.f32.mrb[0].mxu0
        %v1878 = vadd.f32 0.0, %v1877
        %v1879 = vpop.f32.mrb[0].mxu0
        %v1880 = vpop.f32.mrb[0].mxu0
        %v1881 = vadd.f32 0.0, %v1880
        %v1882 = vpop.f32.mrb[0].mxu0
        %1883 = vdwg.mxu0
        %v1884 = vsel %vm1108, %v1677, 0.0
        %1885 = vadd.xlane.f32.xlu0 %v1884
        %v1886 = vpop.xlane.xlu0 %1885
        %v1887 = vsel %vm1108, %v1679, 0.0
        %1888 = vadd.xlane.f32.xlu0 %v1887
        %v1889 = vpop.xlane.xlu0 %1888
        %v1890 = vsel %vm1108, %v1681, 0.0
        %1891 = vadd.xlane.f32.xlu0 %v1890
        %v1892 = vpop.xlane.xlu0 %1891
        %v1893 = vsel %vm1108, %v1683, 0.0
        %1894 = vadd.xlane.f32.xlu0 %v1893
        %v1895 = vpop.xlane.xlu0 %1894
        %v1896 = vsel %vm1108, %v1685, 0.0
        %1897 = vadd.xlane.f32.xlu0 %v1896
        %v1898 = vpop.xlane.xlu0 %1897
        %v1899 = vsel %vm1108, %v1687, 0.0
        %1900 = vadd.xlane.f32.xlu0 %v1899
        %v1901 = vpop.xlane.xlu0 %1900
        %v1902 = vsel %vm1108, %v1689, 0.0
        %1903 = vadd.xlane.f32.xlu0 %v1902
        %v1904 = vpop.xlane.xlu0 %1903
        %v1905 = vsel %vm1108, %v1691, 0.0
        %1906 = vadd.xlane.f32.xlu0 %v1905
        %v1907 = vpop.xlane.xlu0 %1906
        %v1908 = vrcp.pop %v1886
        %v1909 = vrcp.pop %v1889
        %v1910 = vrcp.pop %v1892
        %v1911 = vrcp.pop %v1895
        %v1912 = vrcp.pop %v1898
        %v1913 = vrcp.pop %v1901
        %v1914 = vrcp.pop %v1904
        %v1915 = vrcp.pop %v1907
        %v1916 = vmul.f32 %v1737, %v1908
        %v1917 = vmul.f32 %v1740, %v1909
        %v1918 = vmul.f32 %v1784, %v1910
        %v1919 = vmul.f32 %v1787, %v1911
        %v1920 = vmul.f32 %v1831, %v1912
        %v1921 = vmul.f32 %v1834, %v1913
        %v1922 = vmul.f32 %v1878, %v1914
        %v1923 = vmul.f32 %v1881, %v1915
        %1926 = vrot.lane.b32.xlu0 %v1918, 8
        %v1927 = vpop.permute.xlu0 %1926
        %1928 = vrot.lane.b32.xlu0 %v1919, 8
        %v1929 = vpop.permute.xlu0 %1928
        %1934 = vrot.lane.b32.xlu0 %v1920, 16
        %v1935 = vpop.permute.xlu0 %1934
        %1936 = vrot.lane.b32.xlu0 %v1921, 16
        %v1937 = vpop.permute.xlu0 %1936
        %1942 = vrot.lane.b32.xlu0 %v1922, 24
        %v1943 = vpop.permute.xlu0 %1942
        %1944 = vrot.lane.b32.xlu0 %v1923, 24
        %v1945 = vpop.permute.xlu0 %1944
        %v1948 = vsel %vm910, %v1916, %v1927
        %v1949 = vsel %vm910, %v1917, %v1929
        %v1950 = vsel %vm1108, %v1948, %v1935
        %v1951 = vsel %vm1108, %v1949, %v1937
        %v1952 = vsel %vm1417, %v1950, %v1943
        %v1953 = vsel %vm1417, %v1951, %v1945
        %v1954 = vpack.c.bf16 %v1419, %v1418
        %v1955 = vpack.c.bf16 %v1953, %v1952
        %v1956 = vld [vmem:[%s704] sm:$0xf]
        %v1957 = vld [vmem:[%s704 + $0x4] sm:$0xf]
        %v1958 = vld [vmem:[%s704 + $0x8] sm:$0xf]
        %v1959 = vld [vmem:[%s704 + $0xc] sm:$0xf]
        %v1960 = vld [vmem:[%s707] sm:$0x1]
        %v1962 = vlaneseq
        %v1963 = vshrl.u32 %v1962, 7
        %v1964 = vsub.s32 0, %v1963
        %v1965 = vrot.slane %v1960, %v1964
        %v1971 = vunpack.c.l.b16 %v1956
        %v1972 = vunpack.c.l.b16 %v1957
        %v1973 = vunpack.c.l.b16 %v1958
        %v1974 = vunpack.c.l.b16 %v1959
        %v1975 = vpack.c.b16 %v1972, %v1971
        %v1976 = vpack.c.b16 %v1974, %v1973
        %v1980 = vsel %vm729, %v1954, 0
        %v1983 = vsel %vm729, %v1955, 0
        %1985 = vmatprep.subr.bf16.mxu0 0
        %1986 = vmatpush1.bf16.msra.mxu0 %v1975
        %1987 = vmatprep.subr.bf16.mxu0 0
        %1988 = vmatpush1.bf16.msra.mxu0 %v1976
        %1989 = vmatprep.subr.bf16.mxu0 0
        %1990 = vmatpush1.bf16.msra.mxu0 0
        %1991 = vmatprep.subr.bf16.mxu0 0
        %1992 = vmatpush1.bf16.msra.mxu0 0
        %1993 = vmatprep.subr.bf16.mxu0 0
        %1994 = vmatpush1.bf16.msra.mxu0 0
        %1995 = vmatprep.subr.bf16.mxu0 0
        %1996 = vmatpush1.bf16.msra.mxu0 0
        %1997 = vmatprep.subr.bf16.mxu0 0
        %1998 = vmatpush1.bf16.msra.mxu0 0
        %1999 = vmatprep.subr.bf16.mxu0 0
        %2000 = vmatpush1.bf16.msra.mxu0 0
        %2001 = vmatprep.subr.bf16.mxu0 0
        %2002 = vmatpush1.bf16.msra.mxu0 0
        %2003 = vmatprep.subr.bf16.mxu0 0
        %2004 = vmatpush1.bf16.msra.mxu0 0
        %2005 = vmatprep.subr.bf16.mxu0 0
        %2006 = vmatpush1.bf16.msra.mxu0 0
        %2007 = vmatprep.subr.bf16.mxu0 0
        %2008 = vmatpush1.bf16.msra.mxu0 0
        %2009 = vmatprep.subr.bf16.mxu0 0
        %2010 = vmatpush1.bf16.msra.mxu0 0
        %2011 = vmatprep.subr.bf16.mxu0 0
        %2012 = vmatpush1.bf16.msra.mxu0 0
        %2013 = vmatprep.subr.bf16.mxu0 0
        %2014 = vmatpush1.bf16.msra.mxu0 0
        %2015 = vmatprep.subr.bf16.mxu0 0
        %2016 = vmatpush1.bf16.msra.mxu0 0
        %2017 = vmatprep.mubr.bf16.mxu0 0
        %2018 = vmatmul.mubr.bf16.gmra.mrb[0].mxu0 %v1980
        %v2019 = vpop.f32.mrb[0].mxu0
        %v2020 = vadd.f32 %v1965, %v2019
        %v2021 = vpop.f32.mrb[0].mxu0
        %v2022 = vpop.f32.mrb[0].mxu0
        %v2023 = vadd.f32 %v1965, %v2022
        %v2024 = vpop.f32.mrb[0].mxu0
        %2025 = vmatprep.mubr.bf16.mxu0 0
        %2026 = vmatmul.mubr.bf16.gmra.mrb[0].mxu0 %v1983
        %v2027 = vpop.f32.mrb[0].mxu0
        %v2028 = vadd.f32 %v1965, %v2027
        %v2029 = vpop.f32.mrb[0].mxu0
        %v2030 = vpop.f32.mrb[0].mxu0
        %v2031 = vadd.f32 %v1965, %v2030
        %v2032 = vpop.f32.mrb[0].mxu0
        %2033 = vdwg.mxu0
        %v2034 = vadd.f32 %v723, %v2020
        %v2035 = vadd.f32 %v724, %v2023
        %v2036 = vadd.f32 %v725, %v2028
        %v2037 = vadd.f32 %v726, %v2031
        %v2038 = vld [vmem:[%s564] sm:$0x1]
        %v2039 = vld [vmem:[%s572] sm:$0x1]
        %v2040 = vsel %vm729, %v2034, 0.0
        %2041 = vadd.xlane.f32.xlu0 %v2040
        %v2042 = vpop.xlane.xlu0 %2041
        %v2043 = vsel %vm729, %v2035, 0.0
        %2044 = vadd.xlane.f32.xlu0 %v2043
        %v2045 = vpop.xlane.xlu0 %2044
        %v2046 = vsel %vm729, %v2036, 0.0
        %2047 = vadd.xlane.f32.xlu0 %v2046
        %v2048 = vpop.xlane.xlu0 %2047
        %v2049 = vsel %vm729, %v2037, 0.0
        %2050 = vadd.xlane.f32.xlu0 %v2049
        %v2051 = vpop.xlane.xlu0 %2050
        %v2052 = vmul.f32 %v2042, %v742
        %v2053 = vmul.f32 %v2045, %v742
        %v2054 = vmul.f32 %v2048, %v742
        %v2055 = vmul.f32 %v2051, %v742
        %v2056 = vsub.f32 %v2034, %v2052
        %v2057 = vsub.f32 %v2035, %v2053
        %v2058 = vsub.f32 %v2036, %v2054
        %v2059 = vsub.f32 %v2037, %v2055
        %v2060 = vmul.f32 %v2056, %v2056
        %v2061 = vmul.f32 %v2057, %v2057
        %v2062 = vmul.f32 %v2058, %v2058
        %v2063 = vmul.f32 %v2059, %v2059
        %v2064 = vsel %vm729, %v2060, 0.0
        %2065 = vadd.xlane.f32.xlu0 %v2064
        %v2066 = vpop.xlane.xlu0 %2065
        %v2067 = vsel %vm729, %v2061, 0.0
        %2068 = vadd.xlane.f32.xlu0 %v2067
        %v2069 = vpop.xlane.xlu0 %2068
        %v2070 = vsel %vm729, %v2062, 0.0
        %2071 = vadd.xlane.f32.xlu0 %v2070
        %v2072 = vpop.xlane.xlu0 %2071
        %v2073 = vsel %vm729, %v2063, 0.0
        %2074 = vadd.xlane.f32.xlu0 %v2073
        %v2075 = vpop.xlane.xlu0 %2074
        %v2076 = vmul.f32 %v2066, %v742
        %v2077 = vmul.f32 %v2069, %v742
        %v2078 = vmul.f32 %v2072, %v742
        %v2079 = vmul.f32 %v2075, %v742
        %v2080 = vadd.f32 %v2076, 1e-05
        %v2081 = vadd.f32 %v2077, 1e-05
        %v2082 = vadd.f32 %v2078, 1e-05
        %v2083 = vadd.f32 %v2079, 1e-05
        %v2084 = vrsqrt.pop %v2080
        %v2085 = vrsqrt.pop %v2081
        %v2086 = vrsqrt.pop %v2082
        %v2087 = vrsqrt.pop %v2083
        %v2088 = vmul.f32 %v2056, %v2084
        %v2089 = vmul.f32 %v2057, %v2085
        %v2090 = vmul.f32 %v2058, %v2086
        %v2091 = vmul.f32 %v2059, %v2087
        %v2093 = vlaneseq
        %v2094 = vshrl.u32 %v2093, 7
        %v2095 = vsub.s32 0, %v2094
        %v2096 = vrot.slane %v2038, %v2095
        %v2098 = vmul.f32 %v2088, %v2096
        %v2099 = vmul.f32 %v2089, %v2096
        %v2100 = vmul.f32 %v2090, %v2096
        %v2101 = vmul.f32 %v2091, %v2096
        %v2103 = vlaneseq
        %v2104 = vshrl.u32 %v2103, 7
        %v2105 = vsub.s32 0, %v2104
        %v2106 = vrot.slane %v2039, %v2105
        %v2108 = vadd.f32 %v2098, %v2106
        %v2109 = vadd.f32 %v2099, %v2106
        %v2110 = vadd.f32 %v2100, %v2106
        %v2111 = vadd.f32 %v2101, %v2106
        %v2112 = vpack.c.bf16 %v2109, %v2108
        %v2113 = vpack.c.bf16 %v2111, %v2110
        %v2114 = vld [vmem:[%s712] sm:$0xf]
        %v2115 = vld [vmem:[%s712 + $0x4] sm:$0xf]
        %v2116 = vld [vmem:[%s712 + $0x8] sm:$0xf]
        %v2117 = vld [vmem:[%s712 + $0xc] sm:$0xf]
        %v2118 = vld [vmem:[%s580] sm:$0x1]
        %v2120 = vlaneseq
        %v2121 = vshrl.u32 %v2120, 7
        %v2122 = vsub.s32 0, %v2121
        %v2123 = vrot.slane %v2118, %v2122
        %v2129 = vunpack.c.l.b16 %v2114
        %v2130 = vunpack.c.l.b16 %v2115
        %v2131 = vunpack.c.l.b16 %v2116
        %v2132 = vunpack.c.l.b16 %v2117
        %v2133 = vpack.c.b16 %v2130, %v2129
        %v2134 = vpack.c.b16 %v2132, %v2131
        %v2138 = vsel %vm729, %v2112, 0
        %v2141 = vsel %vm729, %v2113, 0
        %2143 = vmatprep.subr.bf16.mxu0 0
        %2144 = vmatpush1.bf16.msra.mxu0 %v2133
        %2145 = vmatprep.subr.bf16.mxu0 0
        %2146 = vmatpush1.bf16.msra.mxu0 %v2134
        %2147 = vmatprep.subr.bf16.mxu0 0
        %2148 = vmatpush1.bf16.msra.mxu0 0
        %2149 = vmatprep.subr.bf16.mxu0 0
        %2150 = vmatpush1.bf16.msra.mxu0 0
        %2151 = vmatprep.subr.bf16.mxu0 0
        %2152 = vmatpush1.bf16.msra.mxu0 0
        %2153 = vmatprep.subr.bf16.mxu0 0
        %2154 = vmatpush1.bf16.msra.mxu0 0
        %2155 = vmatprep.subr.bf16.mxu0 0
        %2156 = vmatpush1.bf16.msra.mxu0 0
        %2157 = vmatprep.subr.bf16.mxu0 0
        %2158 = vmatpush1.bf16.msra.mxu0 0
        %2159 = vmatprep.subr.bf16.mxu0 0
        %2160 = vmatpush1.bf16.msra.mxu0 0
        %2161 = vmatprep.subr.bf16.mxu0 0
        %2162 = vmatpush1.bf16.msra.mxu0 0
        %2163 = vmatprep.subr.bf16.mxu0 0
        %2164 = vmatpush1.bf16.msra.mxu0 0
        %2165 = vmatprep.subr.bf16.mxu0 0
        %2166 = vmatpush1.bf16.msra.mxu0 0
        %2167 = vmatprep.subr.bf16.mxu0 0
        %2168 = vmatpush1.bf16.msra.mxu0 0
        %2169 = vmatprep.subr.bf16.mxu0 0
        %2170 = vmatpush1.bf16.msra.mxu0 0
        %2171 = vmatprep.subr.bf16.mxu0 0
        %2172 = vmatpush1.bf16.msra.mxu0 0
        %2173 = vmatprep.subr.bf16.mxu0 0
        %2174 = vmatpush1.bf16.msra.mxu0 0
        %2175 = vmatprep.mubr.bf16.mxu0 0
        %2176 = vmatmul.mubr.bf16.gmra.mrb[0].mxu0 %v2138
        %v2177 = vpop.f32.mrb[0].mxu0
        %v2178 = vadd.f32 %v2123, %v2177
        %v2179 = vpop.f32.mrb[0].mxu0
        %v2180 = vpop.f32.mrb[0].mxu0
        %v2181 = vadd.f32 %v2123, %v2180
        %v2182 = vpop.f32.mrb[0].mxu0
        %2183 = vmatprep.mubr.bf16.mxu0 0
        %2184 = vmatmul.mubr.bf16.gmra.mrb[0].mxu0 %v2141
        %v2185 = vpop.f32.mrb[0].mxu0
        %v2186 = vadd.f32 %v2123, %v2185
        %v2187 = vpop.f32.mrb[0].mxu0
        %v2188 = vpop.f32.mrb[0].mxu0
        %v2189 = vadd.f32 %v2123, %v2188
        %v2190 = vpop.f32.mrb[0].mxu0
        %2191 = vdwg.mxu0
        %v2192 = vmul.f32 %v2178, 0.5
        %v2193 = vmul.f32 %v2181, 0.5
        %v2194 = vmul.f32 %v2186, 0.5
        %v2195 = vmul.f32 %v2189, 0.5
        %v2196 = vmul.f32 %v2178, 0.70710677
        %v2197 = vmul.f32 %v2181, 0.70710677
        %v2198 = vmul.f32 %v2186, 0.70710677
        %v2199 = vmul.f32 %v2189, 0.70710677
        %v2200 = verf.f32.pop %v2196
        %v2201 = verf.f32.pop %v2197
        %v2202 = verf.f32.pop %v2198
        %v2203 = verf.f32.pop %v2199
        %v2204 = vadd.f32 %v2200, 1.0
        %v2205 = vadd.f32 %v2201, 1.0
        %v2206 = vadd.f32 %v2202, 1.0
        %v2207 = vadd.f32 %v2203, 1.0
        %v2208 = vmul.f32 %v2192, %v2204
        %v2209 = vmul.f32 %v2193, %v2205
        %v2210 = vmul.f32 %v2194, %v2206
        %v2211 = vmul.f32 %v2195, %v2207
        %v2212 = vpack.c.bf16 %v2209, %v2208
        %v2213 = vpack.c.bf16 %v2211, %v2210
        %v2214 = vld [vmem:[%s717] sm:$0xf]
        %v2215 = vld [vmem:[%s717 + $0x4] sm:$0xf]
        %v2216 = vld [vmem:[%s717 + $0x8] sm:$0xf]
        %v2217 = vld [vmem:[%s717 + $0xc] sm:$0xf]
        %v2218 = vld [vmem:[%s717 + $0x10] sm:$0xf]
        %v2219 = vld [vmem:[%s717 + $0x14] sm:$0xf]
        %v2220 = vld [vmem:[%s717 + $0x18] sm:$0xf]
        %v2221 = vld [vmem:[%s717 + $0x1c] sm:$0xf]
        %v2222 = vld [vmem:[%s717 + $0x20] sm:$0xf]
        %v2223 = vld [vmem:[%s717 + $0x24] sm:$0xf]
        %v2224 = vld [vmem:[%s717 + $0x28] sm:$0xf]
        %v2225 = vld [vmem:[%s717 + $0x2c] sm:$0xf]
        %v2226 = vld [vmem:[%s717 + $0x30] sm:$0xf]
        %v2227 = vld [vmem:[%s717 + $0x34] sm:$0xf]
        %v2228 = vld [vmem:[%s717 + $0x38] sm:$0xf]
        %v2229 = vld [vmem:[%s717 + $0x3c] sm:$0xf]
        %v2230 = vld [vmem:[%s720] sm:$0x1]
        %v2232 = vlaneseq
        %v2233 = vshrl.u32 %v2232, 7
        %v2234 = vsub.s32 0, %v2233
        %v2235 = vrot.slane %v2230, %v2234
        %v2253 = vunpack.c.l.b16 %v2214
        %v2254 = vunpack.c.l.b16 %v2215
        %v2255 = vunpack.c.l.b16 %v2216
        %v2256 = vunpack.c.l.b16 %v2217
        %v2257 = vunpack.c.l.b16 %v2218
        %v2258 = vunpack.c.l.b16 %v2219
        %v2259 = vunpack.c.l.b16 %v2220
        %v2260 = vunpack.c.l.b16 %v2221
        %v2261 = vunpack.c.l.b16 %v2222
        %v2262 = vunpack.c.l.b16 %v2223
        %v2263 = vunpack.c.l.b16 %v2224
        %v2264 = vunpack.c.l.b16 %v2225
        %v2265 = vunpack.c.l.b16 %v2226
        %v2266 = vunpack.c.l.b16 %v2227
        %v2267 = vunpack.c.l.b16 %v2228
        %v2268 = vunpack.c.l.b16 %v2229
        %v2269 = vpack.c.b16 %v2254, %v2253
        %v2270 = vpack.c.b16 %v2256, %v2255
        %v2271 = vpack.c.b16 %v2258, %v2257
        %v2272 = vpack.c.b16 %v2260, %v2259
        %v2273 = vpack.c.b16 %v2262, %v2261
        %v2274 = vpack.c.b16 %v2264, %v2263
        %v2275 = vpack.c.b16 %v2266, %v2265
        %v2276 = vpack.c.b16 %v2268, %v2267
        %2285 = vmatprep.subr.bf16.mxu0 0
        %2286 = vmatpush1.bf16.msra.mxu0 %v2269
        %2287 = vmatprep.subr.bf16.mxu0 0
        %2288 = vmatpush1.bf16.msra.mxu0 %v2270
        %2289 = vmatprep.subr.bf16.mxu0 0
        %2290 = vmatpush1.bf16.msra.mxu0 %v2271
        %2291 = vmatprep.subr.bf16.mxu0 0
        %2292 = vmatpush1.bf16.msra.mxu0 %v2272
        %2293 = vmatprep.subr.bf16.mxu0 0
        %2294 = vmatpush1.bf16.msra.mxu0 %v2273
        %2295 = vmatprep.subr.bf16.mxu0 0
        %2296 = vmatpush1.bf16.msra.mxu0 %v2274
        %2297 = vmatprep.subr.bf16.mxu0 0
        %2298 = vmatpush1.bf16.msra.mxu0 %v2275
        %2299 = vmatprep.subr.bf16.mxu0 0
        %2300 = vmatpush1.bf16.msra.mxu0 %v2276
        %2301 = vmatprep.subr.bf16.mxu0 0
        %2302 = vmatpush1.bf16.msra.mxu0 0
        %2303 = vmatprep.subr.bf16.mxu0 0
        %2304 = vmatpush1.bf16.msra.mxu0 0
        %2305 = vmatprep.subr.bf16.mxu0 0
        %2306 = vmatpush1.bf16.msra.mxu0 0
        %2307 = vmatprep.subr.bf16.mxu0 0
        %2308 = vmatpush1.bf16.msra.mxu0 0
        %2309 = vmatprep.subr.bf16.mxu0 0
        %2310 = vmatpush1.bf16.msra.mxu0 0
        %2311 = vmatprep.subr.bf16.mxu0 0
        %2312 = vmatpush1.bf16.msra.mxu0 0
        %2313 = vmatprep.subr.bf16.mxu0 0
        %2314 = vmatpush1.bf16.msra.mxu0 0
        %2315 = vmatprep.subr.bf16.mxu0 0
        %2316 = vmatpush1.bf16.msra.mxu0 0
        %2317 = vmatprep.mubr.bf16.mxu0 0
        %2318 = vmatmul.mubr.bf16.gmra.mrb[0].mxu0 %v2212
        %v2319 = vpop.f32.mrb[0].mxu0
        %v2320 = vadd.f32 %v2235, %v2319
        %v2321 = vpop.f32.mrb[0].mxu0
        %v2322 = vpop.f32.mrb[0].mxu0
        %v2323 = vadd.f32 %v2235, %v2322
        %v2324 = vpop.f32.mrb[0].mxu0
        %2325 = vmatprep.mubr.bf16.mxu0 0
        %2326 = vmatmul.mubr.bf16.gmra.mrb[0].mxu0 %v2213
        %v2327 = vpop.f32.mrb[0].mxu0
        %v2328 = vadd.f32 %v2235, %v2327
        %v2329 = vpop.f32.mrb[0].mxu0
        %v2330 = vpop.f32.mrb[0].mxu0
        %v2331 = vadd.f32 %v2235, %v2330
        %v2332 = vpop.f32.mrb[0].mxu0
        %2333 = vdwg.mxu0
        %v2334 = vadd.f32 %v2034, %v2320
        %v2335 = vadd.f32 %v2035, %v2323
        %v2336 = vadd.f32 %v2036, %v2328
        %v2337 = vadd.f32 %v2037, %v2331
        %2338 = vst.msk [vmem:[%s674] sm:$0xff] %vm729, %v2334
        %2339 = vst.msk [vmem:[%s674 + $0x8] sm:$0xff] %vm729, %v2335
        %2340 = vst.msk [vmem:[%s674 + $0x10] sm:$0xff] %vm729, %v2336
        %2341 = vst.msk [vmem:[%s674 + $0x18] sm:$0xff] %vm729, %v2337
        %s2342 = sand.u32 %s395, 1
        %s2343 = scalar_lea.sflag [#allocation4], %s2342
        %s2344 = sand.u32 %s395, 1
        %s2345 = smul.addr %s2344, 32
        %s2346 = scalar_lea.vmem [#allocation8], %s2345
        // Predicated region
        $region85: #{tpu_custom_call.1} parent=71 // pred_check
          %p2347 = pneg %p405
        $region86: #{tpu_custom_call.1} parent=71 // pred_check_branch
          %2349 = sbr.rel (%p2347) target = $region88
        $region87: #{tpu_custom_call.1} parent=71 // pred_region
          %s2350 = smul.u32 2, %s38
          %s2352 = ssub.s32 512, 512
          %2353 = vsyncadd %s2343, %s2352
          %s2354 = smul.addr %s2350, 2
          %s2355 = smul.addr %s37, 4
          %s2356 = sadd.s32 %s2354, %s2355
          %s2357 = smul.addr %s2356, 128
          %s2358 = scalar_lea.hbm %s13, %s2357
          %s2359 = sshll.u32 %s2346, 4
          %s2360 = int_to_ptr.vmem [resolvable:$true] %s2359
          %2365 = dma.vmem_to_hbm [thread:$0]  %s2360, 512, %s2358, %s2343, 128, 128, 8
        $region88: #{tpu_custom_call.1} parent=71 // pred_fallthru
          _
      $region72: #{tpu_custom_call.1} parent=5 // pred_fallthru
        _
      %p2366 = scmp.le.s32.totalorder 2, %s28
      // Predicated region
      $region89: #{tpu_custom_call.1} parent=5 // pred_check
        %p2367 = pneg %p2366
      $region90: #{tpu_custom_call.1} parent=5 // pred_check_branch
        %2369 = sbr.rel (%p2367) target = $region92
      $region91: #{tpu_custom_call.1} parent=5 // pred_region
        %s2370 = ssub.s32 %s28, 2
        // Predicated region
        $region93: #{tpu_custom_call.1} parent=91 // pred_check
          %p2371 = pneg %p411
        $region94: #{tpu_custom_call.1} parent=91 // pred_check_branch
          %2373 = sbr.rel (%p2371) target = $region96
        $region95: #{tpu_custom_call.1} parent=91 // pred_region
          %s2374 = sand.u32 %s396, 1
          %s2375 = scalar_lea.sflag [#allocation4], %s2374
          %s2376 = sand.u32 %s396, 1
          %s2377 = smul.addr %s2376, 32
          %s2378 = scalar_lea.vmem [#allocation8], %s2377
          %2379 = dma.done %s2375, 512
        $region96: #{tpu_custom_call.1} parent=91 // pred_fallthru
          _
      $region92: #{tpu_custom_call.1} parent=5 // pred_fallthru
        _
    $region6: #{tpu_custom_call.1} parent=1 // loop_footer
      %s32 = sadd.s32 1, %s28
    $region7: #{tpu_custom_call.1} parent=1 // loop_footer_branch
      %27 = sbr.rel target = $region3
    $region8: #{tpu_custom_call.1} parent=1 // loop_exit
      _
    %2380 = vsyncpa [#allocation3], 1
    %s2381 = scalar_lea.sflag [#allocation3], 1
    %2382 = vsyncpa %s2381, 1
    %2383 = vsyncpa [#allocation6], 1
    %s2384 = scalar_lea.sflag [#allocation6], 1
    %2385 = vsyncpa %s2384, 1
    %2386 = vsyncpa [#allocation4], 1
    %s2387 = scalar_lea.sflag [#allocation4], 1
    %2388 = vsyncpa %s2387, 1

</llo_original>
